<compile_context>
chip_gen: v6e
topology: v6e:2x2x1
jax: 0.10.0
libtpu: 0.0.40
codegen_flags: <defaults>
</compile_context>

<pallas_src>
import functools

import jax
import jax.numpy as jnp
from jax.experimental import pallas as pl
from jax.experimental.pallas import tpu as pltpu


def _round_up(x, m):
    return (x + m - 1) // m * m


# ----------------------------------------------------------------------------
# Fused DenseBlock kernel: one (image, row-tile) per grid step, all
# intermediates (x, x1, x2 and both concats) live in one bf16 VMEM buffer.
# ----------------------------------------------------------------------------
def _dense_block_kernel(x_ref, w1_ref, b1_ref, w2_ref, b2_ref, w3_ref, b3_ref,
                        o_ref, ybuf, *, T, H, W, C0, R):
    # x_ref : (1, 1, T+6, W, C0)  haloed input rows (bf16, zero outside the image)
    # wL_ref: (3, 3*Cpad, PL)     per-dy weights, BN-folded, zero-padded, bf16
    # bL_ref: (1, PL)             folded bias, f32
    # o_ref : (1, T, W, P3)       lane-dense padded output rows, f32
    # ybuf  : (T+6, W+2, Cpad)    bf16 concat buffer: [0:C0]=x, [C0:C0+R]=x1,
    #                             [C0+R:C0+2R]=x2, rest = lane padding (zero).
    Cpad = ybuf.shape[-1]
    rows = T + 6
    rt = pl.program_id(1)
    row0 = rt * T                       # first real output row of this tile

    # --- per-step init (cheap: no full memset) -------------------------------
    # Zero the x1/x2 slots + lane-padding channels everywhere (they must be finite
    # & zero where read), and the left/right conv-padding columns of the x slot.
    # Top/bottom conv-padding rows arrive pre-zeroed inside the haloed input tile.
    if Cpad > C0:
        ybuf[:, :, pl.ds(C0, Cpad - C0)] = jnp.zeros(
            (rows, W + 2, Cpad - C0), jnp.bfloat16)
    ybuf[:, pl.ds(0, 1), pl.ds(0, C0)] = jnp.zeros((rows, 1, C0), jnp.bfloat16)
    ybuf[:, pl.ds(W + 1, 1), pl.ds(0, C0)] = jnp.zeros((rows, 1, C0), jnp.bfloat16)
    # Drop the (already bf16) haloed input rows in.
    ybuf[:, pl.ds(1, W), pl.ds(0, C0)] = x_ref[0, 0]

    def conv3x3(w_ref, b_ref, out_start, out_rows):
        # 3x3 "same" conv as 3 per-dy matmuls with K = 3*Cpad.  Weight rows beyond
        # the layer's true input channels are zero, so contracting over the whole
        # (zero-initialized) concat width is exact.
        pout = w_ref.shape[-1]

        def body(dy, acc):
            slab = ybuf[pl.ds(out_start - 1 + dy, out_rows), :, :]     # (n, W+2, Cpad)
            act = jnp.concatenate(                                      # lane-aligned concat
                [slab[:, dx:dx + W, :] for dx in range(3)], axis=-1)    # (n, W, 3*Cpad)
            act = act.reshape(out_rows * W, 3 * Cpad)
            return acc + jnp.dot(act, w_ref[dy],
                                 preferred_element_type=jnp.float32)   # MXU, f32 acc

        acc = jax.lax.fori_loop(0, 3, body,
                                jnp.zeros((out_rows * W, pout), jnp.float32),
                                unroll=True)
        # BN scale already folded into w/b -> epilogue is bias-add + ReLU only.
        return jnp.maximum(acc + b_ref[...], 0.0).reshape(out_rows, W, pout)

    def valid_rows(out_rows, first_row):
        # Mask rows that fall outside the real image (conv zero-padding of the
        # concatenated tensor): only the top/bottom tiles are affected.
        r = first_row + jax.lax.broadcasted_iota(jnp.int32, (out_rows, 1, 1), 0)
        return (r >= 0) & (r < H)

    # conv1(x) -> x1 over output rows [row0-2, row0+T+2), written into the concat
    # buffer (redundant halo compute; no HBM concat, no HBM round trip).
    n1 = T + 4
    y1 = conv3x3(w1_ref, b1_ref, 1, n1)[:, :, :R]
    y1 = jnp.where(valid_rows(n1, row0 - 2), y1, 0.0)
    ybuf[pl.ds(1, n1), pl.ds(1, W), pl.ds(C0, R)] = y1.astype(jnp.bfloat16)

    # conv2([x, x1]) -> x2 over output rows [row0-1, row0+T+1).
    n2 = T + 2
    y2 = conv3x3(w2_ref, b2_ref, 2, n2)[:, :, :R]
    y2 = jnp.where(valid_rows(n2, row0 - 1), y2, 0.0)
    ybuf[pl.ds(2, n2), pl.ds(1, W), pl.ds(C0 + R, R)] = y2.astype(jnp.bfloat16)

    # conv3([x, x1, x2]) -> x3: the only tensor that leaves VMEM (lane-dense slab).
    y3 = conv3x3(w3_ref, b3_ref, 3, T)
    o_ref[0] = y3.astype(o_ref.dtype)


def _pick_vmem_limit(need_bytes):
    cap = 128 * 1024 * 1024
    try:
        cap = int(pltpu.get_tpu_info().vmem_capacity_bytes)   # 64 MiB on v7x
    except Exception:
        pass
    need = int(1.5 * need_bytes)
    return max(32 << 20, min(need, cap - (8 << 20), 100 << 20))


def _dense_block_pallas(x_tiles, params, dims, H, W, T):
    N, nrt, rows_in, _, C0 = x_tiles.shape
    _, R, C3 = dims
    Cpad = params["conv1"]["w"].shape[1] // 3
    P3 = params["conv3"]["w"].shape[-1]          # lane-dense padded output width

    kernel = functools.partial(_dense_block_kernel, T=T, H=H, W=W, C0=C0, R=R)

    flops = 2 * N * H * W * 9 * (C0 * R + (C0 + R) * R + (C0 + 2 * R) * C3)
    w_bytes = sum(params[k]["w"].size * 2 + params[k]["b"].size * 4
                  for k in ("conv1", "conv2", "conv3"))
    bytes_accessed = x_tiles.size * 2 + w_bytes + N * H * W * P3 * 4

    ybuf_bytes = rows_in * (W + 2) * Cpad * 2
    in_blk = rows_in * W * C0 * 2
    out_blk = T * W * P3 * 4
    tmp = (T + 4) * W * (3 * Cpad) * 2 + 2 * (T + 4) * W * max(128, P3) * 4
    vmem_limit = _pick_vmem_limit(ybuf_bytes + w_bytes + 2 * (in_blk + out_blk) + tmp)

    def wspec(w):
        return pl.BlockSpec(w.shape, lambda n, r: (0, 0, 0))   # resident across grid

    def bspec(b):
        return pl.BlockSpec(b.shape, lambda n, r: (0, 0))

    return pl.pallas_call(
        kernel,
        out_shape=jax.ShapeDtypeStruct((N, H, W, P3), jnp.float32),
        grid_spec=pltpu.PrefetchScalarGridSpec(
            num_scalar_prefetch=0,
            grid=(N, nrt),
            in_specs=[
                pl.BlockSpec((1, 1, rows_in, W, C0), lambda n, r: (n, r, 0, 0, 0)),
                wspec(params["conv1"]["w"]), bspec(params["conv1"]["b"]),
                wspec(params["conv2"]["w"]), bspec(params["conv2"]["b"]),
                wspec(params["conv3"]["w"]), bspec(params["conv3"]["b"]),
            ],
            out_specs=pl.BlockSpec((1, T, W, P3), lambda n, r: (n, r, 0, 0)),
            scratch_shapes=[pltpu.VMEM((rows_in, W + 2, Cpad), jnp.bfloat16)],
        ),
        compiler_params=pltpu.CompilerParams(
            dimension_semantics=("parallel", "parallel"),
            vmem_limit_bytes=vmem_limit,
        ),
        cost_estimate=pl.CostEstimate(flops=flops, transcendentals=0,
                                      bytes_accessed=bytes_accessed),
    )(x_tiles,
      params["conv1"]["w"], params["conv1"]["b"],
      params["conv2"]["w"], params["conv2"]["b"],
      params["conv3"]["w"], params["conv3"]["b"])


# ----------------------------------------------------------------------------
# Parameters: Conv2d 3x3 pad=1 + BatchNorm2d(eval) + ReLU, BN folded into w/b.
# ----------------------------------------------------------------------------
def _make_convblock_params(key, in_ch, out_ch, cpad, eps=1e-5):
    kw, kb = jax.random.split(key)
    # PyTorch layout (Cout, Cin, 3, 3); deterministic small init.
    w = jax.random.normal(kw, (out_ch, in_ch, 3, 3), dtype=jnp.float32) * 0.1
    b = jax.random.normal(kb, (out_ch,), dtype=jnp.float32) * 0.1
    # BatchNorm2d eval-mode defaults: gamma=1, beta=0, running_mean=0, running_var=1.
    gamma = jnp.ones((out_ch,), jnp.float32)
    beta = jnp.zeros((out_ch,), jnp.float32)
    rmean = jnp.zeros((out_ch,), jnp.float32)
    rvar = jnp.ones((out_ch,), jnp.float32)
    scale = gamma / jnp.sqrt(rvar + eps)                         # (Cout,)

    pout = _round_up(out_ch, 128)
    # Fold BN scale into weights, conv bias + BN shift into one bias.
    w_fold = w * scale[:, None, None, None]                      # (Co, Ci, 3, 3)
    w_k = jnp.transpose(w_fold, (2, 3, 1, 0))                    # (ky, kx, Ci, Co)
    w_k = jnp.pad(w_k, ((0, 0), (0, 0), (0, cpad - in_ch), (0, pout - out_ch)))
    # (ky, kx, Cpad, Pout) -> (3, 3*Cpad, Pout); K laid out as [dx0|dx1|dx2]
    # channel slabs, matching the in-kernel lane-concat of the 3 dx windows.
    w_k = w_k.reshape(3, 3 * cpad, pout).astype(jnp.bfloat16)
    b_fold = (b - rmean) * scale + beta
    b_k = jnp.pad(b_fold, (0, pout - out_ch)).reshape(1, pout).astype(jnp.float32)
    return dict(w=w_k, b=b_k, w_torch=w, b_torch=b)


def make_dense_block_params(key, in_ch, out_ch, radio):
    radiof = in_ch // radio
    cpad = _round_up(max(in_ch + 2 * radiof, 1), 128)            # lane-dense concat buf
    k1, k2, k3 = jax.random.split(key, 3)
    params = dict(
        conv1=_make_convblock_params(k1, in_ch, radiof, cpad),
        conv2=_make_convblock_params(k2, in_ch + radiof, radiof, cpad),
        conv3=_make_convblock_params(k3, in_ch + 2 * radiof, out_ch, cpad),
    )
    dims = (in_ch, radiof, out_ch)                               # static ints
    return params, dims


@functools.partial(jax.jit, static_argnames=("dims", "row_tile"))
def dense_block_forward(params, x_nchw, *, dims, row_tile=64):
    C0, R, C3 = dims
    N, _, H, W = x_nchw.shape
    x = jnp.transpose(x_nchw, (0, 2, 3, 1)).astype(jnp.bfloat16)  # NCHW -> NHWC, bf16 once
    # Pick a row tile T that divides H (trace-time ints).
    T = min(int(row_tile), H)
    while H % T != 0:
        T -= 1
    nrt = H // T
    # Haloed row windows: 3 redundant rows per side per tile (one per chained conv);
    # rows outside the image are zeros (conv "same" padding).
    xp = jnp.pad(x, ((0, 0), (3, 3), (0, 0), (0, 0)))
    tiles = jnp.stack(
        [jax.lax.dynamic_slice_in_dim(xp, r * T, T + 6, axis=1) for r in range(nrt)],
        axis=1)                                                   # (N, nrt, T+6, W, C0)
    out = _dense_block_pallas(tiles, params, dims, H, W, T)       # (N, H, W, P3)
    return jnp.transpose(out[..., :C3], (0, 3, 1, 2))             # drop lane pad, to NCHW


# ----------------------------------------------------------------------------
# Pure-JAX reference (for correctness check)
# ----------------------------------------------------------------------------
def _convblock_ref(cp, x_nhwc, eps=1e-5):
    w_hwio = jnp.transpose(cp["w_torch"], (2, 3, 1, 0))
    out = jax.lax.conv_general_dilated(
        x_nhwc, w_hwio, window_strides=(1, 1), padding="SAME",
        dimension_numbers=("NHWC", "HWIO", "NHWC"))
    out = (out + cp["b_torch"]) / jnp.sqrt(1.0 + eps)            # eval-mode BN, defaults
    return jnp.maximum(out, 0.0)


def dense_block_ref(params, x_nchw):
    x = jnp.transpose(x_nchw, (0, 2, 3, 1)).astype(jnp.float32)
    x1 = _convblock_ref(params["conv1"], x)
    y = jnp.concatenate([x, x1], axis=-1)
    x2 = _convblock_ref(params["conv2"], y)
    y = jnp.concatenate([y, x2], axis=-1)
    x3 = _convblock_ref(params["conv3"], y)
    return jnp.transpose(x3, (0, 3, 1, 2))


if __name__ == "__main__":
    key = jax.random.PRNGKey(0)
    kx, kp = jax.random.split(key)

    N, IN_CH, OUT_CH, RADIO, H, W = 2, 4, 8, 2, 16, 16
    x = jax.random.normal(kx, (N, IN_CH, H, W), dtype=jnp.float32)

    params, dims = make_dense_block_params(kp, IN_CH, OUT_CH, RADIO)

    # row_tile=8 -> two row tiles per image, exercising the halo-tiled path.
    out = jax.block_until_ready(dense_block_forward(params, x, dims=dims, row_tile=8))
    ref = jax.block_until_ready(dense_block_ref(params, x))

    assert out.shape == (N, OUT_CH, H, W), out.shape
    max_err = float(jnp.max(jnp.abs(out - ref)))
    # Activations (x, x1, x2) and weights are bf16 in-kernel vs. the f32 reference.
    assert jnp.allclose(out, ref, rtol=5e-2, atol=5e-2), f"max abs err {max_err}"

    print("KERNEL_OK")
</pallas_src>

<mosaic_0001>
module attributes {stable_mosaic.version = 11 : i64} {
  func.func @_dense_block_kernel(%arg0: i32, %arg1: i32, %arg2: memref<1x1x14x16x4xbf16, #tpu.memory_space<vmem>>, %arg3: memref<3x384x128xbf16, #tpu.memory_space<vmem>>, %arg4: memref<1x128xf32, #tpu.memory_space<vmem>>, %arg5: memref<3x384x128xbf16, #tpu.memory_space<vmem>>, %arg6: memref<1x128xf32, #tpu.memory_space<vmem>>, %arg7: memref<3x384x128xbf16, #tpu.memory_space<vmem>>, %arg8: memref<1x128xf32, #tpu.memory_space<vmem>>, %arg9: memref<1x8x16x128xf32, #tpu.memory_space<vmem>>, %arg10: memref<14x18x128xbf16, #tpu.memory_space<vmem>>) attributes {dimension_semantics = [#tpu.dimension_semantics<parallel>, #tpu.dimension_semantics<parallel>], iteration_bounds = array<i64: 2, 2>, scalar_prefetch = 0 : i64, scratch_operands = 1 : i64, tpu.core_type = #tpu.core_type<tc>, window_params = [{transform_indices = @transform_0, window_bounds = array<i64: 1, 1, 14, 16, 4>}, {pipeline_mode = #tpu.pipeline_mode<synchronous>, transform_indices = @transform_1, window_bounds = array<i64: 3, 384, 128>}, {pipeline_mode = #tpu.pipeline_mode<synchronous>, transform_indices = @transform_2, window_bounds = array<i64: 1, 128>}, {pipeline_mode = #tpu.pipeline_mode<synchronous>, transform_indices = @transform_3, window_bounds = array<i64: 3, 384, 128>}, {pipeline_mode = #tpu.pipeline_mode<synchronous>, transform_indices = @transform_4, window_bounds = array<i64: 1, 128>}, {pipeline_mode = #tpu.pipeline_mode<synchronous>, transform_indices = @transform_5, window_bounds = array<i64: 3, 384, 128>}, {pipeline_mode = #tpu.pipeline_mode<synchronous>, transform_indices = @transform_6, window_bounds = array<i64: 1, 128>}, {transform_indices = @transform_7, window_bounds = array<i64: 1, 8, 16, 128>}]} {
    %c8_i32 = arith.constant 8 : i32
    %0 = arith.muli %arg1, %c8_i32 : i32
    %cst = arith.constant 0.000000e+00 : bf16
    %1 = vector.broadcast %cst : bf16 to vector<14x18x124xbf16>
    %c0 = arith.constant 0 : index
    %c0_0 = arith.constant 0 : index
    %c4 = arith.constant 4 : index
    %2 = vector.load %arg10[%c0, %c0_0, %c4] : memref<14x18x128xbf16, #tpu.memory_space<vmem>>, vector<14x18x124xbf16>
    tpu.vector_store %arg10[%c0, %c0_0, %c4], %1 {strides = array<i32>} : memref<14x18x128xbf16, #tpu.memory_space<vmem>>, vector<14x18x124xbf16>,
    %cst_1 = arith.constant 0.000000e+00 : bf16
    %3 = vector.broadcast %cst_1 : bf16 to vector<14x1x4xbf16>
    %c0_2 = arith.constant 0 : index
    %c0_3 = arith.constant 0 : index
    %c0_4 = arith.constant 0 : index
    %4 = vector.load %arg10[%c0_2, %c0_3, %c0_4] : memref<14x18x128xbf16, #tpu.memory_space<vmem>>, vector<14x1x4xbf16>
    tpu.vector_store %arg10[%c0_2, %c0_3, %c0_4], %3 {strides = array<i32>} : memref<14x18x128xbf16, #tpu.memory_space<vmem>>, vector<14x1x4xbf16>,
    %cst_5 = arith.constant 0.000000e+00 : bf16
    %5 = vector.broadcast %cst_5 : bf16 to vector<14x1x4xbf16>
    %c0_6 = arith.constant 0 : index
    %c17 = arith.constant 17 : index
    %c0_7 = arith.constant 0 : index
    %6 = vector.load %arg10[%c0_6, %c17, %c0_7] : memref<14x18x128xbf16, #tpu.memory_space<vmem>>, vector<14x1x4xbf16>
    tpu.vector_store %arg10[%c0_6, %c17, %c0_7], %5 {strides = array<i32>} : memref<14x18x128xbf16, #tpu.memory_space<vmem>>, vector<14x1x4xbf16>,
    %c0_8 = arith.constant 0 : index
    %c0_9 = arith.constant 0 : index
    %c0_10 = arith.constant 0 : index
    %c0_11 = arith.constant 0 : index
    %c0_12 = arith.constant 0 : index
    %7 = vector.load %arg2[%c0_8, %c0_9, %c0_10, %c0_11, %c0_12] : memref<1x1x14x16x4xbf16, #tpu.memory_space<vmem>>, vector<1x1x14x16x4xbf16>
    %8 = vector.shape_cast %7 : vector<1x1x14x16x4xbf16> to vector<14x16x4xbf16>
    %c0_13 = arith.constant 0 : index
    %c1 = arith.constant 1 : index
    %c0_14 = arith.constant 0 : index
    %9 = vector.load %arg10[%c0_13, %c1, %c0_14] : memref<14x18x128xbf16, #tpu.memory_space<vmem>>, vector<14x16x4xbf16>
    tpu.vector_store %arg10[%c0_13, %c1, %c0_14], %8 {strides = array<i32>} : memref<14x18x128xbf16, #tpu.memory_space<vmem>>, vector<14x16x4xbf16>,
    %cst_15 = arith.constant 0.000000e+00 : f32
    %10 = vector.broadcast %cst_15 : f32 to vector<192x128xf32>
    %c0_i32 = arith.constant 0 : i32
    %c0_i32_16 = arith.constant 0 : i32
    %11 = arith.addi %c0_i32_16, %c0_i32 : i32
    %12 = arith.index_cast %11 : i32 to index
    %c0_17 = arith.constant 0 : index
    %c0_18 = arith.constant 0 : index
    %13 = vector.load %arg10[%12, %c0_17, %c0_18] : memref<14x18x128xbf16, #tpu.memory_space<vmem>>, vector<12x18x128xbf16>
    %14 = vector.extract_strided_slice %13 {offsets = [0, 0, 0], sizes = [12, 16, 128], strides = [1, 1, 1]} : vector<12x18x128xbf16> to vector<12x16x128xbf16>
    %15 = vector.extract_strided_slice %13 {offsets = [0, 1, 0], sizes = [12, 16, 128], strides = [1, 1, 1]} : vector<12x18x128xbf16> to vector<12x16x128xbf16>
    %16 = vector.extract_strided_slice %13 {offsets = [0, 2, 0], sizes = [12, 16, 128], strides = [1, 1, 1]} : vector<12x18x128xbf16> to vector<12x16x128xbf16>
    %17 = tpu.concatenate %14, %15, %16 in 2 : vector<12x16x128xbf16>, vector<12x16x128xbf16>, vector<12x16x128xbf16> -> vector<12x16x384xbf16>
    %18 = vector.shape_cast %17 : vector<12x16x384xbf16> to vector<192x384xbf16>
    %19 = arith.index_cast %c0_i32 : i32 to index
    %c0_19 = arith.constant 0 : index
    %c0_20 = arith.constant 0 : index
    %20 = vector.load %arg3[%19, %c0_19, %c0_20] : memref<3x384x128xbf16, #tpu.memory_space<vmem>>, vector<1x384x128xbf16>
    %21 = vector.shape_cast %20 : vector<1x384x128xbf16> to vector<384x128xbf16>
    %cst_21 = arith.constant dense<0.000000e+00> : vector<192x128xf32>
    %22 = tpu.matmul %18, %21, %cst_21 {dimension_numbers = #tpu.dot_dimension_numbers<[1], [0], [0], [1], [0, 0, 1, 1], [], []>} : vector<192x384xbf16>, vector<384x128xbf16>, vector<192x128xf32> -> vector<192x128xf32>
    %23 = arith.addf %10, %22 : vector<192x128xf32>
    %c1_i32 = arith.constant 1 : i32
    %c0_i32_22 = arith.constant 0 : i32
    %24 = arith.addi %c0_i32_22, %c1_i32 : i32
    %25 = arith.index_cast %24 : i32 to index
    %c0_23 = arith.constant 0 : index
    %c0_24 = arith.constant 0 : index
    %26 = vector.load %arg10[%25, %c0_23, %c0_24] : memref<14x18x128xbf16, #tpu.memory_space<vmem>>, vector<12x18x128xbf16>
    %27 = vector.extract_strided_slice %26 {offsets = [0, 0, 0], sizes = [12, 16, 128], strides = [1, 1, 1]} : vector<12x18x128xbf16> to vector<12x16x128xbf16>
    %28 = vector.extract_strided_slice %26 {offsets = [0, 1, 0], sizes = [12, 16, 128], strides = [1, 1, 1]} : vector<12x18x128xbf16> to vector<12x16x128xbf16>
    %29 = vector.extract_strided_slice %26 {offsets = [0, 2, 0], sizes = [12, 16, 128], strides = [1, 1, 1]} : vector<12x18x128xbf16> to vector<12x16x128xbf16>
    %30 = tpu.concatenate %27, %28, %29 in 2 : vector<12x16x128xbf16>, vector<12x16x128xbf16>, vector<12x16x128xbf16> -> vector<12x16x384xbf16>
    %31 = vector.shape_cast %30 : vector<12x16x384xbf16> to vector<192x384xbf16>
    %32 = arith.index_cast %c1_i32 : i32 to index
    %c0_25 = arith.constant 0 : index
    %c0_26 = arith.constant 0 : index
    %33 = vector.load %arg3[%32, %c0_25, %c0_26] : memref<3x384x128xbf16, #tpu.memory_space<vmem>>, vector<1x384x128xbf16>
    %34 = vector.shape_cast %33 : vector<1x384x128xbf16> to vector<384x128xbf16>
    %cst_27 = arith.constant dense<0.000000e+00> : vector<192x128xf32>
    %35 = tpu.matmul %31, %34, %cst_27 {dimension_numbers = #tpu.dot_dimension_numbers<[1], [0], [0], [1], [0, 0, 1, 1], [], []>} : vector<192x384xbf16>, vector<384x128xbf16>, vector<192x128xf32> -> vector<192x128xf32>
    %36 = arith.addf %23, %35 : vector<192x128xf32>
    %c2_i32 = arith.constant 2 : i32
    %c0_i32_28 = arith.constant 0 : i32
    %37 = arith.addi %c0_i32_28, %c2_i32 : i32
    %38 = arith.index_cast %37 : i32 to index
    %c0_29 = arith.constant 0 : index
    %c0_30 = arith.constant 0 : index
    %39 = vector.load %arg10[%38, %c0_29, %c0_30] : memref<14x18x128xbf16, #tpu.memory_space<vmem>>, vector<12x18x128xbf16>
    %40 = vector.extract_strided_slice %39 {offsets = [0, 0, 0], sizes = [12, 16, 128], strides = [1, 1, 1]} : vector<12x18x128xbf16> to vector<12x16x128xbf16>
    %41 = vector.extract_strided_slice %39 {offsets = [0, 1, 0], sizes = [12, 16, 128], strides = [1, 1, 1]} : vector<12x18x128xbf16> to vector<12x16x128xbf16>
    %42 = vector.extract_strided_slice %39 {offsets = [0, 2, 0], sizes = [12, 16, 128], strides = [1, 1, 1]} : vector<12x18x128xbf16> to vector<12x16x128xbf16>
    %43 = tpu.concatenate %40, %41, %42 in 2 : vector<12x16x128xbf16>, vector<12x16x128xbf16>, vector<12x16x128xbf16> -> vector<12x16x384xbf16>
    %44 = vector.shape_cast %43 : vector<12x16x384xbf16> to vector<192x384xbf16>
    %45 = arith.index_cast %c2_i32 : i32 to index
    %c0_31 = arith.constant 0 : index
    %c0_32 = arith.constant 0 : index
    %46 = vector.load %arg3[%45, %c0_31, %c0_32] : memref<3x384x128xbf16, #tpu.memory_space<vmem>>, vector<1x384x128xbf16>
    %47 = vector.shape_cast %46 : vector<1x384x128xbf16> to vector<384x128xbf16>
    %cst_33 = arith.constant dense<0.000000e+00> : vector<192x128xf32>
    %48 = tpu.matmul %44, %47, %cst_33 {dimension_numbers = #tpu.dot_dimension_numbers<[1], [0], [0], [1], [0, 0, 1, 1], [], []>} : vector<192x384xbf16>, vector<384x128xbf16>, vector<192x128xf32> -> vector<192x128xf32>
    %49 = arith.addf %36, %48 : vector<192x128xf32>
    %c3_i32 = arith.constant 3 : i32
    %c0_34 = arith.constant 0 : index
    %c0_35 = arith.constant 0 : index
    %50 = vector.load %arg4[%c0_34, %c0_35] : memref<1x128xf32, #tpu.memory_space<vmem>>, vector<1x128xf32>
    %51 = vector.broadcast %50 : vector<1x128xf32> to vector<192x128xf32>
    %52 = arith.addf %49, %51 : vector<192x128xf32>
    %cst_36 = arith.constant 0.000000e+00 : f32
    %53 = vector.broadcast %cst_36 : f32 to vector<192x128xf32>
    %54 = arith.maximumf %52, %53 : vector<192x128xf32>
    %55 = vector.shape_cast %54 : vector<192x128xf32> to vector<12x16x128xf32>
    %56 = vector.extract_strided_slice %55 {offsets = [0, 0, 0], sizes = [12, 16, 2], strides = [1, 1, 1]} : vector<12x16x128xf32> to vector<12x16x2xf32>
    %c2_i32_37 = arith.constant 2 : i32
    %57 = arith.subi %0, %c2_i32_37 : i32
    %58 = tpu.iota {dimensions = array<i32: 0>} : vector<12x1x1xi32>
    %59 = vector.broadcast %57 : i32 to vector<12x1x1xi32>
    %60 = arith.addi %59, %58 : vector<12x1x1xi32>
    %c0_i32_38 = arith.constant 0 : i32
    %61 = vector.broadcast %c0_i32_38 : i32 to vector<12x1x1xi32>
    %62 = arith.cmpi sge, %60, %61 : vector<12x1x1xi32>
    %c16_i32 = arith.constant 16 : i32
    %63 = vector.broadcast %c16_i32 : i32 to vector<12x1x1xi32>
    %64 = arith.cmpi slt, %60, %63 : vector<12x1x1xi32>
    %65 = arith.andi %62, %64 : vector<12x1x1xi1>
    %cst_39 = arith.constant 0.000000e+00 : f32
    %66 = vector.shape_cast %65 : vector<12x1x1xi1> to vector<12x1x1xi1>
    %67 = vector.broadcast %66 : vector<12x1x1xi1> to vector<12x16x2xi1>
    %68 = vector.broadcast %cst_39 : f32 to vector<12x16x2xf32>
    %69 = arith.select %67, %56, %68 : vector<12x16x2xi1>, vector<12x16x2xf32>
    %70 = arith.truncf %69 : vector<12x16x2xf32> to vector<12x16x2xbf16>
    %c1_40 = arith.constant 1 : index
    %c1_41 = arith.constant 1 : index
    %c4_42 = arith.constant 4 : index
    %71 = vector.load %arg10[%c1_40, %c1_41, %c4_42] : memref<14x18x128xbf16, #tpu.memory_space<vmem>>, vector<12x16x2xbf16>
    tpu.vector_store %arg10[%c1_40, %c1_41, %c4_42], %70 {strides = array<i32>} : memref<14x18x128xbf16, #tpu.memory_space<vmem>>, vector<12x16x2xbf16>,
    %cst_43 = arith.constant 0.000000e+00 : f32
    %72 = vector.broadcast %cst_43 : f32 to vector<160x128xf32>
    %c0_i32_44 = arith.constant 0 : i32
    %c1_i32_45 = arith.constant 1 : i32
    %73 = arith.addi %c1_i32_45, %c0_i32_44 : i32
    %74 = arith.index_cast %73 : i32 to index
    %c0_46 = arith.constant 0 : index
    %c0_47 = arith.constant 0 : index
    %75 = vector.load %arg10[%74, %c0_46, %c0_47] : memref<14x18x128xbf16, #tpu.memory_space<vmem>>, vector<10x18x128xbf16>
    %76 = vector.extract_strided_slice %75 {offsets = [0, 0, 0], sizes = [10, 16, 128], strides = [1, 1, 1]} : vector<10x18x128xbf16> to vector<10x16x128xbf16>
    %77 = vector.extract_strided_slice %75 {offsets = [0, 1, 0], sizes = [10, 16, 128], strides = [1, 1, 1]} : vector<10x18x128xbf16> to vector<10x16x128xbf16>
    %78 = vector.extract_strided_slice %75 {offsets = [0, 2, 0], sizes = [10, 16, 128], strides = [1, 1, 1]} : vector<10x18x128xbf16> to vector<10x16x128xbf16>
    %79 = tpu.concatenate %76, %77, %78 in 2 : vector<10x16x128xbf16>, vector<10x16x128xbf16>, vector<10x16x128xbf16> -> vector<10x16x384xbf16>
    %80 = vector.shape_cast %79 : vector<10x16x384xbf16> to vector<160x384xbf16>
    %81 = arith.index_cast %c0_i32_44 : i32 to index
    %c0_48 = arith.constant 0 : index
    %c0_49 = arith.constant 0 : index
    %82 = vector.load %arg5[%81, %c0_48, %c0_49] : memref<3x384x128xbf16, #tpu.memory_space<vmem>>, vector<1x384x128xbf16>
    %83 = vector.shape_cast %82 : vector<1x384x128xbf16> to vector<384x128xbf16>
    %cst_50 = arith.constant dense<0.000000e+00> : vector<160x128xf32>
    %84 = tpu.matmul %80, %83, %cst_50 {dimension_numbers = #tpu.dot_dimension_numbers<[1], [0], [0], [1], [0, 0, 1, 1], [], []>} : vector<160x384xbf16>, vector<384x128xbf16>, vector<160x128xf32> -> vector<160x128xf32>
    %85 = arith.addf %72, %84 : vector<160x128xf32>
    %c1_i32_51 = arith.constant 1 : i32
    %c1_i32_52 = arith.constant 1 : i32
    %86 = arith.addi %c1_i32_52, %c1_i32_51 : i32
    %87 = arith.index_cast %86 : i32 to index
    %c0_53 = arith.constant 0 : index
    %c0_54 = arith.constant 0 : index
    %88 = vector.load %arg10[%87, %c0_53, %c0_54] : memref<14x18x128xbf16, #tpu.memory_space<vmem>>, vector<10x18x128xbf16>
    %89 = vector.extract_strided_slice %88 {offsets = [0, 0, 0], sizes = [10, 16, 128], strides = [1, 1, 1]} : vector<10x18x128xbf16> to vector<10x16x128xbf16>
    %90 = vector.extract_strided_slice %88 {offsets = [0, 1, 0], sizes = [10, 16, 128], strides = [1, 1, 1]} : vector<10x18x128xbf16> to vector<10x16x128xbf16>
    %91 = vector.extract_strided_slice %88 {offsets = [0, 2, 0], sizes = [10, 16, 128], strides = [1, 1, 1]} : vector<10x18x128xbf16> to vector<10x16x128xbf16>
    %92 = tpu.concatenate %89, %90, %91 in 2 : vector<10x16x128xbf16>, vector<10x16x128xbf16>, vector<10x16x128xbf16> -> vector<10x16x384xbf16>
    %93 = vector.shape_cast %92 : vector<10x16x384xbf16> to vector<160x384xbf16>
    %94 = arith.index_cast %c1_i32_51 : i32 to index
    %c0_55 = arith.constant 0 : index
    %c0_56 = arith.constant 0 : index
    %95 = vector.load %arg5[%94, %c0_55, %c0_56] : memref<3x384x128xbf16, #tpu.memory_space<vmem>>, vector<1x384x128xbf16>
    %96 = vector.shape_cast %95 : vector<1x384x128xbf16> to vector<384x128xbf16>
    %cst_57 = arith.constant dense<0.000000e+00> : vector<160x128xf32>
    %97 = tpu.matmul %93, %96, %cst_57 {dimension_numbers = #tpu.dot_dimension_numbers<[1], [0], [0], [1], [0, 0, 1, 1], [], []>} : vector<160x384xbf16>, vector<384x128xbf16>, vector<160x128xf32> -> vector<160x128xf32>
    %98 = arith.addf %85, %97 : vector<160x128xf32>
    %c2_i32_58 = arith.constant 2 : i32
    %c1_i32_59 = arith.constant 1 : i32
    %99 = arith.addi %c1_i32_59, %c2_i32_58 : i32
    %100 = arith.index_cast %99 : i32 to index
    %c0_60 = arith.constant 0 : index
    %c0_61 = arith.constant 0 : index
    %101 = vector.load %arg10[%100, %c0_60, %c0_61] : memref<14x18x128xbf16, #tpu.memory_space<vmem>>, vector<10x18x128xbf16>
    %102 = vector.extract_strided_slice %101 {offsets = [0, 0, 0], sizes = [10, 16, 128], strides = [1, 1, 1]} : vector<10x18x128xbf16> to vector<10x16x128xbf16>
    %103 = vector.extract_strided_slice %101 {offsets = [0, 1, 0], sizes = [10, 16, 128], strides = [1, 1, 1]} : vector<10x18x128xbf16> to vector<10x16x128xbf16>
    %104 = vector.extract_strided_slice %101 {offsets = [0, 2, 0], sizes = [10, 16, 128], strides = [1, 1, 1]} : vector<10x18x128xbf16> to vector<10x16x128xbf16>
    %105 = tpu.concatenate %102, %103, %104 in 2 : vector<10x16x128xbf16>, vector<10x16x128xbf16>, vector<10x16x128xbf16> -> vector<10x16x384xbf16>
    %106 = vector.shape_cast %105 : vector<10x16x384xbf16> to vector<160x384xbf16>
    %107 = arith.index_cast %c2_i32_58 : i32 to index
    %c0_62 = arith.constant 0 : index
    %c0_63 = arith.constant 0 : index
    %108 = vector.load %arg5[%107, %c0_62, %c0_63] : memref<3x384x128xbf16, #tpu.memory_space<vmem>>, vector<1x384x128xbf16>
    %109 = vector.shape_cast %108 : vector<1x384x128xbf16> to vector<384x128xbf16>
    %cst_64 = arith.constant dense<0.000000e+00> : vector<160x128xf32>
    %110 = tpu.matmul %106, %109, %cst_64 {dimension_numbers = #tpu.dot_dimension_numbers<[1], [0], [0], [1], [0, 0, 1, 1], [], []>} : vector<160x384xbf16>, vector<384x128xbf16>, vector<160x128xf32> -> vector<160x128xf32>
    %111 = arith.addf %98, %110 : vector<160x128xf32>
    %c3_i32_65 = arith.constant 3 : i32
    %c0_66 = arith.constant 0 : index
    %c0_67 = arith.constant 0 : index
    %112 = vector.load %arg6[%c0_66, %c0_67] : memref<1x128xf32, #tpu.memory_space<vmem>>, vector<1x128xf32>
    %113 = vector.broadcast %112 : vector<1x128xf32> to vector<160x128xf32>
    %114 = arith.addf %111, %113 : vector<160x128xf32>
    %cst_68 = arith.constant 0.000000e+00 : f32
    %115 = vector.broadcast %cst_68 : f32 to vector<160x128xf32>
    %116 = arith.maximumf %114, %115 : vector<160x128xf32>
    %117 = vector.shape_cast %116 : vector<160x128xf32> to vector<10x16x128xf32>
    %118 = vector.extract_strided_slice %117 {offsets = [0, 0, 0], sizes = [10, 16, 2], strides = [1, 1, 1]} : vector<10x16x128xf32> to vector<10x16x2xf32>
    %c1_i32_69 = arith.constant 1 : i32
    %119 = arith.subi %0, %c1_i32_69 : i32
    %120 = tpu.iota {dimensions = array<i32: 0>} : vector<10x1x1xi32>
    %121 = vector.broadcast %119 : i32 to vector<10x1x1xi32>
    %122 = arith.addi %121, %120 : vector<10x1x1xi32>
    %c0_i32_70 = arith.constant 0 : i32
    %123 = vector.broadcast %c0_i32_70 : i32 to vector<10x1x1xi32>
    %124 = arith.cmpi sge, %122, %123 : vector<10x1x1xi32>
    %c16_i32_71 = arith.constant 16 : i32
    %125 = vector.broadcast %c16_i32_71 : i32 to vector<10x1x1xi32>
    %126 = arith.cmpi slt, %122, %125 : vector<10x1x1xi32>
    %127 = arith.andi %124, %126 : vector<10x1x1xi1>
    %cst_72 = arith.constant 0.000000e+00 : f32
    %128 = vector.shape_cast %127 : vector<10x1x1xi1> to vector<10x1x1xi1>
    %129 = vector.broadcast %128 : vector<10x1x1xi1> to vector<10x16x2xi1>
    %130 = vector.broadcast %cst_72 : f32 to vector<10x16x2xf32>
    %131 = arith.select %129, %118, %130 : vector<10x16x2xi1>, vector<10x16x2xf32>
    %132 = arith.truncf %131 : vector<10x16x2xf32> to vector<10x16x2xbf16>
    %c2 = arith.constant 2 : index
    %c1_73 = arith.constant 1 : index
    %c6 = arith.constant 6 : index
    %133 = vector.load %arg10[%c2, %c1_73, %c6] : memref<14x18x128xbf16, #tpu.memory_space<vmem>>, vector<10x16x2xbf16>
    tpu.vector_store %arg10[%c2, %c1_73, %c6], %132 {strides = array<i32>} : memref<14x18x128xbf16, #tpu.memory_space<vmem>>, vector<10x16x2xbf16>,
    %cst_74 = arith.constant 0.000000e+00 : f32
    %134 = vector.broadcast %cst_74 : f32 to vector<128x128xf32>
    %c0_i32_75 = arith.constant 0 : i32
    %c2_i32_76 = arith.constant 2 : i32
    %135 = arith.addi %c2_i32_76, %c0_i32_75 : i32
    %136 = arith.index_cast %135 : i32 to index
    %c0_77 = arith.constant 0 : index
    %c0_78 = arith.constant 0 : index
    %137 = vector.load %arg10[%136, %c0_77, %c0_78] : memref<14x18x128xbf16, #tpu.memory_space<vmem>>, vector<8x18x128xbf16>
    %138 = vector.extract_strided_slice %137 {offsets = [0, 0, 0], sizes = [8, 16, 128], strides = [1, 1, 1]} : vector<8x18x128xbf16> to vector<8x16x128xbf16>
    %139 = vector.extract_strided_slice %137 {offsets = [0, 1, 0], sizes = [8, 16, 128], strides = [1, 1, 1]} : vector<8x18x128xbf16> to vector<8x16x128xbf16>
    %140 = vector.extract_strided_slice %137 {offsets = [0, 2, 0], sizes = [8, 16, 128], strides = [1, 1, 1]} : vector<8x18x128xbf16> to vector<8x16x128xbf16>
    %141 = tpu.concatenate %138, %139, %140 in 2 : vector<8x16x128xbf16>, vector<8x16x128xbf16>, vector<8x16x128xbf16> -> vector<8x16x384xbf16>
    %142 = vector.shape_cast %141 : vector<8x16x384xbf16> to vector<128x384xbf16>
    %143 = arith.index_cast %c0_i32_75 : i32 to index
    %c0_79 = arith.constant 0 : index
    %c0_80 = arith.constant 0 : index
    %144 = vector.load %arg7[%143, %c0_79, %c0_80] : memref<3x384x128xbf16, #tpu.memory_space<vmem>>, vector<1x384x128xbf16>
    %145 = vector.shape_cast %144 : vector<1x384x128xbf16> to vector<384x128xbf16>
    %cst_81 = arith.constant dense<0.000000e+00> : vector<128x128xf32>
    %146 = tpu.matmul %142, %145, %cst_81 {dimension_numbers = #tpu.dot_dimension_numbers<[1], [0], [0], [1], [0, 0, 1, 1], [], []>} : vector<128x384xbf16>, vector<384x128xbf16>, vector<128x128xf32> -> vector<128x128xf32>
    %147 = arith.addf %134, %146 : vector<128x128xf32>
    %c1_i32_82 = arith.constant 1 : i32
    %c2_i32_83 = arith.constant 2 : i32
    %148 = arith.addi %c2_i32_83, %c1_i32_82 : i32
    %149 = arith.index_cast %148 : i32 to index
    %c0_84 = arith.constant 0 : index
    %c0_85 = arith.constant 0 : index
    %150 = vector.load %arg10[%149, %c0_84, %c0_85] : memref<14x18x128xbf16, #tpu.memory_space<vmem>>, vector<8x18x128xbf16>
    %151 = vector.extract_strided_slice %150 {offsets = [0, 0, 0], sizes = [8, 16, 128], strides = [1, 1, 1]} : vector<8x18x128xbf16> to vector<8x16x128xbf16>
    %152 = vector.extract_strided_slice %150 {offsets = [0, 1, 0], sizes = [8, 16, 128], strides = [1, 1, 1]} : vector<8x18x128xbf16> to vector<8x16x128xbf16>
    %153 = vector.extract_strided_slice %150 {offsets = [0, 2, 0], sizes = [8, 16, 128], strides = [1, 1, 1]} : vector<8x18x128xbf16> to vector<8x16x128xbf16>
    %154 = tpu.concatenate %151, %152, %153 in 2 : vector<8x16x128xbf16>, vector<8x16x128xbf16>, vector<8x16x128xbf16> -> vector<8x16x384xbf16>
    %155 = vector.shape_cast %154 : vector<8x16x384xbf16> to vector<128x384xbf16>
    %156 = arith.index_cast %c1_i32_82 : i32 to index
    %c0_86 = arith.constant 0 : index
    %c0_87 = arith.constant 0 : index
    %157 = vector.load %arg7[%156, %c0_86, %c0_87] : memref<3x384x128xbf16, #tpu.memory_space<vmem>>, vector<1x384x128xbf16>
    %158 = vector.shape_cast %157 : vector<1x384x128xbf16> to vector<384x128xbf16>
    %cst_88 = arith.constant dense<0.000000e+00> : vector<128x128xf32>
    %159 = tpu.matmul %155, %158, %cst_88 {dimension_numbers = #tpu.dot_dimension_numbers<[1], [0], [0], [1], [0, 0, 1, 1], [], []>} : vector<128x384xbf16>, vector<384x128xbf16>, vector<128x128xf32> -> vector<128x128xf32>
    %160 = arith.addf %147, %159 : vector<128x128xf32>
    %c2_i32_89 = arith.constant 2 : i32
    %c2_i32_90 = arith.constant 2 : i32
    %161 = arith.addi %c2_i32_90, %c2_i32_89 : i32
    %162 = arith.index_cast %161 : i32 to index
    %c0_91 = arith.constant 0 : index
    %c0_92 = arith.constant 0 : index
    %163 = vector.load %arg10[%162, %c0_91, %c0_92] : memref<14x18x128xbf16, #tpu.memory_space<vmem>>, vector<8x18x128xbf16>
    %164 = vector.extract_strided_slice %163 {offsets = [0, 0, 0], sizes = [8, 16, 128], strides = [1, 1, 1]} : vector<8x18x128xbf16> to vector<8x16x128xbf16>
    %165 = vector.extract_strided_slice %163 {offsets = [0, 1, 0], sizes = [8, 16, 128], strides = [1, 1, 1]} : vector<8x18x128xbf16> to vector<8x16x128xbf16>
    %166 = vector.extract_strided_slice %163 {offsets = [0, 2, 0], sizes = [8, 16, 128], strides = [1, 1, 1]} : vector<8x18x128xbf16> to vector<8x16x128xbf16>
    %167 = tpu.concatenate %164, %165, %166 in 2 : vector<8x16x128xbf16>, vector<8x16x128xbf16>, vector<8x16x128xbf16> -> vector<8x16x384xbf16>
    %168 = vector.shape_cast %167 : vector<8x16x384xbf16> to vector<128x384xbf16>
    %169 = arith.index_cast %c2_i32_89 : i32 to index
    %c0_93 = arith.constant 0 : index
    %c0_94 = arith.constant 0 : index
    %170 = vector.load %arg7[%169, %c0_93, %c0_94] : memref<3x384x128xbf16, #tpu.memory_space<vmem>>, vector<1x384x128xbf16>
    %171 = vector.shape_cast %170 : vector<1x384x128xbf16> to vector<384x128xbf16>
    %cst_95 = arith.constant dense<0.000000e+00> : vector<128x128xf32>
    %172 = tpu.matmul %168, %171, %cst_95 {dimension_numbers = #tpu.dot_dimension_numbers<[1], [0], [0], [1], [0, 0, 1, 1], [], []>} : vector<128x384xbf16>, vector<384x128xbf16>, vector<128x128xf32> -> vector<128x128xf32>
    %173 = arith.addf %160, %172 : vector<128x128xf32>
    %c3_i32_96 = arith.constant 3 : i32
    %c0_97 = arith.constant 0 : index
    %c0_98 = arith.constant 0 : index
    %174 = vector.load %arg8[%c0_97, %c0_98] : memref<1x128xf32, #tpu.memory_space<vmem>>, vector<1x128xf32>
    %175 = vector.broadcast %174 : vector<1x128xf32> to vector<128x128xf32>
    %176 = arith.addf %173, %175 : vector<128x128xf32>
    %cst_99 = arith.constant 0.000000e+00 : f32
    %177 = vector.broadcast %cst_99 : f32 to vector<128x128xf32>
    %178 = arith.maximumf %176, %177 : vector<128x128xf32>
    %179 = vector.shape_cast %178 : vector<128x128xf32> to vector<8x16x128xf32>
    %c0_100 = arith.constant 0 : index
    %c0_101 = arith.constant 0 : index
    %c0_102 = arith.constant 0 : index
    %c0_103 = arith.constant 0 : index
    %180 = vector.load %arg9[%c0_100, %c0_101, %c0_102, %c0_103] : memref<1x8x16x128xf32, #tpu.memory_space<vmem>>, vector<1x8x16x128xf32>
    %181 = vector.shape_cast %180 : vector<1x8x16x128xf32> to vector<8x16x128xf32>
    %182 = vector.shape_cast %179 : vector<8x16x128xf32> to vector<1x8x16x128xf32>
    tpu.vector_store %arg9[%c0_100, %c0_101, %c0_102, %c0_103], %182 {strides = array<i32>} : memref<1x8x16x128xf32, #tpu.memory_space<vmem>>, vector<1x8x16x128xf32>,
    return
  }
  func.func @transform_0(%arg0: i32, %arg1: i32) -> (i32, i32, i32, i32, i32) {
    %c0_i32 = arith.constant 0 : i32
    %c0_i32_0 = arith.constant 0 : i32
    %c0_i32_1 = arith.constant 0 : i32
    %c0_i32_2 = arith.constant 0 : i32
    return %arg0, %arg1, %c0_i32, %c0_i32_0, %c0_i32_1 : i32, i32, i32, i32, i32
  }
  func.func @transform_1(%arg0: i32, %arg1: i32) -> (i32, i32, i32) {
    %c0_i32 = arith.constant 0 : i32
    %c0_i32_0 = arith.constant 0 : i32
    %c0_i32_1 = arith.constant 0 : i32
    %c0_i32_2 = arith.constant 0 : i32
    return %c0_i32, %c0_i32_0, %c0_i32_1 : i32, i32, i32
  }
  func.func @transform_2(%arg0: i32, %arg1: i32) -> (i32, i32) {
    %c0_i32 = arith.constant 0 : i32
    %c0_i32_0 = arith.constant 0 : i32
    %c0_i32_1 = arith.constant 0 : i32
    return %c0_i32, %c0_i32_0 : i32, i32
  }
  func.func @transform_3(%arg0: i32, %arg1: i32) -> (i32, i32, i32) {
    %c0_i32 = arith.constant 0 : i32
    %c0_i32_0 = arith.constant 0 : i32
    %c0_i32_1 = arith.constant 0 : i32
    %c0_i32_2 = arith.constant 0 : i32
    return %c0_i32, %c0_i32_0, %c0_i32_1 : i32, i32, i32
  }
  func.func @transform_4(%arg0: i32, %arg1: i32) -> (i32, i32) {
    %c0_i32 = arith.constant 0 : i32
    %c0_i32_0 = arith.constant 0 : i32
    %c0_i32_1 = arith.constant 0 : i32
    return %c0_i32, %c0_i32_0 : i32, i32
  }
  func.func @transform_5(%arg0: i32, %arg1: i32) -> (i32, i32, i32) {
    %c0_i32 = arith.constant 0 : i32
    %c0_i32_0 = arith.constant 0 : i32
    %c0_i32_1 = arith.constant 0 : i32
    %c0_i32_2 = arith.constant 0 : i32
    return %c0_i32, %c0_i32_0, %c0_i32_1 : i32, i32, i32
  }
  func.func @transform_6(%arg0: i32, %arg1: i32) -> (i32, i32) {
    %c0_i32 = arith.constant 0 : i32
    %c0_i32_0 = arith.constant 0 : i32
    %c0_i32_1 = arith.constant 0 : i32
    return %c0_i32, %c0_i32_0 : i32, i32
  }
  func.func @transform_7(%arg0: i32, %arg1: i32) -> (i32, i32, i32, i32) {
    %c0_i32 = arith.constant 0 : i32
    %c0_i32_0 = arith.constant 0 : i32
    %c0_i32_1 = arith.constant 0 : i32
    return %arg0, %arg1, %c0_i32, %c0_i32_0 : i32, i32, i32, i32
  }
}

</mosaic_0001>

<llo_original>
// kernel: dense_block_forward.1
$region0: #{dense_block_forward.1}
  #allocation0 [shape = 'u32[]', space=smem, size = 0x4, offset = 0x4, fixed_abs, tag = 'smem constant byte address 0x4 - core index']
  #allocation1 [shape = 'u32[144,128]{1,0:T(1,128)}', space=vmem, size = 0x12000, scoped, tag = 'internal scratch']
  #allocation2 [shape = 'bf16[14,18,128]{2,1,0:T(8,128)(2,1)}', space=vmem, size = 0x15000, scoped, tag = 'scratch operand']
  %s0 = inlined_call_operand.vmem [shape: bf16[2,2,14,16,4], index: 0, kind: input, shape index: {}]
  %s1 = inlined_call_operand.vmem [shape: bf16[3,384,128], index: 1, kind: input, shape index: {}]
  %s2 = inlined_call_operand.vmem [shape: f32[1,128], index: 2, kind: input, shape index: {}]
  %s3 = inlined_call_operand.vmem [shape: bf16[3,384,128], index: 3, kind: input, shape index: {}]
  %s4 = inlined_call_operand.vmem [shape: f32[1,128], index: 4, kind: input, shape index: {}]
  %s5 = inlined_call_operand.vmem [shape: bf16[3,384,128], index: 5, kind: input, shape index: {}]
  %s6 = inlined_call_operand.vmem [shape: f32[1,128], index: 6, kind: input, shape index: {}]
  %s7 = inlined_call_operand.vmem [shape: f32[2,16,16,128], index: 7, kind: output, shape index: {}]
  %s8 = sld [smem:[#allocation0]]
  $region61: #{dense_block_forward.1} parent=0
    _
  %s10 = ssub.s32 1, %s8
  %s11 = scalar_select 0, %s10, %s8
  loop: start=0, step=1, limit=6
  $region2: #{dense_block_forward.1} parent=0 // loop_pre_header
    _
  $region3: #{dense_block_forward.1} parent=0 // loop_header
    %s13 = sphi 0, %s17
    %p14 = scmp.ge.s32.totalorder %s13, 6
    %s20 = sphi 0, %s32
    %s21 = sphi 0, %s28
    %s22 = sphi 0, %s20
    %s23 = sphi 0, %s21
    %s24 = sphi 0, %s22
    %s25 = sphi 0, %s23
    %s37 = sphi 0, %s39
    %s40 = sphi 0, %s37
    %s41 = sphi 0, %s40
    %s57 = sphi 0, %s41
    %s61 = sphi 0, %s61
    %s63 = sphi 0, %s61
    %s64 = sphi 0, %s63
    %s78 = sphi 0, %s64
    %s82 = sphi 0, %s82
    %s84 = sphi 0, %s82
    %s85 = sphi 0, %s84
    %s99 = sphi 0, %s85
    %s103 = sphi 0, %s103
    %s105 = sphi 0, %s103
    %s106 = sphi 0, %s105
    %s120 = sphi 0, %s106
    %s124 = sphi 0, %s124
    %s126 = sphi 0, %s124
    %s127 = sphi 0, %s126
    %s141 = sphi 0, %s127
    %s145 = sphi 0, %s145
    %s147 = sphi 0, %s145
    %s148 = sphi 0, %s147
    %s162 = sphi 0, %s148
    %s166 = sphi 0, %s166
    %s168 = sphi 0, %s166
    %s169 = sphi 0, %s168
    %s183 = sphi 0, %s169
    %s191 = sphi 0, %s193
    %s194 = sphi 0, %s191
    %s195 = sphi 0, %s194
    %s211 = sphi 0, %s195
  $region4: #{dense_block_forward.1} parent=0 // loop_header_branch
    %16 = sbr.rel (%p14) target = $region8
  $region5: #{dense_block_forward.1} parent=0 // loop_body
    %s18 = ssub.s32 %s13, 1
    %s19 = ssub.s32 %s13, 2
    %s26 = sadd.s32 1, %s21
    %p27 = scmp.ge.s32.totalorder %s26, 2
    %s28 = scalar_select %p27, 0, %s26
    %s29 = sadd.s32 1, %s20
    %s30 = scalar_select %p27, %s29, %s20
    %p31 = scmp.ge.s32.totalorder %s30, 2
    %s32 = scalar_select %p31, 0, %s30
    %s33 = ssub.s32 %s20, %s32
    %s34 = ssub.s32 %s21, %s28
    %s35 = sor.u32 %s33, %s34
    %p36 = scmp.eq.s32.totalorder %s35, 0
    %s38 = sadd.s32 %s37, 1
    %s39 = scalar_select %p36, %s37, %s38
    %p42 = pneg %p36
    %p43 = scmp.eq.s32.totalorder %s13, 3
    %p44 = por %p42, %p43
    %p45 = scmp.ne.s32.totalorder %s37, %s40
    %p46 = scmp.eq.s32.totalorder %s13, 0
    %p47 = por %p45, %p46
    %p48 = scmp.ne.s32.totalorder %s37, %s40
    %p49 = scmp.eq.s32.totalorder %s18, 3
    %p50 = por %p48, %p49
    %p51 = scmp.ne.s32.totalorder %s40, %s41
    %p52 = scmp.eq.s32.totalorder %s18, 0
    %p53 = por %p51, %p52
    %p54 = scmp.ne.s32.totalorder %s40, %s41
    %p55 = scmp.eq.s32.totalorder %s19, 3
    %p56 = por %p54, %p55
    %p58 = scmp.ne.s32.totalorder %s41, %s57
    %p59 = scmp.eq.s32.totalorder %s19, 0
    %p60 = por %p58, %p59
    %s62 = sadd.s32 %s61, 1
    %p65 = scmp.eq.s32.totalorder %s13, 3
    %p66 = scmp.ne.s32.totalorder %s61, %s63
    %p67 = scmp.eq.s32.totalorder %s13, 0
    %p68 = por %p66, %p67
    %p69 = scmp.ne.s32.totalorder %s61, %s63
    %p70 = scmp.eq.s32.totalorder %s18, 3
    %p71 = por %p69, %p70
    %p72 = scmp.ne.s32.totalorder %s63, %s64
    %p73 = scmp.eq.s32.totalorder %s18, 0
    %p74 = por %p72, %p73
    %p75 = scmp.ne.s32.totalorder %s63, %s64
    %p76 = scmp.eq.s32.totalorder %s19, 3
    %p77 = por %p75, %p76
    %p79 = scmp.ne.s32.totalorder %s64, %s78
    %p80 = scmp.eq.s32.totalorder %s19, 0
    %p81 = por %p79, %p80
    %s83 = sadd.s32 %s82, 1
    %p86 = scmp.eq.s32.totalorder %s13, 3
    %p87 = scmp.ne.s32.totalorder %s82, %s84
    %p88 = scmp.eq.s32.totalorder %s13, 0
    %p89 = por %p87, %p88
    %p90 = scmp.ne.s32.totalorder %s82, %s84
    %p91 = scmp.eq.s32.totalorder %s18, 3
    %p92 = por %p90, %p91
    %p93 = scmp.ne.s32.totalorder %s84, %s85
    %p94 = scmp.eq.s32.totalorder %s18, 0
    %p95 = por %p93, %p94
    %p96 = scmp.ne.s32.totalorder %s84, %s85
    %p97 = scmp.eq.s32.totalorder %s19, 3
    %p98 = por %p96, %p97
    %p100 = scmp.ne.s32.totalorder %s85, %s99
    %p101 = scmp.eq.s32.totalorder %s19, 0
    %p102 = por %p100, %p101
    %s104 = sadd.s32 %s103, 1
    %p107 = scmp.eq.s32.totalorder %s13, 3
    %p108 = scmp.ne.s32.totalorder %s103, %s105
    %p109 = scmp.eq.s32.totalorder %s13, 0
    %p110 = por %p108, %p109
    %p111 = scmp.ne.s32.totalorder %s103, %s105
    %p112 = scmp.eq.s32.totalorder %s18, 3
    %p113 = por %p111, %p112
    %p114 = scmp.ne.s32.totalorder %s105, %s106
    %p115 = scmp.eq.s32.totalorder %s18, 0
    %p116 = por %p114, %p115
    %p117 = scmp.ne.s32.totalorder %s105, %s106
    %p118 = scmp.eq.s32.totalorder %s19, 3
    %p119 = por %p117, %p118
    %p121 = scmp.ne.s32.totalorder %s106, %s120
    %p122 = scmp.eq.s32.totalorder %s19, 0
    %p123 = por %p121, %p122
    %s125 = sadd.s32 %s124, 1
    %p128 = scmp.eq.s32.totalorder %s13, 3
    %p129 = scmp.ne.s32.totalorder %s124, %s126
    %p130 = scmp.eq.s32.totalorder %s13, 0
    %p131 = por %p129, %p130
    %p132 = scmp.ne.s32.totalorder %s124, %s126
    %p133 = scmp.eq.s32.totalorder %s18, 3
    %p134 = por %p132, %p133
    %p135 = scmp.ne.s32.totalorder %s126, %s127
    %p136 = scmp.eq.s32.totalorder %s18, 0
    %p137 = por %p135, %p136
    %p138 = scmp.ne.s32.totalorder %s126, %s127
    %p139 = scmp.eq.s32.totalorder %s19, 3
    %p140 = por %p138, %p139
    %p142 = scmp.ne.s32.totalorder %s127, %s141
    %p143 = scmp.eq.s32.totalorder %s19, 0
    %p144 = por %p142, %p143
    %s146 = sadd.s32 %s145, 1
    %p149 = scmp.eq.s32.totalorder %s13, 3
    %p150 = scmp.ne.s32.totalorder %s145, %s147
    %p151 = scmp.eq.s32.totalorder %s13, 0
    %p152 = por %p150, %p151
    %p153 = scmp.ne.s32.totalorder %s145, %s147
    %p154 = scmp.eq.s32.totalorder %s18, 3
    %p155 = por %p153, %p154
    %p156 = scmp.ne.s32.totalorder %s147, %s148
    %p157 = scmp.eq.s32.totalorder %s18, 0
    %p158 = por %p156, %p157
    %p159 = scmp.ne.s32.totalorder %s147, %s148
    %p160 = scmp.eq.s32.totalorder %s19, 3
    %p161 = por %p159, %p160
    %p163 = scmp.ne.s32.totalorder %s148, %s162
    %p164 = scmp.eq.s32.totalorder %s19, 0
    %p165 = por %p163, %p164
    %s167 = sadd.s32 %s166, 1
    %p170 = scmp.eq.s32.totalorder %s13, 3
    %p171 = scmp.ne.s32.totalorder %s166, %s168
    %p172 = scmp.eq.s32.totalorder %s13, 0
    %p173 = por %p171, %p172
    %p174 = scmp.ne.s32.totalorder %s166, %s168
    %p175 = scmp.eq.s32.totalorder %s18, 3
    %p176 = por %p174, %p175
    %p177 = scmp.ne.s32.totalorder %s168, %s169
    %p178 = scmp.eq.s32.totalorder %s18, 0
    %p179 = por %p177, %p178
    %p180 = scmp.ne.s32.totalorder %s168, %s169
    %p181 = scmp.eq.s32.totalorder %s19, 3
    %p182 = por %p180, %p181
    %p184 = scmp.ne.s32.totalorder %s169, %s183
    %p185 = scmp.eq.s32.totalorder %s19, 0
    %p186 = por %p184, %p185
    %s187 = ssub.s32 %s20, %s32
    %s188 = ssub.s32 %s21, %s28
    %s189 = sor.u32 %s187, %s188
    %p190 = scmp.eq.s32.totalorder %s189, 0
    %s192 = sadd.s32 %s191, 1
    %s193 = scalar_select %p190, %s191, %s192
    %p196 = pneg %p190
    %p197 = scmp.eq.s32.totalorder %s13, 3
    %p198 = por %p196, %p197
    %p199 = scmp.ne.s32.totalorder %s191, %s194
    %p200 = scmp.eq.s32.totalorder %s13, 0
    %p201 = por %p199, %p200
    %p202 = scmp.ne.s32.totalorder %s191, %s194
    %p203 = scmp.eq.s32.totalorder %s18, 3
    %p204 = por %p202, %p203
    %p205 = scmp.ne.s32.totalorder %s194, %s195
    %p206 = scmp.eq.s32.totalorder %s18, 0
    %p207 = por %p205, %p206
    %p208 = scmp.ne.s32.totalorder %s194, %s195
    %p209 = scmp.eq.s32.totalorder %s19, 3
    %p210 = por %p208, %p209
    %p212 = scmp.ne.s32.totalorder %s195, %s211
    %p213 = scmp.eq.s32.totalorder %s19, 0
    %p214 = por %p212, %p213
    %p215 = scmp.le.s32.totalorder 1, %s13
    %p216 = scmp.lt.s32.totalorder %s13, 5
    %p217 = pnand %p215, %p216
    %p218 = pneg %p217
    // Predicated region
    $region9: #{dense_block_forward.1} parent=5 // pred_check
      _
    $region10: #{dense_block_forward.1} parent=5 // pred_check_branch
      %220 = sbr.rel (%p217) target = $region12
    $region11: #{dense_block_forward.1} parent=5 // pred_region
      %s221 = ssub.s32 %s13, 1
      // Predicated region
      $region13: #{dense_block_forward.1} parent=11 // pred_check
        %p222 = pneg %p74
      $region14: #{dense_block_forward.1} parent=11 // pred_check_branch
        %224 = sbr.rel (%p222) target = $region16
      $region15: #{dense_block_forward.1} parent=11 // pred_region
        _
      $region16: #{dense_block_forward.1} parent=11 // pred_fallthru
        _
      // Predicated region
      $region17: #{dense_block_forward.1} parent=11 // pred_check
        %p225 = pneg %p95
      $region18: #{dense_block_forward.1} parent=11 // pred_check_branch
        %227 = sbr.rel (%p225) target = $region20
      $region19: #{dense_block_forward.1} parent=11 // pred_region
        _
      $region20: #{dense_block_forward.1} parent=11 // pred_fallthru
        _
      // Predicated region
      $region21: #{dense_block_forward.1} parent=11 // pred_check
        %p228 = pneg %p116
      $region22: #{dense_block_forward.1} parent=11 // pred_check_branch
        %230 = sbr.rel (%p228) target = $region24
      $region23: #{dense_block_forward.1} parent=11 // pred_region
        _
      $region24: #{dense_block_forward.1} parent=11 // pred_fallthru
        _
      // Predicated region
      $region25: #{dense_block_forward.1} parent=11 // pred_check
        %p231 = pneg %p137
      $region26: #{dense_block_forward.1} parent=11 // pred_check_branch
        %233 = sbr.rel (%p231) target = $region28
      $region27: #{dense_block_forward.1} parent=11 // pred_region
        _
      $region28: #{dense_block_forward.1} parent=11 // pred_fallthru
        _
      // Predicated region
      $region29: #{dense_block_forward.1} parent=11 // pred_check
        %p234 = pneg %p158
      $region30: #{dense_block_forward.1} parent=11 // pred_check_branch
        %236 = sbr.rel (%p234) target = $region32
      $region31: #{dense_block_forward.1} parent=11 // pred_region
        _
      $region32: #{dense_block_forward.1} parent=11 // pred_fallthru
        _
      // Predicated region
      $region33: #{dense_block_forward.1} parent=11 // pred_check
        %p237 = pneg %p179
      $region34: #{dense_block_forward.1} parent=11 // pred_check_branch
        %239 = sbr.rel (%p237) target = $region36
      $region35: #{dense_block_forward.1} parent=11 // pred_region
        _
      $region36: #{dense_block_forward.1} parent=11 // pred_fallthru
        _
    $region12: #{dense_block_forward.1} parent=5 // pred_fallthru
      _
    %p240 = scmp.lt.s32.totalorder %s13, 4
    // Predicated region
    $region37: #{dense_block_forward.1} parent=5 // pred_check
      %p241 = pneg %p240
    $region38: #{dense_block_forward.1} parent=5 // pred_check_branch
      %243 = sbr.rel (%p241) target = $region40
    $region39: #{dense_block_forward.1} parent=5 // pred_region
      // Predicated region
      $region41: #{dense_block_forward.1} parent=39 // pred_check
        %p244 = pneg %p47
      $region42: #{dense_block_forward.1} parent=39 // pred_check_branch
        %246 = sbr.rel (%p244) target = $region44
      $region43: #{dense_block_forward.1} parent=39 // pred_region
        %p247 = scmp.lt.s32.totalorder %s20, 1
        %s248 = scalar_select %p247, %s20, 1
        %p249 = scmp.lt.s32.totalorder %s21, 1
        %s250 = scalar_select %p249, %s21, 1
        %s251 = smul.addr %s250, 28
        %s252 = smul.addr %s248, 56
        %s253 = sadd.s32 %s251, %s252
        %s254 = smul.addr %s253, 4
        %s255 = scalar_lea.vmem %s0, %s254
      $region44: #{dense_block_forward.1} parent=39 // pred_fallthru
        _
    $region40: #{dense_block_forward.1} parent=5 // pred_fallthru
      _
    %p256 = scmp.le.s32.totalorder 1, %s13
    %p257 = scmp.lt.s32.totalorder %s13, 5
    %p258 = pnand %p256, %p257
    %p259 = pneg %p258
    // Predicated region
    $region45: #{dense_block_forward.1} parent=5 // pred_check
      _
    $region46: #{dense_block_forward.1} parent=5 // pred_check_branch
      %261 = sbr.rel (%p258) target = $region48
    $region47: #{dense_block_forward.1} parent=5 // pred_region
      %s262 = ssub.s32 %s13, 1
      %p263 = scmp.lt.s32.totalorder %s22, 1
      %s264 = scalar_select %p263, %s22, 1
      %p265 = scmp.lt.s32.totalorder %s23, 1
      %s266 = scalar_select %p265, %s23, 1
      %s267 = smul.addr %s266, 28
      %s268 = smul.addr %s264, 56
      %s269 = sadd.s32 %s267, %s268
      %s270 = smul.addr %s269, 4
      %s271 = scalar_lea.vmem %s0, %s270
      %p272 = pneg %p53
      %p273 = pneg %p50
      %p274 = pneg %p74
      %p275 = pneg %p71
      %p276 = pneg %p95
      %p277 = pneg %p92
      %p278 = pneg %p116
      %p279 = pneg %p113
      %p280 = pneg %p137
      %p281 = pneg %p134
      %p282 = pneg %p158
      %p283 = pneg %p155
      %p284 = pneg %p179
      %p285 = pneg %p176
      %p286 = pneg %p207
      %p287 = pneg %p204
      %s288 = smul.u32 8, %s23
      %p289 = scmp.lt.s32.totalorder %s22, 1
      %s290 = scalar_select %p289, %s22, 1
      %p291 = scmp.lt.s32.totalorder %s288, 15
      %s292 = scalar_select %p291, %s288, 15
      %s293 = smul.addr %s292, 2
      %s294 = smul.addr %s290, 32
      %s295 = sadd.s32 %s293, %s294
      %s296 = smul.addr %s295, 8
      %s297 = scalar_lea.vmem %s7, %s296
      %p298 = scmp.lt.s32.totalorder %s22, 1
      %s299 = scalar_select %p298, %s22, 1
      %p300 = scmp.lt.s32.totalorder %s23, 1
      %s301 = scalar_select %p300, %s23, 1
      %s302 = smul.addr %s301, 28
      %s303 = smul.addr %s299, 56
      %s304 = sadd.s32 %s302, %s303
      %s305 = smul.addr %s304, 4
      %s306 = scalar_lea.vmem %s0, %s305
      %s307 = smul.u32 8, %s23
      %p308 = scmp.lt.s32.totalorder %s22, 1
      %s309 = scalar_select %p308, %s22, 1
      %p310 = scmp.lt.s32.totalorder %s307, 15
      %s311 = scalar_select %p310, %s307, 15
      %s312 = smul.addr %s311, 2
      %s313 = smul.addr %s309, 32
      %s314 = sadd.s32 %s312, %s313
      %s315 = smul.addr %s314, 8
      %s316 = scalar_lea.vmem %s7, %s315
      %s317 = smul.u32 8, %s23
      %s319 = smul.u32 %s23, 8
      %vm320 = vcmask 1043488
      %321 = vst.msk [vmem:[#allocation2] sm:$0xf] %vm320, 0
      %322 = vst.msk [vmem:[#allocation2 + $0x4] sm:$0xf] %vm320, 0
      %vm323 = vcmask 1040416
      %324 = vst.msk [vmem:[#allocation2 + $0x8] sm:$0x1] %vm323, 0
      %325 = vst.msk [vmem:[#allocation2 + $0xc] sm:$0xf] %vm320, 0
      %326 = vst.msk [vmem:[#allocation2 + $0x10] sm:$0xf] %vm320, 0
      %327 = vst.msk [vmem:[#allocation2 + $0x14] sm:$0x1] %vm323, 0
      %328 = vst.msk [vmem:[#allocation2 + $0x18] sm:$0xf] %vm320, 0
      %329 = vst.msk [vmem:[#allocation2 + $0x1c] sm:$0xf] %vm320, 0
      %330 = vst.msk [vmem:[#allocation2 + $0x20] sm:$0x1] %vm323, 0
      %331 = vst.msk [vmem:[#allocation2 + $0x24] sm:$0xf] %vm320, 0
      %332 = vst.msk [vmem:[#allocation2 + $0x28] sm:$0xf] %vm320, 0
      %333 = vst.msk [vmem:[#allocation2 + $0x2c] sm:$0x1] %vm323, 0
      %334 = vst.msk [vmem:[#allocation2 + $0x30] sm:$0xf] %vm320, 0
      %335 = vst.msk [vmem:[#allocation2 + $0x34] sm:$0xf] %vm320, 0
      %336 = vst.msk [vmem:[#allocation2 + $0x38] sm:$0x1] %vm323, 0
      %337 = vst.msk [vmem:[#allocation2 + $0x3c] sm:$0xf] %vm320, 0
      %338 = vst.msk [vmem:[#allocation2 + $0x40] sm:$0xf] %vm320, 0
      %339 = vst.msk [vmem:[#allocation2 + $0x44] sm:$0x1] %vm323, 0
      %340 = vst.msk [vmem:[#allocation2 + $0x48] sm:$0xf] %vm320, 0
      %341 = vst.msk [vmem:[#allocation2 + $0x4c] sm:$0xf] %vm320, 0
      %342 = vst.msk [vmem:[#allocation2 + $0x50] sm:$0x1] %vm323, 0
      %343 = vst.msk [vmem:[#allocation2 + $0x54] sm:$0xf] %vm320, 0
      %344 = vst.msk [vmem:[#allocation2 + $0x58] sm:$0xf] %vm320, 0
      %345 = vst.msk [vmem:[#allocation2 + $0x5c] sm:$0x1] %vm323, 0
      %346 = vst.msk [vmem:[#allocation2 + $0x60] sm:$0xf] %vm320, 0
      %347 = vst.msk [vmem:[#allocation2 + $0x64] sm:$0xf] %vm320, 0
      %348 = vst.msk [vmem:[#allocation2 + $0x68] sm:$0x1] %vm323, 0
      %349 = vst.msk [vmem:[#allocation2 + $0x6c] sm:$0xf] %vm320, 0
      %350 = vst.msk [vmem:[#allocation2 + $0x70] sm:$0xf] %vm320, 0
      %351 = vst.msk [vmem:[#allocation2 + $0x74] sm:$0x1] %vm323, 0
      %352 = vst.msk [vmem:[#allocation2 + $0x78] sm:$0xf] %vm320, 0
      %353 = vst.msk [vmem:[#allocation2 + $0x7c] sm:$0xf] %vm320, 0
      %354 = vst.msk [vmem:[#allocation2 + $0x80] sm:$0x1] %vm323, 0
      %355 = vst.msk [vmem:[#allocation2 + $0x84] sm:$0xf] %vm320, 0
      %356 = vst.msk [vmem:[#allocation2 + $0x88] sm:$0xf] %vm320, 0
      %357 = vst.msk [vmem:[#allocation2 + $0x8c] sm:$0x1] %vm323, 0
      %358 = vst.msk [vmem:[#allocation2 + $0x90] sm:$0xf] %vm320, 0
      %359 = vst.msk [vmem:[#allocation2 + $0x94] sm:$0xf] %vm320, 0
      %360 = vst.msk [vmem:[#allocation2 + $0x98] sm:$0x1] %vm323, 0
      %361 = vst.msk [vmem:[#allocation2 + $0x9c] sm:$0xf] %vm320, 0
      %362 = vst.msk [vmem:[#allocation2 + $0xa0] sm:$0xf] %vm320, 0
      %363 = vst.msk [vmem:[#allocation2 + $0xa4] sm:$0x1] %vm323, 0
      %vm364 = vcmask 24576
      %vm365 = vsmask.f32 256
      %vm366 = vmand %vm364, %vm365
      %v367 = vld [vmem:[#allocation2] sm:$0x1]
      %v368 = vsel %vm366, 0, %v367
      %369 = vst [vmem:[#allocation2] sm:$0x1] %v368
      %v370 = vld [vmem:[#allocation2 + $0xc] sm:$0x1]
      %v371 = vsel %vm366, 0, %v370
      %372 = vst [vmem:[#allocation2 + $0xc] sm:$0x1] %v371
      %v373 = vld [vmem:[#allocation2 + $0x18] sm:$0x1]
      %v374 = vsel %vm366, 0, %v373
      %375 = vst [vmem:[#allocation2 + $0x18] sm:$0x1] %v374
      %v376 = vld [vmem:[#allocation2 + $0x24] sm:$0x1]
      %v377 = vsel %vm366, 0, %v376
      %378 = vst [vmem:[#allocation2 + $0x24] sm:$0x1] %v377
      %v379 = vld [vmem:[#allocation2 + $0x30] sm:$0x1]
      %v380 = vsel %vm366, 0, %v379
      %381 = vst [vmem:[#allocation2 + $0x30] sm:$0x1] %v380
      %v382 = vld [vmem:[#allocation2 + $0x3c] sm:$0x1]
      %v383 = vsel %vm366, 0, %v382
      %384 = vst [vmem:[#allocation2 + $0x3c] sm:$0x1] %v383
      %v385 = vld [vmem:[#allocation2 + $0x48] sm:$0x1]
      %v386 = vsel %vm366, 0, %v385
      %387 = vst [vmem:[#allocation2 + $0x48] sm:$0x1] %v386
      %v388 = vld [vmem:[#allocation2 + $0x54] sm:$0x1]
      %v389 = vsel %vm366, 0, %v388
      %390 = vst [vmem:[#allocation2 + $0x54] sm:$0x1] %v389
      %v391 = vld [vmem:[#allocation2 + $0x60] sm:$0x1]
      %v392 = vsel %vm366, 0, %v391
      %393 = vst [vmem:[#allocation2 + $0x60] sm:$0x1] %v392
      %v394 = vld [vmem:[#allocation2 + $0x6c] sm:$0x1]
      %v395 = vsel %vm366, 0, %v394
      %396 = vst [vmem:[#allocation2 + $0x6c] sm:$0x1] %v395
      %v397 = vld [vmem:[#allocation2 + $0x78] sm:$0x1]
      %v398 = vsel %vm366, 0, %v397
      %399 = vst [vmem:[#allocation2 + $0x78] sm:$0x1] %v398
      %v400 = vld [vmem:[#allocation2 + $0x84] sm:$0x1]
      %v401 = vsel %vm366, 0, %v400
      %402 = vst [vmem:[#allocation2 + $0x84] sm:$0x1] %v401
      %v403 = vld [vmem:[#allocation2 + $0x90] sm:$0x1]
      %v404 = vsel %vm366, 0, %v403
      %405 = vst [vmem:[#allocation2 + $0x90] sm:$0x1] %v404
      %v406 = vld [vmem:[#allocation2 + $0x9c] sm:$0x1]
      %v407 = vsel %vm366, 0, %v406
      %408 = vst [vmem:[#allocation2 + $0x9c] sm:$0x1] %v407
      %vm409 = vsmask.f32 7938
      %vm410 = vmand %vm364, %vm409
      %v411 = vld [vmem:[#allocation2 + $0x8] sm:$0x1]
      %v412 = vsel %vm410, 0, %v411
      %413 = vst [vmem:[#allocation2 + $0x8] sm:$0x1] %v412
      %v414 = vld [vmem:[#allocation2 + $0x14] sm:$0x1]
      %v415 = vsel %vm410, 0, %v414
      %416 = vst [vmem:[#allocation2 + $0x14] sm:$0x1] %v415
      %v417 = vld [vmem:[#allocation2 + $0x20] sm:$0x1]
      %v418 = vsel %vm410, 0, %v417
      %419 = vst [vmem:[#allocation2 + $0x20] sm:$0x1] %v418
      %v420 = vld [vmem:[#allocation2 + $0x2c] sm:$0x1]
      %v421 = vsel %vm410, 0, %v420
      %422 = vst [vmem:[#allocation2 + $0x2c] sm:$0x1] %v421
      %v423 = vld [vmem:[#allocation2 + $0x38] sm:$0x1]
      %v424 = vsel %vm410, 0, %v423
      %425 = vst [vmem:[#allocation2 + $0x38] sm:$0x1] %v424
      %v426 = vld [vmem:[#allocation2 + $0x44] sm:$0x1]
      %v427 = vsel %vm410, 0, %v426
      %428 = vst [vmem:[#allocation2 + $0x44] sm:$0x1] %v427
      %v429 = vld [vmem:[#allocation2 + $0x50] sm:$0x1]
      %v430 = vsel %vm410, 0, %v429
      %431 = vst [vmem:[#allocation2 + $0x50] sm:$0x1] %v430
      %v432 = vld [vmem:[#allocation2 + $0x5c] sm:$0x1]
      %v433 = vsel %vm410, 0, %v432
      %434 = vst [vmem:[#allocation2 + $0x5c] sm:$0x1] %v433
      %v435 = vld [vmem:[#allocation2 + $0x68] sm:$0x1]
      %v436 = vsel %vm410, 0, %v435
      %437 = vst [vmem:[#allocation2 + $0x68] sm:$0x1] %v436
      %v438 = vld [vmem:[#allocation2 + $0x74] sm:$0x1]
      %v439 = vsel %vm410, 0, %v438
      %440 = vst [vmem:[#allocation2 + $0x74] sm:$0x1] %v439
      %v441 = vld [vmem:[#allocation2 + $0x80] sm:$0x1]
      %v442 = vsel %vm410, 0, %v441
      %443 = vst [vmem:[#allocation2 + $0x80] sm:$0x1] %v442
      %v444 = vld [vmem:[#allocation2 + $0x8c] sm:$0x1]
      %v445 = vsel %vm410, 0, %v444
      %446 = vst [vmem:[#allocation2 + $0x8c] sm:$0x1] %v445
      %v447 = vld [vmem:[#allocation2 + $0x98] sm:$0x1]
      %v448 = vsel %vm410, 0, %v447
      %449 = vst [vmem:[#allocation2 + $0x98] sm:$0x1] %v448
      %v450 = vld [vmem:[#allocation2 + $0xa4] sm:$0x1]
      %v451 = vsel %vm410, 0, %v450
      %452 = vst [vmem:[#allocation2 + $0xa4] sm:$0x1] %v451
      %v453 = vld [vmem:[%s306] sm:$0xf]
      %v454 = vld [vmem:[%s306 + $0x4] sm:$0xf]
      %v455 = vld [vmem:[%s306 + $0x8] sm:$0xf]
      %v456 = vld [vmem:[%s306 + $0xc] sm:$0xf]
      %v457 = vld [vmem:[%s306 + $0x10] sm:$0xf]
      %v458 = vld [vmem:[%s306 + $0x14] sm:$0xf]
      %v459 = vld [vmem:[%s306 + $0x18] sm:$0xf]
      %v460 = vld [vmem:[%s306 + $0x1c] sm:$0xf]
      %v461 = vld [vmem:[%s306 + $0x20] sm:$0xf]
      %v462 = vld [vmem:[%s306 + $0x24] sm:$0xf]
      %v463 = vld [vmem:[%s306 + $0x28] sm:$0xf]
      %v464 = vld [vmem:[%s306 + $0x2c] sm:$0xf]
      %v465 = vld [vmem:[%s306 + $0x30] sm:$0xf]
      %v466 = vld [vmem:[%s306 + $0x34] sm:$0xf]
      %v467 = vld [vmem:[%s306 + $0x38] sm:$0xf]
      %v468 = vld [vmem:[%s306 + $0x3c] sm:$0xf]
      %v469 = vld [vmem:[%s306 + $0x40] sm:$0xf]
      %v470 = vld [vmem:[%s306 + $0x44] sm:$0xf]
      %v471 = vld [vmem:[%s306 + $0x48] sm:$0xf]
      %v472 = vld [vmem:[%s306 + $0x4c] sm:$0xf]
      %v473 = vld [vmem:[%s306 + $0x50] sm:$0xf]
      %v474 = vld [vmem:[%s306 + $0x54] sm:$0xf]
      %v475 = vld [vmem:[%s306 + $0x58] sm:$0xf]
      %v476 = vld [vmem:[%s306 + $0x5c] sm:$0xf]
      %v477 = vld [vmem:[%s306 + $0x60] sm:$0xf]
      %v478 = vld [vmem:[%s306 + $0x64] sm:$0xf]
      %v479 = vld [vmem:[%s306 + $0x68] sm:$0xf]
      %v480 = vld [vmem:[%s306 + $0x6c] sm:$0xf]
      %vm481 = vsmask.f32 4368
      %vm482 = vmor %vm365, %vm481
      %v484 = vshrl.u32 %v453, 16
      %v486 = vrot.slane %v484, 7
      %v487 = vshll.u32 %v453, 16
      %v489 = vor.u32 %v486, %v487
      %v490 = vrot.slane %v486, 4
      %v492 = vshrl.u32 %v454, 16
      %v494 = vrot.slane %v492, 7
      %v495 = vshll.u32 %v454, 16
      %v497 = vor.u32 %v494, %v495
      %v498 = vsel %vm482, %v490, %v497
      %v499 = vrot.slane %v494, 4
      %v501 = vshrl.u32 %v455, 16
      %v503 = vrot.slane %v501, 7
      %v504 = vshll.u32 %v455, 16
      %v506 = vor.u32 %v503, %v504
      %v507 = vrot.slane %v503, 4
      %v509 = vshrl.u32 %v456, 16
      %v511 = vrot.slane %v509, 7
      %v512 = vshll.u32 %v456, 16
      %v514 = vor.u32 %v511, %v512
      %v515 = vsel %vm482, %v507, %v514
      %v516 = vrot.slane %v511, 4
      %v518 = vshrl.u32 %v457, 16
      %v520 = vrot.slane %v518, 7
      %v521 = vshll.u32 %v457, 16
      %v523 = vor.u32 %v520, %v521
      %v524 = vrot.slane %v520, 4
      %v526 = vshrl.u32 %v458, 16
      %v528 = vrot.slane %v526, 7
      %v529 = vshll.u32 %v458, 16
      %v531 = vor.u32 %v528, %v529
      %v532 = vsel %vm482, %v524, %v531
      %v533 = vrot.slane %v528, 4
      %v535 = vshrl.u32 %v459, 16
      %v537 = vrot.slane %v535, 7
      %v538 = vshll.u32 %v459, 16
      %v540 = vor.u32 %v537, %v538
      %v541 = vrot.slane %v537, 4
      %v543 = vshrl.u32 %v460, 16
      %v545 = vrot.slane %v543, 7
      %v546 = vshll.u32 %v460, 16
      %v548 = vor.u32 %v545, %v546
      %v549 = vsel %vm482, %v541, %v548
      %v550 = vrot.slane %v545, 4
      %v552 = vshrl.u32 %v461, 16
      %v554 = vrot.slane %v552, 7
      %v555 = vshll.u32 %v461, 16
      %v557 = vor.u32 %v554, %v555
      %v558 = vrot.slane %v554, 4
      %v560 = vshrl.u32 %v462, 16
      %v562 = vrot.slane %v560, 7
      %v563 = vshll.u32 %v462, 16
      %v565 = vor.u32 %v562, %v563
      %v566 = vsel %vm482, %v558, %v565
      %v567 = vrot.slane %v562, 4
      %v569 = vshrl.u32 %v463, 16
      %v571 = vrot.slane %v569, 7
      %v572 = vshll.u32 %v463, 16
      %v574 = vor.u32 %v571, %v572
      %v575 = vrot.slane %v571, 4
      %v577 = vshrl.u32 %v464, 16
      %v579 = vrot.slane %v577, 7
      %v580 = vshll.u32 %v464, 16
      %v582 = vor.u32 %v579, %v580
      %v583 = vsel %vm482, %v575, %v582
      %v584 = vrot.slane %v579, 4
      %v586 = vshrl.u32 %v465, 16
      %v588 = vrot.slane %v586, 7
      %v589 = vshll.u32 %v465, 16
      %v591 = vor.u32 %v588, %v589
      %v592 = vrot.slane %v588, 4
      %v594 = vshrl.u32 %v466, 16
      %v596 = vrot.slane %v594, 7
      %v597 = vshll.u32 %v466, 16
      %v599 = vor.u32 %v596, %v597
      %v600 = vsel %vm482, %v592, %v599
      %v601 = vrot.slane %v596, 4
      %v603 = vshrl.u32 %v467, 16
      %v605 = vrot.slane %v603, 7
      %v606 = vshll.u32 %v467, 16
      %v608 = vor.u32 %v605, %v606
      %v609 = vrot.slane %v605, 4
      %v611 = vshrl.u32 %v468, 16
      %v613 = vrot.slane %v611, 7
      %v614 = vshll.u32 %v468, 16
      %v616 = vor.u32 %v613, %v614
      %v617 = vsel %vm482, %v609, %v616
      %v618 = vrot.slane %v613, 4
      %v620 = vshrl.u32 %v469, 16
      %v622 = vrot.slane %v620, 7
      %v623 = vshll.u32 %v469, 16
      %v625 = vor.u32 %v622, %v623
      %v626 = vrot.slane %v622, 4
      %v628 = vshrl.u32 %v470, 16
      %v630 = vrot.slane %v628, 7
      %v631 = vshll.u32 %v470, 16
      %v633 = vor.u32 %v630, %v631
      %v634 = vsel %vm482, %v626, %v633
      %v635 = vrot.slane %v630, 4
      %v637 = vshrl.u32 %v471, 16
      %v639 = vrot.slane %v637, 7
      %v640 = vshll.u32 %v471, 16
      %v642 = vor.u32 %v639, %v640
      %v643 = vrot.slane %v639, 4
      %v645 = vshrl.u32 %v472, 16
      %v647 = vrot.slane %v645, 7
      %v648 = vshll.u32 %v472, 16
      %v650 = vor.u32 %v647, %v648
      %v651 = vsel %vm482, %v643, %v650
      %v652 = vrot.slane %v647, 4
      %v654 = vshrl.u32 %v473, 16
      %v656 = vrot.slane %v654, 7
      %v657 = vshll.u32 %v473, 16
      %v659 = vor.u32 %v656, %v657
      %v660 = vrot.slane %v656, 4
      %v662 = vshrl.u32 %v474, 16
      %v664 = vrot.slane %v662, 7
      %v665 = vshll.u32 %v474, 16
      %v667 = vor.u32 %v664, %v665
      %v668 = vsel %vm482, %v660, %v667
      %v669 = vrot.slane %v664, 4
      %v671 = vshrl.u32 %v475, 16
      %v673 = vrot.slane %v671, 7
      %v674 = vshll.u32 %v475, 16
      %v676 = vor.u32 %v673, %v674
      %v677 = vrot.slane %v673, 4
      %v679 = vshrl.u32 %v476, 16
      %v681 = vrot.slane %v679, 7
      %v682 = vshll.u32 %v476, 16
      %v684 = vor.u32 %v681, %v682
      %v685 = vsel %vm482, %v677, %v684
      %v686 = vrot.slane %v681, 4
      %v688 = vshrl.u32 %v477, 16
      %v690 = vrot.slane %v688, 7
      %v691 = vshll.u32 %v477, 16
      %v693 = vor.u32 %v690, %v691
      %v694 = vrot.slane %v690, 4
      %v696 = vshrl.u32 %v478, 16
      %v698 = vrot.slane %v696, 7
      %v699 = vshll.u32 %v478, 16
      %v701 = vor.u32 %v698, %v699
      %v702 = vsel %vm482, %v694, %v701
      %v703 = vrot.slane %v698, 4
      %v705 = vshrl.u32 %v479, 16
      %v707 = vrot.slane %v705, 7
      %v708 = vshll.u32 %v479, 16
      %v710 = vor.u32 %v707, %v708
      %v711 = vrot.slane %v707, 4
      %v713 = vshrl.u32 %v480, 16
      %v715 = vrot.slane %v713, 7
      %v716 = vshll.u32 %v480, 16
      %v718 = vor.u32 %v715, %v716
      %v719 = vsel %vm482, %v711, %v718
      %v720 = vrot.slane %v715, 4
      %vm763 = vcmask 27648
      %vm764 = vmand %vm763, %vm409
      %v765 = vld [vmem:[#allocation2] sm:$0xf]
      %v766 = vsel %vm764, %v489, %v765
      %767 = vst [vmem:[#allocation2] sm:$0xf] %v766
      %vm768 = vcmask 27648
      %769 = vst.msk [vmem:[#allocation2 + $0x4] sm:$0xf] %vm768, %v498
      %v770 = vld [vmem:[#allocation2 + $0x8] sm:$0x1]
      %v771 = vsel %vm366, %v499, %v770
      %772 = vst [vmem:[#allocation2 + $0x8] sm:$0x1] %v771
      %v773 = vld [vmem:[#allocation2 + $0xc] sm:$0xf]
      %v774 = vsel %vm764, %v506, %v773
      %775 = vst [vmem:[#allocation2 + $0xc] sm:$0xf] %v774
      %776 = vst.msk [vmem:[#allocation2 + $0x10] sm:$0xf] %vm768, %v515
      %v777 = vld [vmem:[#allocation2 + $0x14] sm:$0x1]
      %v778 = vsel %vm366, %v516, %v777
      %779 = vst [vmem:[#allocation2 + $0x14] sm:$0x1] %v778
      %v780 = vld [vmem:[#allocation2 + $0x18] sm:$0xf]
      %v781 = vsel %vm764, %v523, %v780
      %782 = vst [vmem:[#allocation2 + $0x18] sm:$0xf] %v781
      %783 = vst.msk [vmem:[#allocation2 + $0x1c] sm:$0xf] %vm768, %v532
      %v784 = vld [vmem:[#allocation2 + $0x20] sm:$0x1]
      %v785 = vsel %vm366, %v533, %v784
      %786 = vst [vmem:[#allocation2 + $0x20] sm:$0x1] %v785
      %v787 = vld [vmem:[#allocation2 + $0x24] sm:$0xf]
      %v788 = vsel %vm764, %v540, %v787
      %789 = vst [vmem:[#allocation2 + $0x24] sm:$0xf] %v788
      %790 = vst.msk [vmem:[#allocation2 + $0x28] sm:$0xf] %vm768, %v549
      %v791 = vld [vmem:[#allocation2 + $0x2c] sm:$0x1]
      %v792 = vsel %vm366, %v550, %v791
      %793 = vst [vmem:[#allocation2 + $0x2c] sm:$0x1] %v792
      %v794 = vld [vmem:[#allocation2 + $0x30] sm:$0xf]
      %v795 = vsel %vm764, %v557, %v794
      %796 = vst [vmem:[#allocation2 + $0x30] sm:$0xf] %v795
      %797 = vst.msk [vmem:[#allocation2 + $0x34] sm:$0xf] %vm768, %v566
      %v798 = vld [vmem:[#allocation2 + $0x38] sm:$0x1]
      %v799 = vsel %vm366, %v567, %v798
      %800 = vst [vmem:[#allocation2 + $0x38] sm:$0x1] %v799
      %v801 = vld [vmem:[#allocation2 + $0x3c] sm:$0xf]
      %v802 = vsel %vm764, %v574, %v801
      %803 = vst [vmem:[#allocation2 + $0x3c] sm:$0xf] %v802
      %804 = vst.msk [vmem:[#allocation2 + $0x40] sm:$0xf] %vm768, %v583
      %v805 = vld [vmem:[#allocation2 + $0x44] sm:$0x1]
      %v806 = vsel %vm366, %v584, %v805
      %807 = vst [vmem:[#allocation2 + $0x44] sm:$0x1] %v806
      %v808 = vld [vmem:[#allocation2 + $0x48] sm:$0xf]
      %v809 = vsel %vm764, %v591, %v808
      %810 = vst [vmem:[#allocation2 + $0x48] sm:$0xf] %v809
      %811 = vst.msk [vmem:[#allocation2 + $0x4c] sm:$0xf] %vm768, %v600
      %v812 = vld [vmem:[#allocation2 + $0x50] sm:$0x1]
      %v813 = vsel %vm366, %v601, %v812
      %814 = vst [vmem:[#allocation2 + $0x50] sm:$0x1] %v813
      %v815 = vld [vmem:[#allocation2 + $0x54] sm:$0xf]
      %v816 = vsel %vm764, %v608, %v815
      %817 = vst [vmem:[#allocation2 + $0x54] sm:$0xf] %v816
      %818 = vst.msk [vmem:[#allocation2 + $0x58] sm:$0xf] %vm768, %v617
      %v819 = vld [vmem:[#allocation2 + $0x5c] sm:$0x1]
      %v820 = vsel %vm366, %v618, %v819
      %821 = vst [vmem:[#allocation2 + $0x5c] sm:$0x1] %v820
      %v822 = vld [vmem:[#allocation2 + $0x60] sm:$0xf]
      %v823 = vsel %vm764, %v625, %v822
      %824 = vst [vmem:[#allocation2 + $0x60] sm:$0xf] %v823
      %825 = vst.msk [vmem:[#allocation2 + $0x64] sm:$0xf] %vm768, %v634
      %v826 = vld [vmem:[#allocation2 + $0x68] sm:$0x1]
      %v827 = vsel %vm366, %v635, %v826
      %828 = vst [vmem:[#allocation2 + $0x68] sm:$0x1] %v827
      %v829 = vld [vmem:[#allocation2 + $0x6c] sm:$0xf]
      %v830 = vsel %vm764, %v642, %v829
      %831 = vst [vmem:[#allocation2 + $0x6c] sm:$0xf] %v830
      %832 = vst.msk [vmem:[#allocation2 + $0x70] sm:$0xf] %vm768, %v651
      %v833 = vld [vmem:[#allocation2 + $0x74] sm:$0x1]
      %v834 = vsel %vm366, %v652, %v833
      %835 = vst [vmem:[#allocation2 + $0x74] sm:$0x1] %v834
      %v836 = vld [vmem:[#allocation2 + $0x78] sm:$0xf]
      %v837 = vsel %vm764, %v659, %v836
      %838 = vst [vmem:[#allocation2 + $0x78] sm:$0xf] %v837
      %839 = vst.msk [vmem:[#allocation2 + $0x7c] sm:$0xf] %vm768, %v668
      %v840 = vld [vmem:[#allocation2 + $0x80] sm:$0x1]
      %v841 = vsel %vm366, %v669, %v840
      %842 = vst [vmem:[#allocation2 + $0x80] sm:$0x1] %v841
      %v843 = vld [vmem:[#allocation2 + $0x84] sm:$0xf]
      %v844 = vsel %vm764, %v676, %v843
      %845 = vst [vmem:[#allocation2 + $0x84] sm:$0xf] %v844
      %846 = vst.msk [vmem:[#allocation2 + $0x88] sm:$0xf] %vm768, %v685
      %v847 = vld [vmem:[#allocation2 + $0x8c] sm:$0x1]
      %v848 = vsel %vm366, %v686, %v847
      %849 = vst [vmem:[#allocation2 + $0x8c] sm:$0x1] %v848
      %v850 = vld [vmem:[#allocation2 + $0x90] sm:$0xf]
      %v851 = vsel %vm764, %v693, %v850
      %852 = vst [vmem:[#allocation2 + $0x90] sm:$0xf] %v851
      %853 = vst.msk [vmem:[#allocation2 + $0x94] sm:$0xf] %vm768, %v702
      %v854 = vld [vmem:[#allocation2 + $0x98] sm:$0x1]
      %v855 = vsel %vm366, %v703, %v854
      %856 = vst [vmem:[#allocation2 + $0x98] sm:$0x1] %v855
      %v857 = vld [vmem:[#allocation2 + $0x9c] sm:$0xf]
      %v858 = vsel %vm764, %v710, %v857
      %859 = vst [vmem:[#allocation2 + $0x9c] sm:$0xf] %v858
      %860 = vst.msk [vmem:[#allocation2 + $0xa0] sm:$0xf] %vm768, %v719
      %v861 = vld [vmem:[#allocation2 + $0xa4] sm:$0x1]
      %v862 = vsel %vm366, %v720, %v861
      %863 = vst [vmem:[#allocation2 + $0xa4] sm:$0x1] %v862
      %v864 = vld [vmem:[#allocation2] sm:$0xf]
      %v865 = vld [vmem:[#allocation2 + $0x4] sm:$0xf]
      %v866 = vld [vmem:[#allocation2 + $0x8] sm:$0x1]
      %v867 = vld [vmem:[#allocation2 + $0xc] sm:$0xf]
      %v868 = vld [vmem:[#allocation2 + $0x10] sm:$0xf]
      %v869 = vld [vmem:[#allocation2 + $0x14] sm:$0x1]
      %v870 = vld [vmem:[#allocation2 + $0x18] sm:$0xf]
      %v871 = vld [vmem:[#allocation2 + $0x1c] sm:$0xf]
      %v872 = vld [vmem:[#allocation2 + $0x20] sm:$0x1]
      %v873 = vld [vmem:[#allocation2 + $0x24] sm:$0xf]
      %v874 = vld [vmem:[#allocation2 + $0x28] sm:$0xf]
      %v875 = vld [vmem:[#allocation2 + $0x2c] sm:$0x1]
      %v876 = vld [vmem:[#allocation2 + $0x30] sm:$0xf]
      %v877 = vld [vmem:[#allocation2 + $0x34] sm:$0xf]
      %v878 = vld [vmem:[#allocation2 + $0x38] sm:$0x1]
      %v879 = vld [vmem:[#allocation2 + $0x3c] sm:$0xf]
      %v880 = vld [vmem:[#allocation2 + $0x40] sm:$0xf]
      %v881 = vld [vmem:[#allocation2 + $0x44] sm:$0x1]
      %v882 = vld [vmem:[#allocation2 + $0x48] sm:$0xf]
      %v883 = vld [vmem:[#allocation2 + $0x4c] sm:$0xf]
      %v884 = vld [vmem:[#allocation2 + $0x50] sm:$0x1]
      %v885 = vld [vmem:[#allocation2 + $0x54] sm:$0xf]
      %v886 = vld [vmem:[#allocation2 + $0x58] sm:$0xf]
      %v887 = vld [vmem:[#allocation2 + $0x5c] sm:$0x1]
      %v888 = vld [vmem:[#allocation2 + $0x60] sm:$0xf]
      %v889 = vld [vmem:[#allocation2 + $0x64] sm:$0xf]
      %v890 = vld [vmem:[#allocation2 + $0x68] sm:$0x1]
      %v891 = vld [vmem:[#allocation2 + $0x6c] sm:$0xf]
      %v892 = vld [vmem:[#allocation2 + $0x70] sm:$0xf]
      %v893 = vld [vmem:[#allocation2 + $0x74] sm:$0x1]
      %v894 = vld [vmem:[#allocation2 + $0x78] sm:$0xf]
      %v895 = vld [vmem:[#allocation2 + $0x7c] sm:$0xf]
      %v896 = vld [vmem:[#allocation2 + $0x80] sm:$0x1]
      %v897 = vld [vmem:[#allocation2 + $0x84] sm:$0xf]
      %v898 = vld [vmem:[#allocation2 + $0x88] sm:$0xf]
      %v899 = vld [vmem:[#allocation2 + $0x8c] sm:$0x1]
      %v924 = vunpack.c.l.b16 %v864
      %v925 = vunpack.c.l.b16 %v865
      %v926 = vunpack.c.l.b16 %v867
      %v927 = vunpack.c.l.b16 %v868
      %v928 = vunpack.c.l.b16 %v870
      %v929 = vunpack.c.l.b16 %v871
      %v930 = vunpack.c.l.b16 %v873
      %v931 = vunpack.c.l.b16 %v874
      %v932 = vunpack.c.l.b16 %v876
      %v933 = vunpack.c.l.b16 %v877
      %v934 = vunpack.c.l.b16 %v879
      %v935 = vunpack.c.l.b16 %v880
      %v936 = vunpack.c.l.b16 %v882
      %v937 = vunpack.c.l.b16 %v883
      %v938 = vunpack.c.l.b16 %v885
      %v939 = vunpack.c.l.b16 %v886
      %v940 = vunpack.c.l.b16 %v888
      %v941 = vunpack.c.l.b16 %v889
      %v942 = vunpack.c.l.b16 %v891
      %v943 = vunpack.c.l.b16 %v892
      %v944 = vunpack.c.l.b16 %v894
      %v945 = vunpack.c.l.b16 %v895
      %v946 = vunpack.c.l.b16 %v897
      %v947 = vunpack.c.l.b16 %v898
      %v948 = vpack.c.b16 %v925, %v924
      %v949 = vpack.c.b16 %v927, %v926
      %v950 = vpack.c.b16 %v929, %v928
      %v951 = vpack.c.b16 %v931, %v930
      %v952 = vpack.c.b16 %v933, %v932
      %v953 = vpack.c.b16 %v935, %v934
      %v954 = vpack.c.b16 %v937, %v936
      %v955 = vpack.c.b16 %v939, %v938
      %v956 = vpack.c.b16 %v941, %v940
      %v957 = vpack.c.b16 %v943, %v942
      %v958 = vpack.c.b16 %v945, %v944
      %v959 = vpack.c.b16 %v947, %v946
      %v984 = vunpack.c.l.b16 %v866
      %v985 = vunpack.c.l.b16 %v869
      %v986 = vunpack.c.l.b16 %v872
      %v987 = vunpack.c.l.b16 %v875
      %v988 = vunpack.c.l.b16 %v878
      %v989 = vunpack.c.l.b16 %v881
      %v990 = vunpack.c.l.b16 %v884
      %v991 = vunpack.c.l.b16 %v887
      %v992 = vunpack.c.l.b16 %v890
      %v993 = vunpack.c.l.b16 %v893
      %v994 = vunpack.c.l.b16 %v896
      %v995 = vunpack.c.l.b16 %v899
      %v996 = vpack.c.b16 %v984, %v984
      %v997 = vpack.c.b16 %v985, %v985
      %v998 = vpack.c.b16 %v986, %v986
      %v999 = vpack.c.b16 %v987, %v987
      %v1000 = vpack.c.b16 %v988, %v988
      %v1001 = vpack.c.b16 %v989, %v989
      %v1002 = vpack.c.b16 %v990, %v990
      %v1003 = vpack.c.b16 %v991, %v991
      %v1004 = vpack.c.b16 %v992, %v992
      %v1005 = vpack.c.b16 %v993, %v993
      %v1006 = vpack.c.b16 %v994, %v994
      %v1007 = vpack.c.b16 %v995, %v995
      %vm1008 = vsmask.f32 7424
      %v1010 = vshrl.u32 %v948, 16
      %v1012 = vshll.u32 %v948, 16
      %v1014 = vrot.slane %v1012, 1
      %v1015 = vor.u32 %v1010, %v1014
      %v1017 = vshll.u32 %v996, 16
      %v1019 = vrot.slane %v1017, 1
      %v1020 = vsel %vm1008, %v1015, %v1019
      %v1022 = vshrl.u32 %v949, 16
      %v1024 = vshll.u32 %v949, 16
      %v1026 = vrot.slane %v1024, 1
      %v1027 = vor.u32 %v1022, %v1026
      %v1029 = vshll.u32 %v997, 16
      %v1031 = vrot.slane %v1029, 1
      %v1032 = vsel %vm1008, %v1027, %v1031
      %v1034 = vshrl.u32 %v950, 16
      %v1036 = vshll.u32 %v950, 16
      %v1038 = vrot.slane %v1036, 1
      %v1039 = vor.u32 %v1034, %v1038
      %v1041 = vshll.u32 %v998, 16
      %v1043 = vrot.slane %v1041, 1
      %v1044 = vsel %vm1008, %v1039, %v1043
      %v1046 = vshrl.u32 %v951, 16
      %v1048 = vshll.u32 %v951, 16
      %v1050 = vrot.slane %v1048, 1
      %v1051 = vor.u32 %v1046, %v1050
      %v1053 = vshll.u32 %v999, 16
      %v1055 = vrot.slane %v1053, 1
      %v1056 = vsel %vm1008, %v1051, %v1055
      %v1058 = vshrl.u32 %v952, 16
      %v1060 = vshll.u32 %v952, 16
      %v1062 = vrot.slane %v1060, 1
      %v1063 = vor.u32 %v1058, %v1062
      %v1065 = vshll.u32 %v1000, 16
      %v1067 = vrot.slane %v1065, 1
      %v1068 = vsel %vm1008, %v1063, %v1067
      %v1070 = vshrl.u32 %v953, 16
      %v1072 = vshll.u32 %v953, 16
      %v1074 = vrot.slane %v1072, 1
      %v1075 = vor.u32 %v1070, %v1074
      %v1077 = vshll.u32 %v1001, 16
      %v1079 = vrot.slane %v1077, 1
      %v1080 = vsel %vm1008, %v1075, %v1079
      %v1082 = vshrl.u32 %v954, 16
      %v1084 = vshll.u32 %v954, 16
      %v1086 = vrot.slane %v1084, 1
      %v1087 = vor.u32 %v1082, %v1086
      %v1089 = vshll.u32 %v1002, 16
      %v1091 = vrot.slane %v1089, 1
      %v1092 = vsel %vm1008, %v1087, %v1091
      %v1094 = vshrl.u32 %v955, 16
      %v1096 = vshll.u32 %v955, 16
      %v1098 = vrot.slane %v1096, 1
      %v1099 = vor.u32 %v1094, %v1098
      %v1101 = vshll.u32 %v1003, 16
      %v1103 = vrot.slane %v1101, 1
      %v1104 = vsel %vm1008, %v1099, %v1103
      %v1106 = vshrl.u32 %v956, 16
      %v1108 = vshll.u32 %v956, 16
      %v1110 = vrot.slane %v1108, 1
      %v1111 = vor.u32 %v1106, %v1110
      %v1113 = vshll.u32 %v1004, 16
      %v1115 = vrot.slane %v1113, 1
      %v1116 = vsel %vm1008, %v1111, %v1115
      %v1118 = vshrl.u32 %v957, 16
      %v1120 = vshll.u32 %v957, 16
      %v1122 = vrot.slane %v1120, 1
      %v1123 = vor.u32 %v1118, %v1122
      %v1125 = vshll.u32 %v1005, 16
      %v1127 = vrot.slane %v1125, 1
      %v1128 = vsel %vm1008, %v1123, %v1127
      %v1130 = vshrl.u32 %v958, 16
      %v1132 = vshll.u32 %v958, 16
      %v1134 = vrot.slane %v1132, 1
      %v1135 = vor.u32 %v1130, %v1134
      %v1137 = vshll.u32 %v1006, 16
      %v1139 = vrot.slane %v1137, 1
      %v1140 = vsel %vm1008, %v1135, %v1139
      %v1142 = vshrl.u32 %v959, 16
      %v1144 = vshll.u32 %v959, 16
      %v1146 = vrot.slane %v1144, 1
      %v1147 = vor.u32 %v1142, %v1146
      %v1149 = vshll.u32 %v1007, 16
      %v1151 = vrot.slane %v1149, 1
      %v1152 = vsel %vm1008, %v1147, %v1151
      %vm1165 = vcmask 1046528
      %v1166 = vrot.slane %v948, 1
      %v1167 = vrot.slane %v996, 1
      %v1168 = vsel %vm1165, %v1166, %v1167
      %v1169 = vrot.slane %v949, 1
      %v1170 = vrot.slane %v997, 1
      %v1171 = vsel %vm1165, %v1169, %v1170
      %v1172 = vrot.slane %v950, 1
      %v1173 = vrot.slane %v998, 1
      %v1174 = vsel %vm1165, %v1172, %v1173
      %v1175 = vrot.slane %v951, 1
      %v1176 = vrot.slane %v999, 1
      %v1177 = vsel %vm1165, %v1175, %v1176
      %v1178 = vrot.slane %v952, 1
      %v1179 = vrot.slane %v1000, 1
      %v1180 = vsel %vm1165, %v1178, %v1179
      %v1181 = vrot.slane %v953, 1
      %v1182 = vrot.slane %v1001, 1
      %v1183 = vsel %vm1165, %v1181, %v1182
      %v1184 = vrot.slane %v954, 1
      %v1185 = vrot.slane %v1002, 1
      %v1186 = vsel %vm1165, %v1184, %v1185
      %v1187 = vrot.slane %v955, 1
      %v1188 = vrot.slane %v1003, 1
      %v1189 = vsel %vm1165, %v1187, %v1188
      %v1190 = vrot.slane %v956, 1
      %v1191 = vrot.slane %v1004, 1
      %v1192 = vsel %vm1165, %v1190, %v1191
      %v1193 = vrot.slane %v957, 1
      %v1194 = vrot.slane %v1005, 1
      %v1195 = vsel %vm1165, %v1193, %v1194
      %v1196 = vrot.slane %v958, 1
      %v1197 = vrot.slane %v1006, 1
      %v1198 = vsel %vm1165, %v1196, %v1197
      %v1199 = vrot.slane %v959, 1
      %v1200 = vrot.slane %v1007, 1
      %v1201 = vsel %vm1165, %v1199, %v1200
      %v1214 = vld [vmem:[%s1] sm:$0xf]
      %v1215 = vld [vmem:[%s1 + $0x4] sm:$0xf]
      %v1216 = vld [vmem:[%s1 + $0x8] sm:$0xf]
      %v1217 = vld [vmem:[%s1 + $0xc] sm:$0xf]
      %v1218 = vld [vmem:[%s1 + $0x10] sm:$0xf]
      %v1219 = vld [vmem:[%s1 + $0x14] sm:$0xf]
      %v1220 = vld [vmem:[%s1 + $0x18] sm:$0xf]
      %v1221 = vld [vmem:[%s1 + $0x1c] sm:$0xf]
      %v1222 = vld [vmem:[%s1 + $0x20] sm:$0xf]
      %v1223 = vld [vmem:[%s1 + $0x24] sm:$0xf]
      %v1224 = vld [vmem:[%s1 + $0x28] sm:$0xf]
      %v1225 = vld [vmem:[%s1 + $0x2c] sm:$0xf]
      %v1226 = vld [vmem:[%s1 + $0x30] sm:$0xf]
      %v1227 = vld [vmem:[%s1 + $0x34] sm:$0xf]
      %v1228 = vld [vmem:[%s1 + $0x38] sm:$0xf]
      %v1229 = vld [vmem:[%s1 + $0x3c] sm:$0xf]
      %v1230 = vld [vmem:[%s1 + $0x40] sm:$0xf]
      %v1231 = vld [vmem:[%s1 + $0x44] sm:$0xf]
      %v1232 = vld [vmem:[%s1 + $0x48] sm:$0xf]
      %v1233 = vld [vmem:[%s1 + $0x4c] sm:$0xf]
      %v1234 = vld [vmem:[%s1 + $0x50] sm:$0xf]
      %v1235 = vld [vmem:[%s1 + $0x54] sm:$0xf]
      %v1236 = vld [vmem:[%s1 + $0x58] sm:$0xf]
      %v1237 = vld [vmem:[%s1 + $0x5c] sm:$0xf]
      %v1238 = vld [vmem:[%s1 + $0x60] sm:$0xf]
      %v1239 = vld [vmem:[%s1 + $0x64] sm:$0xf]
      %v1240 = vld [vmem:[%s1 + $0x68] sm:$0xf]
      %v1241 = vld [vmem:[%s1 + $0x6c] sm:$0xf]
      %v1242 = vld [vmem:[%s1 + $0x70] sm:$0xf]
      %v1243 = vld [vmem:[%s1 + $0x74] sm:$0xf]
      %v1244 = vld [vmem:[%s1 + $0x78] sm:$0xf]
      %v1245 = vld [vmem:[%s1 + $0x7c] sm:$0xf]
      %v1246 = vld [vmem:[%s1 + $0x80] sm:$0xf]
      %v1247 = vld [vmem:[%s1 + $0x84] sm:$0xf]
      %v1248 = vld [vmem:[%s1 + $0x88] sm:$0xf]
      %v1249 = vld [vmem:[%s1 + $0x8c] sm:$0xf]
      %v1250 = vld [vmem:[%s1 + $0x90] sm:$0xf]
      %v1251 = vld [vmem:[%s1 + $0x94] sm:$0xf]
      %v1252 = vld [vmem:[%s1 + $0x98] sm:$0xf]
      %v1253 = vld [vmem:[%s1 + $0x9c] sm:$0xf]
      %v1254 = vld [vmem:[%s1 + $0xa0] sm:$0xf]
      %v1255 = vld [vmem:[%s1 + $0xa4] sm:$0xf]
      %v1256 = vld [vmem:[%s1 + $0xa8] sm:$0xf]
      %v1257 = vld [vmem:[%s1 + $0xac] sm:$0xf]
      %v1258 = vld [vmem:[%s1 + $0xb0] sm:$0xf]
      %v1259 = vld [vmem:[%s1 + $0xb4] sm:$0xf]
      %v1260 = vld [vmem:[%s1 + $0xb8] sm:$0xf]
      %v1261 = vld [vmem:[%s1 + $0xbc] sm:$0xf]
      %s1262 = scalar_lea.vmem [#allocation2], 12
      %v1263 = vld [vmem:[%s1262] sm:$0xf]
      %v1264 = vld [vmem:[%s1262 + $0x4] sm:$0xf]
      %v1265 = vld [vmem:[%s1262 + $0x8] sm:$0x1]
      %v1266 = vld [vmem:[%s1262 + $0xc] sm:$0xf]
      %v1267 = vld [vmem:[%s1262 + $0x10] sm:$0xf]
      %v1268 = vld [vmem:[%s1262 + $0x14] sm:$0x1]
      %v1269 = vld [vmem:[%s1262 + $0x18] sm:$0xf]
      %v1270 = vld [vmem:[%s1262 + $0x1c] sm:$0xf]
      %v1271 = vld [vmem:[%s1262 + $0x20] sm:$0x1]
      %v1272 = vld [vmem:[%s1262 + $0x24] sm:$0xf]
      %v1273 = vld [vmem:[%s1262 + $0x28] sm:$0xf]
      %v1274 = vld [vmem:[%s1262 + $0x2c] sm:$0x1]
      %v1275 = vld [vmem:[%s1262 + $0x30] sm:$0xf]
      %v1276 = vld [vmem:[%s1262 + $0x34] sm:$0xf]
      %v1277 = vld [vmem:[%s1262 + $0x38] sm:$0x1]
      %v1278 = vld [vmem:[%s1262 + $0x3c] sm:$0xf]
      %v1279 = vld [vmem:[%s1262 + $0x40] sm:$0xf]
      %v1280 = vld [vmem:[%s1262 + $0x44] sm:$0x1]
      %v1281 = vld [vmem:[%s1262 + $0x48] sm:$0xf]
      %v1282 = vld [vmem:[%s1262 + $0x4c] sm:$0xf]
      %v1283 = vld [vmem:[%s1262 + $0x50] sm:$0x1]
      %v1284 = vld [vmem:[%s1262 + $0x54] sm:$0xf]
      %v1285 = vld [vmem:[%s1262 + $0x58] sm:$0xf]
      %v1286 = vld [vmem:[%s1262 + $0x5c] sm:$0x1]
      %v1287 = vld [vmem:[%s1262 + $0x60] sm:$0xf]
      %v1288 = vld [vmem:[%s1262 + $0x64] sm:$0xf]
      %v1289 = vld [vmem:[%s1262 + $0x68] sm:$0x1]
      %v1290 = vld [vmem:[%s1262 + $0x6c] sm:$0xf]
      %v1291 = vld [vmem:[%s1262 + $0x70] sm:$0xf]
      %v1292 = vld [vmem:[%s1262 + $0x74] sm:$0x1]
      %v1293 = vld [vmem:[%s1262 + $0x78] sm:$0xf]
      %v1294 = vld [vmem:[%s1262 + $0x7c] sm:$0xf]
      %v1295 = vld [vmem:[%s1262 + $0x80] sm:$0x1]
      %v1296 = vld [vmem:[%s1262 + $0x84] sm:$0xf]
      %v1297 = vld [vmem:[%s1262 + $0x88] sm:$0xf]
      %v1298 = vld [vmem:[%s1262 + $0x8c] sm:$0x1]
      %v1323 = vunpack.c.l.b16 %v1263
      %v1324 = vunpack.c.l.b16 %v1264
      %v1325 = vunpack.c.l.b16 %v1266
      %v1326 = vunpack.c.l.b16 %v1267
      %v1327 = vunpack.c.l.b16 %v1269
      %v1328 = vunpack.c.l.b16 %v1270
      %v1329 = vunpack.c.l.b16 %v1272
      %v1330 = vunpack.c.l.b16 %v1273
      %v1331 = vunpack.c.l.b16 %v1275
      %v1332 = vunpack.c.l.b16 %v1276
      %v1333 = vunpack.c.l.b16 %v1278
      %v1334 = vunpack.c.l.b16 %v1279
      %v1335 = vunpack.c.l.b16 %v1281
      %v1336 = vunpack.c.l.b16 %v1282
      %v1337 = vunpack.c.l.b16 %v1284
      %v1338 = vunpack.c.l.b16 %v1285
      %v1339 = vunpack.c.l.b16 %v1287
      %v1340 = vunpack.c.l.b16 %v1288
      %v1341 = vunpack.c.l.b16 %v1290
      %v1342 = vunpack.c.l.b16 %v1291
      %v1343 = vunpack.c.l.b16 %v1293
      %v1344 = vunpack.c.l.b16 %v1294
      %v1345 = vunpack.c.l.b16 %v1296
      %v1346 = vunpack.c.l.b16 %v1297
      %v1347 = vpack.c.b16 %v1324, %v1323
      %v1348 = vpack.c.b16 %v1326, %v1325
      %v1349 = vpack.c.b16 %v1328, %v1327
      %v1350 = vpack.c.b16 %v1330, %v1329
      %v1351 = vpack.c.b16 %v1332, %v1331
      %v1352 = vpack.c.b16 %v1334, %v1333
      %v1353 = vpack.c.b16 %v1336, %v1335
      %v1354 = vpack.c.b16 %v1338, %v1337
      %v1355 = vpack.c.b16 %v1340, %v1339
      %v1356 = vpack.c.b16 %v1342, %v1341
      %v1357 = vpack.c.b16 %v1344, %v1343
      %v1358 = vpack.c.b16 %v1346, %v1345
      %v1383 = vunpack.c.l.b16 %v1265
      %v1384 = vunpack.c.l.b16 %v1268
      %v1385 = vunpack.c.l.b16 %v1271
      %v1386 = vunpack.c.l.b16 %v1274
      %v1387 = vunpack.c.l.b16 %v1277
      %v1388 = vunpack.c.l.b16 %v1280
      %v1389 = vunpack.c.l.b16 %v1283
      %v1390 = vunpack.c.l.b16 %v1286
      %v1391 = vunpack.c.l.b16 %v1289
      %v1392 = vunpack.c.l.b16 %v1292
      %v1393 = vunpack.c.l.b16 %v1295
      %v1394 = vunpack.c.l.b16 %v1298
      %v1395 = vpack.c.b16 %v1383, %v1383
      %v1396 = vpack.c.b16 %v1384, %v1384
      %v1397 = vpack.c.b16 %v1385, %v1385
      %v1398 = vpack.c.b16 %v1386, %v1386
      %v1399 = vpack.c.b16 %v1387, %v1387
      %v1400 = vpack.c.b16 %v1388, %v1388
      %v1401 = vpack.c.b16 %v1389, %v1389
      %v1402 = vpack.c.b16 %v1390, %v1390
      %v1403 = vpack.c.b16 %v1391, %v1391
      %v1404 = vpack.c.b16 %v1392, %v1392
      %v1405 = vpack.c.b16 %v1393, %v1393
      %v1406 = vpack.c.b16 %v1394, %v1394
      %v1408 = vshrl.u32 %v1347, 16
      %v1410 = vshll.u32 %v1347, 16
      %v1412 = vrot.slane %v1410, 1
      %v1413 = vor.u32 %v1408, %v1412
      %v1415 = vshll.u32 %v1395, 16
      %v1417 = vrot.slane %v1415, 1
      %v1418 = vsel %vm1008, %v1413, %v1417
      %v1420 = vshrl.u32 %v1348, 16
      %v1422 = vshll.u32 %v1348, 16
      %v1424 = vrot.slane %v1422, 1
      %v1425 = vor.u32 %v1420, %v1424
      %v1427 = vshll.u32 %v1396, 16
      %v1429 = vrot.slane %v1427, 1
      %v1430 = vsel %vm1008, %v1425, %v1429
      %v1432 = vshrl.u32 %v1349, 16
      %v1434 = vshll.u32 %v1349, 16
      %v1436 = vrot.slane %v1434, 1
      %v1437 = vor.u32 %v1432, %v1436
      %v1439 = vshll.u32 %v1397, 16
      %v1441 = vrot.slane %v1439, 1
      %v1442 = vsel %vm1008, %v1437, %v1441
      %v1444 = vshrl.u32 %v1350, 16
      %v1446 = vshll.u32 %v1350, 16
      %v1448 = vrot.slane %v1446, 1
      %v1449 = vor.u32 %v1444, %v1448
      %v1451 = vshll.u32 %v1398, 16
      %v1453 = vrot.slane %v1451, 1
      %v1454 = vsel %vm1008, %v1449, %v1453
      %v1456 = vshrl.u32 %v1351, 16
      %v1458 = vshll.u32 %v1351, 16
      %v1460 = vrot.slane %v1458, 1
      %v1461 = vor.u32 %v1456, %v1460
      %v1463 = vshll.u32 %v1399, 16
      %v1465 = vrot.slane %v1463, 1
      %v1466 = vsel %vm1008, %v1461, %v1465
      %v1468 = vshrl.u32 %v1352, 16
      %v1470 = vshll.u32 %v1352, 16
      %v1472 = vrot.slane %v1470, 1
      %v1473 = vor.u32 %v1468, %v1472
      %v1475 = vshll.u32 %v1400, 16
      %v1477 = vrot.slane %v1475, 1
      %v1478 = vsel %vm1008, %v1473, %v1477
      %v1480 = vshrl.u32 %v1353, 16
      %v1482 = vshll.u32 %v1353, 16
      %v1484 = vrot.slane %v1482, 1
      %v1485 = vor.u32 %v1480, %v1484
      %v1487 = vshll.u32 %v1401, 16
      %v1489 = vrot.slane %v1487, 1
      %v1490 = vsel %vm1008, %v1485, %v1489
      %v1492 = vshrl.u32 %v1354, 16
      %v1494 = vshll.u32 %v1354, 16
      %v1496 = vrot.slane %v1494, 1
      %v1497 = vor.u32 %v1492, %v1496
      %v1499 = vshll.u32 %v1402, 16
      %v1501 = vrot.slane %v1499, 1
      %v1502 = vsel %vm1008, %v1497, %v1501
      %v1504 = vshrl.u32 %v1355, 16
      %v1506 = vshll.u32 %v1355, 16
      %v1508 = vrot.slane %v1506, 1
      %v1509 = vor.u32 %v1504, %v1508
      %v1511 = vshll.u32 %v1403, 16
      %v1513 = vrot.slane %v1511, 1
      %v1514 = vsel %vm1008, %v1509, %v1513
      %v1516 = vshrl.u32 %v1356, 16
      %v1518 = vshll.u32 %v1356, 16
      %v1520 = vrot.slane %v1518, 1
      %v1521 = vor.u32 %v1516, %v1520
      %v1523 = vshll.u32 %v1404, 16
      %v1525 = vrot.slane %v1523, 1
      %v1526 = vsel %vm1008, %v1521, %v1525
      %v1528 = vshrl.u32 %v1357, 16
      %v1530 = vshll.u32 %v1357, 16
      %v1532 = vrot.slane %v1530, 1
      %v1533 = vor.u32 %v1528, %v1532
      %v1535 = vshll.u32 %v1405, 16
      %v1537 = vrot.slane %v1535, 1
      %v1538 = vsel %vm1008, %v1533, %v1537
      %v1540 = vshrl.u32 %v1358, 16
      %v1542 = vshll.u32 %v1358, 16
      %v1544 = vrot.slane %v1542, 1
      %v1545 = vor.u32 %v1540, %v1544
      %v1547 = vshll.u32 %v1406, 16
      %v1549 = vrot.slane %v1547, 1
      %v1550 = vsel %vm1008, %v1545, %v1549
      %v1563 = vrot.slane %v1347, 1
      %v1564 = vrot.slane %v1395, 1
      %v1565 = vsel %vm1165, %v1563, %v1564
      %v1566 = vrot.slane %v1348, 1
      %v1567 = vrot.slane %v1396, 1
      %v1568 = vsel %vm1165, %v1566, %v1567
      %v1569 = vrot.slane %v1349, 1
      %v1570 = vrot.slane %v1397, 1
      %v1571 = vsel %vm1165, %v1569, %v1570
      %v1572 = vrot.slane %v1350, 1
      %v1573 = vrot.slane %v1398, 1
      %v1574 = vsel %vm1165, %v1572, %v1573
      %v1575 = vrot.slane %v1351, 1
      %v1576 = vrot.slane %v1399, 1
      %v1577 = vsel %vm1165, %v1575, %v1576
      %v1578 = vrot.slane %v1352, 1
      %v1579 = vrot.slane %v1400, 1
      %v1580 = vsel %vm1165, %v1578, %v1579
      %v1581 = vrot.slane %v1353, 1
      %v1582 = vrot.slane %v1401, 1
      %v1583 = vsel %vm1165, %v1581, %v1582
      %v1584 = vrot.slane %v1354, 1
      %v1585 = vrot.slane %v1402, 1
      %v1586 = vsel %vm1165, %v1584, %v1585
      %v1587 = vrot.slane %v1355, 1
      %v1588 = vrot.slane %v1403, 1
      %v1589 = vsel %vm1165, %v1587, %v1588
      %v1590 = vrot.slane %v1356, 1
      %v1591 = vrot.slane %v1404, 1
      %v1592 = vsel %vm1165, %v1590, %v1591
      %v1593 = vrot.slane %v1357, 1
      %v1594 = vrot.slane %v1405, 1
      %v1595 = vsel %vm1165, %v1593, %v1594
      %v1596 = vrot.slane %v1358, 1
      %v1597 = vrot.slane %v1406, 1
      %v1598 = vsel %vm1165, %v1596, %v1597
      %s1611 = scalar_lea.vmem %s1, 192
      %v1612 = vld [vmem:[%s1611] sm:$0xf]
      %v1613 = vld [vmem:[%s1611 + $0x4] sm:$0xf]
      %v1614 = vld [vmem:[%s1611 + $0x8] sm:$0xf]
      %v1615 = vld [vmem:[%s1611 + $0xc] sm:$0xf]
      %v1616 = vld [vmem:[%s1611 + $0x10] sm:$0xf]
      %v1617 = vld [vmem:[%s1611 + $0x14] sm:$0xf]
      %v1618 = vld [vmem:[%s1611 + $0x18] sm:$0xf]
      %v1619 = vld [vmem:[%s1611 + $0x1c] sm:$0xf]
      %v1620 = vld [vmem:[%s1611 + $0x20] sm:$0xf]
      %v1621 = vld [vmem:[%s1611 + $0x24] sm:$0xf]
      %v1622 = vld [vmem:[%s1611 + $0x28] sm:$0xf]
      %v1623 = vld [vmem:[%s1611 + $0x2c] sm:$0xf]
      %v1624 = vld [vmem:[%s1611 + $0x30] sm:$0xf]
      %v1625 = vld [vmem:[%s1611 + $0x34] sm:$0xf]
      %v1626 = vld [vmem:[%s1611 + $0x38] sm:$0xf]
      %v1627 = vld [vmem:[%s1611 + $0x3c] sm:$0xf]
      %v1628 = vld [vmem:[%s1611 + $0x40] sm:$0xf]
      %v1629 = vld [vmem:[%s1611 + $0x44] sm:$0xf]
      %v1630 = vld [vmem:[%s1611 + $0x48] sm:$0xf]
      %v1631 = vld [vmem:[%s1611 + $0x4c] sm:$0xf]
      %v1632 = vld [vmem:[%s1611 + $0x50] sm:$0xf]
      %v1633 = vld [vmem:[%s1611 + $0x54] sm:$0xf]
      %v1634 = vld [vmem:[%s1611 + $0x58] sm:$0xf]
      %v1635 = vld [vmem:[%s1611 + $0x5c] sm:$0xf]
      %v1636 = vld [vmem:[%s1611 + $0x60] sm:$0xf]
      %v1637 = vld [vmem:[%s1611 + $0x64] sm:$0xf]
      %v1638 = vld [vmem:[%s1611 + $0x68] sm:$0xf]
      %v1639 = vld [vmem:[%s1611 + $0x6c] sm:$0xf]
      %v1640 = vld [vmem:[%s1611 + $0x70] sm:$0xf]
      %v1641 = vld [vmem:[%s1611 + $0x74] sm:$0xf]
      %v1642 = vld [vmem:[%s1611 + $0x78] sm:$0xf]
      %v1643 = vld [vmem:[%s1611 + $0x7c] sm:$0xf]
      %v1644 = vld [vmem:[%s1611 + $0x80] sm:$0xf]
      %v1645 = vld [vmem:[%s1611 + $0x84] sm:$0xf]
      %v1646 = vld [vmem:[%s1611 + $0x88] sm:$0xf]
      %v1647 = vld [vmem:[%s1611 + $0x8c] sm:$0xf]
      %v1648 = vld [vmem:[%s1611 + $0x90] sm:$0xf]
      %v1649 = vld [vmem:[%s1611 + $0x94] sm:$0xf]
      %v1650 = vld [vmem:[%s1611 + $0x98] sm:$0xf]
      %v1651 = vld [vmem:[%s1611 + $0x9c] sm:$0xf]
      %v1652 = vld [vmem:[%s1611 + $0xa0] sm:$0xf]
      %v1653 = vld [vmem:[%s1611 + $0xa4] sm:$0xf]
      %v1654 = vld [vmem:[%s1611 + $0xa8] sm:$0xf]
      %v1655 = vld [vmem:[%s1611 + $0xac] sm:$0xf]
      %v1656 = vld [vmem:[%s1611 + $0xb0] sm:$0xf]
      %v1657 = vld [vmem:[%s1611 + $0xb4] sm:$0xf]
      %v1658 = vld [vmem:[%s1611 + $0xb8] sm:$0xf]
      %v1659 = vld [vmem:[%s1611 + $0xbc] sm:$0xf]
      %v1708 = vunpack.c.l.b16 %v1612
      %v1709 = vunpack.c.l.b16 %v1613
      %v1710 = vunpack.c.l.b16 %v1614
      %v1711 = vunpack.c.l.b16 %v1615
      %v1712 = vunpack.c.l.b16 %v1616
      %v1713 = vunpack.c.l.b16 %v1617
      %v1714 = vunpack.c.l.b16 %v1618
      %v1715 = vunpack.c.l.b16 %v1619
      %v1716 = vunpack.c.l.b16 %v1620
      %v1717 = vunpack.c.l.b16 %v1621
      %v1718 = vunpack.c.l.b16 %v1622
      %v1719 = vunpack.c.l.b16 %v1623
      %v1720 = vunpack.c.l.b16 %v1624
      %v1721 = vunpack.c.l.b16 %v1625
      %v1722 = vunpack.c.l.b16 %v1626
      %v1723 = vunpack.c.l.b16 %v1627
      %v1724 = vunpack.c.l.b16 %v1628
      %v1725 = vunpack.c.l.b16 %v1629
      %v1726 = vunpack.c.l.b16 %v1630
      %v1727 = vunpack.c.l.b16 %v1631
      %v1728 = vunpack.c.l.b16 %v1632
      %v1729 = vunpack.c.l.b16 %v1633
      %v1730 = vunpack.c.l.b16 %v1634
      %v1731 = vunpack.c.l.b16 %v1635
      %v1732 = vunpack.c.l.b16 %v1636
      %v1733 = vunpack.c.l.b16 %v1637
      %v1734 = vunpack.c.l.b16 %v1638
      %v1735 = vunpack.c.l.b16 %v1639
      %v1736 = vunpack.c.l.b16 %v1640
      %v1737 = vunpack.c.l.b16 %v1641
      %v1738 = vunpack.c.l.b16 %v1642
      %v1739 = vunpack.c.l.b16 %v1643
      %v1740 = vunpack.c.l.b16 %v1644
      %v1741 = vunpack.c.l.b16 %v1645
      %v1742 = vunpack.c.l.b16 %v1646
      %v1743 = vunpack.c.l.b16 %v1647
      %v1744 = vunpack.c.l.b16 %v1648
      %v1745 = vunpack.c.l.b16 %v1649
      %v1746 = vunpack.c.l.b16 %v1650
      %v1747 = vunpack.c.l.b16 %v1651
      %v1748 = vunpack.c.l.b16 %v1652
      %v1749 = vunpack.c.l.b16 %v1653
      %v1750 = vunpack.c.l.b16 %v1654
      %v1751 = vunpack.c.l.b16 %v1655
      %v1752 = vunpack.c.l.b16 %v1656
      %v1753 = vunpack.c.l.b16 %v1657
      %v1754 = vunpack.c.l.b16 %v1658
      %v1755 = vunpack.c.l.b16 %v1659
      %v1756 = vpack.c.b16 %v1709, %v1708
      %v1757 = vpack.c.b16 %v1711, %v1710
      %v1758 = vpack.c.b16 %v1713, %v1712
      %v1759 = vpack.c.b16 %v1715, %v1714
      %v1760 = vpack.c.b16 %v1717, %v1716
      %v1761 = vpack.c.b16 %v1719, %v1718
      %v1762 = vpack.c.b16 %v1721, %v1720
      %v1763 = vpack.c.b16 %v1723, %v1722
      %v1764 = vpack.c.b16 %v1725, %v1724
      %v1765 = vpack.c.b16 %v1727, %v1726
      %v1766 = vpack.c.b16 %v1729, %v1728
      %v1767 = vpack.c.b16 %v1731, %v1730
      %v1768 = vpack.c.b16 %v1733, %v1732
      %v1769 = vpack.c.b16 %v1735, %v1734
      %v1770 = vpack.c.b16 %v1737, %v1736
      %v1771 = vpack.c.b16 %v1739, %v1738
      %v1772 = vpack.c.b16 %v1741, %v1740
      %v1773 = vpack.c.b16 %v1743, %v1742
      %v1774 = vpack.c.b16 %v1745, %v1744
      %v1775 = vpack.c.b16 %v1747, %v1746
      %v1776 = vpack.c.b16 %v1749, %v1748
      %v1777 = vpack.c.b16 %v1751, %v1750
      %v1778 = vpack.c.b16 %v1753, %v1752
      %v1779 = vpack.c.b16 %v1755, %v1754
      %1804 = vmatprep.subr.bf16.mxu0 0
      %1805 = vmatpush1.bf16.msra.mxu0 %v1763
      %1806 = vmatprep.subr.bf16.mxu0 0
      %1807 = vmatpush1.bf16.msra.mxu0 %v1762
      %1808 = vmatprep.subr.bf16.mxu0 0
      %1809 = vmatpush1.bf16.msra.mxu0 %v1761
      %1810 = vmatprep.subr.bf16.mxu0 0
      %1811 = vmatpush1.bf16.msra.mxu0 %v1760
      %1812 = vmatprep.subr.bf16.mxu0 0
      %1813 = vmatpush1.bf16.msra.mxu0 %v1759
      %1814 = vmatprep.subr.bf16.mxu0 0
      %1815 = vmatpush1.bf16.msra.mxu0 %v1758
      %1816 = vmatprep.subr.bf16.mxu0 0
      %1817 = vmatpush1.bf16.msra.mxu0 %v1757
      %1818 = vmatprep.subr.bf16.mxu0 0
      %1819 = vmatpush1.bf16.msra.mxu0 %v1756
      %1820 = vmatprep.subr.bf16.mxu0 0
      %1821 = vmatpush2.bf16.msra.mxu0 %v1771
      %1822 = vmatprep.subr.bf16.mxu0 0
      %1823 = vmatpush2.bf16.msra.mxu0 %v1770
      %1824 = vmatprep.subr.bf16.mxu0 0
      %1825 = vmatpush2.bf16.msra.mxu0 %v1769
      %1826 = vmatprep.subr.bf16.mxu0 0
      %1827 = vmatpush2.bf16.msra.mxu0 %v1768
      %1828 = vmatprep.subr.bf16.mxu0 0
      %1829 = vmatpush2.bf16.msra.mxu0 %v1767
      %1830 = vmatprep.subr.bf16.mxu0 0
      %1831 = vmatpush2.bf16.msra.mxu0 %v1766
      %1832 = vmatprep.subr.bf16.mxu0 0
      %1833 = vmatpush2.bf16.msra.mxu0 %v1765
      %1834 = vmatprep.subr.bf16.mxu0 0
      %1835 = vmatpush2.bf16.msra.mxu0 %v1764
      %1836 = vmatprep.mubr.bf16.mxu0 %v1418
      %1837 = vmatmul.mubr.bf16.gmra.mxu0 %v1347
      %v1838 = vpop.f32.mrf.mxu0
      %v1839 = vadd.f32 0.0, %v1838
      %v1840 = vpop.f32.mrf.mxu0
      %v1841 = vpop.f32.mrf.mxu0
      %v1842 = vadd.f32 0.0, %v1841
      %v1843 = vpop.f32.mrf.mxu0
      %1844 = vmatprep.mubr.bf16.mxu0 %v1430
      %1845 = vmatmul.mubr.bf16.gmra.mxu0 %v1348
      %v1846 = vpop.f32.mrf.mxu0
      %v1847 = vadd.f32 0.0, %v1846
      %v1848 = vpop.f32.mrf.mxu0
      %v1849 = vpop.f32.mrf.mxu0
      %v1850 = vadd.f32 0.0, %v1849
      %v1851 = vpop.f32.mrf.mxu0
      %1852 = vmatprep.mubr.bf16.mxu0 %v1442
      %1853 = vmatmul.mubr.bf16.gmra.mxu0 %v1349
      %v1854 = vpop.f32.mrf.mxu0
      %v1855 = vadd.f32 0.0, %v1854
      %v1856 = vpop.f32.mrf.mxu0
      %v1857 = vpop.f32.mrf.mxu0
      %v1858 = vadd.f32 0.0, %v1857
      %v1859 = vpop.f32.mrf.mxu0
      %1860 = vmatprep.mubr.bf16.mxu0 %v1454
      %1861 = vmatmul.mubr.bf16.gmra.mxu0 %v1350
      %v1862 = vpop.f32.mrf.mxu0
      %v1863 = vadd.f32 0.0, %v1862
      %v1864 = vpop.f32.mrf.mxu0
      %v1865 = vpop.f32.mrf.mxu0
      %v1866 = vadd.f32 0.0, %v1865
      %v1867 = vpop.f32.mrf.mxu0
      %1868 = vmatprep.mubr.bf16.mxu0 %v1466
      %1869 = vmatmul.mubr.bf16.gmra.mxu0 %v1351
      %v1870 = vpop.f32.mrf.mxu0
      %v1871 = vadd.f32 0.0, %v1870
      %v1872 = vpop.f32.mrf.mxu0
      %v1873 = vpop.f32.mrf.mxu0
      %v1874 = vadd.f32 0.0, %v1873
      %v1875 = vpop.f32.mrf.mxu0
      %1876 = vmatprep.mubr.bf16.mxu0 %v1478
      %1877 = vmatmul.mubr.bf16.gmra.mxu0 %v1352
      %v1878 = vpop.f32.mrf.mxu0
      %v1879 = vadd.f32 0.0, %v1878
      %v1880 = vpop.f32.mrf.mxu0
      %v1881 = vpop.f32.mrf.mxu0
      %v1882 = vadd.f32 0.0, %v1881
      %v1883 = vpop.f32.mrf.mxu0
      %1884 = vmatprep.mubr.bf16.mxu0 %v1490
      %1885 = vmatmul.mubr.bf16.gmra.mxu0 %v1353
      %v1886 = vpop.f32.mrf.mxu0
      %v1887 = vadd.f32 0.0, %v1886
      %v1888 = vpop.f32.mrf.mxu0
      %v1889 = vpop.f32.mrf.mxu0
      %v1890 = vadd.f32 0.0, %v1889
      %v1891 = vpop.f32.mrf.mxu0
      %1892 = vmatprep.mubr.bf16.mxu0 %v1502
      %1893 = vmatmul.mubr.bf16.gmra.mxu0 %v1354
      %v1894 = vpop.f32.mrf.mxu0
      %v1895 = vadd.f32 0.0, %v1894
      %v1896 = vpop.f32.mrf.mxu0
      %v1897 = vpop.f32.mrf.mxu0
      %v1898 = vadd.f32 0.0, %v1897
      %v1899 = vpop.f32.mrf.mxu0
      %1900 = vmatprep.mubr.bf16.mxu0 %v1514
      %1901 = vmatmul.mubr.bf16.gmra.mxu0 %v1355
      %v1902 = vpop.f32.mrf.mxu0
      %v1903 = vadd.f32 0.0, %v1902
      %v1904 = vpop.f32.mrf.mxu0
      %v1905 = vpop.f32.mrf.mxu0
      %v1906 = vadd.f32 0.0, %v1905
      %v1907 = vpop.f32.mrf.mxu0
      %1908 = vmatprep.mubr.bf16.mxu0 %v1526
      %1909 = vmatmul.mubr.bf16.gmra.mxu0 %v1356
      %v1910 = vpop.f32.mrf.mxu0
      %v1911 = vadd.f32 0.0, %v1910
      %v1912 = vpop.f32.mrf.mxu0
      %v1913 = vpop.f32.mrf.mxu0
      %v1914 = vadd.f32 0.0, %v1913
      %v1915 = vpop.f32.mrf.mxu0
      %1916 = vmatprep.mubr.bf16.mxu0 %v1538
      %1917 = vmatmul.mubr.bf16.gmra.mxu0 %v1357
      %v1918 = vpop.f32.mrf.mxu0
      %v1919 = vadd.f32 0.0, %v1918
      %v1920 = vpop.f32.mrf.mxu0
      %v1921 = vpop.f32.mrf.mxu0
      %v1922 = vadd.f32 0.0, %v1921
      %v1923 = vpop.f32.mrf.mxu0
      %1924 = vmatprep.mubr.bf16.mxu0 %v1550
      %1925 = vmatmul.mubr.bf16.gmra.mxu0 %v1358
      %v1926 = vpop.f32.mrf.mxu0
      %v1927 = vadd.f32 0.0, %v1926
      %v1928 = vpop.f32.mrf.mxu0
      %v1929 = vpop.f32.mrf.mxu0
      %v1930 = vadd.f32 0.0, %v1929
      %v1931 = vpop.f32.mrf.mxu0
      %1932 = vdwg.mxu0
      %1933 = vmatprep.subr.bf16.mxu0 0
      %1934 = vmatpush1.bf16.msra.mxu0 %v1779
      %1935 = vmatprep.subr.bf16.mxu0 0
      %1936 = vmatpush1.bf16.msra.mxu0 %v1778
      %1937 = vmatprep.subr.bf16.mxu0 0
      %1938 = vmatpush1.bf16.msra.mxu0 %v1777
      %1939 = vmatprep.subr.bf16.mxu0 0
      %1940 = vmatpush1.bf16.msra.mxu0 %v1776
      %1941 = vmatprep.subr.bf16.mxu0 0
      %1942 = vmatpush1.bf16.msra.mxu0 %v1775
      %1943 = vmatprep.subr.bf16.mxu0 0
      %1944 = vmatpush1.bf16.msra.mxu0 %v1774
      %1945 = vmatprep.subr.bf16.mxu0 0
      %1946 = vmatpush1.bf16.msra.mxu0 %v1773
      %1947 = vmatprep.subr.bf16.mxu0 0
      %1948 = vmatpush1.bf16.msra.mxu0 %v1772
      %1949 = vmatprep.subr.bf16.mxu0 0
      %1950 = vmatpush2.bf16.msra.mxu0 0
      %1951 = vmatprep.subr.bf16.mxu0 0
      %1952 = vmatpush2.bf16.msra.mxu0 0
      %1953 = vmatprep.subr.bf16.mxu0 0
      %1954 = vmatpush2.bf16.msra.mxu0 0
      %1955 = vmatprep.subr.bf16.mxu0 0
      %1956 = vmatpush2.bf16.msra.mxu0 0
      %1957 = vmatprep.subr.bf16.mxu0 0
      %1958 = vmatpush2.bf16.msra.mxu0 0
      %1959 = vmatprep.subr.bf16.mxu0 0
      %1960 = vmatpush2.bf16.msra.mxu0 0
      %1961 = vmatprep.subr.bf16.mxu0 0
      %1962 = vmatpush2.bf16.msra.mxu0 0
      %1963 = vmatprep.subr.bf16.mxu0 0
      %1964 = vmatpush2.bf16.msra.mxu0 0
      %1965 = vmatprep.mubr.bf16.mxu0 0
      %1966 = vmatmul.mubr.bf16.gmra.mxu0 %v1565
      %v1967 = vpop.f32.mrf.mxu0
      %v1968 = vadd.f32 %v1839, %v1967
      %v1969 = vpop.f32.mrf.mxu0
      %v1970 = vpop.f32.mrf.mxu0
      %v1971 = vadd.f32 %v1842, %v1970
      %v1972 = vpop.f32.mrf.mxu0
      %1973 = vmatprep.mubr.bf16.mxu0 0
      %1974 = vmatmul.mubr.bf16.gmra.mxu0 %v1568
      %v1975 = vpop.f32.mrf.mxu0
      %v1976 = vadd.f32 %v1847, %v1975
      %v1977 = vpop.f32.mrf.mxu0
      %v1978 = vpop.f32.mrf.mxu0
      %v1979 = vadd.f32 %v1850, %v1978
      %v1980 = vpop.f32.mrf.mxu0
      %1981 = vmatprep.mubr.bf16.mxu0 0
      %1982 = vmatmul.mubr.bf16.gmra.mxu0 %v1571
      %v1983 = vpop.f32.mrf.mxu0
      %v1984 = vadd.f32 %v1855, %v1983
      %v1985 = vpop.f32.mrf.mxu0
      %v1986 = vpop.f32.mrf.mxu0
      %v1987 = vadd.f32 %v1858, %v1986
      %v1988 = vpop.f32.mrf.mxu0
      %1989 = vmatprep.mubr.bf16.mxu0 0
      %1990 = vmatmul.mubr.bf16.gmra.mxu0 %v1574
      %v1991 = vpop.f32.mrf.mxu0
      %v1992 = vadd.f32 %v1863, %v1991
      %v1993 = vpop.f32.mrf.mxu0
      %v1994 = vpop.f32.mrf.mxu0
      %v1995 = vadd.f32 %v1866, %v1994
      %v1996 = vpop.f32.mrf.mxu0
      %1997 = vmatprep.mubr.bf16.mxu0 0
      %1998 = vmatmul.mubr.bf16.gmra.mxu0 %v1577
      %v1999 = vpop.f32.mrf.mxu0
      %v2000 = vadd.f32 %v1871, %v1999
      %v2001 = vpop.f32.mrf.mxu0
      %v2002 = vpop.f32.mrf.mxu0
      %v2003 = vadd.f32 %v1874, %v2002
      %v2004 = vpop.f32.mrf.mxu0
      %2005 = vmatprep.mubr.bf16.mxu0 0
      %2006 = vmatmul.mubr.bf16.gmra.mxu0 %v1580
      %v2007 = vpop.f32.mrf.mxu0
      %v2008 = vadd.f32 %v1879, %v2007
      %v2009 = vpop.f32.mrf.mxu0
      %v2010 = vpop.f32.mrf.mxu0
      %v2011 = vadd.f32 %v1882, %v2010
      %v2012 = vpop.f32.mrf.mxu0
      %2013 = vmatprep.mubr.bf16.mxu0 0
      %2014 = vmatmul.mubr.bf16.gmra.mxu0 %v1583
      %v2015 = vpop.f32.mrf.mxu0
      %v2016 = vadd.f32 %v1887, %v2015
      %v2017 = vpop.f32.mrf.mxu0
      %v2018 = vpop.f32.mrf.mxu0
      %v2019 = vadd.f32 %v1890, %v2018
      %v2020 = vpop.f32.mrf.mxu0
      %2021 = vmatprep.mubr.bf16.mxu0 0
      %2022 = vmatmul.mubr.bf16.gmra.mxu0 %v1586
      %v2023 = vpop.f32.mrf.mxu0
      %v2024 = vadd.f32 %v1895, %v2023
      %v2025 = vpop.f32.mrf.mxu0
      %v2026 = vpop.f32.mrf.mxu0
      %v2027 = vadd.f32 %v1898, %v2026
      %v2028 = vpop.f32.mrf.mxu0
      %2029 = vmatprep.mubr.bf16.mxu0 0
      %2030 = vmatmul.mubr.bf16.gmra.mxu0 %v1589
      %v2031 = vpop.f32.mrf.mxu0
      %v2032 = vadd.f32 %v1903, %v2031
      %v2033 = vpop.f32.mrf.mxu0
      %v2034 = vpop.f32.mrf.mxu0
      %v2035 = vadd.f32 %v1906, %v2034
      %v2036 = vpop.f32.mrf.mxu0
      %2037 = vmatprep.mubr.bf16.mxu0 0
      %2038 = vmatmul.mubr.bf16.gmra.mxu0 %v1592
      %v2039 = vpop.f32.mrf.mxu0
      %v2040 = vadd.f32 %v1911, %v2039
      %v2041 = vpop.f32.mrf.mxu0
      %v2042 = vpop.f32.mrf.mxu0
      %v2043 = vadd.f32 %v1914, %v2042
      %v2044 = vpop.f32.mrf.mxu0
      %2045 = vmatprep.mubr.bf16.mxu0 0
      %2046 = vmatmul.mubr.bf16.gmra.mxu0 %v1595
      %v2047 = vpop.f32.mrf.mxu0
      %v2048 = vadd.f32 %v1919, %v2047
      %v2049 = vpop.f32.mrf.mxu0
      %v2050 = vpop.f32.mrf.mxu0
      %v2051 = vadd.f32 %v1922, %v2050
      %v2052 = vpop.f32.mrf.mxu0
      %2053 = vmatprep.mubr.bf16.mxu0 0
      %2054 = vmatmul.mubr.bf16.gmra.mxu0 %v1598
      %v2055 = vpop.f32.mrf.mxu0
      %v2056 = vadd.f32 %v1927, %v2055
      %v2057 = vpop.f32.mrf.mxu0
      %v2058 = vpop.f32.mrf.mxu0
      %v2059 = vadd.f32 %v1930, %v2058
      %v2060 = vpop.f32.mrf.mxu0
      %2061 = vdwg.mxu0
      %v2110 = vunpack.c.l.b16 %v1214
      %v2111 = vunpack.c.l.b16 %v1215
      %v2112 = vunpack.c.l.b16 %v1216
      %v2113 = vunpack.c.l.b16 %v1217
      %v2114 = vunpack.c.l.b16 %v1218
      %v2115 = vunpack.c.l.b16 %v1219
      %v2116 = vunpack.c.l.b16 %v1220
      %v2117 = vunpack.c.l.b16 %v1221
      %v2118 = vunpack.c.l.b16 %v1222
      %v2119 = vunpack.c.l.b16 %v1223
      %v2120 = vunpack.c.l.b16 %v1224
      %v2121 = vunpack.c.l.b16 %v1225
      %v2122 = vunpack.c.l.b16 %v1226
      %v2123 = vunpack.c.l.b16 %v1227
      %v2124 = vunpack.c.l.b16 %v1228
      %v2125 = vunpack.c.l.b16 %v1229
      %v2126 = vunpack.c.l.b16 %v1230
      %v2127 = vunpack.c.l.b16 %v1231
      %v2128 = vunpack.c.l.b16 %v1232
      %v2129 = vunpack.c.l.b16 %v1233
      %v2130 = vunpack.c.l.b16 %v1234
      %v2131 = vunpack.c.l.b16 %v1235
      %v2132 = vunpack.c.l.b16 %v1236
      %v2133 = vunpack.c.l.b16 %v1237
      %v2134 = vunpack.c.l.b16 %v1238
      %v2135 = vunpack.c.l.b16 %v1239
      %v2136 = vunpack.c.l.b16 %v1240
      %v2137 = vunpack.c.l.b16 %v1241
      %v2138 = vunpack.c.l.b16 %v1242
      %v2139 = vunpack.c.l.b16 %v1243
      %v2140 = vunpack.c.l.b16 %v1244
      %v2141 = vunpack.c.l.b16 %v1245
      %v2142 = vunpack.c.l.b16 %v1246
      %v2143 = vunpack.c.l.b16 %v1247
      %v2144 = vunpack.c.l.b16 %v1248
      %v2145 = vunpack.c.l.b16 %v1249
      %v2146 = vunpack.c.l.b16 %v1250
      %v2147 = vunpack.c.l.b16 %v1251
      %v2148 = vunpack.c.l.b16 %v1252
      %v2149 = vunpack.c.l.b16 %v1253
      %v2150 = vunpack.c.l.b16 %v1254
      %v2151 = vunpack.c.l.b16 %v1255
      %v2152 = vunpack.c.l.b16 %v1256
      %v2153 = vunpack.c.l.b16 %v1257
      %v2154 = vunpack.c.l.b16 %v1258
      %v2155 = vunpack.c.l.b16 %v1259
      %v2156 = vunpack.c.l.b16 %v1260
      %v2157 = vunpack.c.l.b16 %v1261
      %v2158 = vpack.c.b16 %v2111, %v2110
      %v2159 = vpack.c.b16 %v2113, %v2112
      %v2160 = vpack.c.b16 %v2115, %v2114
      %v2161 = vpack.c.b16 %v2117, %v2116
      %v2162 = vpack.c.b16 %v2119, %v2118
      %v2163 = vpack.c.b16 %v2121, %v2120
      %v2164 = vpack.c.b16 %v2123, %v2122
      %v2165 = vpack.c.b16 %v2125, %v2124
      %v2166 = vpack.c.b16 %v2127, %v2126
      %v2167 = vpack.c.b16 %v2129, %v2128
      %v2168 = vpack.c.b16 %v2131, %v2130
      %v2169 = vpack.c.b16 %v2133, %v2132
      %v2170 = vpack.c.b16 %v2135, %v2134
      %v2171 = vpack.c.b16 %v2137, %v2136
      %v2172 = vpack.c.b16 %v2139, %v2138
      %v2173 = vpack.c.b16 %v2141, %v2140
      %v2174 = vpack.c.b16 %v2143, %v2142
      %v2175 = vpack.c.b16 %v2145, %v2144
      %v2176 = vpack.c.b16 %v2147, %v2146
      %v2177 = vpack.c.b16 %v2149, %v2148
      %v2178 = vpack.c.b16 %v2151, %v2150
      %v2179 = vpack.c.b16 %v2153, %v2152
      %v2180 = vpack.c.b16 %v2155, %v2154
      %v2181 = vpack.c.b16 %v2157, %v2156
      %2206 = vmatprep.subr.bf16.mxu0 0
      %2207 = vmatpush1.bf16.msra.mxu0 %v2165
      %2208 = vmatprep.subr.bf16.mxu0 0
      %2209 = vmatpush1.bf16.msra.mxu0 %v2164
      %2210 = vmatprep.subr.bf16.mxu0 0
      %2211 = vmatpush1.bf16.msra.mxu0 %v2163
      %2212 = vmatprep.subr.bf16.mxu0 0
      %2213 = vmatpush1.bf16.msra.mxu0 %v2162
      %2214 = vmatprep.subr.bf16.mxu0 0
      %2215 = vmatpush1.bf16.msra.mxu0 %v2161
      %2216 = vmatprep.subr.bf16.mxu0 0
      %2217 = vmatpush1.bf16.msra.mxu0 %v2160
      %2218 = vmatprep.subr.bf16.mxu0 0
      %2219 = vmatpush1.bf16.msra.mxu0 %v2159
      %2220 = vmatprep.subr.bf16.mxu0 0
      %2221 = vmatpush1.bf16.msra.mxu0 %v2158
      %2222 = vmatprep.subr.bf16.mxu0 0
      %2223 = vmatpush2.bf16.msra.mxu0 %v2173
      %2224 = vmatprep.subr.bf16.mxu0 0
      %2225 = vmatpush2.bf16.msra.mxu0 %v2172
      %2226 = vmatprep.subr.bf16.mxu0 0
      %2227 = vmatpush2.bf16.msra.mxu0 %v2171
      %2228 = vmatprep.subr.bf16.mxu0 0
      %2229 = vmatpush2.bf16.msra.mxu0 %v2170
      %2230 = vmatprep.subr.bf16.mxu0 0
      %2231 = vmatpush2.bf16.msra.mxu0 %v2169
      %2232 = vmatprep.subr.bf16.mxu0 0
      %2233 = vmatpush2.bf16.msra.mxu0 %v2168
      %2234 = vmatprep.subr.bf16.mxu0 0
      %2235 = vmatpush2.bf16.msra.mxu0 %v2167
      %2236 = vmatprep.subr.bf16.mxu0 0
      %2237 = vmatpush2.bf16.msra.mxu0 %v2166
      %2238 = vmatprep.mubr.bf16.mxu0 %v1020
      %2239 = vmatmul.mubr.bf16.gmra.mxu0 %v948
      %v2240 = vpop.f32.mrf.mxu0
      %v2241 = vadd.f32 %v1968, %v2240
      %v2242 = vpop.f32.mrf.mxu0
      %v2243 = vpop.f32.mrf.mxu0
      %v2244 = vadd.f32 %v1971, %v2243
      %v2245 = vpop.f32.mrf.mxu0
      %2246 = vmatprep.mubr.bf16.mxu0 %v1032
      %2247 = vmatmul.mubr.bf16.gmra.mxu0 %v949
      %v2248 = vpop.f32.mrf.mxu0
      %v2249 = vadd.f32 %v1976, %v2248
      %v2250 = vpop.f32.mrf.mxu0
      %v2251 = vpop.f32.mrf.mxu0
      %v2252 = vadd.f32 %v1979, %v2251
      %v2253 = vpop.f32.mrf.mxu0
      %2254 = vmatprep.mubr.bf16.mxu0 %v1044
      %2255 = vmatmul.mubr.bf16.gmra.mxu0 %v950
      %v2256 = vpop.f32.mrf.mxu0
      %v2257 = vadd.f32 %v1984, %v2256
      %v2258 = vpop.f32.mrf.mxu0
      %v2259 = vpop.f32.mrf.mxu0
      %v2260 = vadd.f32 %v1987, %v2259
      %v2261 = vpop.f32.mrf.mxu0
      %2262 = vmatprep.mubr.bf16.mxu0 %v1056
      %2263 = vmatmul.mubr.bf16.gmra.mxu0 %v951
      %v2264 = vpop.f32.mrf.mxu0
      %v2265 = vadd.f32 %v1992, %v2264
      %v2266 = vpop.f32.mrf.mxu0
      %v2267 = vpop.f32.mrf.mxu0
      %v2268 = vadd.f32 %v1995, %v2267
      %v2269 = vpop.f32.mrf.mxu0
      %2270 = vmatprep.mubr.bf16.mxu0 %v1068
      %2271 = vmatmul.mubr.bf16.gmra.mxu0 %v952
      %v2272 = vpop.f32.mrf.mxu0
      %v2273 = vadd.f32 %v2000, %v2272
      %v2274 = vpop.f32.mrf.mxu0
      %v2275 = vpop.f32.mrf.mxu0
      %v2276 = vadd.f32 %v2003, %v2275
      %v2277 = vpop.f32.mrf.mxu0
      %2278 = vmatprep.mubr.bf16.mxu0 %v1080
      %2279 = vmatmul.mubr.bf16.gmra.mxu0 %v953
      %v2280 = vpop.f32.mrf.mxu0
      %v2281 = vadd.f32 %v2008, %v2280
      %v2282 = vpop.f32.mrf.mxu0
      %v2283 = vpop.f32.mrf.mxu0
      %v2284 = vadd.f32 %v2011, %v2283
      %v2285 = vpop.f32.mrf.mxu0
      %2286 = vmatprep.mubr.bf16.mxu0 %v1092
      %2287 = vmatmul.mubr.bf16.gmra.mxu0 %v954
      %v2288 = vpop.f32.mrf.mxu0
      %v2289 = vadd.f32 %v2016, %v2288
      %v2290 = vpop.f32.mrf.mxu0
      %v2291 = vpop.f32.mrf.mxu0
      %v2292 = vadd.f32 %v2019, %v2291
      %v2293 = vpop.f32.mrf.mxu0
      %2294 = vmatprep.mubr.bf16.mxu0 %v1104
      %2295 = vmatmul.mubr.bf16.gmra.mxu0 %v955
      %v2296 = vpop.f32.mrf.mxu0
      %v2297 = vadd.f32 %v2024, %v2296
      %v2298 = vpop.f32.mrf.mxu0
      %v2299 = vpop.f32.mrf.mxu0
      %v2300 = vadd.f32 %v2027, %v2299
      %v2301 = vpop.f32.mrf.mxu0
      %2302 = vmatprep.mubr.bf16.mxu0 %v1116
      %2303 = vmatmul.mubr.bf16.gmra.mxu0 %v956
      %v2304 = vpop.f32.mrf.mxu0
      %v2305 = vadd.f32 %v2032, %v2304
      %v2306 = vpop.f32.mrf.mxu0
      %v2307 = vpop.f32.mrf.mxu0
      %v2308 = vadd.f32 %v2035, %v2307
      %v2309 = vpop.f32.mrf.mxu0
      %2310 = vmatprep.mubr.bf16.mxu0 %v1128
      %2311 = vmatmul.mubr.bf16.gmra.mxu0 %v957
      %v2312 = vpop.f32.mrf.mxu0
      %v2313 = vadd.f32 %v2040, %v2312
      %v2314 = vpop.f32.mrf.mxu0
      %v2315 = vpop.f32.mrf.mxu0
      %v2316 = vadd.f32 %v2043, %v2315
      %v2317 = vpop.f32.mrf.mxu0
      %2318 = vmatprep.mubr.bf16.mxu0 %v1140
      %2319 = vmatmul.mubr.bf16.gmra.mxu0 %v958
      %v2320 = vpop.f32.mrf.mxu0
      %v2321 = vadd.f32 %v2048, %v2320
      %v2322 = vpop.f32.mrf.mxu0
      %v2323 = vpop.f32.mrf.mxu0
      %v2324 = vadd.f32 %v2051, %v2323
      %v2325 = vpop.f32.mrf.mxu0
      %2326 = vmatprep.mubr.bf16.mxu0 %v1152
      %2327 = vmatmul.mubr.bf16.gmra.mxu0 %v959
      %v2328 = vpop.f32.mrf.mxu0
      %v2329 = vadd.f32 %v2056, %v2328
      %v2330 = vpop.f32.mrf.mxu0
      %v2331 = vpop.f32.mrf.mxu0
      %v2332 = vadd.f32 %v2059, %v2331
      %v2333 = vpop.f32.mrf.mxu0
      %2334 = vdwg.mxu0
      %2335 = vmatprep.subr.bf16.mxu0 0
      %2336 = vmatpush1.bf16.msra.mxu0 %v2181
      %2337 = vmatprep.subr.bf16.mxu0 0
      %2338 = vmatpush1.bf16.msra.mxu0 %v2180
      %2339 = vmatprep.subr.bf16.mxu0 0
      %2340 = vmatpush1.bf16.msra.mxu0 %v2179
      %2341 = vmatprep.subr.bf16.mxu0 0
      %2342 = vmatpush1.bf16.msra.mxu0 %v2178
      %2343 = vmatprep.subr.bf16.mxu0 0
      %2344 = vmatpush1.bf16.msra.mxu0 %v2177
      %2345 = vmatprep.subr.bf16.mxu0 0
      %2346 = vmatpush1.bf16.msra.mxu0 %v2176
      %2347 = vmatprep.subr.bf16.mxu0 0
      %2348 = vmatpush1.bf16.msra.mxu0 %v2175
      %2349 = vmatprep.subr.bf16.mxu0 0
      %2350 = vmatpush1.bf16.msra.mxu0 %v2174
      %2351 = vmatprep.subr.bf16.mxu0 0
      %2352 = vmatpush2.bf16.msra.mxu0 0
      %2353 = vmatprep.subr.bf16.mxu0 0
      %2354 = vmatpush2.bf16.msra.mxu0 0
      %2355 = vmatprep.subr.bf16.mxu0 0
      %2356 = vmatpush2.bf16.msra.mxu0 0
      %2357 = vmatprep.subr.bf16.mxu0 0
      %2358 = vmatpush2.bf16.msra.mxu0 0
      %2359 = vmatprep.subr.bf16.mxu0 0
      %2360 = vmatpush2.bf16.msra.mxu0 0
      %2361 = vmatprep.subr.bf16.mxu0 0
      %2362 = vmatpush2.bf16.msra.mxu0 0
      %2363 = vmatprep.subr.bf16.mxu0 0
      %2364 = vmatpush2.bf16.msra.mxu0 0
      %2365 = vmatprep.subr.bf16.mxu0 0
      %2366 = vmatpush2.bf16.msra.mxu0 0
      %2367 = vmatprep.mubr.bf16.mxu0 0
      %2368 = vmatmul.mubr.bf16.gmra.mxu0 %v1168
      %v2369 = vpop.f32.mrf.mxu0
      %v2370 = vadd.f32 %v2241, %v2369
      %v2371 = vpop.f32.mrf.mxu0
      %v2372 = vpop.f32.mrf.mxu0
      %v2373 = vadd.f32 %v2244, %v2372
      %v2374 = vpop.f32.mrf.mxu0
      %2375 = vmatprep.mubr.bf16.mxu0 0
      %2376 = vmatmul.mubr.bf16.gmra.mxu0 %v1171
      %v2377 = vpop.f32.mrf.mxu0
      %v2378 = vadd.f32 %v2249, %v2377
      %v2379 = vpop.f32.mrf.mxu0
      %v2380 = vpop.f32.mrf.mxu0
      %v2381 = vadd.f32 %v2252, %v2380
      %v2382 = vpop.f32.mrf.mxu0
      %2383 = vmatprep.mubr.bf16.mxu0 0
      %2384 = vmatmul.mubr.bf16.gmra.mxu0 %v1174
      %v2385 = vpop.f32.mrf.mxu0
      %v2386 = vadd.f32 %v2257, %v2385
      %v2387 = vpop.f32.mrf.mxu0
      %v2388 = vpop.f32.mrf.mxu0
      %v2389 = vadd.f32 %v2260, %v2388
      %v2390 = vpop.f32.mrf.mxu0
      %2391 = vmatprep.mubr.bf16.mxu0 0
      %2392 = vmatmul.mubr.bf16.gmra.mxu0 %v1177
      %v2393 = vpop.f32.mrf.mxu0
      %v2394 = vadd.f32 %v2265, %v2393
      %v2395 = vpop.f32.mrf.mxu0
      %v2396 = vpop.f32.mrf.mxu0
      %v2397 = vadd.f32 %v2268, %v2396
      %v2398 = vpop.f32.mrf.mxu0
      %2399 = vmatprep.mubr.bf16.mxu0 0
      %2400 = vmatmul.mubr.bf16.gmra.mxu0 %v1180
      %v2401 = vpop.f32.mrf.mxu0
      %v2402 = vadd.f32 %v2273, %v2401
      %v2403 = vpop.f32.mrf.mxu0
      %v2404 = vpop.f32.mrf.mxu0
      %v2405 = vadd.f32 %v2276, %v2404
      %v2406 = vpop.f32.mrf.mxu0
      %2407 = vmatprep.mubr.bf16.mxu0 0
      %2408 = vmatmul.mubr.bf16.gmra.mxu0 %v1183
      %v2409 = vpop.f32.mrf.mxu0
      %v2410 = vadd.f32 %v2281, %v2409
      %v2411 = vpop.f32.mrf.mxu0
      %v2412 = vpop.f32.mrf.mxu0
      %v2413 = vadd.f32 %v2284, %v2412
      %v2414 = vpop.f32.mrf.mxu0
      %2415 = vmatprep.mubr.bf16.mxu0 0
      %2416 = vmatmul.mubr.bf16.gmra.mxu0 %v1186
      %v2417 = vpop.f32.mrf.mxu0
      %v2418 = vadd.f32 %v2289, %v2417
      %v2419 = vpop.f32.mrf.mxu0
      %v2420 = vpop.f32.mrf.mxu0
      %v2421 = vadd.f32 %v2292, %v2420
      %v2422 = vpop.f32.mrf.mxu0
      %2423 = vmatprep.mubr.bf16.mxu0 0
      %2424 = vmatmul.mubr.bf16.gmra.mxu0 %v1189
      %v2425 = vpop.f32.mrf.mxu0
      %v2426 = vadd.f32 %v2297, %v2425
      %v2427 = vpop.f32.mrf.mxu0
      %v2428 = vpop.f32.mrf.mxu0
      %v2429 = vadd.f32 %v2300, %v2428
      %v2430 = vpop.f32.mrf.mxu0
      %2431 = vmatprep.mubr.bf16.mxu0 0
      %2432 = vmatmul.mubr.bf16.gmra.mxu0 %v1192
      %v2433 = vpop.f32.mrf.mxu0
      %v2434 = vadd.f32 %v2305, %v2433
      %v2435 = vpop.f32.mrf.mxu0
      %v2436 = vpop.f32.mrf.mxu0
      %v2437 = vadd.f32 %v2308, %v2436
      %v2438 = vpop.f32.mrf.mxu0
      %2439 = vmatprep.mubr.bf16.mxu0 0
      %2440 = vmatmul.mubr.bf16.gmra.mxu0 %v1195
      %v2441 = vpop.f32.mrf.mxu0
      %v2442 = vadd.f32 %v2313, %v2441
      %v2443 = vpop.f32.mrf.mxu0
      %v2444 = vpop.f32.mrf.mxu0
      %v2445 = vadd.f32 %v2316, %v2444
      %v2446 = vpop.f32.mrf.mxu0
      %2447 = vmatprep.mubr.bf16.mxu0 0
      %2448 = vmatmul.mubr.bf16.gmra.mxu0 %v1198
      %v2449 = vpop.f32.mrf.mxu0
      %v2450 = vadd.f32 %v2321, %v2449
      %v2451 = vpop.f32.mrf.mxu0
      %v2452 = vpop.f32.mrf.mxu0
      %v2453 = vadd.f32 %v2324, %v2452
      %v2454 = vpop.f32.mrf.mxu0
      %2455 = vmatprep.mubr.bf16.mxu0 0
      %2456 = vmatmul.mubr.bf16.gmra.mxu0 %v1201
      %v2457 = vpop.f32.mrf.mxu0
      %v2458 = vadd.f32 %v2329, %v2457
      %v2459 = vpop.f32.mrf.mxu0
      %v2460 = vpop.f32.mrf.mxu0
      %v2461 = vadd.f32 %v2332, %v2460
      %v2462 = vpop.f32.mrf.mxu0
      %2463 = vdwg.mxu0
      %s2464 = scalar_lea.vmem [#allocation2], 24
      %v2465 = vld [vmem:[%s2464] sm:$0xf]
      %v2466 = vld [vmem:[%s2464 + $0x4] sm:$0xf]
      %v2467 = vld [vmem:[%s2464 + $0x8] sm:$0x1]
      %v2468 = vld [vmem:[%s2464 + $0xc] sm:$0xf]
      %v2469 = vld [vmem:[%s2464 + $0x10] sm:$0xf]
      %v2470 = vld [vmem:[%s2464 + $0x14] sm:$0x1]
      %v2471 = vld [vmem:[%s2464 + $0x18] sm:$0xf]
      %v2472 = vld [vmem:[%s2464 + $0x1c] sm:$0xf]
      %v2473 = vld [vmem:[%s2464 + $0x20] sm:$0x1]
      %v2474 = vld [vmem:[%s2464 + $0x24] sm:$0xf]
      %v2475 = vld [vmem:[%s2464 + $0x28] sm:$0xf]
      %v2476 = vld [vmem:[%s2464 + $0x2c] sm:$0x1]
      %v2477 = vld [vmem:[%s2464 + $0x30] sm:$0xf]
      %v2478 = vld [vmem:[%s2464 + $0x34] sm:$0xf]
      %v2479 = vld [vmem:[%s2464 + $0x38] sm:$0x1]
      %v2480 = vld [vmem:[%s2464 + $0x3c] sm:$0xf]
      %v2481 = vld [vmem:[%s2464 + $0x40] sm:$0xf]
      %v2482 = vld [vmem:[%s2464 + $0x44] sm:$0x1]
      %v2483 = vld [vmem:[%s2464 + $0x48] sm:$0xf]
      %v2484 = vld [vmem:[%s2464 + $0x4c] sm:$0xf]
      %v2485 = vld [vmem:[%s2464 + $0x50] sm:$0x1]
      %v2486 = vld [vmem:[%s2464 + $0x54] sm:$0xf]
      %v2487 = vld [vmem:[%s2464 + $0x58] sm:$0xf]
      %v2488 = vld [vmem:[%s2464 + $0x5c] sm:$0x1]
      %v2489 = vld [vmem:[%s2464 + $0x60] sm:$0xf]
      %v2490 = vld [vmem:[%s2464 + $0x64] sm:$0xf]
      %v2491 = vld [vmem:[%s2464 + $0x68] sm:$0x1]
      %v2492 = vld [vmem:[%s2464 + $0x6c] sm:$0xf]
      %v2493 = vld [vmem:[%s2464 + $0x70] sm:$0xf]
      %v2494 = vld [vmem:[%s2464 + $0x74] sm:$0x1]
      %v2495 = vld [vmem:[%s2464 + $0x78] sm:$0xf]
      %v2496 = vld [vmem:[%s2464 + $0x7c] sm:$0xf]
      %v2497 = vld [vmem:[%s2464 + $0x80] sm:$0x1]
      %v2498 = vld [vmem:[%s2464 + $0x84] sm:$0xf]
      %v2499 = vld [vmem:[%s2464 + $0x88] sm:$0xf]
      %v2500 = vld [vmem:[%s2464 + $0x8c] sm:$0x1]
      %v2525 = vunpack.c.l.b16 %v2465
      %v2526 = vunpack.c.l.b16 %v2466
      %v2527 = vunpack.c.l.b16 %v2468
      %v2528 = vunpack.c.l.b16 %v2469
      %v2529 = vunpack.c.l.b16 %v2471
      %v2530 = vunpack.c.l.b16 %v2472
      %v2531 = vunpack.c.l.b16 %v2474
      %v2532 = vunpack.c.l.b16 %v2475
      %v2533 = vunpack.c.l.b16 %v2477
      %v2534 = vunpack.c.l.b16 %v2478
      %v2535 = vunpack.c.l.b16 %v2480
      %v2536 = vunpack.c.l.b16 %v2481
      %v2537 = vunpack.c.l.b16 %v2483
      %v2538 = vunpack.c.l.b16 %v2484
      %v2539 = vunpack.c.l.b16 %v2486
      %v2540 = vunpack.c.l.b16 %v2487
      %v2541 = vunpack.c.l.b16 %v2489
      %v2542 = vunpack.c.l.b16 %v2490
      %v2543 = vunpack.c.l.b16 %v2492
      %v2544 = vunpack.c.l.b16 %v2493
      %v2545 = vunpack.c.l.b16 %v2495
      %v2546 = vunpack.c.l.b16 %v2496
      %v2547 = vunpack.c.l.b16 %v2498
      %v2548 = vunpack.c.l.b16 %v2499
      %v2549 = vpack.c.b16 %v2526, %v2525
      %v2550 = vpack.c.b16 %v2528, %v2527
      %v2551 = vpack.c.b16 %v2530, %v2529
      %v2552 = vpack.c.b16 %v2532, %v2531
      %v2553 = vpack.c.b16 %v2534, %v2533
      %v2554 = vpack.c.b16 %v2536, %v2535
      %v2555 = vpack.c.b16 %v2538, %v2537
      %v2556 = vpack.c.b16 %v2540, %v2539
      %v2557 = vpack.c.b16 %v2542, %v2541
      %v2558 = vpack.c.b16 %v2544, %v2543
      %v2559 = vpack.c.b16 %v2546, %v2545
      %v2560 = vpack.c.b16 %v2548, %v2547
      %v2585 = vunpack.c.l.b16 %v2467
      %v2586 = vunpack.c.l.b16 %v2470
      %v2587 = vunpack.c.l.b16 %v2473
      %v2588 = vunpack.c.l.b16 %v2476
      %v2589 = vunpack.c.l.b16 %v2479
      %v2590 = vunpack.c.l.b16 %v2482
      %v2591 = vunpack.c.l.b16 %v2485
      %v2592 = vunpack.c.l.b16 %v2488
      %v2593 = vunpack.c.l.b16 %v2491
      %v2594 = vunpack.c.l.b16 %v2494
      %v2595 = vunpack.c.l.b16 %v2497
      %v2596 = vunpack.c.l.b16 %v2500
      %v2597 = vpack.c.b16 %v2585, %v2585
      %v2598 = vpack.c.b16 %v2586, %v2586
      %v2599 = vpack.c.b16 %v2587, %v2587
      %v2600 = vpack.c.b16 %v2588, %v2588
      %v2601 = vpack.c.b16 %v2589, %v2589
      %v2602 = vpack.c.b16 %v2590, %v2590
      %v2603 = vpack.c.b16 %v2591, %v2591
      %v2604 = vpack.c.b16 %v2592, %v2592
      %v2605 = vpack.c.b16 %v2593, %v2593
      %v2606 = vpack.c.b16 %v2594, %v2594
      %v2607 = vpack.c.b16 %v2595, %v2595
      %v2608 = vpack.c.b16 %v2596, %v2596
      %v2610 = vshrl.u32 %v2549, 16
      %v2612 = vshll.u32 %v2549, 16
      %v2614 = vrot.slane %v2612, 1
      %v2615 = vor.u32 %v2610, %v2614
      %v2617 = vshll.u32 %v2597, 16
      %v2619 = vrot.slane %v2617, 1
      %v2620 = vsel %vm1008, %v2615, %v2619
      %v2622 = vshrl.u32 %v2550, 16
      %v2624 = vshll.u32 %v2550, 16
      %v2626 = vrot.slane %v2624, 1
      %v2627 = vor.u32 %v2622, %v2626
      %v2629 = vshll.u32 %v2598, 16
      %v2631 = vrot.slane %v2629, 1
      %v2632 = vsel %vm1008, %v2627, %v2631
      %v2634 = vshrl.u32 %v2551, 16
      %v2636 = vshll.u32 %v2551, 16
      %v2638 = vrot.slane %v2636, 1
      %v2639 = vor.u32 %v2634, %v2638
      %v2641 = vshll.u32 %v2599, 16
      %v2643 = vrot.slane %v2641, 1
      %v2644 = vsel %vm1008, %v2639, %v2643
      %v2646 = vshrl.u32 %v2552, 16
      %v2648 = vshll.u32 %v2552, 16
      %v2650 = vrot.slane %v2648, 1
      %v2651 = vor.u32 %v2646, %v2650
      %v2653 = vshll.u32 %v2600, 16
      %v2655 = vrot.slane %v2653, 1
      %v2656 = vsel %vm1008, %v2651, %v2655
      %v2658 = vshrl.u32 %v2553, 16
      %v2660 = vshll.u32 %v2553, 16
      %v2662 = vrot.slane %v2660, 1
      %v2663 = vor.u32 %v2658, %v2662
      %v2665 = vshll.u32 %v2601, 16
      %v2667 = vrot.slane %v2665, 1
      %v2668 = vsel %vm1008, %v2663, %v2667
      %v2670 = vshrl.u32 %v2554, 16
      %v2672 = vshll.u32 %v2554, 16
      %v2674 = vrot.slane %v2672, 1
      %v2675 = vor.u32 %v2670, %v2674
      %v2677 = vshll.u32 %v2602, 16
      %v2679 = vrot.slane %v2677, 1
      %v2680 = vsel %vm1008, %v2675, %v2679
      %v2682 = vshrl.u32 %v2555, 16
      %v2684 = vshll.u32 %v2555, 16
      %v2686 = vrot.slane %v2684, 1
      %v2687 = vor.u32 %v2682, %v2686
      %v2689 = vshll.u32 %v2603, 16
      %v2691 = vrot.slane %v2689, 1
      %v2692 = vsel %vm1008, %v2687, %v2691
      %v2694 = vshrl.u32 %v2556, 16
      %v2696 = vshll.u32 %v2556, 16
      %v2698 = vrot.slane %v2696, 1
      %v2699 = vor.u32 %v2694, %v2698
      %v2701 = vshll.u32 %v2604, 16
      %v2703 = vrot.slane %v2701, 1
      %v2704 = vsel %vm1008, %v2699, %v2703
      %v2706 = vshrl.u32 %v2557, 16
      %v2708 = vshll.u32 %v2557, 16
      %v2710 = vrot.slane %v2708, 1
      %v2711 = vor.u32 %v2706, %v2710
      %v2713 = vshll.u32 %v2605, 16
      %v2715 = vrot.slane %v2713, 1
      %v2716 = vsel %vm1008, %v2711, %v2715
      %v2718 = vshrl.u32 %v2558, 16
      %v2720 = vshll.u32 %v2558, 16
      %v2722 = vrot.slane %v2720, 1
      %v2723 = vor.u32 %v2718, %v2722
      %v2725 = vshll.u32 %v2606, 16
      %v2727 = vrot.slane %v2725, 1
      %v2728 = vsel %vm1008, %v2723, %v2727
      %v2730 = vshrl.u32 %v2559, 16
      %v2732 = vshll.u32 %v2559, 16
      %v2734 = vrot.slane %v2732, 1
      %v2735 = vor.u32 %v2730, %v2734
      %v2737 = vshll.u32 %v2607, 16
      %v2739 = vrot.slane %v2737, 1
      %v2740 = vsel %vm1008, %v2735, %v2739
      %v2742 = vshrl.u32 %v2560, 16
      %v2744 = vshll.u32 %v2560, 16
      %v2746 = vrot.slane %v2744, 1
      %v2747 = vor.u32 %v2742, %v2746
      %v2749 = vshll.u32 %v2608, 16
      %v2751 = vrot.slane %v2749, 1
      %v2752 = vsel %vm1008, %v2747, %v2751
      %v2765 = vrot.slane %v2549, 1
      %v2766 = vrot.slane %v2597, 1
      %v2767 = vsel %vm1165, %v2765, %v2766
      %v2768 = vrot.slane %v2550, 1
      %v2769 = vrot.slane %v2598, 1
      %v2770 = vsel %vm1165, %v2768, %v2769
      %v2771 = vrot.slane %v2551, 1
      %v2772 = vrot.slane %v2599, 1
      %v2773 = vsel %vm1165, %v2771, %v2772
      %v2774 = vrot.slane %v2552, 1
      %v2775 = vrot.slane %v2600, 1
      %v2776 = vsel %vm1165, %v2774, %v2775
      %v2777 = vrot.slane %v2553, 1
      %v2778 = vrot.slane %v2601, 1
      %v2779 = vsel %vm1165, %v2777, %v2778
      %v2780 = vrot.slane %v2554, 1
      %v2781 = vrot.slane %v2602, 1
      %v2782 = vsel %vm1165, %v2780, %v2781
      %v2783 = vrot.slane %v2555, 1
      %v2784 = vrot.slane %v2603, 1
      %v2785 = vsel %vm1165, %v2783, %v2784
      %v2786 = vrot.slane %v2556, 1
      %v2787 = vrot.slane %v2604, 1
      %v2788 = vsel %vm1165, %v2786, %v2787
      %v2789 = vrot.slane %v2557, 1
      %v2790 = vrot.slane %v2605, 1
      %v2791 = vsel %vm1165, %v2789, %v2790
      %v2792 = vrot.slane %v2558, 1
      %v2793 = vrot.slane %v2606, 1
      %v2794 = vsel %vm1165, %v2792, %v2793
      %v2795 = vrot.slane %v2559, 1
      %v2796 = vrot.slane %v2607, 1
      %v2797 = vsel %vm1165, %v2795, %v2796
      %v2798 = vrot.slane %v2560, 1
      %v2799 = vrot.slane %v2608, 1
      %v2800 = vsel %vm1165, %v2798, %v2799
      %s2813 = scalar_lea.vmem %s1, 384
      %v2814 = vld [vmem:[%s2813] sm:$0xf]
      %v2815 = vld [vmem:[%s2813 + $0x4] sm:$0xf]
      %v2816 = vld [vmem:[%s2813 + $0x8] sm:$0xf]
      %v2817 = vld [vmem:[%s2813 + $0xc] sm:$0xf]
      %v2818 = vld [vmem:[%s2813 + $0x10] sm:$0xf]
      %v2819 = vld [vmem:[%s2813 + $0x14] sm:$0xf]
      %v2820 = vld [vmem:[%s2813 + $0x18] sm:$0xf]
      %v2821 = vld [vmem:[%s2813 + $0x1c] sm:$0xf]
      %v2822 = vld [vmem:[%s2813 + $0x20] sm:$0xf]
      %v2823 = vld [vmem:[%s2813 + $0x24] sm:$0xf]
      %v2824 = vld [vmem:[%s2813 + $0x28] sm:$0xf]
      %v2825 = vld [vmem:[%s2813 + $0x2c] sm:$0xf]
      %v2826 = vld [vmem:[%s2813 + $0x30] sm:$0xf]
      %v2827 = vld [vmem:[%s2813 + $0x34] sm:$0xf]
      %v2828 = vld [vmem:[%s2813 + $0x38] sm:$0xf]
      %v2829 = vld [vmem:[%s2813 + $0x3c] sm:$0xf]
      %v2830 = vld [vmem:[%s2813 + $0x40] sm:$0xf]
      %v2831 = vld [vmem:[%s2813 + $0x44] sm:$0xf]
      %v2832 = vld [vmem:[%s2813 + $0x48] sm:$0xf]
      %v2833 = vld [vmem:[%s2813 + $0x4c] sm:$0xf]
      %v2834 = vld [vmem:[%s2813 + $0x50] sm:$0xf]
      %v2835 = vld [vmem:[%s2813 + $0x54] sm:$0xf]
      %v2836 = vld [vmem:[%s2813 + $0x58] sm:$0xf]
      %v2837 = vld [vmem:[%s2813 + $0x5c] sm:$0xf]
      %v2838 = vld [vmem:[%s2813 + $0x60] sm:$0xf]
      %v2839 = vld [vmem:[%s2813 + $0x64] sm:$0xf]
      %v2840 = vld [vmem:[%s2813 + $0x68] sm:$0xf]
      %v2841 = vld [vmem:[%s2813 + $0x6c] sm:$0xf]
      %v2842 = vld [vmem:[%s2813 + $0x70] sm:$0xf]
      %v2843 = vld [vmem:[%s2813 + $0x74] sm:$0xf]
      %v2844 = vld [vmem:[%s2813 + $0x78] sm:$0xf]
      %v2845 = vld [vmem:[%s2813 + $0x7c] sm:$0xf]
      %v2846 = vld [vmem:[%s2813 + $0x80] sm:$0xf]
      %v2847 = vld [vmem:[%s2813 + $0x84] sm:$0xf]
      %v2848 = vld [vmem:[%s2813 + $0x88] sm:$0xf]
      %v2849 = vld [vmem:[%s2813 + $0x8c] sm:$0xf]
      %v2850 = vld [vmem:[%s2813 + $0x90] sm:$0xf]
      %v2851 = vld [vmem:[%s2813 + $0x94] sm:$0xf]
      %v2852 = vld [vmem:[%s2813 + $0x98] sm:$0xf]
      %v2853 = vld [vmem:[%s2813 + $0x9c] sm:$0xf]
      %v2854 = vld [vmem:[%s2813 + $0xa0] sm:$0xf]
      %v2855 = vld [vmem:[%s2813 + $0xa4] sm:$0xf]
      %v2856 = vld [vmem:[%s2813 + $0xa8] sm:$0xf]
      %v2857 = vld [vmem:[%s2813 + $0xac] sm:$0xf]
      %v2858 = vld [vmem:[%s2813 + $0xb0] sm:$0xf]
      %v2859 = vld [vmem:[%s2813 + $0xb4] sm:$0xf]
      %v2860 = vld [vmem:[%s2813 + $0xb8] sm:$0xf]
      %v2861 = vld [vmem:[%s2813 + $0xbc] sm:$0xf]
      %v2910 = vunpack.c.l.b16 %v2814
      %v2911 = vunpack.c.l.b16 %v2815
      %v2912 = vunpack.c.l.b16 %v2816
      %v2913 = vunpack.c.l.b16 %v2817
      %v2914 = vunpack.c.l.b16 %v2818
      %v2915 = vunpack.c.l.b16 %v2819
      %v2916 = vunpack.c.l.b16 %v2820
      %v2917 = vunpack.c.l.b16 %v2821
      %v2918 = vunpack.c.l.b16 %v2822
      %v2919 = vunpack.c.l.b16 %v2823
      %v2920 = vunpack.c.l.b16 %v2824
      %v2921 = vunpack.c.l.b16 %v2825
      %v2922 = vunpack.c.l.b16 %v2826
      %v2923 = vunpack.c.l.b16 %v2827
      %v2924 = vunpack.c.l.b16 %v2828
      %v2925 = vunpack.c.l.b16 %v2829
      %v2926 = vunpack.c.l.b16 %v2830
      %v2927 = vunpack.c.l.b16 %v2831
      %v2928 = vunpack.c.l.b16 %v2832
      %v2929 = vunpack.c.l.b16 %v2833
      %v2930 = vunpack.c.l.b16 %v2834
      %v2931 = vunpack.c.l.b16 %v2835
      %v2932 = vunpack.c.l.b16 %v2836
      %v2933 = vunpack.c.l.b16 %v2837
      %v2934 = vunpack.c.l.b16 %v2838
      %v2935 = vunpack.c.l.b16 %v2839
      %v2936 = vunpack.c.l.b16 %v2840
      %v2937 = vunpack.c.l.b16 %v2841
      %v2938 = vunpack.c.l.b16 %v2842
      %v2939 = vunpack.c.l.b16 %v2843
      %v2940 = vunpack.c.l.b16 %v2844
      %v2941 = vunpack.c.l.b16 %v2845
      %v2942 = vunpack.c.l.b16 %v2846
      %v2943 = vunpack.c.l.b16 %v2847
      %v2944 = vunpack.c.l.b16 %v2848
      %v2945 = vunpack.c.l.b16 %v2849
      %v2946 = vunpack.c.l.b16 %v2850
      %v2947 = vunpack.c.l.b16 %v2851
      %v2948 = vunpack.c.l.b16 %v2852
      %v2949 = vunpack.c.l.b16 %v2853
      %v2950 = vunpack.c.l.b16 %v2854
      %v2951 = vunpack.c.l.b16 %v2855
      %v2952 = vunpack.c.l.b16 %v2856
      %v2953 = vunpack.c.l.b16 %v2857
      %v2954 = vunpack.c.l.b16 %v2858
      %v2955 = vunpack.c.l.b16 %v2859
      %v2956 = vunpack.c.l.b16 %v2860
      %v2957 = vunpack.c.l.b16 %v2861
      %v2958 = vpack.c.b16 %v2911, %v2910
      %v2959 = vpack.c.b16 %v2913, %v2912
      %v2960 = vpack.c.b16 %v2915, %v2914
      %v2961 = vpack.c.b16 %v2917, %v2916
      %v2962 = vpack.c.b16 %v2919, %v2918
      %v2963 = vpack.c.b16 %v2921, %v2920
      %v2964 = vpack.c.b16 %v2923, %v2922
      %v2965 = vpack.c.b16 %v2925, %v2924
      %v2966 = vpack.c.b16 %v2927, %v2926
      %v2967 = vpack.c.b16 %v2929, %v2928
      %v2968 = vpack.c.b16 %v2931, %v2930
      %v2969 = vpack.c.b16 %v2933, %v2932
      %v2970 = vpack.c.b16 %v2935, %v2934
      %v2971 = vpack.c.b16 %v2937, %v2936
      %v2972 = vpack.c.b16 %v2939, %v2938
      %v2973 = vpack.c.b16 %v2941, %v2940
      %v2974 = vpack.c.b16 %v2943, %v2942
      %v2975 = vpack.c.b16 %v2945, %v2944
      %v2976 = vpack.c.b16 %v2947, %v2946
      %v2977 = vpack.c.b16 %v2949, %v2948
      %v2978 = vpack.c.b16 %v2951, %v2950
      %v2979 = vpack.c.b16 %v2953, %v2952
      %v2980 = vpack.c.b16 %v2955, %v2954
      %v2981 = vpack.c.b16 %v2957, %v2956
      %3006 = vmatprep.subr.bf16.mxu0 0
      %3007 = vmatpush1.bf16.msra.mxu0 %v2965
      %3008 = vmatprep.subr.bf16.mxu0 0
      %3009 = vmatpush1.bf16.msra.mxu0 %v2964
      %3010 = vmatprep.subr.bf16.mxu0 0
      %3011 = vmatpush1.bf16.msra.mxu0 %v2963
      %3012 = vmatprep.subr.bf16.mxu0 0
      %3013 = vmatpush1.bf16.msra.mxu0 %v2962
      %3014 = vmatprep.subr.bf16.mxu0 0
      %3015 = vmatpush1.bf16.msra.mxu0 %v2961
      %3016 = vmatprep.subr.bf16.mxu0 0
      %3017 = vmatpush1.bf16.msra.mxu0 %v2960
      %3018 = vmatprep.subr.bf16.mxu0 0
      %3019 = vmatpush1.bf16.msra.mxu0 %v2959
      %3020 = vmatprep.subr.bf16.mxu0 0
      %3021 = vmatpush1.bf16.msra.mxu0 %v2958
      %3022 = vmatprep.subr.bf16.mxu0 0
      %3023 = vmatpush2.bf16.msra.mxu0 %v2973
      %3024 = vmatprep.subr.bf16.mxu0 0
      %3025 = vmatpush2.bf16.msra.mxu0 %v2972
      %3026 = vmatprep.subr.bf16.mxu0 0
      %3027 = vmatpush2.bf16.msra.mxu0 %v2971
      %3028 = vmatprep.subr.bf16.mxu0 0
      %3029 = vmatpush2.bf16.msra.mxu0 %v2970
      %3030 = vmatprep.subr.bf16.mxu0 0
      %3031 = vmatpush2.bf16.msra.mxu0 %v2969
      %3032 = vmatprep.subr.bf16.mxu0 0
      %3033 = vmatpush2.bf16.msra.mxu0 %v2968
      %3034 = vmatprep.subr.bf16.mxu0 0
      %3035 = vmatpush2.bf16.msra.mxu0 %v2967
      %3036 = vmatprep.subr.bf16.mxu0 0
      %3037 = vmatpush2.bf16.msra.mxu0 %v2966
      %3038 = vmatprep.mubr.bf16.mxu0 %v2620
      %3039 = vmatmul.mubr.bf16.gmra.mxu0 %v2549
      %v3040 = vpop.f32.mrf.mxu0
      %v3041 = vadd.f32 0.0, %v3040
      %v3042 = vpop.f32.mrf.mxu0
      %v3043 = vpop.f32.mrf.mxu0
      %v3044 = vadd.f32 0.0, %v3043
      %v3045 = vpop.f32.mrf.mxu0
      %3046 = vmatprep.mubr.bf16.mxu0 %v2632
      %3047 = vmatmul.mubr.bf16.gmra.mxu0 %v2550
      %v3048 = vpop.f32.mrf.mxu0
      %v3049 = vadd.f32 0.0, %v3048
      %v3050 = vpop.f32.mrf.mxu0
      %v3051 = vpop.f32.mrf.mxu0
      %v3052 = vadd.f32 0.0, %v3051
      %v3053 = vpop.f32.mrf.mxu0
      %3054 = vmatprep.mubr.bf16.mxu0 %v2644
      %3055 = vmatmul.mubr.bf16.gmra.mxu0 %v2551
      %v3056 = vpop.f32.mrf.mxu0
      %v3057 = vadd.f32 0.0, %v3056
      %v3058 = vpop.f32.mrf.mxu0
      %v3059 = vpop.f32.mrf.mxu0
      %v3060 = vadd.f32 0.0, %v3059
      %v3061 = vpop.f32.mrf.mxu0
      %3062 = vmatprep.mubr.bf16.mxu0 %v2656
      %3063 = vmatmul.mubr.bf16.gmra.mxu0 %v2552
      %v3064 = vpop.f32.mrf.mxu0
      %v3065 = vadd.f32 0.0, %v3064
      %v3066 = vpop.f32.mrf.mxu0
      %v3067 = vpop.f32.mrf.mxu0
      %v3068 = vadd.f32 0.0, %v3067
      %v3069 = vpop.f32.mrf.mxu0
      %3070 = vmatprep.mubr.bf16.mxu0 %v2668
      %3071 = vmatmul.mubr.bf16.gmra.mxu0 %v2553
      %v3072 = vpop.f32.mrf.mxu0
      %v3073 = vadd.f32 0.0, %v3072
      %v3074 = vpop.f32.mrf.mxu0
      %v3075 = vpop.f32.mrf.mxu0
      %v3076 = vadd.f32 0.0, %v3075
      %v3077 = vpop.f32.mrf.mxu0
      %3078 = vmatprep.mubr.bf16.mxu0 %v2680
      %3079 = vmatmul.mubr.bf16.gmra.mxu0 %v2554
      %v3080 = vpop.f32.mrf.mxu0
      %v3081 = vadd.f32 0.0, %v3080
      %v3082 = vpop.f32.mrf.mxu0
      %v3083 = vpop.f32.mrf.mxu0
      %v3084 = vadd.f32 0.0, %v3083
      %v3085 = vpop.f32.mrf.mxu0
      %3086 = vmatprep.mubr.bf16.mxu0 %v2692
      %3087 = vmatmul.mubr.bf16.gmra.mxu0 %v2555
      %v3088 = vpop.f32.mrf.mxu0
      %v3089 = vadd.f32 0.0, %v3088
      %v3090 = vpop.f32.mrf.mxu0
      %v3091 = vpop.f32.mrf.mxu0
      %v3092 = vadd.f32 0.0, %v3091
      %v3093 = vpop.f32.mrf.mxu0
      %3094 = vmatprep.mubr.bf16.mxu0 %v2704
      %3095 = vmatmul.mubr.bf16.gmra.mxu0 %v2556
      %v3096 = vpop.f32.mrf.mxu0
      %v3097 = vadd.f32 0.0, %v3096
      %v3098 = vpop.f32.mrf.mxu0
      %v3099 = vpop.f32.mrf.mxu0
      %v3100 = vadd.f32 0.0, %v3099
      %v3101 = vpop.f32.mrf.mxu0
      %3102 = vmatprep.mubr.bf16.mxu0 %v2716
      %3103 = vmatmul.mubr.bf16.gmra.mxu0 %v2557
      %v3104 = vpop.f32.mrf.mxu0
      %v3105 = vadd.f32 0.0, %v3104
      %v3106 = vpop.f32.mrf.mxu0
      %v3107 = vpop.f32.mrf.mxu0
      %v3108 = vadd.f32 0.0, %v3107
      %v3109 = vpop.f32.mrf.mxu0
      %3110 = vmatprep.mubr.bf16.mxu0 %v2728
      %3111 = vmatmul.mubr.bf16.gmra.mxu0 %v2558
      %v3112 = vpop.f32.mrf.mxu0
      %v3113 = vadd.f32 0.0, %v3112
      %v3114 = vpop.f32.mrf.mxu0
      %v3115 = vpop.f32.mrf.mxu0
      %v3116 = vadd.f32 0.0, %v3115
      %v3117 = vpop.f32.mrf.mxu0
      %3118 = vmatprep.mubr.bf16.mxu0 %v2740
      %3119 = vmatmul.mubr.bf16.gmra.mxu0 %v2559
      %v3120 = vpop.f32.mrf.mxu0
      %v3121 = vadd.f32 0.0, %v3120
      %v3122 = vpop.f32.mrf.mxu0
      %v3123 = vpop.f32.mrf.mxu0
      %v3124 = vadd.f32 0.0, %v3123
      %v3125 = vpop.f32.mrf.mxu0
      %3126 = vmatprep.mubr.bf16.mxu0 %v2752
      %3127 = vmatmul.mubr.bf16.gmra.mxu0 %v2560
      %v3128 = vpop.f32.mrf.mxu0
      %v3129 = vadd.f32 0.0, %v3128
      %v3130 = vpop.f32.mrf.mxu0
      %v3131 = vpop.f32.mrf.mxu0
      %v3132 = vadd.f32 0.0, %v3131
      %v3133 = vpop.f32.mrf.mxu0
      %3134 = vdwg.mxu0
      %3135 = vmatprep.subr.bf16.mxu0 0
      %3136 = vmatpush1.bf16.msra.mxu0 %v2981
      %3137 = vmatprep.subr.bf16.mxu0 0
      %3138 = vmatpush1.bf16.msra.mxu0 %v2980
      %3139 = vmatprep.subr.bf16.mxu0 0
      %3140 = vmatpush1.bf16.msra.mxu0 %v2979
      %3141 = vmatprep.subr.bf16.mxu0 0
      %3142 = vmatpush1.bf16.msra.mxu0 %v2978
      %3143 = vmatprep.subr.bf16.mxu0 0
      %3144 = vmatpush1.bf16.msra.mxu0 %v2977
      %3145 = vmatprep.subr.bf16.mxu0 0
      %3146 = vmatpush1.bf16.msra.mxu0 %v2976
      %3147 = vmatprep.subr.bf16.mxu0 0
      %3148 = vmatpush1.bf16.msra.mxu0 %v2975
      %3149 = vmatprep.subr.bf16.mxu0 0
      %3150 = vmatpush1.bf16.msra.mxu0 %v2974
      %3151 = vmatprep.subr.bf16.mxu0 0
      %3152 = vmatpush2.bf16.msra.mxu0 0
      %3153 = vmatprep.subr.bf16.mxu0 0
      %3154 = vmatpush2.bf16.msra.mxu0 0
      %3155 = vmatprep.subr.bf16.mxu0 0
      %3156 = vmatpush2.bf16.msra.mxu0 0
      %3157 = vmatprep.subr.bf16.mxu0 0
      %3158 = vmatpush2.bf16.msra.mxu0 0
      %3159 = vmatprep.subr.bf16.mxu0 0
      %3160 = vmatpush2.bf16.msra.mxu0 0
      %3161 = vmatprep.subr.bf16.mxu0 0
      %3162 = vmatpush2.bf16.msra.mxu0 0
      %3163 = vmatprep.subr.bf16.mxu0 0
      %3164 = vmatpush2.bf16.msra.mxu0 0
      %3165 = vmatprep.subr.bf16.mxu0 0
      %3166 = vmatpush2.bf16.msra.mxu0 0
      %3167 = vmatprep.mubr.bf16.mxu0 0
      %3168 = vmatmul.mubr.bf16.gmra.mxu0 %v2767
      %v3169 = vpop.f32.mrf.mxu0
      %v3170 = vadd.f32 %v3041, %v3169
      %v3171 = vpop.f32.mrf.mxu0
      %v3172 = vpop.f32.mrf.mxu0
      %v3173 = vadd.f32 %v3044, %v3172
      %v3174 = vpop.f32.mrf.mxu0
      %3175 = vmatprep.mubr.bf16.mxu0 0
      %3176 = vmatmul.mubr.bf16.gmra.mxu0 %v2770
      %v3177 = vpop.f32.mrf.mxu0
      %v3178 = vadd.f32 %v3049, %v3177
      %v3179 = vpop.f32.mrf.mxu0
      %v3180 = vpop.f32.mrf.mxu0
      %v3181 = vadd.f32 %v3052, %v3180
      %v3182 = vpop.f32.mrf.mxu0
      %3183 = vmatprep.mubr.bf16.mxu0 0
      %3184 = vmatmul.mubr.bf16.gmra.mxu0 %v2773
      %v3185 = vpop.f32.mrf.mxu0
      %v3186 = vadd.f32 %v3057, %v3185
      %v3187 = vpop.f32.mrf.mxu0
      %v3188 = vpop.f32.mrf.mxu0
      %v3189 = vadd.f32 %v3060, %v3188
      %v3190 = vpop.f32.mrf.mxu0
      %3191 = vmatprep.mubr.bf16.mxu0 0
      %3192 = vmatmul.mubr.bf16.gmra.mxu0 %v2776
      %v3193 = vpop.f32.mrf.mxu0
      %v3194 = vadd.f32 %v3065, %v3193
      %v3195 = vpop.f32.mrf.mxu0
      %v3196 = vpop.f32.mrf.mxu0
      %v3197 = vadd.f32 %v3068, %v3196
      %v3198 = vpop.f32.mrf.mxu0
      %3199 = vmatprep.mubr.bf16.mxu0 0
      %3200 = vmatmul.mubr.bf16.gmra.mxu0 %v2779
      %v3201 = vpop.f32.mrf.mxu0
      %v3202 = vadd.f32 %v3073, %v3201
      %v3203 = vpop.f32.mrf.mxu0
      %v3204 = vpop.f32.mrf.mxu0
      %v3205 = vadd.f32 %v3076, %v3204
      %v3206 = vpop.f32.mrf.mxu0
      %3207 = vmatprep.mubr.bf16.mxu0 0
      %3208 = vmatmul.mubr.bf16.gmra.mxu0 %v2782
      %v3209 = vpop.f32.mrf.mxu0
      %v3210 = vadd.f32 %v3081, %v3209
      %v3211 = vpop.f32.mrf.mxu0
      %v3212 = vpop.f32.mrf.mxu0
      %v3213 = vadd.f32 %v3084, %v3212
      %v3214 = vpop.f32.mrf.mxu0
      %3215 = vmatprep.mubr.bf16.mxu0 0
      %3216 = vmatmul.mubr.bf16.gmra.mxu0 %v2785
      %v3217 = vpop.f32.mrf.mxu0
      %v3218 = vadd.f32 %v3089, %v3217
      %v3219 = vpop.f32.mrf.mxu0
      %v3220 = vpop.f32.mrf.mxu0
      %v3221 = vadd.f32 %v3092, %v3220
      %v3222 = vpop.f32.mrf.mxu0
      %3223 = vmatprep.mubr.bf16.mxu0 0
      %3224 = vmatmul.mubr.bf16.gmra.mxu0 %v2788
      %v3225 = vpop.f32.mrf.mxu0
      %v3226 = vadd.f32 %v3097, %v3225
      %v3227 = vpop.f32.mrf.mxu0
      %v3228 = vpop.f32.mrf.mxu0
      %v3229 = vadd.f32 %v3100, %v3228
      %v3230 = vpop.f32.mrf.mxu0
      %3231 = vmatprep.mubr.bf16.mxu0 0
      %3232 = vmatmul.mubr.bf16.gmra.mxu0 %v2791
      %v3233 = vpop.f32.mrf.mxu0
      %v3234 = vadd.f32 %v3105, %v3233
      %v3235 = vpop.f32.mrf.mxu0
      %v3236 = vpop.f32.mrf.mxu0
      %v3237 = vadd.f32 %v3108, %v3236
      %v3238 = vpop.f32.mrf.mxu0
      %3239 = vmatprep.mubr.bf16.mxu0 0
      %3240 = vmatmul.mubr.bf16.gmra.mxu0 %v2794
      %v3241 = vpop.f32.mrf.mxu0
      %v3242 = vadd.f32 %v3113, %v3241
      %v3243 = vpop.f32.mrf.mxu0
      %v3244 = vpop.f32.mrf.mxu0
      %v3245 = vadd.f32 %v3116, %v3244
      %v3246 = vpop.f32.mrf.mxu0
      %3247 = vmatprep.mubr.bf16.mxu0 0
      %3248 = vmatmul.mubr.bf16.gmra.mxu0 %v2797
      %v3249 = vpop.f32.mrf.mxu0
      %v3250 = vadd.f32 %v3121, %v3249
      %v3251 = vpop.f32.mrf.mxu0
      %v3252 = vpop.f32.mrf.mxu0
      %v3253 = vadd.f32 %v3124, %v3252
      %v3254 = vpop.f32.mrf.mxu0
      %3255 = vmatprep.mubr.bf16.mxu0 0
      %3256 = vmatmul.mubr.bf16.gmra.mxu0 %v2800
      %v3257 = vpop.f32.mrf.mxu0
      %v3258 = vadd.f32 %v3129, %v3257
      %v3259 = vpop.f32.mrf.mxu0
      %v3260 = vpop.f32.mrf.mxu0
      %v3261 = vadd.f32 %v3132, %v3260
      %v3262 = vpop.f32.mrf.mxu0
      %3263 = vdwg.mxu0
      %v3264 = vadd.f32 %v2370, %v3170
      %v3265 = vadd.f32 %v2373, %v3173
      %v3266 = vadd.f32 %v2378, %v3178
      %v3267 = vadd.f32 %v2381, %v3181
      %v3268 = vadd.f32 %v2386, %v3186
      %v3269 = vadd.f32 %v2389, %v3189
      %v3270 = vadd.f32 %v2394, %v3194
      %v3271 = vadd.f32 %v2397, %v3197
      %v3272 = vadd.f32 %v2402, %v3202
      %v3273 = vadd.f32 %v2405, %v3205
      %v3274 = vadd.f32 %v2410, %v3210
      %v3275 = vadd.f32 %v2413, %v3213
      %v3276 = vadd.f32 %v2418, %v3218
      %v3277 = vadd.f32 %v2421, %v3221
      %v3278 = vadd.f32 %v2426, %v3226
      %v3279 = vadd.f32 %v2429, %v3229
      %v3280 = vadd.f32 %v2434, %v3234
      %v3281 = vadd.f32 %v2437, %v3237
      %v3282 = vadd.f32 %v2442, %v3242
      %v3283 = vadd.f32 %v2445, %v3245
      %v3284 = vadd.f32 %v2450, %v3250
      %v3285 = vadd.f32 %v2453, %v3253
      %v3286 = vadd.f32 %v2458, %v3258
      %v3287 = vadd.f32 %v2461, %v3261
      %v3288 = vld [vmem:[%s2] sm:$0x1]
      %v3290 = vlaneseq
      %v3291 = vshrl.u32 %v3290, 7
      %v3292 = vsub.s32 0, %v3291
      %v3293 = vrot.slane %v3288, %v3292
      %v3295 = vadd.f32 %v3264, %v3293
      %v3296 = vadd.f32 %v3265, %v3293
      %v3297 = vadd.f32 %v3266, %v3293
      %v3298 = vadd.f32 %v3267, %v3293
      %v3299 = vadd.f32 %v3268, %v3293
      %v3300 = vadd.f32 %v3269, %v3293
      %v3301 = vadd.f32 %v3270, %v3293
      %v3302 = vadd.f32 %v3271, %v3293
      %v3303 = vadd.f32 %v3272, %v3293
      %v3304 = vadd.f32 %v3273, %v3293
      %v3305 = vadd.f32 %v3274, %v3293
      %v3306 = vadd.f32 %v3275, %v3293
      %v3307 = vadd.f32 %v3276, %v3293
      %v3308 = vadd.f32 %v3277, %v3293
      %v3309 = vadd.f32 %v3278, %v3293
      %v3310 = vadd.f32 %v3279, %v3293
      %v3311 = vadd.f32 %v3280, %v3293
      %v3312 = vadd.f32 %v3281, %v3293
      %v3313 = vadd.f32 %v3282, %v3293
      %v3314 = vadd.f32 %v3283, %v3293
      %v3315 = vadd.f32 %v3284, %v3293
      %v3316 = vadd.f32 %v3285, %v3293
      %v3317 = vadd.f32 %v3286, %v3293
      %v3318 = vadd.f32 %v3287, %v3293
      %v3319 = vmax.f32 %v3295, 0.0
      %v3320 = vmax.f32 %v3296, 0.0
      %v3321 = vmax.f32 %v3297, 0.0
      %v3322 = vmax.f32 %v3298, 0.0
      %v3323 = vmax.f32 %v3299, 0.0
      %v3324 = vmax.f32 %v3300, 0.0
      %v3325 = vmax.f32 %v3301, 0.0
      %v3326 = vmax.f32 %v3302, 0.0
      %v3327 = vmax.f32 %v3303, 0.0
      %v3328 = vmax.f32 %v3304, 0.0
      %v3329 = vmax.f32 %v3305, 0.0
      %v3330 = vmax.f32 %v3306, 0.0
      %v3331 = vmax.f32 %v3307, 0.0
      %v3332 = vmax.f32 %v3308, 0.0
      %v3333 = vmax.f32 %v3309, 0.0
      %v3334 = vmax.f32 %v3310, 0.0
      %v3335 = vmax.f32 %v3311, 0.0
      %v3336 = vmax.f32 %v3312, 0.0
      %v3337 = vmax.f32 %v3313, 0.0
      %v3338 = vmax.f32 %v3314, 0.0
      %v3339 = vmax.f32 %v3315, 0.0
      %v3340 = vmax.f32 %v3316, 0.0
      %v3341 = vmax.f32 %v3317, 0.0
      %v3342 = vmax.f32 %v3318, 0.0
      %s3343 = ssub.s32 %s319, 2
      %v3344 = vstv %s3343
      %v3345 = vadd.s32 %v3344, 1
      %v3346 = vadd.s32 %v3344, 2
      %v3347 = vadd.s32 %v3344, 3
      %v3348 = vadd.s32 %v3344, 4
      %v3349 = vadd.s32 %v3344, 5
      %v3350 = vadd.s32 %v3344, 6
      %v3351 = vadd.s32 %v3344, 7
      %v3352 = vadd.s32 %v3344, 8
      %v3353 = vadd.s32 %v3344, 9
      %v3354 = vadd.s32 %v3344, 10
      %v3355 = vadd.s32 %v3344, 11
      %vm3356 = vcmp.ge.s32.totalorder %v3344, 0
      %vm3357 = vcmp.ge.s32.totalorder %v3345, 0
      %vm3358 = vcmp.ge.s32.totalorder %v3346, 0
      %vm3359 = vcmp.ge.s32.totalorder %v3347, 0
      %vm3360 = vcmp.ge.s32.totalorder %v3348, 0
      %vm3361 = vcmp.ge.s32.totalorder %v3349, 0
      %vm3362 = vcmp.ge.s32.totalorder %v3350, 0
      %vm3363 = vcmp.ge.s32.totalorder %v3351, 0
      %vm3364 = vcmp.ge.s32.totalorder %v3352, 0
      %vm3365 = vcmp.ge.s32.totalorder %v3353, 0
      %vm3366 = vcmp.ge.s32.totalorder %v3354, 0
      %vm3367 = vcmp.ge.s32.totalorder %v3355, 0
      %vm3368 = vcmp.lt.s32.totalorder %v3344, 16
      %vm3369 = vcmp.lt.s32.totalorder %v3345, 16
      %vm3370 = vcmp.lt.s32.totalorder %v3346, 16
      %vm3371 = vcmp.lt.s32.totalorder %v3347, 16
      %vm3372 = vcmp.lt.s32.totalorder %v3348, 16
      %vm3373 = vcmp.lt.s32.totalorder %v3349, 16
      %vm3374 = vcmp.lt.s32.totalorder %v3350, 16
      %vm3375 = vcmp.lt.s32.totalorder %v3351, 16
      %vm3376 = vcmp.lt.s32.totalorder %v3352, 16
      %vm3377 = vcmp.lt.s32.totalorder %v3353, 16
      %vm3378 = vcmp.lt.s32.totalorder %v3354, 16
      %vm3379 = vcmp.lt.s32.totalorder %v3355, 16
      %vm3380 = vmand %vm3356, %vm3368
      %vm3381 = vmand %vm3357, %vm3369
      %vm3382 = vmand %vm3358, %vm3370
      %vm3383 = vmand %vm3359, %vm3371
      %vm3384 = vmand %vm3360, %vm3372
      %vm3385 = vmand %vm3361, %vm3373
      %vm3386 = vmand %vm3362, %vm3374
      %vm3387 = vmand %vm3363, %vm3375
      %vm3388 = vmand %vm3364, %vm3376
      %vm3389 = vmand %vm3365, %vm3377
      %vm3390 = vmand %vm3366, %vm3378
      %vm3391 = vmand %vm3367, %vm3379
      %v3392 = vsel %vm3380, 1, 0
      %v3393 = vsel %vm3381, 1, 0
      %v3394 = vsel %vm3382, 1, 0
      %v3395 = vsel %vm3383, 1, 0
      %v3396 = vsel %vm3384, 1, 0
      %v3397 = vsel %vm3385, 1, 0
      %v3398 = vsel %vm3386, 1, 0
      %v3399 = vsel %vm3387, 1, 0
      %v3400 = vsel %vm3388, 1, 0
      %v3401 = vsel %vm3389, 1, 0
      %v3402 = vsel %vm3390, 1, 0
      %v3403 = vsel %vm3391, 1, 0
      %vm3404 = vcmp.eq.s32.totalorder %v3392, 1
      %vm3405 = vcmp.eq.s32.totalorder %v3393, 1
      %vm3406 = vcmp.eq.s32.totalorder %v3394, 1
      %vm3407 = vcmp.eq.s32.totalorder %v3395, 1
      %vm3408 = vcmp.eq.s32.totalorder %v3396, 1
      %vm3409 = vcmp.eq.s32.totalorder %v3397, 1
      %vm3410 = vcmp.eq.s32.totalorder %v3398, 1
      %vm3411 = vcmp.eq.s32.totalorder %v3399, 1
      %vm3412 = vcmp.eq.s32.totalorder %v3400, 1
      %vm3413 = vcmp.eq.s32.totalorder %v3401, 1
      %vm3414 = vcmp.eq.s32.totalorder %v3402, 1
      %vm3415 = vcmp.eq.s32.totalorder %v3403, 1
      %v3416 = vsel %vm3404, %v3319, 0.0
      %v3417 = vsel %vm3404, %v3320, 0.0
      %v3418 = vsel %vm3405, %v3321, 0.0
      %v3419 = vsel %vm3405, %v3322, 0.0
      %v3420 = vsel %vm3406, %v3323, 0.0
      %v3421 = vsel %vm3406, %v3324, 0.0
      %v3422 = vsel %vm3407, %v3325, 0.0
      %v3423 = vsel %vm3407, %v3326, 0.0
      %v3424 = vsel %vm3408, %v3327, 0.0
      %v3425 = vsel %vm3408, %v3328, 0.0
      %v3426 = vsel %vm3409, %v3329, 0.0
      %v3427 = vsel %vm3409, %v3330, 0.0
      %v3428 = vsel %vm3410, %v3331, 0.0
      %v3429 = vsel %vm3410, %v3332, 0.0
      %v3430 = vsel %vm3411, %v3333, 0.0
      %v3431 = vsel %vm3411, %v3334, 0.0
      %v3432 = vsel %vm3412, %v3335, 0.0
      %v3433 = vsel %vm3412, %v3336, 0.0
      %v3434 = vsel %vm3413, %v3337, 0.0
      %v3435 = vsel %vm3413, %v3338, 0.0
      %v3436 = vsel %vm3414, %v3339, 0.0
      %v3437 = vsel %vm3414, %v3340, 0.0
      %v3438 = vsel %vm3415, %v3341, 0.0
      %v3439 = vsel %vm3415, %v3342, 0.0
      %v3440 = vpack.c.bf16 %v3417, %v3416
      %v3441 = vpack.c.bf16 %v3419, %v3418
      %v3442 = vpack.c.bf16 %v3421, %v3420
      %v3443 = vpack.c.bf16 %v3423, %v3422
      %v3444 = vpack.c.bf16 %v3425, %v3424
      %v3445 = vpack.c.bf16 %v3427, %v3426
      %v3446 = vpack.c.bf16 %v3429, %v3428
      %v3447 = vpack.c.bf16 %v3431, %v3430
      %v3448 = vpack.c.bf16 %v3433, %v3432
      %v3449 = vpack.c.bf16 %v3435, %v3434
      %v3450 = vpack.c.bf16 %v3437, %v3436
      %v3451 = vpack.c.bf16 %v3439, %v3438
      %v3464 = vunpack.c.l.b16 %v3440
      %v3465 = vunpack.c.h.b16 %v3440
      %v3466 = vunpack.c.l.b16 %v3441
      %v3467 = vunpack.c.h.b16 %v3441
      %v3468 = vunpack.c.l.b16 %v3442
      %v3469 = vunpack.c.h.b16 %v3442
      %v3470 = vunpack.c.l.b16 %v3443
      %v3471 = vunpack.c.h.b16 %v3443
      %v3472 = vunpack.c.l.b16 %v3444
      %v3473 = vunpack.c.h.b16 %v3444
      %v3474 = vunpack.c.l.b16 %v3445
      %v3475 = vunpack.c.h.b16 %v3445
      %v3476 = vunpack.c.l.b16 %v3446
      %v3477 = vunpack.c.h.b16 %v3446
      %v3478 = vunpack.c.l.b16 %v3447
      %v3479 = vunpack.c.h.b16 %v3447
      %v3480 = vunpack.c.l.b16 %v3448
      %v3481 = vunpack.c.h.b16 %v3448
      %v3482 = vunpack.c.l.b16 %v3449
      %v3483 = vunpack.c.h.b16 %v3449
      %v3484 = vunpack.c.l.b16 %v3450
      %v3485 = vunpack.c.h.b16 %v3450
      %v3486 = vunpack.c.l.b16 %v3451
      %v3487 = vunpack.c.h.b16 %v3451
      %v3488 = vpack.c.b16 %v3464, %v3464
      %v3489 = vpack.c.b16 %v3465, %v3465
      %v3490 = vpack.c.b16 %v3466, %v3466
      %v3491 = vpack.c.b16 %v3467, %v3467
      %v3492 = vpack.c.b16 %v3468, %v3468
      %v3493 = vpack.c.b16 %v3469, %v3469
      %v3494 = vpack.c.b16 %v3470, %v3470
      %v3495 = vpack.c.b16 %v3471, %v3471
      %v3496 = vpack.c.b16 %v3472, %v3472
      %v3497 = vpack.c.b16 %v3473, %v3473
      %v3498 = vpack.c.b16 %v3474, %v3474
      %v3499 = vpack.c.b16 %v3475, %v3475
      %v3500 = vpack.c.b16 %v3476, %v3476
      %v3501 = vpack.c.b16 %v3477, %v3477
      %v3502 = vpack.c.b16 %v3478, %v3478
      %v3503 = vpack.c.b16 %v3479, %v3479
      %v3504 = vpack.c.b16 %v3480, %v3480
      %v3505 = vpack.c.b16 %v3481, %v3481
      %v3506 = vpack.c.b16 %v3482, %v3482
      %v3507 = vpack.c.b16 %v3483, %v3483
      %v3508 = vpack.c.b16 %v3484, %v3484
      %v3509 = vpack.c.b16 %v3485, %v3485
      %v3510 = vpack.c.b16 %v3486, %v3486
      %v3511 = vpack.c.b16 %v3487, %v3487
      %v3513 = vshrl.u32 %v3488, 16
      %v3515 = vrot.slane %v3513, 7
      %v3516 = vshll.u32 %v3488, 16
      %v3518 = vor.u32 %v3515, %v3516
      %v3519 = vrot.slane %v3515, 4
      %v3521 = vshrl.u32 %v3489, 16
      %v3523 = vrot.slane %v3521, 7
      %v3524 = vshll.u32 %v3489, 16
      %v3526 = vor.u32 %v3523, %v3524
      %v3527 = vsel %vm482, %v3519, %v3526
      %v3528 = vrot.slane %v3523, 4
      %v3530 = vshrl.u32 %v3490, 16
      %v3532 = vrot.slane %v3530, 7
      %v3533 = vshll.u32 %v3490, 16
      %v3535 = vor.u32 %v3532, %v3533
      %v3536 = vrot.slane %v3532, 4
      %v3538 = vshrl.u32 %v3491, 16
      %v3540 = vrot.slane %v3538, 7
      %v3541 = vshll.u32 %v3491, 16
      %v3543 = vor.u32 %v3540, %v3541
      %v3544 = vsel %vm482, %v3536, %v3543
      %v3545 = vrot.slane %v3540, 4
      %v3547 = vshrl.u32 %v3492, 16
      %v3549 = vrot.slane %v3547, 7
      %v3550 = vshll.u32 %v3492, 16
      %v3552 = vor.u32 %v3549, %v3550
      %v3553 = vrot.slane %v3549, 4
      %v3555 = vshrl.u32 %v3493, 16
      %v3557 = vrot.slane %v3555, 7
      %v3558 = vshll.u32 %v3493, 16
      %v3560 = vor.u32 %v3557, %v3558
      %v3561 = vsel %vm482, %v3553, %v3560
      %v3562 = vrot.slane %v3557, 4
      %v3564 = vshrl.u32 %v3494, 16
      %v3566 = vrot.slane %v3564, 7
      %v3567 = vshll.u32 %v3494, 16
      %v3569 = vor.u32 %v3566, %v3567
      %v3570 = vrot.slane %v3566, 4
      %v3572 = vshrl.u32 %v3495, 16
      %v3574 = vrot.slane %v3572, 7
      %v3575 = vshll.u32 %v3495, 16
      %v3577 = vor.u32 %v3574, %v3575
      %v3578 = vsel %vm482, %v3570, %v3577
      %v3579 = vrot.slane %v3574, 4
      %v3581 = vshrl.u32 %v3496, 16
      %v3583 = vrot.slane %v3581, 7
      %v3584 = vshll.u32 %v3496, 16
      %v3586 = vor.u32 %v3583, %v3584
      %v3587 = vrot.slane %v3583, 4
      %v3589 = vshrl.u32 %v3497, 16
      %v3591 = vrot.slane %v3589, 7
      %v3592 = vshll.u32 %v3497, 16
      %v3594 = vor.u32 %v3591, %v3592
      %v3595 = vsel %vm482, %v3587, %v3594
      %v3596 = vrot.slane %v3591, 4
      %v3598 = vshrl.u32 %v3498, 16
      %v3600 = vrot.slane %v3598, 7
      %v3601 = vshll.u32 %v3498, 16
      %v3603 = vor.u32 %v3600, %v3601
      %v3604 = vrot.slane %v3600, 4
      %v3606 = vshrl.u32 %v3499, 16
      %v3608 = vrot.slane %v3606, 7
      %v3609 = vshll.u32 %v3499, 16
      %v3611 = vor.u32 %v3608, %v3609
      %v3612 = vsel %vm482, %v3604, %v3611
      %v3613 = vrot.slane %v3608, 4
      %v3615 = vshrl.u32 %v3500, 16
      %v3617 = vrot.slane %v3615, 7
      %v3618 = vshll.u32 %v3500, 16
      %v3620 = vor.u32 %v3617, %v3618
      %v3621 = vrot.slane %v3617, 4
      %v3623 = vshrl.u32 %v3501, 16
      %v3625 = vrot.slane %v3623, 7
      %v3626 = vshll.u32 %v3501, 16
      %v3628 = vor.u32 %v3625, %v3626
      %v3629 = vsel %vm482, %v3621, %v3628
      %v3630 = vrot.slane %v3625, 4
      %v3632 = vshrl.u32 %v3502, 16
      %v3634 = vrot.slane %v3632, 7
      %v3635 = vshll.u32 %v3502, 16
      %v3637 = vor.u32 %v3634, %v3635
      %v3638 = vrot.slane %v3634, 4
      %v3640 = vshrl.u32 %v3503, 16
      %v3642 = vrot.slane %v3640, 7
      %v3643 = vshll.u32 %v3503, 16
      %v3645 = vor.u32 %v3642, %v3643
      %v3646 = vsel %vm482, %v3638, %v3645
      %v3647 = vrot.slane %v3642, 4
      %v3649 = vshrl.u32 %v3504, 16
      %v3651 = vrot.slane %v3649, 7
      %v3652 = vshll.u32 %v3504, 16
      %v3654 = vor.u32 %v3651, %v3652
      %v3655 = vrot.slane %v3651, 4
      %v3657 = vshrl.u32 %v3505, 16
      %v3659 = vrot.slane %v3657, 7
      %v3660 = vshll.u32 %v3505, 16
      %v3662 = vor.u32 %v3659, %v3660
      %v3663 = vsel %vm482, %v3655, %v3662
      %v3664 = vrot.slane %v3659, 4
      %v3666 = vshrl.u32 %v3506, 16
      %v3668 = vrot.slane %v3666, 7
      %v3669 = vshll.u32 %v3506, 16
      %v3671 = vor.u32 %v3668, %v3669
      %v3672 = vrot.slane %v3668, 4
      %v3674 = vshrl.u32 %v3507, 16
      %v3676 = vrot.slane %v3674, 7
      %v3677 = vshll.u32 %v3507, 16
      %v3679 = vor.u32 %v3676, %v3677
      %v3680 = vsel %vm482, %v3672, %v3679
      %v3681 = vrot.slane %v3676, 4
      %v3683 = vshrl.u32 %v3508, 16
      %v3685 = vrot.slane %v3683, 7
      %v3686 = vshll.u32 %v3508, 16
      %v3688 = vor.u32 %v3685, %v3686
      %v3689 = vrot.slane %v3685, 4
      %v3691 = vshrl.u32 %v3509, 16
      %v3693 = vrot.slane %v3691, 7
      %v3694 = vshll.u32 %v3509, 16
      %v3696 = vor.u32 %v3693, %v3694
      %v3697 = vsel %vm482, %v3689, %v3696
      %v3698 = vrot.slane %v3693, 4
      %v3700 = vshrl.u32 %v3510, 16
      %v3702 = vrot.slane %v3700, 7
      %v3703 = vshll.u32 %v3510, 16
      %v3705 = vor.u32 %v3702, %v3703
      %v3706 = vrot.slane %v3702, 4
      %v3708 = vshrl.u32 %v3511, 16
      %v3710 = vrot.slane %v3708, 7
      %v3711 = vshll.u32 %v3511, 16
      %v3713 = vor.u32 %v3710, %v3711
      %v3714 = vsel %vm482, %v3706, %v3713
      %v3715 = vrot.slane %v3710, 4
      %3716 = vrot.lane.b32.xlu0 %v3518, 4
      %v3717 = vpop.permute.xlu0 %3716
      %3718 = vrot.lane.b32.xlu0 %v3527, 4
      %v3719 = vpop.permute.xlu0 %3718
      %3720 = vrot.lane.b32.xlu0 %v3528, 4
      %v3721 = vpop.permute.xlu0 %3720
      %3722 = vrot.lane.b32.xlu0 %v3535, 4
      %v3723 = vpop.permute.xlu0 %3722
      %3724 = vrot.lane.b32.xlu0 %v3544, 4
      %v3725 = vpop.permute.xlu0 %3724
      %3726 = vrot.lane.b32.xlu0 %v3545, 4
      %v3727 = vpop.permute.xlu0 %3726
      %3728 = vrot.lane.b32.xlu0 %v3552, 4
      %v3729 = vpop.permute.xlu0 %3728
      %3730 = vrot.lane.b32.xlu0 %v3561, 4
      %v3731 = vpop.permute.xlu0 %3730
      %3732 = vrot.lane.b32.xlu0 %v3562, 4
      %v3733 = vpop.permute.xlu0 %3732
      %3734 = vrot.lane.b32.xlu0 %v3569, 4
      %v3735 = vpop.permute.xlu0 %3734
      %3736 = vrot.lane.b32.xlu0 %v3578, 4
      %v3737 = vpop.permute.xlu0 %3736
      %3738 = vrot.lane.b32.xlu0 %v3579, 4
      %v3739 = vpop.permute.xlu0 %3738
      %3740 = vrot.lane.b32.xlu0 %v3586, 4
      %v3741 = vpop.permute.xlu0 %3740
      %3742 = vrot.lane.b32.xlu0 %v3595, 4
      %v3743 = vpop.permute.xlu0 %3742
      %3744 = vrot.lane.b32.xlu0 %v3596, 4
      %v3745 = vpop.permute.xlu0 %3744
      %3746 = vrot.lane.b32.xlu0 %v3603, 4
      %v3747 = vpop.permute.xlu0 %3746
      %3748 = vrot.lane.b32.xlu0 %v3612, 4
      %v3749 = vpop.permute.xlu0 %3748
      %3750 = vrot.lane.b32.xlu0 %v3613, 4
      %v3751 = vpop.permute.xlu0 %3750
      %3752 = vrot.lane.b32.xlu0 %v3620, 4
      %v3753 = vpop.permute.xlu0 %3752
      %3754 = vrot.lane.b32.xlu0 %v3629, 4
      %v3755 = vpop.permute.xlu0 %3754
      %3756 = vrot.lane.b32.xlu0 %v3630, 4
      %v3757 = vpop.permute.xlu0 %3756
      %3758 = vrot.lane.b32.xlu0 %v3637, 4
      %v3759 = vpop.permute.xlu0 %3758
      %3760 = vrot.lane.b32.xlu0 %v3646, 4
      %v3761 = vpop.permute.xlu0 %3760
      %3762 = vrot.lane.b32.xlu0 %v3647, 4
      %v3763 = vpop.permute.xlu0 %3762
      %3764 = vrot.lane.b32.xlu0 %v3654, 4
      %v3765 = vpop.permute.xlu0 %3764
      %3766 = vrot.lane.b32.xlu0 %v3663, 4
      %v3767 = vpop.permute.xlu0 %3766
      %3768 = vrot.lane.b32.xlu0 %v3664, 4
      %v3769 = vpop.permute.xlu0 %3768
      %3770 = vrot.lane.b32.xlu0 %v3671, 4
      %v3771 = vpop.permute.xlu0 %3770
      %3772 = vrot.lane.b32.xlu0 %v3680, 4
      %v3773 = vpop.permute.xlu0 %3772
      %3774 = vrot.lane.b32.xlu0 %v3681, 4
      %v3775 = vpop.permute.xlu0 %3774
      %3776 = vrot.lane.b32.xlu0 %v3688, 4
      %v3777 = vpop.permute.xlu0 %3776
      %3778 = vrot.lane.b32.xlu0 %v3697, 4
      %v3779 = vpop.permute.xlu0 %3778
      %3780 = vrot.lane.b32.xlu0 %v3698, 4
      %v3781 = vpop.permute.xlu0 %3780
      %3782 = vrot.lane.b32.xlu0 %v3705, 4
      %v3783 = vpop.permute.xlu0 %3782
      %3784 = vrot.lane.b32.xlu0 %v3714, 4
      %v3785 = vpop.permute.xlu0 %3784
      %3786 = vrot.lane.b32.xlu0 %v3715, 4
      %v3787 = vpop.permute.xlu0 %3786
      %vm3824 = vcmask 44064
      %vm3825 = vmand %vm3824, %vm409
      %v3826 = vsel %vm3825, %v3717, %v1263
      %3827 = vst [vmem:[%s1262] sm:$0xf] %v3826
      %vm3828 = vcmask 44064
      %3829 = vst.msk [vmem:[%s1262 + $0x4] sm:$0xf] %vm3828, %v3719
      %vm3830 = vcmask 40992
      %vm3831 = vmand %vm3830, %vm365
      %v3832 = vld [vmem:[%s1262 + $0x8] sm:$0x1]
      %v3833 = vsel %vm3831, %v3721, %v3832
      %3834 = vst [vmem:[%s1262 + $0x8] sm:$0x1] %v3833
      %v3835 = vld [vmem:[%s1262 + $0xc] sm:$0xf]
      %v3836 = vsel %vm3825, %v3723, %v3835
      %3837 = vst [vmem:[%s1262 + $0xc] sm:$0xf] %v3836
      %3838 = vst.msk [vmem:[%s1262 + $0x10] sm:$0xf] %vm3828, %v3725
      %v3839 = vld [vmem:[%s1262 + $0x14] sm:$0x1]
      %v3840 = vsel %vm3831, %v3727, %v3839
      %3841 = vst [vmem:[%s1262 + $0x14] sm:$0x1] %v3840
      %v3842 = vld [vmem:[%s1262 + $0x18] sm:$0xf]
      %v3843 = vsel %vm3825, %v3729, %v3842
      %3844 = vst [vmem:[%s1262 + $0x18] sm:$0xf] %v3843
      %3845 = vst.msk [vmem:[%s1262 + $0x1c] sm:$0xf] %vm3828, %v3731
      %v3846 = vld [vmem:[%s1262 + $0x20] sm:$0x1]
      %v3847 = vsel %vm3831, %v3733, %v3846
      %3848 = vst [vmem:[%s1262 + $0x20] sm:$0x1] %v3847
      %v3849 = vld [vmem:[%s1262 + $0x24] sm:$0xf]
      %v3850 = vsel %vm3825, %v3735, %v3849
      %3851 = vst [vmem:[%s1262 + $0x24] sm:$0xf] %v3850
      %3852 = vst.msk [vmem:[%s1262 + $0x28] sm:$0xf] %vm3828, %v3737
      %v3853 = vld [vmem:[%s1262 + $0x2c] sm:$0x1]
      %v3854 = vsel %vm3831, %v3739, %v3853
      %3855 = vst [vmem:[%s1262 + $0x2c] sm:$0x1] %v3854
      %v3856 = vld [vmem:[%s1262 + $0x30] sm:$0xf]
      %v3857 = vsel %vm3825, %v3741, %v3856
      %3858 = vst [vmem:[%s1262 + $0x30] sm:$0xf] %v3857
      %3859 = vst.msk [vmem:[%s1262 + $0x34] sm:$0xf] %vm3828, %v3743
      %v3860 = vld [vmem:[%s1262 + $0x38] sm:$0x1]
      %v3861 = vsel %vm3831, %v3745, %v3860
      %3862 = vst [vmem:[%s1262 + $0x38] sm:$0x1] %v3861
      %v3863 = vld [vmem:[%s1262 + $0x3c] sm:$0xf]
      %v3864 = vsel %vm3825, %v3747, %v3863
      %3865 = vst [vmem:[%s1262 + $0x3c] sm:$0xf] %v3864
      %3866 = vst.msk [vmem:[%s1262 + $0x40] sm:$0xf] %vm3828, %v3749
      %v3867 = vld [vmem:[%s1262 + $0x44] sm:$0x1]
      %v3868 = vsel %vm3831, %v3751, %v3867
      %3869 = vst [vmem:[%s1262 + $0x44] sm:$0x1] %v3868
      %v3870 = vld [vmem:[%s1262 + $0x48] sm:$0xf]
      %v3871 = vsel %vm3825, %v3753, %v3870
      %3872 = vst [vmem:[%s1262 + $0x48] sm:$0xf] %v3871
      %3873 = vst.msk [vmem:[%s1262 + $0x4c] sm:$0xf] %vm3828, %v3755
      %v3874 = vld [vmem:[%s1262 + $0x50] sm:$0x1]
      %v3875 = vsel %vm3831, %v3757, %v3874
      %3876 = vst [vmem:[%s1262 + $0x50] sm:$0x1] %v3875
      %v3877 = vld [vmem:[%s1262 + $0x54] sm:$0xf]
      %v3878 = vsel %vm3825, %v3759, %v3877
      %3879 = vst [vmem:[%s1262 + $0x54] sm:$0xf] %v3878
      %3880 = vst.msk [vmem:[%s1262 + $0x58] sm:$0xf] %vm3828, %v3761
      %v3881 = vld [vmem:[%s1262 + $0x5c] sm:$0x1]
      %v3882 = vsel %vm3831, %v3763, %v3881
      %3883 = vst [vmem:[%s1262 + $0x5c] sm:$0x1] %v3882
      %v3884 = vld [vmem:[%s1262 + $0x60] sm:$0xf]
      %v3885 = vsel %vm3825, %v3765, %v3884
      %3886 = vst [vmem:[%s1262 + $0x60] sm:$0xf] %v3885
      %3887 = vst.msk [vmem:[%s1262 + $0x64] sm:$0xf] %vm3828, %v3767
      %v3888 = vld [vmem:[%s1262 + $0x68] sm:$0x1]
      %v3889 = vsel %vm3831, %v3769, %v3888
      %3890 = vst [vmem:[%s1262 + $0x68] sm:$0x1] %v3889
      %v3891 = vld [vmem:[%s1262 + $0x6c] sm:$0xf]
      %v3892 = vsel %vm3825, %v3771, %v3891
      %3893 = vst [vmem:[%s1262 + $0x6c] sm:$0xf] %v3892
      %3894 = vst.msk [vmem:[%s1262 + $0x70] sm:$0xf] %vm3828, %v3773
      %v3895 = vld [vmem:[%s1262 + $0x74] sm:$0x1]
      %v3896 = vsel %vm3831, %v3775, %v3895
      %3897 = vst [vmem:[%s1262 + $0x74] sm:$0x1] %v3896
      %v3898 = vld [vmem:[%s1262 + $0x78] sm:$0xf]
      %v3899 = vsel %vm3825, %v3777, %v3898
      %3900 = vst [vmem:[%s1262 + $0x78] sm:$0xf] %v3899
      %3901 = vst.msk [vmem:[%s1262 + $0x7c] sm:$0xf] %vm3828, %v3779
      %v3902 = vld [vmem:[%s1262 + $0x80] sm:$0x1]
      %v3903 = vsel %vm3831, %v3781, %v3902
      %3904 = vst [vmem:[%s1262 + $0x80] sm:$0x1] %v3903
      %v3905 = vld [vmem:[%s1262 + $0x84] sm:$0xf]
      %v3906 = vsel %vm3825, %v3783, %v3905
      %3907 = vst [vmem:[%s1262 + $0x84] sm:$0xf] %v3906
      %3908 = vst.msk [vmem:[%s1262 + $0x88] sm:$0xf] %vm3828, %v3785
      %v3909 = vld [vmem:[%s1262 + $0x8c] sm:$0x1]
      %v3910 = vsel %vm3831, %v3787, %v3909
      %3911 = vst [vmem:[%s1262 + $0x8c] sm:$0x1] %v3910
      %v3912 = vld [vmem:[%s1262] sm:$0xf]
      %v3913 = vld [vmem:[%s1262 + $0x4] sm:$0xf]
      %v3914 = vld [vmem:[%s1262 + $0x8] sm:$0x1]
      %v3915 = vld [vmem:[%s1262 + $0xc] sm:$0xf]
      %v3916 = vld [vmem:[%s1262 + $0x10] sm:$0xf]
      %v3917 = vld [vmem:[%s1262 + $0x14] sm:$0x1]
      %v3918 = vld [vmem:[%s1262 + $0x18] sm:$0xf]
      %v3919 = vld [vmem:[%s1262 + $0x1c] sm:$0xf]
      %v3920 = vld [vmem:[%s1262 + $0x20] sm:$0x1]
      %v3921 = vld [vmem:[%s1262 + $0x24] sm:$0xf]
      %v3922 = vld [vmem:[%s1262 + $0x28] sm:$0xf]
      %v3923 = vld [vmem:[%s1262 + $0x2c] sm:$0x1]
      %v3924 = vld [vmem:[%s1262 + $0x30] sm:$0xf]
      %v3925 = vld [vmem:[%s1262 + $0x34] sm:$0xf]
      %v3926 = vld [vmem:[%s1262 + $0x38] sm:$0x1]
      %v3927 = vld [vmem:[%s1262 + $0x3c] sm:$0xf]
      %v3928 = vld [vmem:[%s1262 + $0x40] sm:$0xf]
      %v3929 = vld [vmem:[%s1262 + $0x44] sm:$0x1]
      %v3930 = vld [vmem:[%s1262 + $0x48] sm:$0xf]
      %v3931 = vld [vmem:[%s1262 + $0x4c] sm:$0xf]
      %v3932 = vld [vmem:[%s1262 + $0x50] sm:$0x1]
      %v3933 = vld [vmem:[%s1262 + $0x54] sm:$0xf]
      %v3934 = vld [vmem:[%s1262 + $0x58] sm:$0xf]
      %v3935 = vld [vmem:[%s1262 + $0x5c] sm:$0x1]
      %v3936 = vld [vmem:[%s1262 + $0x60] sm:$0xf]
      %v3937 = vld [vmem:[%s1262 + $0x64] sm:$0xf]
      %v3938 = vld [vmem:[%s1262 + $0x68] sm:$0x1]
      %v3939 = vld [vmem:[%s1262 + $0x6c] sm:$0xf]
      %v3940 = vld [vmem:[%s1262 + $0x70] sm:$0xf]
      %v3941 = vld [vmem:[%s1262 + $0x74] sm:$0x1]
      %v3962 = vunpack.c.l.b16 %v3912
      %v3963 = vunpack.c.l.b16 %v3913
      %v3964 = vunpack.c.l.b16 %v3915
      %v3965 = vunpack.c.l.b16 %v3916
      %v3966 = vunpack.c.l.b16 %v3918
      %v3967 = vunpack.c.l.b16 %v3919
      %v3968 = vunpack.c.l.b16 %v3921
      %v3969 = vunpack.c.l.b16 %v3922
      %v3970 = vunpack.c.l.b16 %v3924
      %v3971 = vunpack.c.l.b16 %v3925
      %v3972 = vunpack.c.l.b16 %v3927
      %v3973 = vunpack.c.l.b16 %v3928
      %v3974 = vunpack.c.l.b16 %v3930
      %v3975 = vunpack.c.l.b16 %v3931
      %v3976 = vunpack.c.l.b16 %v3933
      %v3977 = vunpack.c.l.b16 %v3934
      %v3978 = vunpack.c.l.b16 %v3936
      %v3979 = vunpack.c.l.b16 %v3937
      %v3980 = vunpack.c.l.b16 %v3939
      %v3981 = vunpack.c.l.b16 %v3940
      %v3982 = vpack.c.b16 %v3963, %v3962
      %v3983 = vpack.c.b16 %v3965, %v3964
      %v3984 = vpack.c.b16 %v3967, %v3966
      %v3985 = vpack.c.b16 %v3969, %v3968
      %v3986 = vpack.c.b16 %v3971, %v3970
      %v3987 = vpack.c.b16 %v3973, %v3972
      %v3988 = vpack.c.b16 %v3975, %v3974
      %v3989 = vpack.c.b16 %v3977, %v3976
      %v3990 = vpack.c.b16 %v3979, %v3978
      %v3991 = vpack.c.b16 %v3981, %v3980
      %v4012 = vunpack.c.l.b16 %v3914
      %v4013 = vunpack.c.l.b16 %v3917
      %v4014 = vunpack.c.l.b16 %v3920
      %v4015 = vunpack.c.l.b16 %v3923
      %v4016 = vunpack.c.l.b16 %v3926
      %v4017 = vunpack.c.l.b16 %v3929
      %v4018 = vunpack.c.l.b16 %v3932
      %v4019 = vunpack.c.l.b16 %v3935
      %v4020 = vunpack.c.l.b16 %v3938
      %v4021 = vunpack.c.l.b16 %v3941
      %v4022 = vpack.c.b16 %v4012, %v4012
      %v4023 = vpack.c.b16 %v4013, %v4013
      %v4024 = vpack.c.b16 %v4014, %v4014
      %v4025 = vpack.c.b16 %v4015, %v4015
      %v4026 = vpack.c.b16 %v4016, %v4016
      %v4027 = vpack.c.b16 %v4017, %v4017
      %v4028 = vpack.c.b16 %v4018, %v4018
      %v4029 = vpack.c.b16 %v4019, %v4019
      %v4030 = vpack.c.b16 %v4020, %v4020
      %v4031 = vpack.c.b16 %v4021, %v4021
      %v4033 = vshrl.u32 %v3982, 16
      %v4035 = vshll.u32 %v3982, 16
      %v4037 = vrot.slane %v4035, 1
      %v4038 = vor.u32 %v4033, %v4037
      %v4040 = vshll.u32 %v4022, 16
      %v4042 = vrot.slane %v4040, 1
      %v4043 = vsel %vm1008, %v4038, %v4042
      %v4045 = vshrl.u32 %v3983, 16
      %v4047 = vshll.u32 %v3983, 16
      %v4049 = vrot.slane %v4047, 1
      %v4050 = vor.u32 %v4045, %v4049
      %v4052 = vshll.u32 %v4023, 16
      %v4054 = vrot.slane %v4052, 1
      %v4055 = vsel %vm1008, %v4050, %v4054
      %v4057 = vshrl.u32 %v3984, 16
      %v4059 = vshll.u32 %v3984, 16
      %v4061 = vrot.slane %v4059, 1
      %v4062 = vor.u32 %v4057, %v4061
      %v4064 = vshll.u32 %v4024, 16
      %v4066 = vrot.slane %v4064, 1
      %v4067 = vsel %vm1008, %v4062, %v4066
      %v4069 = vshrl.u32 %v3985, 16
      %v4071 = vshll.u32 %v3985, 16
      %v4073 = vrot.slane %v4071, 1
      %v4074 = vor.u32 %v4069, %v4073
      %v4076 = vshll.u32 %v4025, 16
      %v4078 = vrot.slane %v4076, 1
      %v4079 = vsel %vm1008, %v4074, %v4078
      %v4081 = vshrl.u32 %v3986, 16
      %v4083 = vshll.u32 %v3986, 16
      %v4085 = vrot.slane %v4083, 1
      %v4086 = vor.u32 %v4081, %v4085
      %v4088 = vshll.u32 %v4026, 16
      %v4090 = vrot.slane %v4088, 1
      %v4091 = vsel %vm1008, %v4086, %v4090
      %v4093 = vshrl.u32 %v3987, 16
      %v4095 = vshll.u32 %v3987, 16
      %v4097 = vrot.slane %v4095, 1
      %v4098 = vor.u32 %v4093, %v4097
      %v4100 = vshll.u32 %v4027, 16
      %v4102 = vrot.slane %v4100, 1
      %v4103 = vsel %vm1008, %v4098, %v4102
      %v4105 = vshrl.u32 %v3988, 16
      %v4107 = vshll.u32 %v3988, 16
      %v4109 = vrot.slane %v4107, 1
      %v4110 = vor.u32 %v4105, %v4109
      %v4112 = vshll.u32 %v4028, 16
      %v4114 = vrot.slane %v4112, 1
      %v4115 = vsel %vm1008, %v4110, %v4114
      %v4117 = vshrl.u32 %v3989, 16
      %v4119 = vshll.u32 %v3989, 16
      %v4121 = vrot.slane %v4119, 1
      %v4122 = vor.u32 %v4117, %v4121
      %v4124 = vshll.u32 %v4029, 16
      %v4126 = vrot.slane %v4124, 1
      %v4127 = vsel %vm1008, %v4122, %v4126
      %v4129 = vshrl.u32 %v3990, 16
      %v4131 = vshll.u32 %v3990, 16
      %v4133 = vrot.slane %v4131, 1
      %v4134 = vor.u32 %v4129, %v4133
      %v4136 = vshll.u32 %v4030, 16
      %v4138 = vrot.slane %v4136, 1
      %v4139 = vsel %vm1008, %v4134, %v4138
      %v4141 = vshrl.u32 %v3991, 16
      %v4143 = vshll.u32 %v3991, 16
      %v4145 = vrot.slane %v4143, 1
      %v4146 = vor.u32 %v4141, %v4145
      %v4148 = vshll.u32 %v4031, 16
      %v4150 = vrot.slane %v4148, 1
      %v4151 = vsel %vm1008, %v4146, %v4150
      %v4162 = vrot.slane %v3982, 1
      %v4163 = vrot.slane %v4022, 1
      %v4164 = vsel %vm1165, %v4162, %v4163
      %v4165 = vrot.slane %v3983, 1
      %v4166 = vrot.slane %v4023, 1
      %v4167 = vsel %vm1165, %v4165, %v4166
      %v4168 = vrot.slane %v3984, 1
      %v4169 = vrot.slane %v4024, 1
      %v4170 = vsel %vm1165, %v4168, %v4169
      %v4171 = vrot.slane %v3985, 1
      %v4172 = vrot.slane %v4025, 1
      %v4173 = vsel %vm1165, %v4171, %v4172
      %v4174 = vrot.slane %v3986, 1
      %v4175 = vrot.slane %v4026, 1
      %v4176 = vsel %vm1165, %v4174, %v4175
      %v4177 = vrot.slane %v3987, 1
      %v4178 = vrot.slane %v4027, 1
      %v4179 = vsel %vm1165, %v4177, %v4178
      %v4180 = vrot.slane %v3988, 1
      %v4181 = vrot.slane %v4028, 1
      %v4182 = vsel %vm1165, %v4180, %v4181
      %v4183 = vrot.slane %v3989, 1
      %v4184 = vrot.slane %v4029, 1
      %v4185 = vsel %vm1165, %v4183, %v4184
      %v4186 = vrot.slane %v3990, 1
      %v4187 = vrot.slane %v4030, 1
      %v4188 = vsel %vm1165, %v4186, %v4187
      %v4189 = vrot.slane %v3991, 1
      %v4190 = vrot.slane %v4031, 1
      %v4191 = vsel %vm1165, %v4189, %v4190
      %v4202 = vld [vmem:[%s3] sm:$0xf]
      %v4203 = vld [vmem:[%s3 + $0x4] sm:$0xf]
      %v4204 = vld [vmem:[%s3 + $0x8] sm:$0xf]
      %v4205 = vld [vmem:[%s3 + $0xc] sm:$0xf]
      %v4206 = vld [vmem:[%s3 + $0x10] sm:$0xf]
      %v4207 = vld [vmem:[%s3 + $0x14] sm:$0xf]
      %v4208 = vld [vmem:[%s3 + $0x18] sm:$0xf]
      %v4209 = vld [vmem:[%s3 + $0x1c] sm:$0xf]
      %v4210 = vld [vmem:[%s3 + $0x20] sm:$0xf]
      %v4211 = vld [vmem:[%s3 + $0x24] sm:$0xf]
      %v4212 = vld [vmem:[%s3 + $0x28] sm:$0xf]
      %v4213 = vld [vmem:[%s3 + $0x2c] sm:$0xf]
      %v4214 = vld [vmem:[%s3 + $0x30] sm:$0xf]
      %v4215 = vld [vmem:[%s3 + $0x34] sm:$0xf]
      %v4216 = vld [vmem:[%s3 + $0x38] sm:$0xf]
      %v4217 = vld [vmem:[%s3 + $0x3c] sm:$0xf]
      %v4218 = vld [vmem:[%s3 + $0x40] sm:$0xf]
      %v4219 = vld [vmem:[%s3 + $0x44] sm:$0xf]
      %v4220 = vld [vmem:[%s3 + $0x48] sm:$0xf]
      %v4221 = vld [vmem:[%s3 + $0x4c] sm:$0xf]
      %v4222 = vld [vmem:[%s3 + $0x50] sm:$0xf]
      %v4223 = vld [vmem:[%s3 + $0x54] sm:$0xf]
      %v4224 = vld [vmem:[%s3 + $0x58] sm:$0xf]
      %v4225 = vld [vmem:[%s3 + $0x5c] sm:$0xf]
      %v4226 = vld [vmem:[%s3 + $0x60] sm:$0xf]
      %v4227 = vld [vmem:[%s3 + $0x64] sm:$0xf]
      %v4228 = vld [vmem:[%s3 + $0x68] sm:$0xf]
      %v4229 = vld [vmem:[%s3 + $0x6c] sm:$0xf]
      %v4230 = vld [vmem:[%s3 + $0x70] sm:$0xf]
      %v4231 = vld [vmem:[%s3 + $0x74] sm:$0xf]
      %v4232 = vld [vmem:[%s3 + $0x78] sm:$0xf]
      %v4233 = vld [vmem:[%s3 + $0x7c] sm:$0xf]
      %v4234 = vld [vmem:[%s3 + $0x80] sm:$0xf]
      %v4235 = vld [vmem:[%s3 + $0x84] sm:$0xf]
      %v4236 = vld [vmem:[%s3 + $0x88] sm:$0xf]
      %v4237 = vld [vmem:[%s3 + $0x8c] sm:$0xf]
      %v4238 = vld [vmem:[%s3 + $0x90] sm:$0xf]
      %v4239 = vld [vmem:[%s3 + $0x94] sm:$0xf]
      %v4240 = vld [vmem:[%s3 + $0x98] sm:$0xf]
      %v4241 = vld [vmem:[%s3 + $0x9c] sm:$0xf]
      %v4242 = vld [vmem:[%s3 + $0xa0] sm:$0xf]
      %v4243 = vld [vmem:[%s3 + $0xa4] sm:$0xf]
      %v4244 = vld [vmem:[%s3 + $0xa8] sm:$0xf]
      %v4245 = vld [vmem:[%s3 + $0xac] sm:$0xf]
      %v4246 = vld [vmem:[%s3 + $0xb0] sm:$0xf]
      %v4247 = vld [vmem:[%s3 + $0xb4] sm:$0xf]
      %v4248 = vld [vmem:[%s3 + $0xb8] sm:$0xf]
      %v4249 = vld [vmem:[%s3 + $0xbc] sm:$0xf]
      %v4250 = vld [vmem:[%s2464] sm:$0xf]
      %v4251 = vld [vmem:[%s2464 + $0x4] sm:$0xf]
      %v4252 = vld [vmem:[%s2464 + $0x8] sm:$0x1]
      %v4253 = vld [vmem:[%s2464 + $0xc] sm:$0xf]
      %v4254 = vld [vmem:[%s2464 + $0x10] sm:$0xf]
      %v4255 = vld [vmem:[%s2464 + $0x14] sm:$0x1]
      %v4256 = vld [vmem:[%s2464 + $0x18] sm:$0xf]
      %v4257 = vld [vmem:[%s2464 + $0x1c] sm:$0xf]
      %v4258 = vld [vmem:[%s2464 + $0x20] sm:$0x1]
      %v4259 = vld [vmem:[%s2464 + $0x24] sm:$0xf]
      %v4260 = vld [vmem:[%s2464 + $0x28] sm:$0xf]
      %v4261 = vld [vmem:[%s2464 + $0x2c] sm:$0x1]
      %v4262 = vld [vmem:[%s2464 + $0x30] sm:$0xf]
      %v4263 = vld [vmem:[%s2464 + $0x34] sm:$0xf]
      %v4264 = vld [vmem:[%s2464 + $0x38] sm:$0x1]
      %v4265 = vld [vmem:[%s2464 + $0x3c] sm:$0xf]
      %v4266 = vld [vmem:[%s2464 + $0x40] sm:$0xf]
      %v4267 = vld [vmem:[%s2464 + $0x44] sm:$0x1]
      %v4268 = vld [vmem:[%s2464 + $0x48] sm:$0xf]
      %v4269 = vld [vmem:[%s2464 + $0x4c] sm:$0xf]
      %v4270 = vld [vmem:[%s2464 + $0x50] sm:$0x1]
      %v4271 = vld [vmem:[%s2464 + $0x54] sm:$0xf]
      %v4272 = vld [vmem:[%s2464 + $0x58] sm:$0xf]
      %v4273 = vld [vmem:[%s2464 + $0x5c] sm:$0x1]
      %v4274 = vld [vmem:[%s2464 + $0x60] sm:$0xf]
      %v4275 = vld [vmem:[%s2464 + $0x64] sm:$0xf]
      %v4276 = vld [vmem:[%s2464 + $0x68] sm:$0x1]
      %v4277 = vld [vmem:[%s2464 + $0x6c] sm:$0xf]
      %v4278 = vld [vmem:[%s2464 + $0x70] sm:$0xf]
      %v4279 = vld [vmem:[%s2464 + $0x74] sm:$0x1]
      %v4300 = vunpack.c.l.b16 %v4250
      %v4301 = vunpack.c.l.b16 %v4251
      %v4302 = vunpack.c.l.b16 %v4253
      %v4303 = vunpack.c.l.b16 %v4254
      %v4304 = vunpack.c.l.b16 %v4256
      %v4305 = vunpack.c.l.b16 %v4257
      %v4306 = vunpack.c.l.b16 %v4259
      %v4307 = vunpack.c.l.b16 %v4260
      %v4308 = vunpack.c.l.b16 %v4262
      %v4309 = vunpack.c.l.b16 %v4263
      %v4310 = vunpack.c.l.b16 %v4265
      %v4311 = vunpack.c.l.b16 %v4266
      %v4312 = vunpack.c.l.b16 %v4268
      %v4313 = vunpack.c.l.b16 %v4269
      %v4314 = vunpack.c.l.b16 %v4271
      %v4315 = vunpack.c.l.b16 %v4272
      %v4316 = vunpack.c.l.b16 %v4274
      %v4317 = vunpack.c.l.b16 %v4275
      %v4318 = vunpack.c.l.b16 %v4277
      %v4319 = vunpack.c.l.b16 %v4278
      %v4320 = vpack.c.b16 %v4301, %v4300
      %v4321 = vpack.c.b16 %v4303, %v4302
      %v4322 = vpack.c.b16 %v4305, %v4304
      %v4323 = vpack.c.b16 %v4307, %v4306
      %v4324 = vpack.c.b16 %v4309, %v4308
      %v4325 = vpack.c.b16 %v4311, %v4310
      %v4326 = vpack.c.b16 %v4313, %v4312
      %v4327 = vpack.c.b16 %v4315, %v4314
      %v4328 = vpack.c.b16 %v4317, %v4316
      %v4329 = vpack.c.b16 %v4319, %v4318
      %v4350 = vunpack.c.l.b16 %v4252
      %v4351 = vunpack.c.l.b16 %v4255
      %v4352 = vunpack.c.l.b16 %v4258
      %v4353 = vunpack.c.l.b16 %v4261
      %v4354 = vunpack.c.l.b16 %v4264
      %v4355 = vunpack.c.l.b16 %v4267
      %v4356 = vunpack.c.l.b16 %v4270
      %v4357 = vunpack.c.l.b16 %v4273
      %v4358 = vunpack.c.l.b16 %v4276
      %v4359 = vunpack.c.l.b16 %v4279
      %v4360 = vpack.c.b16 %v4350, %v4350
      %v4361 = vpack.c.b16 %v4351, %v4351
      %v4362 = vpack.c.b16 %v4352, %v4352
      %v4363 = vpack.c.b16 %v4353, %v4353
      %v4364 = vpack.c.b16 %v4354, %v4354
      %v4365 = vpack.c.b16 %v4355, %v4355
      %v4366 = vpack.c.b16 %v4356, %v4356
      %v4367 = vpack.c.b16 %v4357, %v4357
      %v4368 = vpack.c.b16 %v4358, %v4358
      %v4369 = vpack.c.b16 %v4359, %v4359
      %v4371 = vshrl.u32 %v4320, 16
      %v4373 = vshll.u32 %v4320, 16
      %v4375 = vrot.slane %v4373, 1
      %v4376 = vor.u32 %v4371, %v4375
      %v4378 = vshll.u32 %v4360, 16
      %v4380 = vrot.slane %v4378, 1
      %v4381 = vsel %vm1008, %v4376, %v4380
      %v4383 = vshrl.u32 %v4321, 16
      %v4385 = vshll.u32 %v4321, 16
      %v4387 = vrot.slane %v4385, 1
      %v4388 = vor.u32 %v4383, %v4387
      %v4390 = vshll.u32 %v4361, 16
      %v4392 = vrot.slane %v4390, 1
      %v4393 = vsel %vm1008, %v4388, %v4392
      %v4395 = vshrl.u32 %v4322, 16
      %v4397 = vshll.u32 %v4322, 16
      %v4399 = vrot.slane %v4397, 1
      %v4400 = vor.u32 %v4395, %v4399
      %v4402 = vshll.u32 %v4362, 16
      %v4404 = vrot.slane %v4402, 1
      %v4405 = vsel %vm1008, %v4400, %v4404
      %v4407 = vshrl.u32 %v4323, 16
      %v4409 = vshll.u32 %v4323, 16
      %v4411 = vrot.slane %v4409, 1
      %v4412 = vor.u32 %v4407, %v4411
      %v4414 = vshll.u32 %v4363, 16
      %v4416 = vrot.slane %v4414, 1
      %v4417 = vsel %vm1008, %v4412, %v4416
      %v4419 = vshrl.u32 %v4324, 16
      %v4421 = vshll.u32 %v4324, 16
      %v4423 = vrot.slane %v4421, 1
      %v4424 = vor.u32 %v4419, %v4423
      %v4426 = vshll.u32 %v4364, 16
      %v4428 = vrot.slane %v4426, 1
      %v4429 = vsel %vm1008, %v4424, %v4428
      %v4431 = vshrl.u32 %v4325, 16
      %v4433 = vshll.u32 %v4325, 16
      %v4435 = vrot.slane %v4433, 1
      %v4436 = vor.u32 %v4431, %v4435
      %v4438 = vshll.u32 %v4365, 16
      %v4440 = vrot.slane %v4438, 1
      %v4441 = vsel %vm1008, %v4436, %v4440
      %v4443 = vshrl.u32 %v4326, 16
      %v4445 = vshll.u32 %v4326, 16
      %v4447 = vrot.slane %v4445, 1
      %v4448 = vor.u32 %v4443, %v4447
      %v4450 = vshll.u32 %v4366, 16
      %v4452 = vrot.slane %v4450, 1
      %v4453 = vsel %vm1008, %v4448, %v4452
      %v4455 = vshrl.u32 %v4327, 16
      %v4457 = vshll.u32 %v4327, 16
      %v4459 = vrot.slane %v4457, 1
      %v4460 = vor.u32 %v4455, %v4459
      %v4462 = vshll.u32 %v4367, 16
      %v4464 = vrot.slane %v4462, 1
      %v4465 = vsel %vm1008, %v4460, %v4464
      %v4467 = vshrl.u32 %v4328, 16
      %v4469 = vshll.u32 %v4328, 16
      %v4471 = vrot.slane %v4469, 1
      %v4472 = vor.u32 %v4467, %v4471
      %v4474 = vshll.u32 %v4368, 16
      %v4476 = vrot.slane %v4474, 1
      %v4477 = vsel %vm1008, %v4472, %v4476
      %v4479 = vshrl.u32 %v4329, 16
      %v4481 = vshll.u32 %v4329, 16
      %v4483 = vrot.slane %v4481, 1
      %v4484 = vor.u32 %v4479, %v4483
      %v4486 = vshll.u32 %v4369, 16
      %v4488 = vrot.slane %v4486, 1
      %v4489 = vsel %vm1008, %v4484, %v4488
      %v4500 = vrot.slane %v4320, 1
      %v4501 = vrot.slane %v4360, 1
      %v4502 = vsel %vm1165, %v4500, %v4501
      %v4503 = vrot.slane %v4321, 1
      %v4504 = vrot.slane %v4361, 1
      %v4505 = vsel %vm1165, %v4503, %v4504
      %v4506 = vrot.slane %v4322, 1
      %v4507 = vrot.slane %v4362, 1
      %v4508 = vsel %vm1165, %v4506, %v4507
      %v4509 = vrot.slane %v4323, 1
      %v4510 = vrot.slane %v4363, 1
      %v4511 = vsel %vm1165, %v4509, %v4510
      %v4512 = vrot.slane %v4324, 1
      %v4513 = vrot.slane %v4364, 1
      %v4514 = vsel %vm1165, %v4512, %v4513
      %v4515 = vrot.slane %v4325, 1
      %v4516 = vrot.slane %v4365, 1
      %v4517 = vsel %vm1165, %v4515, %v4516
      %v4518 = vrot.slane %v4326, 1
      %v4519 = vrot.slane %v4366, 1
      %v4520 = vsel %vm1165, %v4518, %v4519
      %v4521 = vrot.slane %v4327, 1
      %v4522 = vrot.slane %v4367, 1
      %v4523 = vsel %vm1165, %v4521, %v4522
      %v4524 = vrot.slane %v4328, 1
      %v4525 = vrot.slane %v4368, 1
      %v4526 = vsel %vm1165, %v4524, %v4525
      %v4527 = vrot.slane %v4329, 1
      %v4528 = vrot.slane %v4369, 1
      %v4529 = vsel %vm1165, %v4527, %v4528
      %s4540 = scalar_lea.vmem %s3, 192
      %v4541 = vld [vmem:[%s4540] sm:$0xf]
      %v4542 = vld [vmem:[%s4540 + $0x4] sm:$0xf]
      %v4543 = vld [vmem:[%s4540 + $0x8] sm:$0xf]
      %v4544 = vld [vmem:[%s4540 + $0xc] sm:$0xf]
      %v4545 = vld [vmem:[%s4540 + $0x10] sm:$0xf]
      %v4546 = vld [vmem:[%s4540 + $0x14] sm:$0xf]
      %v4547 = vld [vmem:[%s4540 + $0x18] sm:$0xf]
      %v4548 = vld [vmem:[%s4540 + $0x1c] sm:$0xf]
      %v4549 = vld [vmem:[%s4540 + $0x20] sm:$0xf]
      %v4550 = vld [vmem:[%s4540 + $0x24] sm:$0xf]
      %v4551 = vld [vmem:[%s4540 + $0x28] sm:$0xf]
      %v4552 = vld [vmem:[%s4540 + $0x2c] sm:$0xf]
      %v4553 = vld [vmem:[%s4540 + $0x30] sm:$0xf]
      %v4554 = vld [vmem:[%s4540 + $0x34] sm:$0xf]
      %v4555 = vld [vmem:[%s4540 + $0x38] sm:$0xf]
      %v4556 = vld [vmem:[%s4540 + $0x3c] sm:$0xf]
      %v4557 = vld [vmem:[%s4540 + $0x40] sm:$0xf]
      %v4558 = vld [vmem:[%s4540 + $0x44] sm:$0xf]
      %v4559 = vld [vmem:[%s4540 + $0x48] sm:$0xf]
      %v4560 = vld [vmem:[%s4540 + $0x4c] sm:$0xf]
      %v4561 = vld [vmem:[%s4540 + $0x50] sm:$0xf]
      %v4562 = vld [vmem:[%s4540 + $0x54] sm:$0xf]
      %v4563 = vld [vmem:[%s4540 + $0x58] sm:$0xf]
      %v4564 = vld [vmem:[%s4540 + $0x5c] sm:$0xf]
      %v4565 = vld [vmem:[%s4540 + $0x60] sm:$0xf]
      %v4566 = vld [vmem:[%s4540 + $0x64] sm:$0xf]
      %v4567 = vld [vmem:[%s4540 + $0x68] sm:$0xf]
      %v4568 = vld [vmem:[%s4540 + $0x6c] sm:$0xf]
      %v4569 = vld [vmem:[%s4540 + $0x70] sm:$0xf]
      %v4570 = vld [vmem:[%s4540 + $0x74] sm:$0xf]
      %v4571 = vld [vmem:[%s4540 + $0x78] sm:$0xf]
      %v4572 = vld [vmem:[%s4540 + $0x7c] sm:$0xf]
      %v4573 = vld [vmem:[%s4540 + $0x80] sm:$0xf]
      %v4574 = vld [vmem:[%s4540 + $0x84] sm:$0xf]
      %v4575 = vld [vmem:[%s4540 + $0x88] sm:$0xf]
      %v4576 = vld [vmem:[%s4540 + $0x8c] sm:$0xf]
      %v4577 = vld [vmem:[%s4540 + $0x90] sm:$0xf]
      %v4578 = vld [vmem:[%s4540 + $0x94] sm:$0xf]
      %v4579 = vld [vmem:[%s4540 + $0x98] sm:$0xf]
      %v4580 = vld [vmem:[%s4540 + $0x9c] sm:$0xf]
      %v4581 = vld [vmem:[%s4540 + $0xa0] sm:$0xf]
      %v4582 = vld [vmem:[%s4540 + $0xa4] sm:$0xf]
      %v4583 = vld [vmem:[%s4540 + $0xa8] sm:$0xf]
      %v4584 = vld [vmem:[%s4540 + $0xac] sm:$0xf]
      %v4585 = vld [vmem:[%s4540 + $0xb0] sm:$0xf]
      %v4586 = vld [vmem:[%s4540 + $0xb4] sm:$0xf]
      %v4587 = vld [vmem:[%s4540 + $0xb8] sm:$0xf]
      %v4588 = vld [vmem:[%s4540 + $0xbc] sm:$0xf]
      %v4637 = vunpack.c.l.b16 %v4541
      %v4638 = vunpack.c.l.b16 %v4542
      %v4639 = vunpack.c.l.b16 %v4543
      %v4640 = vunpack.c.l.b16 %v4544
      %v4641 = vunpack.c.l.b16 %v4545
      %v4642 = vunpack.c.l.b16 %v4546
      %v4643 = vunpack.c.l.b16 %v4547
      %v4644 = vunpack.c.l.b16 %v4548
      %v4645 = vunpack.c.l.b16 %v4549
      %v4646 = vunpack.c.l.b16 %v4550
      %v4647 = vunpack.c.l.b16 %v4551
      %v4648 = vunpack.c.l.b16 %v4552
      %v4649 = vunpack.c.l.b16 %v4553
      %v4650 = vunpack.c.l.b16 %v4554
      %v4651 = vunpack.c.l.b16 %v4555
      %v4652 = vunpack.c.l.b16 %v4556
      %v4653 = vunpack.c.l.b16 %v4557
      %v4654 = vunpack.c.l.b16 %v4558
      %v4655 = vunpack.c.l.b16 %v4559
      %v4656 = vunpack.c.l.b16 %v4560
      %v4657 = vunpack.c.l.b16 %v4561
      %v4658 = vunpack.c.l.b16 %v4562
      %v4659 = vunpack.c.l.b16 %v4563
      %v4660 = vunpack.c.l.b16 %v4564
      %v4661 = vunpack.c.l.b16 %v4565
      %v4662 = vunpack.c.l.b16 %v4566
      %v4663 = vunpack.c.l.b16 %v4567
      %v4664 = vunpack.c.l.b16 %v4568
      %v4665 = vunpack.c.l.b16 %v4569
      %v4666 = vunpack.c.l.b16 %v4570
      %v4667 = vunpack.c.l.b16 %v4571
      %v4668 = vunpack.c.l.b16 %v4572
      %v4669 = vunpack.c.l.b16 %v4573
      %v4670 = vunpack.c.l.b16 %v4574
      %v4671 = vunpack.c.l.b16 %v4575
      %v4672 = vunpack.c.l.b16 %v4576
      %v4673 = vunpack.c.l.b16 %v4577
      %v4674 = vunpack.c.l.b16 %v4578
      %v4675 = vunpack.c.l.b16 %v4579
      %v4676 = vunpack.c.l.b16 %v4580
      %v4677 = vunpack.c.l.b16 %v4581
      %v4678 = vunpack.c.l.b16 %v4582
      %v4679 = vunpack.c.l.b16 %v4583
      %v4680 = vunpack.c.l.b16 %v4584
      %v4681 = vunpack.c.l.b16 %v4585
      %v4682 = vunpack.c.l.b16 %v4586
      %v4683 = vunpack.c.l.b16 %v4587
      %v4684 = vunpack.c.l.b16 %v4588
      %v4685 = vpack.c.b16 %v4638, %v4637
      %v4686 = vpack.c.b16 %v4640, %v4639
      %v4687 = vpack.c.b16 %v4642, %v4641
      %v4688 = vpack.c.b16 %v4644, %v4643
      %v4689 = vpack.c.b16 %v4646, %v4645
      %v4690 = vpack.c.b16 %v4648, %v4647
      %v4691 = vpack.c.b16 %v4650, %v4649
      %v4692 = vpack.c.b16 %v4652, %v4651
      %v4693 = vpack.c.b16 %v4654, %v4653
      %v4694 = vpack.c.b16 %v4656, %v4655
      %v4695 = vpack.c.b16 %v4658, %v4657
      %v4696 = vpack.c.b16 %v4660, %v4659
      %v4697 = vpack.c.b16 %v4662, %v4661
      %v4698 = vpack.c.b16 %v4664, %v4663
      %v4699 = vpack.c.b16 %v4666, %v4665
      %v4700 = vpack.c.b16 %v4668, %v4667
      %v4701 = vpack.c.b16 %v4670, %v4669
      %v4702 = vpack.c.b16 %v4672, %v4671
      %v4703 = vpack.c.b16 %v4674, %v4673
      %v4704 = vpack.c.b16 %v4676, %v4675
      %v4705 = vpack.c.b16 %v4678, %v4677
      %v4706 = vpack.c.b16 %v4680, %v4679
      %v4707 = vpack.c.b16 %v4682, %v4681
      %v4708 = vpack.c.b16 %v4684, %v4683
      %4733 = vmatprep.subr.bf16.mxu0 0
      %4734 = vmatpush1.bf16.msra.mxu0 %v4692
      %4735 = vmatprep.subr.bf16.mxu0 0
      %4736 = vmatpush1.bf16.msra.mxu0 %v4691
      %4737 = vmatprep.subr.bf16.mxu0 0
      %4738 = vmatpush1.bf16.msra.mxu0 %v4690
      %4739 = vmatprep.subr.bf16.mxu0 0
      %4740 = vmatpush1.bf16.msra.mxu0 %v4689
      %4741 = vmatprep.subr.bf16.mxu0 0
      %4742 = vmatpush1.bf16.msra.mxu0 %v4688
      %4743 = vmatprep.subr.bf16.mxu0 0
      %4744 = vmatpush1.bf16.msra.mxu0 %v4687
      %4745 = vmatprep.subr.bf16.mxu0 0
      %4746 = vmatpush1.bf16.msra.mxu0 %v4686
      %4747 = vmatprep.subr.bf16.mxu0 0
      %4748 = vmatpush1.bf16.msra.mxu0 %v4685
      %4749 = vmatprep.subr.bf16.mxu0 0
      %4750 = vmatpush2.bf16.msra.mxu0 %v4700
      %4751 = vmatprep.subr.bf16.mxu0 0
      %4752 = vmatpush2.bf16.msra.mxu0 %v4699
      %4753 = vmatprep.subr.bf16.mxu0 0
      %4754 = vmatpush2.bf16.msra.mxu0 %v4698
      %4755 = vmatprep.subr.bf16.mxu0 0
      %4756 = vmatpush2.bf16.msra.mxu0 %v4697
      %4757 = vmatprep.subr.bf16.mxu0 0
      %4758 = vmatpush2.bf16.msra.mxu0 %v4696
      %4759 = vmatprep.subr.bf16.mxu0 0
      %4760 = vmatpush2.bf16.msra.mxu0 %v4695
      %4761 = vmatprep.subr.bf16.mxu0 0
      %4762 = vmatpush2.bf16.msra.mxu0 %v4694
      %4763 = vmatprep.subr.bf16.mxu0 0
      %4764 = vmatpush2.bf16.msra.mxu0 %v4693
      %4765 = vmatprep.mubr.bf16.mxu0 %v4381
      %4766 = vmatmul.mubr.bf16.gmra.mxu0 %v4320
      %v4767 = vpop.f32.mrf.mxu0
      %v4768 = vadd.f32 0.0, %v4767
      %v4769 = vpop.f32.mrf.mxu0
      %v4770 = vpop.f32.mrf.mxu0
      %v4771 = vadd.f32 0.0, %v4770
      %v4772 = vpop.f32.mrf.mxu0
      %4773 = vmatprep.mubr.bf16.mxu0 %v4393
      %4774 = vmatmul.mubr.bf16.gmra.mxu0 %v4321
      %v4775 = vpop.f32.mrf.mxu0
      %v4776 = vadd.f32 0.0, %v4775
      %v4777 = vpop.f32.mrf.mxu0
      %v4778 = vpop.f32.mrf.mxu0
      %v4779 = vadd.f32 0.0, %v4778
      %v4780 = vpop.f32.mrf.mxu0
      %4781 = vmatprep.mubr.bf16.mxu0 %v4405
      %4782 = vmatmul.mubr.bf16.gmra.mxu0 %v4322
      %v4783 = vpop.f32.mrf.mxu0
      %v4784 = vadd.f32 0.0, %v4783
      %v4785 = vpop.f32.mrf.mxu0
      %v4786 = vpop.f32.mrf.mxu0
      %v4787 = vadd.f32 0.0, %v4786
      %v4788 = vpop.f32.mrf.mxu0
      %4789 = vmatprep.mubr.bf16.mxu0 %v4417
      %4790 = vmatmul.mubr.bf16.gmra.mxu0 %v4323
      %v4791 = vpop.f32.mrf.mxu0
      %v4792 = vadd.f32 0.0, %v4791
      %v4793 = vpop.f32.mrf.mxu0
      %v4794 = vpop.f32.mrf.mxu0
      %v4795 = vadd.f32 0.0, %v4794
      %v4796 = vpop.f32.mrf.mxu0
      %4797 = vmatprep.mubr.bf16.mxu0 %v4429
      %4798 = vmatmul.mubr.bf16.gmra.mxu0 %v4324
      %v4799 = vpop.f32.mrf.mxu0
      %v4800 = vadd.f32 0.0, %v4799
      %v4801 = vpop.f32.mrf.mxu0
      %v4802 = vpop.f32.mrf.mxu0
      %v4803 = vadd.f32 0.0, %v4802
      %v4804 = vpop.f32.mrf.mxu0
      %4805 = vmatprep.mubr.bf16.mxu0 %v4441
      %4806 = vmatmul.mubr.bf16.gmra.mxu0 %v4325
      %v4807 = vpop.f32.mrf.mxu0
      %v4808 = vadd.f32 0.0, %v4807
      %v4809 = vpop.f32.mrf.mxu0
      %v4810 = vpop.f32.mrf.mxu0
      %v4811 = vadd.f32 0.0, %v4810
      %v4812 = vpop.f32.mrf.mxu0
      %4813 = vmatprep.mubr.bf16.mxu0 %v4453
      %4814 = vmatmul.mubr.bf16.gmra.mxu0 %v4326
      %v4815 = vpop.f32.mrf.mxu0
      %v4816 = vadd.f32 0.0, %v4815
      %v4817 = vpop.f32.mrf.mxu0
      %v4818 = vpop.f32.mrf.mxu0
      %v4819 = vadd.f32 0.0, %v4818
      %v4820 = vpop.f32.mrf.mxu0
      %4821 = vmatprep.mubr.bf16.mxu0 %v4465
      %4822 = vmatmul.mubr.bf16.gmra.mxu0 %v4327
      %v4823 = vpop.f32.mrf.mxu0
      %v4824 = vadd.f32 0.0, %v4823
      %v4825 = vpop.f32.mrf.mxu0
      %v4826 = vpop.f32.mrf.mxu0
      %v4827 = vadd.f32 0.0, %v4826
      %v4828 = vpop.f32.mrf.mxu0
      %4829 = vmatprep.mubr.bf16.mxu0 %v4477
      %4830 = vmatmul.mubr.bf16.gmra.mxu0 %v4328
      %v4831 = vpop.f32.mrf.mxu0
      %v4832 = vadd.f32 0.0, %v4831
      %v4833 = vpop.f32.mrf.mxu0
      %v4834 = vpop.f32.mrf.mxu0
      %v4835 = vadd.f32 0.0, %v4834
      %v4836 = vpop.f32.mrf.mxu0
      %4837 = vmatprep.mubr.bf16.mxu0 %v4489
      %4838 = vmatmul.mubr.bf16.gmra.mxu0 %v4329
      %v4839 = vpop.f32.mrf.mxu0
      %v4840 = vadd.f32 0.0, %v4839
      %v4841 = vpop.f32.mrf.mxu0
      %v4842 = vpop.f32.mrf.mxu0
      %v4843 = vadd.f32 0.0, %v4842
      %v4844 = vpop.f32.mrf.mxu0
      %4845 = vdwg.mxu0
      %4846 = vmatprep.subr.bf16.mxu0 0
      %4847 = vmatpush1.bf16.msra.mxu0 %v4708
      %4848 = vmatprep.subr.bf16.mxu0 0
      %4849 = vmatpush1.bf16.msra.mxu0 %v4707
      %4850 = vmatprep.subr.bf16.mxu0 0
      %4851 = vmatpush1.bf16.msra.mxu0 %v4706
      %4852 = vmatprep.subr.bf16.mxu0 0
      %4853 = vmatpush1.bf16.msra.mxu0 %v4705
      %4854 = vmatprep.subr.bf16.mxu0 0
      %4855 = vmatpush1.bf16.msra.mxu0 %v4704
      %4856 = vmatprep.subr.bf16.mxu0 0
      %4857 = vmatpush1.bf16.msra.mxu0 %v4703
      %4858 = vmatprep.subr.bf16.mxu0 0
      %4859 = vmatpush1.bf16.msra.mxu0 %v4702
      %4860 = vmatprep.subr.bf16.mxu0 0
      %4861 = vmatpush1.bf16.msra.mxu0 %v4701
      %4862 = vmatprep.subr.bf16.mxu0 0
      %4863 = vmatpush2.bf16.msra.mxu0 0
      %4864 = vmatprep.subr.bf16.mxu0 0
      %4865 = vmatpush2.bf16.msra.mxu0 0
      %4866 = vmatprep.subr.bf16.mxu0 0
      %4867 = vmatpush2.bf16.msra.mxu0 0
      %4868 = vmatprep.subr.bf16.mxu0 0
      %4869 = vmatpush2.bf16.msra.mxu0 0
      %4870 = vmatprep.subr.bf16.mxu0 0
      %4871 = vmatpush2.bf16.msra.mxu0 0
      %4872 = vmatprep.subr.bf16.mxu0 0
      %4873 = vmatpush2.bf16.msra.mxu0 0
      %4874 = vmatprep.subr.bf16.mxu0 0
      %4875 = vmatpush2.bf16.msra.mxu0 0
      %4876 = vmatprep.subr.bf16.mxu0 0
      %4877 = vmatpush2.bf16.msra.mxu0 0
      %4878 = vmatprep.mubr.bf16.mxu0 0
      %4879 = vmatmul.mubr.bf16.gmra.mxu0 %v4502
      %v4880 = vpop.f32.mrf.mxu0
      %v4881 = vadd.f32 %v4768, %v4880
      %v4882 = vpop.f32.mrf.mxu0
      %v4883 = vpop.f32.mrf.mxu0
      %v4884 = vadd.f32 %v4771, %v4883
      %v4885 = vpop.f32.mrf.mxu0
      %4886 = vmatprep.mubr.bf16.mxu0 0
      %4887 = vmatmul.mubr.bf16.gmra.mxu0 %v4505
      %v4888 = vpop.f32.mrf.mxu0
      %v4889 = vadd.f32 %v4776, %v4888
      %v4890 = vpop.f32.mrf.mxu0
      %v4891 = vpop.f32.mrf.mxu0
      %v4892 = vadd.f32 %v4779, %v4891
      %v4893 = vpop.f32.mrf.mxu0
      %4894 = vmatprep.mubr.bf16.mxu0 0
      %4895 = vmatmul.mubr.bf16.gmra.mxu0 %v4508
      %v4896 = vpop.f32.mrf.mxu0
      %v4897 = vadd.f32 %v4784, %v4896
      %v4898 = vpop.f32.mrf.mxu0
      %v4899 = vpop.f32.mrf.mxu0
      %v4900 = vadd.f32 %v4787, %v4899
      %v4901 = vpop.f32.mrf.mxu0
      %4902 = vmatprep.mubr.bf16.mxu0 0
      %4903 = vmatmul.mubr.bf16.gmra.mxu0 %v4511
      %v4904 = vpop.f32.mrf.mxu0
      %v4905 = vadd.f32 %v4792, %v4904
      %v4906 = vpop.f32.mrf.mxu0
      %v4907 = vpop.f32.mrf.mxu0
      %v4908 = vadd.f32 %v4795, %v4907
      %v4909 = vpop.f32.mrf.mxu0
      %4910 = vmatprep.mubr.bf16.mxu0 0
      %4911 = vmatmul.mubr.bf16.gmra.mxu0 %v4514
      %v4912 = vpop.f32.mrf.mxu0
      %v4913 = vadd.f32 %v4800, %v4912
      %v4914 = vpop.f32.mrf.mxu0
      %v4915 = vpop.f32.mrf.mxu0
      %v4916 = vadd.f32 %v4803, %v4915
      %v4917 = vpop.f32.mrf.mxu0
      %4918 = vmatprep.mubr.bf16.mxu0 0
      %4919 = vmatmul.mubr.bf16.gmra.mxu0 %v4517
      %v4920 = vpop.f32.mrf.mxu0
      %v4921 = vadd.f32 %v4808, %v4920
      %v4922 = vpop.f32.mrf.mxu0
      %v4923 = vpop.f32.mrf.mxu0
      %v4924 = vadd.f32 %v4811, %v4923
      %v4925 = vpop.f32.mrf.mxu0
      %4926 = vmatprep.mubr.bf16.mxu0 0
      %4927 = vmatmul.mubr.bf16.gmra.mxu0 %v4520
      %v4928 = vpop.f32.mrf.mxu0
      %v4929 = vadd.f32 %v4816, %v4928
      %v4930 = vpop.f32.mrf.mxu0
      %v4931 = vpop.f32.mrf.mxu0
      %v4932 = vadd.f32 %v4819, %v4931
      %v4933 = vpop.f32.mrf.mxu0
      %4934 = vmatprep.mubr.bf16.mxu0 0
      %4935 = vmatmul.mubr.bf16.gmra.mxu0 %v4523
      %v4936 = vpop.f32.mrf.mxu0
      %v4937 = vadd.f32 %v4824, %v4936
      %v4938 = vpop.f32.mrf.mxu0
      %v4939 = vpop.f32.mrf.mxu0
      %v4940 = vadd.f32 %v4827, %v4939
      %v4941 = vpop.f32.mrf.mxu0
      %4942 = vmatprep.mubr.bf16.mxu0 0
      %4943 = vmatmul.mubr.bf16.gmra.mxu0 %v4526
      %v4944 = vpop.f32.mrf.mxu0
      %v4945 = vadd.f32 %v4832, %v4944
      %v4946 = vpop.f32.mrf.mxu0
      %v4947 = vpop.f32.mrf.mxu0
      %v4948 = vadd.f32 %v4835, %v4947
      %v4949 = vpop.f32.mrf.mxu0
      %4950 = vmatprep.mubr.bf16.mxu0 0
      %4951 = vmatmul.mubr.bf16.gmra.mxu0 %v4529
      %v4952 = vpop.f32.mrf.mxu0
      %v4953 = vadd.f32 %v4840, %v4952
      %v4954 = vpop.f32.mrf.mxu0
      %v4955 = vpop.f32.mrf.mxu0
      %v4956 = vadd.f32 %v4843, %v4955
      %v4957 = vpop.f32.mrf.mxu0
      %4958 = vdwg.mxu0
      %v5007 = vunpack.c.l.b16 %v4202
      %v5008 = vunpack.c.l.b16 %v4203
      %v5009 = vunpack.c.l.b16 %v4204
      %v5010 = vunpack.c.l.b16 %v4205
      %v5011 = vunpack.c.l.b16 %v4206
      %v5012 = vunpack.c.l.b16 %v4207
      %v5013 = vunpack.c.l.b16 %v4208
      %v5014 = vunpack.c.l.b16 %v4209
      %v5015 = vunpack.c.l.b16 %v4210
      %v5016 = vunpack.c.l.b16 %v4211
      %v5017 = vunpack.c.l.b16 %v4212
      %v5018 = vunpack.c.l.b16 %v4213
      %v5019 = vunpack.c.l.b16 %v4214
      %v5020 = vunpack.c.l.b16 %v4215
      %v5021 = vunpack.c.l.b16 %v4216
      %v5022 = vunpack.c.l.b16 %v4217
      %v5023 = vunpack.c.l.b16 %v4218
      %v5024 = vunpack.c.l.b16 %v4219
      %v5025 = vunpack.c.l.b16 %v4220
      %v5026 = vunpack.c.l.b16 %v4221
      %v5027 = vunpack.c.l.b16 %v4222
      %v5028 = vunpack.c.l.b16 %v4223
      %v5029 = vunpack.c.l.b16 %v4224
      %v5030 = vunpack.c.l.b16 %v4225
      %v5031 = vunpack.c.l.b16 %v4226
      %v5032 = vunpack.c.l.b16 %v4227
      %v5033 = vunpack.c.l.b16 %v4228
      %v5034 = vunpack.c.l.b16 %v4229
      %v5035 = vunpack.c.l.b16 %v4230
      %v5036 = vunpack.c.l.b16 %v4231
      %v5037 = vunpack.c.l.b16 %v4232
      %v5038 = vunpack.c.l.b16 %v4233
      %v5039 = vunpack.c.l.b16 %v4234
      %v5040 = vunpack.c.l.b16 %v4235
      %v5041 = vunpack.c.l.b16 %v4236
      %v5042 = vunpack.c.l.b16 %v4237
      %v5043 = vunpack.c.l.b16 %v4238
      %v5044 = vunpack.c.l.b16 %v4239
      %v5045 = vunpack.c.l.b16 %v4240
      %v5046 = vunpack.c.l.b16 %v4241
      %v5047 = vunpack.c.l.b16 %v4242
      %v5048 = vunpack.c.l.b16 %v4243
      %v5049 = vunpack.c.l.b16 %v4244
      %v5050 = vunpack.c.l.b16 %v4245
      %v5051 = vunpack.c.l.b16 %v4246
      %v5052 = vunpack.c.l.b16 %v4247
      %v5053 = vunpack.c.l.b16 %v4248
      %v5054 = vunpack.c.l.b16 %v4249
      %v5055 = vpack.c.b16 %v5008, %v5007
      %v5056 = vpack.c.b16 %v5010, %v5009
      %v5057 = vpack.c.b16 %v5012, %v5011
      %v5058 = vpack.c.b16 %v5014, %v5013
      %v5059 = vpack.c.b16 %v5016, %v5015
      %v5060 = vpack.c.b16 %v5018, %v5017
      %v5061 = vpack.c.b16 %v5020, %v5019
      %v5062 = vpack.c.b16 %v5022, %v5021
      %v5063 = vpack.c.b16 %v5024, %v5023
      %v5064 = vpack.c.b16 %v5026, %v5025
      %v5065 = vpack.c.b16 %v5028, %v5027
      %v5066 = vpack.c.b16 %v5030, %v5029
      %v5067 = vpack.c.b16 %v5032, %v5031
      %v5068 = vpack.c.b16 %v5034, %v5033
      %v5069 = vpack.c.b16 %v5036, %v5035
      %v5070 = vpack.c.b16 %v5038, %v5037
      %v5071 = vpack.c.b16 %v5040, %v5039
      %v5072 = vpack.c.b16 %v5042, %v5041
      %v5073 = vpack.c.b16 %v5044, %v5043
      %v5074 = vpack.c.b16 %v5046, %v5045
      %v5075 = vpack.c.b16 %v5048, %v5047
      %v5076 = vpack.c.b16 %v5050, %v5049
      %v5077 = vpack.c.b16 %v5052, %v5051
      %v5078 = vpack.c.b16 %v5054, %v5053
      %5103 = vmatprep.subr.bf16.mxu0 0
      %5104 = vmatpush1.bf16.msra.mxu0 %v5062
      %5105 = vmatprep.subr.bf16.mxu0 0
      %5106 = vmatpush1.bf16.msra.mxu0 %v5061
      %5107 = vmatprep.subr.bf16.mxu0 0
      %5108 = vmatpush1.bf16.msra.mxu0 %v5060
      %5109 = vmatprep.subr.bf16.mxu0 0
      %5110 = vmatpush1.bf16.msra.mxu0 %v5059
      %5111 = vmatprep.subr.bf16.mxu0 0
      %5112 = vmatpush1.bf16.msra.mxu0 %v5058
      %5113 = vmatprep.subr.bf16.mxu0 0
      %5114 = vmatpush1.bf16.msra.mxu0 %v5057
      %5115 = vmatprep.subr.bf16.mxu0 0
      %5116 = vmatpush1.bf16.msra.mxu0 %v5056
      %5117 = vmatprep.subr.bf16.mxu0 0
      %5118 = vmatpush1.bf16.msra.mxu0 %v5055
      %5119 = vmatprep.subr.bf16.mxu0 0
      %5120 = vmatpush2.bf16.msra.mxu0 %v5070
      %5121 = vmatprep.subr.bf16.mxu0 0
      %5122 = vmatpush2.bf16.msra.mxu0 %v5069
      %5123 = vmatprep.subr.bf16.mxu0 0
      %5124 = vmatpush2.bf16.msra.mxu0 %v5068
      %5125 = vmatprep.subr.bf16.mxu0 0
      %5126 = vmatpush2.bf16.msra.mxu0 %v5067
      %5127 = vmatprep.subr.bf16.mxu0 0
      %5128 = vmatpush2.bf16.msra.mxu0 %v5066
      %5129 = vmatprep.subr.bf16.mxu0 0
      %5130 = vmatpush2.bf16.msra.mxu0 %v5065
      %5131 = vmatprep.subr.bf16.mxu0 0
      %5132 = vmatpush2.bf16.msra.mxu0 %v5064
      %5133 = vmatprep.subr.bf16.mxu0 0
      %5134 = vmatpush2.bf16.msra.mxu0 %v5063
      %5135 = vmatprep.mubr.bf16.mxu0 %v4043
      %5136 = vmatmul.mubr.bf16.gmra.mxu0 %v3982
      %v5137 = vpop.f32.mrf.mxu0
      %v5138 = vadd.f32 %v4881, %v5137
      %v5139 = vpop.f32.mrf.mxu0
      %v5140 = vpop.f32.mrf.mxu0
      %v5141 = vadd.f32 %v4884, %v5140
      %v5142 = vpop.f32.mrf.mxu0
      %5143 = vmatprep.mubr.bf16.mxu0 %v4055
      %5144 = vmatmul.mubr.bf16.gmra.mxu0 %v3983
      %v5145 = vpop.f32.mrf.mxu0
      %v5146 = vadd.f32 %v4889, %v5145
      %v5147 = vpop.f32.mrf.mxu0
      %v5148 = vpop.f32.mrf.mxu0
      %v5149 = vadd.f32 %v4892, %v5148
      %v5150 = vpop.f32.mrf.mxu0
      %5151 = vmatprep.mubr.bf16.mxu0 %v4067
      %5152 = vmatmul.mubr.bf16.gmra.mxu0 %v3984
      %v5153 = vpop.f32.mrf.mxu0
      %v5154 = vadd.f32 %v4897, %v5153
      %v5155 = vpop.f32.mrf.mxu0
      %v5156 = vpop.f32.mrf.mxu0
      %v5157 = vadd.f32 %v4900, %v5156
      %v5158 = vpop.f32.mrf.mxu0
      %5159 = vmatprep.mubr.bf16.mxu0 %v4079
      %5160 = vmatmul.mubr.bf16.gmra.mxu0 %v3985
      %v5161 = vpop.f32.mrf.mxu0
      %v5162 = vadd.f32 %v4905, %v5161
      %v5163 = vpop.f32.mrf.mxu0
      %v5164 = vpop.f32.mrf.mxu0
      %v5165 = vadd.f32 %v4908, %v5164
      %v5166 = vpop.f32.mrf.mxu0
      %5167 = vmatprep.mubr.bf16.mxu0 %v4091
      %5168 = vmatmul.mubr.bf16.gmra.mxu0 %v3986
      %v5169 = vpop.f32.mrf.mxu0
      %v5170 = vadd.f32 %v4913, %v5169
      %v5171 = vpop.f32.mrf.mxu0
      %v5172 = vpop.f32.mrf.mxu0
      %v5173 = vadd.f32 %v4916, %v5172
      %v5174 = vpop.f32.mrf.mxu0
      %5175 = vmatprep.mubr.bf16.mxu0 %v4103
      %5176 = vmatmul.mubr.bf16.gmra.mxu0 %v3987
      %v5177 = vpop.f32.mrf.mxu0
      %v5178 = vadd.f32 %v4921, %v5177
      %v5179 = vpop.f32.mrf.mxu0
      %v5180 = vpop.f32.mrf.mxu0
      %v5181 = vadd.f32 %v4924, %v5180
      %v5182 = vpop.f32.mrf.mxu0
      %5183 = vmatprep.mubr.bf16.mxu0 %v4115
      %5184 = vmatmul.mubr.bf16.gmra.mxu0 %v3988
      %v5185 = vpop.f32.mrf.mxu0
      %v5186 = vadd.f32 %v4929, %v5185
      %v5187 = vpop.f32.mrf.mxu0
      %v5188 = vpop.f32.mrf.mxu0
      %v5189 = vadd.f32 %v4932, %v5188
      %v5190 = vpop.f32.mrf.mxu0
      %5191 = vmatprep.mubr.bf16.mxu0 %v4127
      %5192 = vmatmul.mubr.bf16.gmra.mxu0 %v3989
      %v5193 = vpop.f32.mrf.mxu0
      %v5194 = vadd.f32 %v4937, %v5193
      %v5195 = vpop.f32.mrf.mxu0
      %v5196 = vpop.f32.mrf.mxu0
      %v5197 = vadd.f32 %v4940, %v5196
      %v5198 = vpop.f32.mrf.mxu0
      %5199 = vmatprep.mubr.bf16.mxu0 %v4139
      %5200 = vmatmul.mubr.bf16.gmra.mxu0 %v3990
      %v5201 = vpop.f32.mrf.mxu0
      %v5202 = vadd.f32 %v4945, %v5201
      %v5203 = vpop.f32.mrf.mxu0
      %v5204 = vpop.f32.mrf.mxu0
      %v5205 = vadd.f32 %v4948, %v5204
      %v5206 = vpop.f32.mrf.mxu0
      %5207 = vmatprep.mubr.bf16.mxu0 %v4151
      %5208 = vmatmul.mubr.bf16.gmra.mxu0 %v3991
      %v5209 = vpop.f32.mrf.mxu0
      %v5210 = vadd.f32 %v4953, %v5209
      %v5211 = vpop.f32.mrf.mxu0
      %v5212 = vpop.f32.mrf.mxu0
      %v5213 = vadd.f32 %v4956, %v5212
      %v5214 = vpop.f32.mrf.mxu0
      %5215 = vdwg.mxu0
      %5216 = vmatprep.subr.bf16.mxu0 0
      %5217 = vmatpush1.bf16.msra.mxu0 %v5078
      %5218 = vmatprep.subr.bf16.mxu0 0
      %5219 = vmatpush1.bf16.msra.mxu0 %v5077
      %5220 = vmatprep.subr.bf16.mxu0 0
      %5221 = vmatpush1.bf16.msra.mxu0 %v5076
      %5222 = vmatprep.subr.bf16.mxu0 0
      %5223 = vmatpush1.bf16.msra.mxu0 %v5075
      %5224 = vmatprep.subr.bf16.mxu0 0
      %5225 = vmatpush1.bf16.msra.mxu0 %v5074
      %5226 = vmatprep.subr.bf16.mxu0 0
      %5227 = vmatpush1.bf16.msra.mxu0 %v5073
      %5228 = vmatprep.subr.bf16.mxu0 0
      %5229 = vmatpush1.bf16.msra.mxu0 %v5072
      %5230 = vmatprep.subr.bf16.mxu0 0
      %5231 = vmatpush1.bf16.msra.mxu0 %v5071
      %5232 = vmatprep.subr.bf16.mxu0 0
      %5233 = vmatpush2.bf16.msra.mxu0 0
      %5234 = vmatprep.subr.bf16.mxu0 0
      %5235 = vmatpush2.bf16.msra.mxu0 0
      %5236 = vmatprep.subr.bf16.mxu0 0
      %5237 = vmatpush2.bf16.msra.mxu0 0
      %5238 = vmatprep.subr.bf16.mxu0 0
      %5239 = vmatpush2.bf16.msra.mxu0 0
      %5240 = vmatprep.subr.bf16.mxu0 0
      %5241 = vmatpush2.bf16.msra.mxu0 0
      %5242 = vmatprep.subr.bf16.mxu0 0
      %5243 = vmatpush2.bf16.msra.mxu0 0
      %5244 = vmatprep.subr.bf16.mxu0 0
      %5245 = vmatpush2.bf16.msra.mxu0 0
      %5246 = vmatprep.subr.bf16.mxu0 0
      %5247 = vmatpush2.bf16.msra.mxu0 0
      %5248 = vmatprep.mubr.bf16.mxu0 0
      %5249 = vmatmul.mubr.bf16.gmra.mxu0 %v4164
      %v5250 = vpop.f32.mrf.mxu0
      %v5251 = vadd.f32 %v5138, %v5250
      %v5252 = vpop.f32.mrf.mxu0
      %v5253 = vpop.f32.mrf.mxu0
      %v5254 = vadd.f32 %v5141, %v5253
      %v5255 = vpop.f32.mrf.mxu0
      %5256 = vmatprep.mubr.bf16.mxu0 0
      %5257 = vmatmul.mubr.bf16.gmra.mxu0 %v4167
      %v5258 = vpop.f32.mrf.mxu0
      %v5259 = vadd.f32 %v5146, %v5258
      %v5260 = vpop.f32.mrf.mxu0
      %v5261 = vpop.f32.mrf.mxu0
      %v5262 = vadd.f32 %v5149, %v5261
      %v5263 = vpop.f32.mrf.mxu0
      %5264 = vmatprep.mubr.bf16.mxu0 0
      %5265 = vmatmul.mubr.bf16.gmra.mxu0 %v4170
      %v5266 = vpop.f32.mrf.mxu0
      %v5267 = vadd.f32 %v5154, %v5266
      %v5268 = vpop.f32.mrf.mxu0
      %v5269 = vpop.f32.mrf.mxu0
      %v5270 = vadd.f32 %v5157, %v5269
      %v5271 = vpop.f32.mrf.mxu0
      %5272 = vmatprep.mubr.bf16.mxu0 0
      %5273 = vmatmul.mubr.bf16.gmra.mxu0 %v4173
      %v5274 = vpop.f32.mrf.mxu0
      %v5275 = vadd.f32 %v5162, %v5274
      %v5276 = vpop.f32.mrf.mxu0
      %v5277 = vpop.f32.mrf.mxu0
      %v5278 = vadd.f32 %v5165, %v5277
      %v5279 = vpop.f32.mrf.mxu0
      %5280 = vmatprep.mubr.bf16.mxu0 0
      %5281 = vmatmul.mubr.bf16.gmra.mxu0 %v4176
      %v5282 = vpop.f32.mrf.mxu0
      %v5283 = vadd.f32 %v5170, %v5282
      %v5284 = vpop.f32.mrf.mxu0
      %v5285 = vpop.f32.mrf.mxu0
      %v5286 = vadd.f32 %v5173, %v5285
      %v5287 = vpop.f32.mrf.mxu0
      %5288 = vmatprep.mubr.bf16.mxu0 0
      %5289 = vmatmul.mubr.bf16.gmra.mxu0 %v4179
      %v5290 = vpop.f32.mrf.mxu0
      %v5291 = vadd.f32 %v5178, %v5290
      %v5292 = vpop.f32.mrf.mxu0
      %v5293 = vpop.f32.mrf.mxu0
      %v5294 = vadd.f32 %v5181, %v5293
      %v5295 = vpop.f32.mrf.mxu0
      %5296 = vmatprep.mubr.bf16.mxu0 0
      %5297 = vmatmul.mubr.bf16.gmra.mxu0 %v4182
      %v5298 = vpop.f32.mrf.mxu0
      %v5299 = vadd.f32 %v5186, %v5298
      %v5300 = vpop.f32.mrf.mxu0
      %v5301 = vpop.f32.mrf.mxu0
      %v5302 = vadd.f32 %v5189, %v5301
      %v5303 = vpop.f32.mrf.mxu0
      %5304 = vmatprep.mubr.bf16.mxu0 0
      %5305 = vmatmul.mubr.bf16.gmra.mxu0 %v4185
      %v5306 = vpop.f32.mrf.mxu0
      %v5307 = vadd.f32 %v5194, %v5306
      %v5308 = vpop.f32.mrf.mxu0
      %v5309 = vpop.f32.mrf.mxu0
      %v5310 = vadd.f32 %v5197, %v5309
      %v5311 = vpop.f32.mrf.mxu0
      %5312 = vmatprep.mubr.bf16.mxu0 0
      %5313 = vmatmul.mubr.bf16.gmra.mxu0 %v4188
      %v5314 = vpop.f32.mrf.mxu0
      %v5315 = vadd.f32 %v5202, %v5314
      %v5316 = vpop.f32.mrf.mxu0
      %v5317 = vpop.f32.mrf.mxu0
      %v5318 = vadd.f32 %v5205, %v5317
      %v5319 = vpop.f32.mrf.mxu0
      %5320 = vmatprep.mubr.bf16.mxu0 0
      %5321 = vmatmul.mubr.bf16.gmra.mxu0 %v4191
      %v5322 = vpop.f32.mrf.mxu0
      %v5323 = vadd.f32 %v5210, %v5322
      %v5324 = vpop.f32.mrf.mxu0
      %v5325 = vpop.f32.mrf.mxu0
      %v5326 = vadd.f32 %v5213, %v5325
      %v5327 = vpop.f32.mrf.mxu0
      %5328 = vdwg.mxu0
      %s5329 = scalar_lea.vmem [#allocation2], 36
      %v5330 = vld [vmem:[%s5329] sm:$0xf]
      %v5331 = vld [vmem:[%s5329 + $0x4] sm:$0xf]
      %v5332 = vld [vmem:[%s5329 + $0x8] sm:$0x1]
      %v5333 = vld [vmem:[%s5329 + $0xc] sm:$0xf]
      %v5334 = vld [vmem:[%s5329 + $0x10] sm:$0xf]
      %v5335 = vld [vmem:[%s5329 + $0x14] sm:$0x1]
      %v5336 = vld [vmem:[%s5329 + $0x18] sm:$0xf]
      %v5337 = vld [vmem:[%s5329 + $0x1c] sm:$0xf]
      %v5338 = vld [vmem:[%s5329 + $0x20] sm:$0x1]
      %v5339 = vld [vmem:[%s5329 + $0x24] sm:$0xf]
      %v5340 = vld [vmem:[%s5329 + $0x28] sm:$0xf]
      %v5341 = vld [vmem:[%s5329 + $0x2c] sm:$0x1]
      %v5342 = vld [vmem:[%s5329 + $0x30] sm:$0xf]
      %v5343 = vld [vmem:[%s5329 + $0x34] sm:$0xf]
      %v5344 = vld [vmem:[%s5329 + $0x38] sm:$0x1]
      %v5345 = vld [vmem:[%s5329 + $0x3c] sm:$0xf]
      %v5346 = vld [vmem:[%s5329 + $0x40] sm:$0xf]
      %v5347 = vld [vmem:[%s5329 + $0x44] sm:$0x1]
      %v5348 = vld [vmem:[%s5329 + $0x48] sm:$0xf]
      %v5349 = vld [vmem:[%s5329 + $0x4c] sm:$0xf]
      %v5350 = vld [vmem:[%s5329 + $0x50] sm:$0x1]
      %v5351 = vld [vmem:[%s5329 + $0x54] sm:$0xf]
      %v5352 = vld [vmem:[%s5329 + $0x58] sm:$0xf]
      %v5353 = vld [vmem:[%s5329 + $0x5c] sm:$0x1]
      %v5354 = vld [vmem:[%s5329 + $0x60] sm:$0xf]
      %v5355 = vld [vmem:[%s5329 + $0x64] sm:$0xf]
      %v5356 = vld [vmem:[%s5329 + $0x68] sm:$0x1]
      %v5357 = vld [vmem:[%s5329 + $0x6c] sm:$0xf]
      %v5358 = vld [vmem:[%s5329 + $0x70] sm:$0xf]
      %v5359 = vld [vmem:[%s5329 + $0x74] sm:$0x1]
      %v5380 = vunpack.c.l.b16 %v5330
      %v5381 = vunpack.c.l.b16 %v5331
      %v5382 = vunpack.c.l.b16 %v5333
      %v5383 = vunpack.c.l.b16 %v5334
      %v5384 = vunpack.c.l.b16 %v5336
      %v5385 = vunpack.c.l.b16 %v5337
      %v5386 = vunpack.c.l.b16 %v5339
      %v5387 = vunpack.c.l.b16 %v5340
      %v5388 = vunpack.c.l.b16 %v5342
      %v5389 = vunpack.c.l.b16 %v5343
      %v5390 = vunpack.c.l.b16 %v5345
      %v5391 = vunpack.c.l.b16 %v5346
      %v5392 = vunpack.c.l.b16 %v5348
      %v5393 = vunpack.c.l.b16 %v5349
      %v5394 = vunpack.c.l.b16 %v5351
      %v5395 = vunpack.c.l.b16 %v5352
      %v5396 = vunpack.c.l.b16 %v5354
      %v5397 = vunpack.c.l.b16 %v5355
      %v5398 = vunpack.c.l.b16 %v5357
      %v5399 = vunpack.c.l.b16 %v5358
      %v5400 = vpack.c.b16 %v5381, %v5380
      %v5401 = vpack.c.b16 %v5383, %v5382
      %v5402 = vpack.c.b16 %v5385, %v5384
      %v5403 = vpack.c.b16 %v5387, %v5386
      %v5404 = vpack.c.b16 %v5389, %v5388
      %v5405 = vpack.c.b16 %v5391, %v5390
      %v5406 = vpack.c.b16 %v5393, %v5392
      %v5407 = vpack.c.b16 %v5395, %v5394
      %v5408 = vpack.c.b16 %v5397, %v5396
      %v5409 = vpack.c.b16 %v5399, %v5398
      %v5430 = vunpack.c.l.b16 %v5332
      %v5431 = vunpack.c.l.b16 %v5335
      %v5432 = vunpack.c.l.b16 %v5338
      %v5433 = vunpack.c.l.b16 %v5341
      %v5434 = vunpack.c.l.b16 %v5344
      %v5435 = vunpack.c.l.b16 %v5347
      %v5436 = vunpack.c.l.b16 %v5350
      %v5437 = vunpack.c.l.b16 %v5353
      %v5438 = vunpack.c.l.b16 %v5356
      %v5439 = vunpack.c.l.b16 %v5359
      %v5440 = vpack.c.b16 %v5430, %v5430
      %v5441 = vpack.c.b16 %v5431, %v5431
      %v5442 = vpack.c.b16 %v5432, %v5432
      %v5443 = vpack.c.b16 %v5433, %v5433
      %v5444 = vpack.c.b16 %v5434, %v5434
      %v5445 = vpack.c.b16 %v5435, %v5435
      %v5446 = vpack.c.b16 %v5436, %v5436
      %v5447 = vpack.c.b16 %v5437, %v5437
      %v5448 = vpack.c.b16 %v5438, %v5438
      %v5449 = vpack.c.b16 %v5439, %v5439
      %v5451 = vshrl.u32 %v5400, 16
      %v5453 = vshll.u32 %v5400, 16
      %v5455 = vrot.slane %v5453, 1
      %v5456 = vor.u32 %v5451, %v5455
      %v5458 = vshll.u32 %v5440, 16
      %v5460 = vrot.slane %v5458, 1
      %v5461 = vsel %vm1008, %v5456, %v5460
      %v5463 = vshrl.u32 %v5401, 16
      %v5465 = vshll.u32 %v5401, 16
      %v5467 = vrot.slane %v5465, 1
      %v5468 = vor.u32 %v5463, %v5467
      %v5470 = vshll.u32 %v5441, 16
      %v5472 = vrot.slane %v5470, 1
      %v5473 = vsel %vm1008, %v5468, %v5472
      %v5475 = vshrl.u32 %v5402, 16
      %v5477 = vshll.u32 %v5402, 16
      %v5479 = vrot.slane %v5477, 1
      %v5480 = vor.u32 %v5475, %v5479
      %v5482 = vshll.u32 %v5442, 16
      %v5484 = vrot.slane %v5482, 1
      %v5485 = vsel %vm1008, %v5480, %v5484
      %v5487 = vshrl.u32 %v5403, 16
      %v5489 = vshll.u32 %v5403, 16
      %v5491 = vrot.slane %v5489, 1
      %v5492 = vor.u32 %v5487, %v5491
      %v5494 = vshll.u32 %v5443, 16
      %v5496 = vrot.slane %v5494, 1
      %v5497 = vsel %vm1008, %v5492, %v5496
      %v5499 = vshrl.u32 %v5404, 16
      %v5501 = vshll.u32 %v5404, 16
      %v5503 = vrot.slane %v5501, 1
      %v5504 = vor.u32 %v5499, %v5503
      %v5506 = vshll.u32 %v5444, 16
      %v5508 = vrot.slane %v5506, 1
      %v5509 = vsel %vm1008, %v5504, %v5508
      %v5511 = vshrl.u32 %v5405, 16
      %v5513 = vshll.u32 %v5405, 16
      %v5515 = vrot.slane %v5513, 1
      %v5516 = vor.u32 %v5511, %v5515
      %v5518 = vshll.u32 %v5445, 16
      %v5520 = vrot.slane %v5518, 1
      %v5521 = vsel %vm1008, %v5516, %v5520
      %v5523 = vshrl.u32 %v5406, 16
      %v5525 = vshll.u32 %v5406, 16
      %v5527 = vrot.slane %v5525, 1
      %v5528 = vor.u32 %v5523, %v5527
      %v5530 = vshll.u32 %v5446, 16
      %v5532 = vrot.slane %v5530, 1
      %v5533 = vsel %vm1008, %v5528, %v5532
      %v5535 = vshrl.u32 %v5407, 16
      %v5537 = vshll.u32 %v5407, 16
      %v5539 = vrot.slane %v5537, 1
      %v5540 = vor.u32 %v5535, %v5539
      %v5542 = vshll.u32 %v5447, 16
      %v5544 = vrot.slane %v5542, 1
      %v5545 = vsel %vm1008, %v5540, %v5544
      %v5547 = vshrl.u32 %v5408, 16
      %v5549 = vshll.u32 %v5408, 16
      %v5551 = vrot.slane %v5549, 1
      %v5552 = vor.u32 %v5547, %v5551
      %v5554 = vshll.u32 %v5448, 16
      %v5556 = vrot.slane %v5554, 1
      %v5557 = vsel %vm1008, %v5552, %v5556
      %v5559 = vshrl.u32 %v5409, 16
      %v5561 = vshll.u32 %v5409, 16
      %v5563 = vrot.slane %v5561, 1
      %v5564 = vor.u32 %v5559, %v5563
      %v5566 = vshll.u32 %v5449, 16
      %v5568 = vrot.slane %v5566, 1
      %v5569 = vsel %vm1008, %v5564, %v5568
      %v5580 = vrot.slane %v5400, 1
      %v5581 = vrot.slane %v5440, 1
      %v5582 = vsel %vm1165, %v5580, %v5581
      %v5583 = vrot.slane %v5401, 1
      %v5584 = vrot.slane %v5441, 1
      %v5585 = vsel %vm1165, %v5583, %v5584
      %v5586 = vrot.slane %v5402, 1
      %v5587 = vrot.slane %v5442, 1
      %v5588 = vsel %vm1165, %v5586, %v5587
      %v5589 = vrot.slane %v5403, 1
      %v5590 = vrot.slane %v5443, 1
      %v5591 = vsel %vm1165, %v5589, %v5590
      %v5592 = vrot.slane %v5404, 1
      %v5593 = vrot.slane %v5444, 1
      %v5594 = vsel %vm1165, %v5592, %v5593
      %v5595 = vrot.slane %v5405, 1
      %v5596 = vrot.slane %v5445, 1
      %v5597 = vsel %vm1165, %v5595, %v5596
      %v5598 = vrot.slane %v5406, 1
      %v5599 = vrot.slane %v5446, 1
      %v5600 = vsel %vm1165, %v5598, %v5599
      %v5601 = vrot.slane %v5407, 1
      %v5602 = vrot.slane %v5447, 1
      %v5603 = vsel %vm1165, %v5601, %v5602
      %v5604 = vrot.slane %v5408, 1
      %v5605 = vrot.slane %v5448, 1
      %v5606 = vsel %vm1165, %v5604, %v5605
      %v5607 = vrot.slane %v5409, 1
      %v5608 = vrot.slane %v5449, 1
      %v5609 = vsel %vm1165, %v5607, %v5608
      %s5620 = scalar_lea.vmem %s3, 384
      %v5621 = vld [vmem:[%s5620] sm:$0xf]
      %v5622 = vld [vmem:[%s5620 + $0x4] sm:$0xf]
      %v5623 = vld [vmem:[%s5620 + $0x8] sm:$0xf]
      %v5624 = vld [vmem:[%s5620 + $0xc] sm:$0xf]
      %v5625 = vld [vmem:[%s5620 + $0x10] sm:$0xf]
      %v5626 = vld [vmem:[%s5620 + $0x14] sm:$0xf]
      %v5627 = vld [vmem:[%s5620 + $0x18] sm:$0xf]
      %v5628 = vld [vmem:[%s5620 + $0x1c] sm:$0xf]
      %v5629 = vld [vmem:[%s5620 + $0x20] sm:$0xf]
      %v5630 = vld [vmem:[%s5620 + $0x24] sm:$0xf]
      %v5631 = vld [vmem:[%s5620 + $0x28] sm:$0xf]
      %v5632 = vld [vmem:[%s5620 + $0x2c] sm:$0xf]
      %v5633 = vld [vmem:[%s5620 + $0x30] sm:$0xf]
      %v5634 = vld [vmem:[%s5620 + $0x34] sm:$0xf]
      %v5635 = vld [vmem:[%s5620 + $0x38] sm:$0xf]
      %v5636 = vld [vmem:[%s5620 + $0x3c] sm:$0xf]
      %v5637 = vld [vmem:[%s5620 + $0x40] sm:$0xf]
      %v5638 = vld [vmem:[%s5620 + $0x44] sm:$0xf]
      %v5639 = vld [vmem:[%s5620 + $0x48] sm:$0xf]
      %v5640 = vld [vmem:[%s5620 + $0x4c] sm:$0xf]
      %v5641 = vld [vmem:[%s5620 + $0x50] sm:$0xf]
      %v5642 = vld [vmem:[%s5620 + $0x54] sm:$0xf]
      %v5643 = vld [vmem:[%s5620 + $0x58] sm:$0xf]
      %v5644 = vld [vmem:[%s5620 + $0x5c] sm:$0xf]
      %v5645 = vld [vmem:[%s5620 + $0x60] sm:$0xf]
      %v5646 = vld [vmem:[%s5620 + $0x64] sm:$0xf]
      %v5647 = vld [vmem:[%s5620 + $0x68] sm:$0xf]
      %v5648 = vld [vmem:[%s5620 + $0x6c] sm:$0xf]
      %v5649 = vld [vmem:[%s5620 + $0x70] sm:$0xf]
      %v5650 = vld [vmem:[%s5620 + $0x74] sm:$0xf]
      %v5651 = vld [vmem:[%s5620 + $0x78] sm:$0xf]
      %v5652 = vld [vmem:[%s5620 + $0x7c] sm:$0xf]
      %v5653 = vld [vmem:[%s5620 + $0x80] sm:$0xf]
      %v5654 = vld [vmem:[%s5620 + $0x84] sm:$0xf]
      %v5655 = vld [vmem:[%s5620 + $0x88] sm:$0xf]
      %v5656 = vld [vmem:[%s5620 + $0x8c] sm:$0xf]
      %v5657 = vld [vmem:[%s5620 + $0x90] sm:$0xf]
      %v5658 = vld [vmem:[%s5620 + $0x94] sm:$0xf]
      %v5659 = vld [vmem:[%s5620 + $0x98] sm:$0xf]
      %v5660 = vld [vmem:[%s5620 + $0x9c] sm:$0xf]
      %v5661 = vld [vmem:[%s5620 + $0xa0] sm:$0xf]
      %v5662 = vld [vmem:[%s5620 + $0xa4] sm:$0xf]
      %v5663 = vld [vmem:[%s5620 + $0xa8] sm:$0xf]
      %v5664 = vld [vmem:[%s5620 + $0xac] sm:$0xf]
      %v5665 = vld [vmem:[%s5620 + $0xb0] sm:$0xf]
      %v5666 = vld [vmem:[%s5620 + $0xb4] sm:$0xf]
      %v5667 = vld [vmem:[%s5620 + $0xb8] sm:$0xf]
      %v5668 = vld [vmem:[%s5620 + $0xbc] sm:$0xf]
      %v5717 = vunpack.c.l.b16 %v5621
      %v5718 = vunpack.c.l.b16 %v5622
      %v5719 = vunpack.c.l.b16 %v5623
      %v5720 = vunpack.c.l.b16 %v5624
      %v5721 = vunpack.c.l.b16 %v5625
      %v5722 = vunpack.c.l.b16 %v5626
      %v5723 = vunpack.c.l.b16 %v5627
      %v5724 = vunpack.c.l.b16 %v5628
      %v5725 = vunpack.c.l.b16 %v5629
      %v5726 = vunpack.c.l.b16 %v5630
      %v5727 = vunpack.c.l.b16 %v5631
      %v5728 = vunpack.c.l.b16 %v5632
      %v5729 = vunpack.c.l.b16 %v5633
      %v5730 = vunpack.c.l.b16 %v5634
      %v5731 = vunpack.c.l.b16 %v5635
      %v5732 = vunpack.c.l.b16 %v5636
      %v5733 = vunpack.c.l.b16 %v5637
      %v5734 = vunpack.c.l.b16 %v5638
      %v5735 = vunpack.c.l.b16 %v5639
      %v5736 = vunpack.c.l.b16 %v5640
      %v5737 = vunpack.c.l.b16 %v5641
      %v5738 = vunpack.c.l.b16 %v5642
      %v5739 = vunpack.c.l.b16 %v5643
      %v5740 = vunpack.c.l.b16 %v5644
      %v5741 = vunpack.c.l.b16 %v5645
      %v5742 = vunpack.c.l.b16 %v5646
      %v5743 = vunpack.c.l.b16 %v5647
      %v5744 = vunpack.c.l.b16 %v5648
      %v5745 = vunpack.c.l.b16 %v5649
      %v5746 = vunpack.c.l.b16 %v5650
      %v5747 = vunpack.c.l.b16 %v5651
      %v5748 = vunpack.c.l.b16 %v5652
      %v5749 = vunpack.c.l.b16 %v5653
      %v5750 = vunpack.c.l.b16 %v5654
      %v5751 = vunpack.c.l.b16 %v5655
      %v5752 = vunpack.c.l.b16 %v5656
      %v5753 = vunpack.c.l.b16 %v5657
      %v5754 = vunpack.c.l.b16 %v5658
      %v5755 = vunpack.c.l.b16 %v5659
      %v5756 = vunpack.c.l.b16 %v5660
      %v5757 = vunpack.c.l.b16 %v5661
      %v5758 = vunpack.c.l.b16 %v5662
      %v5759 = vunpack.c.l.b16 %v5663
      %v5760 = vunpack.c.l.b16 %v5664
      %v5761 = vunpack.c.l.b16 %v5665
      %v5762 = vunpack.c.l.b16 %v5666
      %v5763 = vunpack.c.l.b16 %v5667
      %v5764 = vunpack.c.l.b16 %v5668
      %v5765 = vpack.c.b16 %v5718, %v5717
      %v5766 = vpack.c.b16 %v5720, %v5719
      %v5767 = vpack.c.b16 %v5722, %v5721
      %v5768 = vpack.c.b16 %v5724, %v5723
      %v5769 = vpack.c.b16 %v5726, %v5725
      %v5770 = vpack.c.b16 %v5728, %v5727
      %v5771 = vpack.c.b16 %v5730, %v5729
      %v5772 = vpack.c.b16 %v5732, %v5731
      %v5773 = vpack.c.b16 %v5734, %v5733
      %v5774 = vpack.c.b16 %v5736, %v5735
      %v5775 = vpack.c.b16 %v5738, %v5737
      %v5776 = vpack.c.b16 %v5740, %v5739
      %v5777 = vpack.c.b16 %v5742, %v5741
      %v5778 = vpack.c.b16 %v5744, %v5743
      %v5779 = vpack.c.b16 %v5746, %v5745
      %v5780 = vpack.c.b16 %v5748, %v5747
      %v5781 = vpack.c.b16 %v5750, %v5749
      %v5782 = vpack.c.b16 %v5752, %v5751
      %v5783 = vpack.c.b16 %v5754, %v5753
      %v5784 = vpack.c.b16 %v5756, %v5755
      %v5785 = vpack.c.b16 %v5758, %v5757
      %v5786 = vpack.c.b16 %v5760, %v5759
      %v5787 = vpack.c.b16 %v5762, %v5761
      %v5788 = vpack.c.b16 %v5764, %v5763
      %5813 = vmatprep.subr.bf16.mxu0 0
      %5814 = vmatpush1.bf16.msra.mxu0 %v5772
      %5815 = vmatprep.subr.bf16.mxu0 0
      %5816 = vmatpush1.bf16.msra.mxu0 %v5771
      %5817 = vmatprep.subr.bf16.mxu0 0
      %5818 = vmatpush1.bf16.msra.mxu0 %v5770
      %5819 = vmatprep.subr.bf16.mxu0 0
      %5820 = vmatpush1.bf16.msra.mxu0 %v5769
      %5821 = vmatprep.subr.bf16.mxu0 0
      %5822 = vmatpush1.bf16.msra.mxu0 %v5768
      %5823 = vmatprep.subr.bf16.mxu0 0
      %5824 = vmatpush1.bf16.msra.mxu0 %v5767
      %5825 = vmatprep.subr.bf16.mxu0 0
      %5826 = vmatpush1.bf16.msra.mxu0 %v5766
      %5827 = vmatprep.subr.bf16.mxu0 0
      %5828 = vmatpush1.bf16.msra.mxu0 %v5765
      %5829 = vmatprep.subr.bf16.mxu0 0
      %5830 = vmatpush2.bf16.msra.mxu0 %v5780
      %5831 = vmatprep.subr.bf16.mxu0 0
      %5832 = vmatpush2.bf16.msra.mxu0 %v5779
      %5833 = vmatprep.subr.bf16.mxu0 0
      %5834 = vmatpush2.bf16.msra.mxu0 %v5778
      %5835 = vmatprep.subr.bf16.mxu0 0
      %5836 = vmatpush2.bf16.msra.mxu0 %v5777
      %5837 = vmatprep.subr.bf16.mxu0 0
      %5838 = vmatpush2.bf16.msra.mxu0 %v5776
      %5839 = vmatprep.subr.bf16.mxu0 0
      %5840 = vmatpush2.bf16.msra.mxu0 %v5775
      %5841 = vmatprep.subr.bf16.mxu0 0
      %5842 = vmatpush2.bf16.msra.mxu0 %v5774
      %5843 = vmatprep.subr.bf16.mxu0 0
      %5844 = vmatpush2.bf16.msra.mxu0 %v5773
      %5845 = vmatprep.mubr.bf16.mxu0 %v5461
      %5846 = vmatmul.mubr.bf16.gmra.mxu0 %v5400
      %v5847 = vpop.f32.mrf.mxu0
      %v5848 = vadd.f32 0.0, %v5847
      %v5849 = vpop.f32.mrf.mxu0
      %v5850 = vpop.f32.mrf.mxu0
      %v5851 = vadd.f32 0.0, %v5850
      %v5852 = vpop.f32.mrf.mxu0
      %5853 = vmatprep.mubr.bf16.mxu0 %v5473
      %5854 = vmatmul.mubr.bf16.gmra.mxu0 %v5401
      %v5855 = vpop.f32.mrf.mxu0
      %v5856 = vadd.f32 0.0, %v5855
      %v5857 = vpop.f32.mrf.mxu0
      %v5858 = vpop.f32.mrf.mxu0
      %v5859 = vadd.f32 0.0, %v5858
      %v5860 = vpop.f32.mrf.mxu0
      %5861 = vmatprep.mubr.bf16.mxu0 %v5485
      %5862 = vmatmul.mubr.bf16.gmra.mxu0 %v5402
      %v5863 = vpop.f32.mrf.mxu0
      %v5864 = vadd.f32 0.0, %v5863
      %v5865 = vpop.f32.mrf.mxu0
      %v5866 = vpop.f32.mrf.mxu0
      %v5867 = vadd.f32 0.0, %v5866
      %v5868 = vpop.f32.mrf.mxu0
      %5869 = vmatprep.mubr.bf16.mxu0 %v5497
      %5870 = vmatmul.mubr.bf16.gmra.mxu0 %v5403
      %v5871 = vpop.f32.mrf.mxu0
      %v5872 = vadd.f32 0.0, %v5871
      %v5873 = vpop.f32.mrf.mxu0
      %v5874 = vpop.f32.mrf.mxu0
      %v5875 = vadd.f32 0.0, %v5874
      %v5876 = vpop.f32.mrf.mxu0
      %5877 = vmatprep.mubr.bf16.mxu0 %v5509
      %5878 = vmatmul.mubr.bf16.gmra.mxu0 %v5404
      %v5879 = vpop.f32.mrf.mxu0
      %v5880 = vadd.f32 0.0, %v5879
      %v5881 = vpop.f32.mrf.mxu0
      %v5882 = vpop.f32.mrf.mxu0
      %v5883 = vadd.f32 0.0, %v5882
      %v5884 = vpop.f32.mrf.mxu0
      %5885 = vmatprep.mubr.bf16.mxu0 %v5521
      %5886 = vmatmul.mubr.bf16.gmra.mxu0 %v5405
      %v5887 = vpop.f32.mrf.mxu0
      %v5888 = vadd.f32 0.0, %v5887
      %v5889 = vpop.f32.mrf.mxu0
      %v5890 = vpop.f32.mrf.mxu0
      %v5891 = vadd.f32 0.0, %v5890
      %v5892 = vpop.f32.mrf.mxu0
      %5893 = vmatprep.mubr.bf16.mxu0 %v5533
      %5894 = vmatmul.mubr.bf16.gmra.mxu0 %v5406
      %v5895 = vpop.f32.mrf.mxu0
      %v5896 = vadd.f32 0.0, %v5895
      %v5897 = vpop.f32.mrf.mxu0
      %v5898 = vpop.f32.mrf.mxu0
      %v5899 = vadd.f32 0.0, %v5898
      %v5900 = vpop.f32.mrf.mxu0
      %5901 = vmatprep.mubr.bf16.mxu0 %v5545
      %5902 = vmatmul.mubr.bf16.gmra.mxu0 %v5407
      %v5903 = vpop.f32.mrf.mxu0
      %v5904 = vadd.f32 0.0, %v5903
      %v5905 = vpop.f32.mrf.mxu0
      %v5906 = vpop.f32.mrf.mxu0
      %v5907 = vadd.f32 0.0, %v5906
      %v5908 = vpop.f32.mrf.mxu0
      %5909 = vmatprep.mubr.bf16.mxu0 %v5557
      %5910 = vmatmul.mubr.bf16.gmra.mxu0 %v5408
      %v5911 = vpop.f32.mrf.mxu0
      %v5912 = vadd.f32 0.0, %v5911
      %v5913 = vpop.f32.mrf.mxu0
      %v5914 = vpop.f32.mrf.mxu0
      %v5915 = vadd.f32 0.0, %v5914
      %v5916 = vpop.f32.mrf.mxu0
      %5917 = vmatprep.mubr.bf16.mxu0 %v5569
      %5918 = vmatmul.mubr.bf16.gmra.mxu0 %v5409
      %v5919 = vpop.f32.mrf.mxu0
      %v5920 = vadd.f32 0.0, %v5919
      %v5921 = vpop.f32.mrf.mxu0
      %v5922 = vpop.f32.mrf.mxu0
      %v5923 = vadd.f32 0.0, %v5922
      %v5924 = vpop.f32.mrf.mxu0
      %5925 = vdwg.mxu0
      %5926 = vmatprep.subr.bf16.mxu0 0
      %5927 = vmatpush1.bf16.msra.mxu0 %v5788
      %5928 = vmatprep.subr.bf16.mxu0 0
      %5929 = vmatpush1.bf16.msra.mxu0 %v5787
      %5930 = vmatprep.subr.bf16.mxu0 0
      %5931 = vmatpush1.bf16.msra.mxu0 %v5786
      %5932 = vmatprep.subr.bf16.mxu0 0
      %5933 = vmatpush1.bf16.msra.mxu0 %v5785
      %5934 = vmatprep.subr.bf16.mxu0 0
      %5935 = vmatpush1.bf16.msra.mxu0 %v5784
      %5936 = vmatprep.subr.bf16.mxu0 0
      %5937 = vmatpush1.bf16.msra.mxu0 %v5783
      %5938 = vmatprep.subr.bf16.mxu0 0
      %5939 = vmatpush1.bf16.msra.mxu0 %v5782
      %5940 = vmatprep.subr.bf16.mxu0 0
      %5941 = vmatpush1.bf16.msra.mxu0 %v5781
      %5942 = vmatprep.subr.bf16.mxu0 0
      %5943 = vmatpush2.bf16.msra.mxu0 0
      %5944 = vmatprep.subr.bf16.mxu0 0
      %5945 = vmatpush2.bf16.msra.mxu0 0
      %5946 = vmatprep.subr.bf16.mxu0 0
      %5947 = vmatpush2.bf16.msra.mxu0 0
      %5948 = vmatprep.subr.bf16.mxu0 0
      %5949 = vmatpush2.bf16.msra.mxu0 0
      %5950 = vmatprep.subr.bf16.mxu0 0
      %5951 = vmatpush2.bf16.msra.mxu0 0
      %5952 = vmatprep.subr.bf16.mxu0 0
      %5953 = vmatpush2.bf16.msra.mxu0 0
      %5954 = vmatprep.subr.bf16.mxu0 0
      %5955 = vmatpush2.bf16.msra.mxu0 0
      %5956 = vmatprep.subr.bf16.mxu0 0
      %5957 = vmatpush2.bf16.msra.mxu0 0
      %5958 = vmatprep.mubr.bf16.mxu0 0
      %5959 = vmatmul.mubr.bf16.gmra.mxu0 %v5582
      %v5960 = vpop.f32.mrf.mxu0
      %v5961 = vadd.f32 %v5848, %v5960
      %v5962 = vpop.f32.mrf.mxu0
      %v5963 = vpop.f32.mrf.mxu0
      %v5964 = vadd.f32 %v5851, %v5963
      %v5965 = vpop.f32.mrf.mxu0
      %5966 = vmatprep.mubr.bf16.mxu0 0
      %5967 = vmatmul.mubr.bf16.gmra.mxu0 %v5585
      %v5968 = vpop.f32.mrf.mxu0
      %v5969 = vadd.f32 %v5856, %v5968
      %v5970 = vpop.f32.mrf.mxu0
      %v5971 = vpop.f32.mrf.mxu0
      %v5972 = vadd.f32 %v5859, %v5971
      %v5973 = vpop.f32.mrf.mxu0
      %5974 = vmatprep.mubr.bf16.mxu0 0
      %5975 = vmatmul.mubr.bf16.gmra.mxu0 %v5588
      %v5976 = vpop.f32.mrf.mxu0
      %v5977 = vadd.f32 %v5864, %v5976
      %v5978 = vpop.f32.mrf.mxu0
      %v5979 = vpop.f32.mrf.mxu0
      %v5980 = vadd.f32 %v5867, %v5979
      %v5981 = vpop.f32.mrf.mxu0
      %5982 = vmatprep.mubr.bf16.mxu0 0
      %5983 = vmatmul.mubr.bf16.gmra.mxu0 %v5591
      %v5984 = vpop.f32.mrf.mxu0
      %v5985 = vadd.f32 %v5872, %v5984
      %v5986 = vpop.f32.mrf.mxu0
      %v5987 = vpop.f32.mrf.mxu0
      %v5988 = vadd.f32 %v5875, %v5987
      %v5989 = vpop.f32.mrf.mxu0
      %5990 = vmatprep.mubr.bf16.mxu0 0
      %5991 = vmatmul.mubr.bf16.gmra.mxu0 %v5594
      %v5992 = vpop.f32.mrf.mxu0
      %v5993 = vadd.f32 %v5880, %v5992
      %v5994 = vpop.f32.mrf.mxu0
      %v5995 = vpop.f32.mrf.mxu0
      %v5996 = vadd.f32 %v5883, %v5995
      %v5997 = vpop.f32.mrf.mxu0
      %5998 = vmatprep.mubr.bf16.mxu0 0
      %5999 = vmatmul.mubr.bf16.gmra.mxu0 %v5597
      %v6000 = vpop.f32.mrf.mxu0
      %v6001 = vadd.f32 %v5888, %v6000
      %v6002 = vpop.f32.mrf.mxu0
      %v6003 = vpop.f32.mrf.mxu0
      %v6004 = vadd.f32 %v5891, %v6003
      %v6005 = vpop.f32.mrf.mxu0
      %6006 = vmatprep.mubr.bf16.mxu0 0
      %6007 = vmatmul.mubr.bf16.gmra.mxu0 %v5600
      %v6008 = vpop.f32.mrf.mxu0
      %v6009 = vadd.f32 %v5896, %v6008
      %v6010 = vpop.f32.mrf.mxu0
      %v6011 = vpop.f32.mrf.mxu0
      %v6012 = vadd.f32 %v5899, %v6011
      %v6013 = vpop.f32.mrf.mxu0
      %6014 = vmatprep.mubr.bf16.mxu0 0
      %6015 = vmatmul.mubr.bf16.gmra.mxu0 %v5603
      %v6016 = vpop.f32.mrf.mxu0
      %v6017 = vadd.f32 %v5904, %v6016
      %v6018 = vpop.f32.mrf.mxu0
      %v6019 = vpop.f32.mrf.mxu0
      %v6020 = vadd.f32 %v5907, %v6019
      %v6021 = vpop.f32.mrf.mxu0
      %6022 = vmatprep.mubr.bf16.mxu0 0
      %6023 = vmatmul.mubr.bf16.gmra.mxu0 %v5606
      %v6024 = vpop.f32.mrf.mxu0
      %v6025 = vadd.f32 %v5912, %v6024
      %v6026 = vpop.f32.mrf.mxu0
      %v6027 = vpop.f32.mrf.mxu0
      %v6028 = vadd.f32 %v5915, %v6027
      %v6029 = vpop.f32.mrf.mxu0
      %6030 = vmatprep.mubr.bf16.mxu0 0
      %6031 = vmatmul.mubr.bf16.gmra.mxu0 %v5609
      %v6032 = vpop.f32.mrf.mxu0
      %v6033 = vadd.f32 %v5920, %v6032
      %v6034 = vpop.f32.mrf.mxu0
      %v6035 = vpop.f32.mrf.mxu0
      %v6036 = vadd.f32 %v5923, %v6035
      %v6037 = vpop.f32.mrf.mxu0
      %6038 = vdwg.mxu0
      %v6039 = vadd.f32 %v5251, %v5961
      %v6040 = vadd.f32 %v5254, %v5964
      %v6041 = vadd.f32 %v5259, %v5969
      %v6042 = vadd.f32 %v5262, %v5972
      %v6043 = vadd.f32 %v5267, %v5977
      %v6044 = vadd.f32 %v5270, %v5980
      %v6045 = vadd.f32 %v5275, %v5985
      %v6046 = vadd.f32 %v5278, %v5988
      %v6047 = vadd.f32 %v5283, %v5993
      %v6048 = vadd.f32 %v5286, %v5996
      %v6049 = vadd.f32 %v5291, %v6001
      %v6050 = vadd.f32 %v5294, %v6004
      %v6051 = vadd.f32 %v5299, %v6009
      %v6052 = vadd.f32 %v5302, %v6012
      %v6053 = vadd.f32 %v5307, %v6017
      %v6054 = vadd.f32 %v5310, %v6020
      %v6055 = vadd.f32 %v5315, %v6025
      %v6056 = vadd.f32 %v5318, %v6028
      %v6057 = vadd.f32 %v5323, %v6033
      %v6058 = vadd.f32 %v5326, %v6036
      %v6059 = vld [vmem:[%s4] sm:$0x1]
      %v6061 = vlaneseq
      %v6062 = vshrl.u32 %v6061, 7
      %v6063 = vsub.s32 0, %v6062
      %v6064 = vrot.slane %v6059, %v6063
      %v6066 = vadd.f32 %v6039, %v6064
      %v6067 = vadd.f32 %v6040, %v6064
      %v6068 = vadd.f32 %v6041, %v6064
      %v6069 = vadd.f32 %v6042, %v6064
      %v6070 = vadd.f32 %v6043, %v6064
      %v6071 = vadd.f32 %v6044, %v6064
      %v6072 = vadd.f32 %v6045, %v6064
      %v6073 = vadd.f32 %v6046, %v6064
      %v6074 = vadd.f32 %v6047, %v6064
      %v6075 = vadd.f32 %v6048, %v6064
      %v6076 = vadd.f32 %v6049, %v6064
      %v6077 = vadd.f32 %v6050, %v6064
      %v6078 = vadd.f32 %v6051, %v6064
      %v6079 = vadd.f32 %v6052, %v6064
      %v6080 = vadd.f32 %v6053, %v6064
      %v6081 = vadd.f32 %v6054, %v6064
      %v6082 = vadd.f32 %v6055, %v6064
      %v6083 = vadd.f32 %v6056, %v6064
      %v6084 = vadd.f32 %v6057, %v6064
      %v6085 = vadd.f32 %v6058, %v6064
      %v6086 = vmax.f32 %v6066, 0.0
      %v6087 = vmax.f32 %v6067, 0.0
      %v6088 = vmax.f32 %v6068, 0.0
      %v6089 = vmax.f32 %v6069, 0.0
      %v6090 = vmax.f32 %v6070, 0.0
      %v6091 = vmax.f32 %v6071, 0.0
      %v6092 = vmax.f32 %v6072, 0.0
      %v6093 = vmax.f32 %v6073, 0.0
      %v6094 = vmax.f32 %v6074, 0.0
      %v6095 = vmax.f32 %v6075, 0.0
      %v6096 = vmax.f32 %v6076, 0.0
      %v6097 = vmax.f32 %v6077, 0.0
      %v6098 = vmax.f32 %v6078, 0.0
      %v6099 = vmax.f32 %v6079, 0.0
      %v6100 = vmax.f32 %v6080, 0.0
      %v6101 = vmax.f32 %v6081, 0.0
      %v6102 = vmax.f32 %v6082, 0.0
      %v6103 = vmax.f32 %v6083, 0.0
      %v6104 = vmax.f32 %v6084, 0.0
      %v6105 = vmax.f32 %v6085, 0.0
      %s6106 = ssub.s32 %s319, 1
      %v6107 = vstv %s6106
      %v6108 = vadd.s32 %v6107, 1
      %v6109 = vadd.s32 %v6107, 2
      %v6110 = vadd.s32 %v6107, 3
      %v6111 = vadd.s32 %v6107, 4
      %v6112 = vadd.s32 %v6107, 5
      %v6113 = vadd.s32 %v6107, 6
      %v6114 = vadd.s32 %v6107, 7
      %v6115 = vadd.s32 %v6107, 8
      %v6116 = vadd.s32 %v6107, 9
      %vm6117 = vcmp.ge.s32.totalorder %v6107, 0
      %vm6118 = vcmp.ge.s32.totalorder %v6108, 0
      %vm6119 = vcmp.ge.s32.totalorder %v6109, 0
      %vm6120 = vcmp.ge.s32.totalorder %v6110, 0
      %vm6121 = vcmp.ge.s32.totalorder %v6111, 0
      %vm6122 = vcmp.ge.s32.totalorder %v6112, 0
      %vm6123 = vcmp.ge.s32.totalorder %v6113, 0
      %vm6124 = vcmp.ge.s32.totalorder %v6114, 0
      %vm6125 = vcmp.ge.s32.totalorder %v6115, 0
      %vm6126 = vcmp.ge.s32.totalorder %v6116, 0
      %vm6127 = vcmp.lt.s32.totalorder %v6107, 16
      %vm6128 = vcmp.lt.s32.totalorder %v6108, 16
      %vm6129 = vcmp.lt.s32.totalorder %v6109, 16
      %vm6130 = vcmp.lt.s32.totalorder %v6110, 16
      %vm6131 = vcmp.lt.s32.totalorder %v6111, 16
      %vm6132 = vcmp.lt.s32.totalorder %v6112, 16
      %vm6133 = vcmp.lt.s32.totalorder %v6113, 16
      %vm6134 = vcmp.lt.s32.totalorder %v6114, 16
      %vm6135 = vcmp.lt.s32.totalorder %v6115, 16
      %vm6136 = vcmp.lt.s32.totalorder %v6116, 16
      %vm6137 = vmand %vm6117, %vm6127
      %vm6138 = vmand %vm6118, %vm6128
      %vm6139 = vmand %vm6119, %vm6129
      %vm6140 = vmand %vm6120, %vm6130
      %vm6141 = vmand %vm6121, %vm6131
      %vm6142 = vmand %vm6122, %vm6132
      %vm6143 = vmand %vm6123, %vm6133
      %vm6144 = vmand %vm6124, %vm6134
      %vm6145 = vmand %vm6125, %vm6135
      %vm6146 = vmand %vm6126, %vm6136
      %v6147 = vsel %vm6137, 1, 0
      %v6148 = vsel %vm6138, 1, 0
      %v6149 = vsel %vm6139, 1, 0
      %v6150 = vsel %vm6140, 1, 0
      %v6151 = vsel %vm6141, 1, 0
      %v6152 = vsel %vm6142, 1, 0
      %v6153 = vsel %vm6143, 1, 0
      %v6154 = vsel %vm6144, 1, 0
      %v6155 = vsel %vm6145, 1, 0
      %v6156 = vsel %vm6146, 1, 0
      %vm6157 = vcmp.eq.s32.totalorder %v6147, 1
      %vm6158 = vcmp.eq.s32.totalorder %v6148, 1
      %vm6159 = vcmp.eq.s32.totalorder %v6149, 1
      %vm6160 = vcmp.eq.s32.totalorder %v6150, 1
      %vm6161 = vcmp.eq.s32.totalorder %v6151, 1
      %vm6162 = vcmp.eq.s32.totalorder %v6152, 1
      %vm6163 = vcmp.eq.s32.totalorder %v6153, 1
      %vm6164 = vcmp.eq.s32.totalorder %v6154, 1
      %vm6165 = vcmp.eq.s32.totalorder %v6155, 1
      %vm6166 = vcmp.eq.s32.totalorder %v6156, 1
      %v6167 = vsel %vm6157, %v6086, 0.0
      %v6168 = vsel %vm6157, %v6087, 0.0
      %v6169 = vsel %vm6158, %v6088, 0.0
      %v6170 = vsel %vm6158, %v6089, 0.0
      %v6171 = vsel %vm6159, %v6090, 0.0
      %v6172 = vsel %vm6159, %v6091, 0.0
      %v6173 = vsel %vm6160, %v6092, 0.0
      %v6174 = vsel %vm6160, %v6093, 0.0
      %v6175 = vsel %vm6161, %v6094, 0.0
      %v6176 = vsel %vm6161, %v6095, 0.0
      %v6177 = vsel %vm6162, %v6096, 0.0
      %v6178 = vsel %vm6162, %v6097, 0.0
      %v6179 = vsel %vm6163, %v6098, 0.0
      %v6180 = vsel %vm6163, %v6099, 0.0
      %v6181 = vsel %vm6164, %v6100, 0.0
      %v6182 = vsel %vm6164, %v6101, 0.0
      %v6183 = vsel %vm6165, %v6102, 0.0
      %v6184 = vsel %vm6165, %v6103, 0.0
      %v6185 = vsel %vm6166, %v6104, 0.0
      %v6186 = vsel %vm6166, %v6105, 0.0
      %v6187 = vpack.c.bf16 %v6168, %v6167
      %v6188 = vpack.c.bf16 %v6170, %v6169
      %v6189 = vpack.c.bf16 %v6172, %v6171
      %v6190 = vpack.c.bf16 %v6174, %v6173
      %v6191 = vpack.c.bf16 %v6176, %v6175
      %v6192 = vpack.c.bf16 %v6178, %v6177
      %v6193 = vpack.c.bf16 %v6180, %v6179
      %v6194 = vpack.c.bf16 %v6182, %v6181
      %v6195 = vpack.c.bf16 %v6184, %v6183
      %v6196 = vpack.c.bf16 %v6186, %v6185
      %v6207 = vunpack.c.l.b16 %v6187
      %v6208 = vunpack.c.h.b16 %v6187
      %v6209 = vunpack.c.l.b16 %v6188
      %v6210 = vunpack.c.h.b16 %v6188
      %v6211 = vunpack.c.l.b16 %v6189
      %v6212 = vunpack.c.h.b16 %v6189
      %v6213 = vunpack.c.l.b16 %v6190
      %v6214 = vunpack.c.h.b16 %v6190
      %v6215 = vunpack.c.l.b16 %v6191
      %v6216 = vunpack.c.h.b16 %v6191
      %v6217 = vunpack.c.l.b16 %v6192
      %v6218 = vunpack.c.h.b16 %v6192
      %v6219 = vunpack.c.l.b16 %v6193
      %v6220 = vunpack.c.h.b16 %v6193
      %v6221 = vunpack.c.l.b16 %v6194
      %v6222 = vunpack.c.h.b16 %v6194
      %v6223 = vunpack.c.l.b16 %v6195
      %v6224 = vunpack.c.h.b16 %v6195
      %v6225 = vunpack.c.l.b16 %v6196
      %v6226 = vunpack.c.h.b16 %v6196
      %v6227 = vpack.c.b16 %v6207, %v6207
      %v6228 = vpack.c.b16 %v6208, %v6208
      %v6229 = vpack.c.b16 %v6209, %v6209
      %v6230 = vpack.c.b16 %v6210, %v6210
      %v6231 = vpack.c.b16 %v6211, %v6211
      %v6232 = vpack.c.b16 %v6212, %v6212
      %v6233 = vpack.c.b16 %v6213, %v6213
      %v6234 = vpack.c.b16 %v6214, %v6214
      %v6235 = vpack.c.b16 %v6215, %v6215
      %v6236 = vpack.c.b16 %v6216, %v6216
      %v6237 = vpack.c.b16 %v6217, %v6217
      %v6238 = vpack.c.b16 %v6218, %v6218
      %v6239 = vpack.c.b16 %v6219, %v6219
      %v6240 = vpack.c.b16 %v6220, %v6220
      %v6241 = vpack.c.b16 %v6221, %v6221
      %v6242 = vpack.c.b16 %v6222, %v6222
      %v6243 = vpack.c.b16 %v6223, %v6223
      %v6244 = vpack.c.b16 %v6224, %v6224
      %v6245 = vpack.c.b16 %v6225, %v6225
      %v6246 = vpack.c.b16 %v6226, %v6226
      %v6248 = vshrl.u32 %v6227, 16
      %v6250 = vrot.slane %v6248, 7
      %v6251 = vshll.u32 %v6227, 16
      %v6253 = vor.u32 %v6250, %v6251
      %v6254 = vrot.slane %v6250, 4
      %v6256 = vshrl.u32 %v6228, 16
      %v6258 = vrot.slane %v6256, 7
      %v6259 = vshll.u32 %v6228, 16
      %v6261 = vor.u32 %v6258, %v6259
      %v6262 = vsel %vm482, %v6254, %v6261
      %v6263 = vrot.slane %v6258, 4
      %v6265 = vshrl.u32 %v6229, 16
      %v6267 = vrot.slane %v6265, 7
      %v6268 = vshll.u32 %v6229, 16
      %v6270 = vor.u32 %v6267, %v6268
      %v6271 = vrot.slane %v6267, 4
      %v6273 = vshrl.u32 %v6230, 16
      %v6275 = vrot.slane %v6273, 7
      %v6276 = vshll.u32 %v6230, 16
      %v6278 = vor.u32 %v6275, %v6276
      %v6279 = vsel %vm482, %v6271, %v6278
      %v6280 = vrot.slane %v6275, 4
      %v6282 = vshrl.u32 %v6231, 16
      %v6284 = vrot.slane %v6282, 7
      %v6285 = vshll.u32 %v6231, 16
      %v6287 = vor.u32 %v6284, %v6285
      %v6288 = vrot.slane %v6284, 4
      %v6290 = vshrl.u32 %v6232, 16
      %v6292 = vrot.slane %v6290, 7
      %v6293 = vshll.u32 %v6232, 16
      %v6295 = vor.u32 %v6292, %v6293
      %v6296 = vsel %vm482, %v6288, %v6295
      %v6297 = vrot.slane %v6292, 4
      %v6299 = vshrl.u32 %v6233, 16
      %v6301 = vrot.slane %v6299, 7
      %v6302 = vshll.u32 %v6233, 16
      %v6304 = vor.u32 %v6301, %v6302
      %v6305 = vrot.slane %v6301, 4
      %v6307 = vshrl.u32 %v6234, 16
      %v6309 = vrot.slane %v6307, 7
      %v6310 = vshll.u32 %v6234, 16
      %v6312 = vor.u32 %v6309, %v6310
      %v6313 = vsel %vm482, %v6305, %v6312
      %v6314 = vrot.slane %v6309, 4
      %v6316 = vshrl.u32 %v6235, 16
      %v6318 = vrot.slane %v6316, 7
      %v6319 = vshll.u32 %v6235, 16
      %v6321 = vor.u32 %v6318, %v6319
      %v6322 = vrot.slane %v6318, 4
      %v6324 = vshrl.u32 %v6236, 16
      %v6326 = vrot.slane %v6324, 7
      %v6327 = vshll.u32 %v6236, 16
      %v6329 = vor.u32 %v6326, %v6327
      %v6330 = vsel %vm482, %v6322, %v6329
      %v6331 = vrot.slane %v6326, 4
      %v6333 = vshrl.u32 %v6237, 16
      %v6335 = vrot.slane %v6333, 7
      %v6336 = vshll.u32 %v6237, 16
      %v6338 = vor.u32 %v6335, %v6336
      %v6339 = vrot.slane %v6335, 4
      %v6341 = vshrl.u32 %v6238, 16
      %v6343 = vrot.slane %v6341, 7
      %v6344 = vshll.u32 %v6238, 16
      %v6346 = vor.u32 %v6343, %v6344
      %v6347 = vsel %vm482, %v6339, %v6346
      %v6348 = vrot.slane %v6343, 4
      %v6350 = vshrl.u32 %v6239, 16
      %v6352 = vrot.slane %v6350, 7
      %v6353 = vshll.u32 %v6239, 16
      %v6355 = vor.u32 %v6352, %v6353
      %v6356 = vrot.slane %v6352, 4
      %v6358 = vshrl.u32 %v6240, 16
      %v6360 = vrot.slane %v6358, 7
      %v6361 = vshll.u32 %v6240, 16
      %v6363 = vor.u32 %v6360, %v6361
      %v6364 = vsel %vm482, %v6356, %v6363
      %v6365 = vrot.slane %v6360, 4
      %v6367 = vshrl.u32 %v6241, 16
      %v6369 = vrot.slane %v6367, 7
      %v6370 = vshll.u32 %v6241, 16
      %v6372 = vor.u32 %v6369, %v6370
      %v6373 = vrot.slane %v6369, 4
      %v6375 = vshrl.u32 %v6242, 16
      %v6377 = vrot.slane %v6375, 7
      %v6378 = vshll.u32 %v6242, 16
      %v6380 = vor.u32 %v6377, %v6378
      %v6381 = vsel %vm482, %v6373, %v6380
      %v6382 = vrot.slane %v6377, 4
      %v6384 = vshrl.u32 %v6243, 16
      %v6386 = vrot.slane %v6384, 7
      %v6387 = vshll.u32 %v6243, 16
      %v6389 = vor.u32 %v6386, %v6387
      %v6390 = vrot.slane %v6386, 4
      %v6392 = vshrl.u32 %v6244, 16
      %v6394 = vrot.slane %v6392, 7
      %v6395 = vshll.u32 %v6244, 16
      %v6397 = vor.u32 %v6394, %v6395
      %v6398 = vsel %vm482, %v6390, %v6397
      %v6399 = vrot.slane %v6394, 4
      %v6401 = vshrl.u32 %v6245, 16
      %v6403 = vrot.slane %v6401, 7
      %v6404 = vshll.u32 %v6245, 16
      %v6406 = vor.u32 %v6403, %v6404
      %v6407 = vrot.slane %v6403, 4
      %v6409 = vshrl.u32 %v6246, 16
      %v6411 = vrot.slane %v6409, 7
      %v6412 = vshll.u32 %v6246, 16
      %v6414 = vor.u32 %v6411, %v6412
      %v6415 = vsel %vm482, %v6407, %v6414
      %v6416 = vrot.slane %v6411, 4
      %6417 = vrot.lane.b32.xlu0 %v6253, 6
      %v6418 = vpop.permute.xlu0 %6417
      %6419 = vrot.lane.b32.xlu0 %v6262, 6
      %v6420 = vpop.permute.xlu0 %6419
      %6421 = vrot.lane.b32.xlu0 %v6263, 6
      %v6422 = vpop.permute.xlu0 %6421
      %6423 = vrot.lane.b32.xlu0 %v6270, 6
      %v6424 = vpop.permute.xlu0 %6423
      %6425 = vrot.lane.b32.xlu0 %v6279, 6
      %v6426 = vpop.permute.xlu0 %6425
      %6427 = vrot.lane.b32.xlu0 %v6280, 6
      %v6428 = vpop.permute.xlu0 %6427
      %6429 = vrot.lane.b32.xlu0 %v6287, 6
      %v6430 = vpop.permute.xlu0 %6429
      %6431 = vrot.lane.b32.xlu0 %v6296, 6
      %v6432 = vpop.permute.xlu0 %6431
      %6433 = vrot.lane.b32.xlu0 %v6297, 6
      %v6434 = vpop.permute.xlu0 %6433
      %6435 = vrot.lane.b32.xlu0 %v6304, 6
      %v6436 = vpop.permute.xlu0 %6435
      %6437 = vrot.lane.b32.xlu0 %v6313, 6
      %v6438 = vpop.permute.xlu0 %6437
      %6439 = vrot.lane.b32.xlu0 %v6314, 6
      %v6440 = vpop.permute.xlu0 %6439
      %6441 = vrot.lane.b32.xlu0 %v6321, 6
      %v6442 = vpop.permute.xlu0 %6441
      %6443 = vrot.lane.b32.xlu0 %v6330, 6
      %v6444 = vpop.permute.xlu0 %6443
      %6445 = vrot.lane.b32.xlu0 %v6331, 6
      %v6446 = vpop.permute.xlu0 %6445
      %6447 = vrot.lane.b32.xlu0 %v6338, 6
      %v6448 = vpop.permute.xlu0 %6447
      %6449 = vrot.lane.b32.xlu0 %v6347, 6
      %v6450 = vpop.permute.xlu0 %6449
      %6451 = vrot.lane.b32.xlu0 %v6348, 6
      %v6452 = vpop.permute.xlu0 %6451
      %6453 = vrot.lane.b32.xlu0 %v6355, 6
      %v6454 = vpop.permute.xlu0 %6453
      %6455 = vrot.lane.b32.xlu0 %v6364, 6
      %v6456 = vpop.permute.xlu0 %6455
      %6457 = vrot.lane.b32.xlu0 %v6365, 6
      %v6458 = vpop.permute.xlu0 %6457
      %6459 = vrot.lane.b32.xlu0 %v6372, 6
      %v6460 = vpop.permute.xlu0 %6459
      %6461 = vrot.lane.b32.xlu0 %v6381, 6
      %v6462 = vpop.permute.xlu0 %6461
      %6463 = vrot.lane.b32.xlu0 %v6382, 6
      %v6464 = vpop.permute.xlu0 %6463
      %6465 = vrot.lane.b32.xlu0 %v6389, 6
      %v6466 = vpop.permute.xlu0 %6465
      %6467 = vrot.lane.b32.xlu0 %v6398, 6
      %v6468 = vpop.permute.xlu0 %6467
      %6469 = vrot.lane.b32.xlu0 %v6399, 6
      %v6470 = vpop.permute.xlu0 %6469
      %6471 = vrot.lane.b32.xlu0 %v6406, 6
      %v6472 = vpop.permute.xlu0 %6471
      %6473 = vrot.lane.b32.xlu0 %v6415, 6
      %v6474 = vpop.permute.xlu0 %6473
      %6475 = vrot.lane.b32.xlu0 %v6416, 6
      %v6476 = vpop.permute.xlu0 %6475
      %vm6507 = vcmask 60464
      %vm6508 = vmand %vm6507, %vm409
      %v6509 = vsel %vm6508, %v6418, %v4250
      %6510 = vst [vmem:[%s2464] sm:$0xf] %v6509
      %vm6511 = vcmask 60464
      %6512 = vst.msk [vmem:[%s2464 + $0x4] sm:$0xf] %vm6511, %v6420
      %vm6513 = vcmask 57392
      %vm6514 = vmand %vm6513, %vm365
      %v6515 = vld [vmem:[%s2464 + $0x8] sm:$0x1]
      %v6516 = vsel %vm6514, %v6422, %v6515
      %6517 = vst [vmem:[%s2464 + $0x8] sm:$0x1] %v6516
      %v6518 = vld [vmem:[%s2464 + $0xc] sm:$0xf]
      %v6519 = vsel %vm6508, %v6424, %v6518
      %6520 = vst [vmem:[%s2464 + $0xc] sm:$0xf] %v6519
      %6521 = vst.msk [vmem:[%s2464 + $0x10] sm:$0xf] %vm6511, %v6426
      %v6522 = vld [vmem:[%s2464 + $0x14] sm:$0x1]
      %v6523 = vsel %vm6514, %v6428, %v6522
      %6524 = vst [vmem:[%s2464 + $0x14] sm:$0x1] %v6523
      %v6525 = vld [vmem:[%s2464 + $0x18] sm:$0xf]
      %v6526 = vsel %vm6508, %v6430, %v6525
      %6527 = vst [vmem:[%s2464 + $0x18] sm:$0xf] %v6526
      %6528 = vst.msk [vmem:[%s2464 + $0x1c] sm:$0xf] %vm6511, %v6432
      %v6529 = vld [vmem:[%s2464 + $0x20] sm:$0x1]
      %v6530 = vsel %vm6514, %v6434, %v6529
      %6531 = vst [vmem:[%s2464 + $0x20] sm:$0x1] %v6530
      %v6532 = vld [vmem:[%s2464 + $0x24] sm:$0xf]
      %v6533 = vsel %vm6508, %v6436, %v6532
      %6534 = vst [vmem:[%s2464 + $0x24] sm:$0xf] %v6533
      %6535 = vst.msk [vmem:[%s2464 + $0x28] sm:$0xf] %vm6511, %v6438
      %v6536 = vld [vmem:[%s2464 + $0x2c] sm:$0x1]
      %v6537 = vsel %vm6514, %v6440, %v6536
      %6538 = vst [vmem:[%s2464 + $0x2c] sm:$0x1] %v6537
      %v6539 = vld [vmem:[%s2464 + $0x30] sm:$0xf]
      %v6540 = vsel %vm6508, %v6442, %v6539
      %6541 = vst [vmem:[%s2464 + $0x30] sm:$0xf] %v6540
      %6542 = vst.msk [vmem:[%s2464 + $0x34] sm:$0xf] %vm6511, %v6444
      %v6543 = vld [vmem:[%s2464 + $0x38] sm:$0x1]
      %v6544 = vsel %vm6514, %v6446, %v6543
      %6545 = vst [vmem:[%s2464 + $0x38] sm:$0x1] %v6544
      %v6546 = vld [vmem:[%s2464 + $0x3c] sm:$0xf]
      %v6547 = vsel %vm6508, %v6448, %v6546
      %6548 = vst [vmem:[%s2464 + $0x3c] sm:$0xf] %v6547
      %6549 = vst.msk [vmem:[%s2464 + $0x40] sm:$0xf] %vm6511, %v6450
      %v6550 = vld [vmem:[%s2464 + $0x44] sm:$0x1]
      %v6551 = vsel %vm6514, %v6452, %v6550
      %6552 = vst [vmem:[%s2464 + $0x44] sm:$0x1] %v6551
      %v6553 = vld [vmem:[%s2464 + $0x48] sm:$0xf]
      %v6554 = vsel %vm6508, %v6454, %v6553
      %6555 = vst [vmem:[%s2464 + $0x48] sm:$0xf] %v6554
      %6556 = vst.msk [vmem:[%s2464 + $0x4c] sm:$0xf] %vm6511, %v6456
      %v6557 = vld [vmem:[%s2464 + $0x50] sm:$0x1]
      %v6558 = vsel %vm6514, %v6458, %v6557
      %6559 = vst [vmem:[%s2464 + $0x50] sm:$0x1] %v6558
      %v6560 = vld [vmem:[%s2464 + $0x54] sm:$0xf]
      %v6561 = vsel %vm6508, %v6460, %v6560
      %6562 = vst [vmem:[%s2464 + $0x54] sm:$0xf] %v6561
      %6563 = vst.msk [vmem:[%s2464 + $0x58] sm:$0xf] %vm6511, %v6462
      %v6564 = vld [vmem:[%s2464 + $0x5c] sm:$0x1]
      %v6565 = vsel %vm6514, %v6464, %v6564
      %6566 = vst [vmem:[%s2464 + $0x5c] sm:$0x1] %v6565
      %v6567 = vld [vmem:[%s2464 + $0x60] sm:$0xf]
      %v6568 = vsel %vm6508, %v6466, %v6567
      %6569 = vst [vmem:[%s2464 + $0x60] sm:$0xf] %v6568
      %6570 = vst.msk [vmem:[%s2464 + $0x64] sm:$0xf] %vm6511, %v6468
      %v6571 = vld [vmem:[%s2464 + $0x68] sm:$0x1]
      %v6572 = vsel %vm6514, %v6470, %v6571
      %6573 = vst [vmem:[%s2464 + $0x68] sm:$0x1] %v6572
      %v6574 = vld [vmem:[%s2464 + $0x6c] sm:$0xf]
      %v6575 = vsel %vm6508, %v6472, %v6574
      %6576 = vst [vmem:[%s2464 + $0x6c] sm:$0xf] %v6575
      %6577 = vst.msk [vmem:[%s2464 + $0x70] sm:$0xf] %vm6511, %v6474
      %v6578 = vld [vmem:[%s2464 + $0x74] sm:$0x1]
      %v6579 = vsel %vm6514, %v6476, %v6578
      %6580 = vst [vmem:[%s2464 + $0x74] sm:$0x1] %v6579
      %v6581 = vld [vmem:[%s2464] sm:$0xf]
      %v6582 = vld [vmem:[%s2464 + $0x4] sm:$0xf]
      %v6583 = vld [vmem:[%s2464 + $0x8] sm:$0x1]
      %v6584 = vld [vmem:[%s2464 + $0xc] sm:$0xf]
      %v6585 = vld [vmem:[%s2464 + $0x10] sm:$0xf]
      %v6586 = vld [vmem:[%s2464 + $0x14] sm:$0x1]
      %v6587 = vld [vmem:[%s2464 + $0x18] sm:$0xf]
      %v6588 = vld [vmem:[%s2464 + $0x1c] sm:$0xf]
      %v6589 = vld [vmem:[%s2464 + $0x20] sm:$0x1]
      %v6590 = vld [vmem:[%s2464 + $0x24] sm:$0xf]
      %v6591 = vld [vmem:[%s2464 + $0x28] sm:$0xf]
      %v6592 = vld [vmem:[%s2464 + $0x2c] sm:$0x1]
      %v6593 = vld [vmem:[%s2464 + $0x30] sm:$0xf]
      %v6594 = vld [vmem:[%s2464 + $0x34] sm:$0xf]
      %v6595 = vld [vmem:[%s2464 + $0x38] sm:$0x1]
      %v6596 = vld [vmem:[%s2464 + $0x3c] sm:$0xf]
      %v6597 = vld [vmem:[%s2464 + $0x40] sm:$0xf]
      %v6598 = vld [vmem:[%s2464 + $0x44] sm:$0x1]
      %v6599 = vld [vmem:[%s2464 + $0x48] sm:$0xf]
      %v6600 = vld [vmem:[%s2464 + $0x4c] sm:$0xf]
      %v6601 = vld [vmem:[%s2464 + $0x50] sm:$0x1]
      %v6602 = vld [vmem:[%s2464 + $0x54] sm:$0xf]
      %v6603 = vld [vmem:[%s2464 + $0x58] sm:$0xf]
      %v6604 = vld [vmem:[%s2464 + $0x5c] sm:$0x1]
      %v6621 = vunpack.c.l.b16 %v6581
      %v6622 = vunpack.c.l.b16 %v6582
      %v6623 = vunpack.c.l.b16 %v6584
      %v6624 = vunpack.c.l.b16 %v6585
      %v6625 = vunpack.c.l.b16 %v6587
      %v6626 = vunpack.c.l.b16 %v6588
      %v6627 = vunpack.c.l.b16 %v6590
      %v6628 = vunpack.c.l.b16 %v6591
      %v6629 = vunpack.c.l.b16 %v6593
      %v6630 = vunpack.c.l.b16 %v6594
      %v6631 = vunpack.c.l.b16 %v6596
      %v6632 = vunpack.c.l.b16 %v6597
      %v6633 = vunpack.c.l.b16 %v6599
      %v6634 = vunpack.c.l.b16 %v6600
      %v6635 = vunpack.c.l.b16 %v6602
      %v6636 = vunpack.c.l.b16 %v6603
      %v6637 = vpack.c.b16 %v6622, %v6621
      %v6638 = vpack.c.b16 %v6624, %v6623
      %v6639 = vpack.c.b16 %v6626, %v6625
      %v6640 = vpack.c.b16 %v6628, %v6627
      %v6641 = vpack.c.b16 %v6630, %v6629
      %v6642 = vpack.c.b16 %v6632, %v6631
      %v6643 = vpack.c.b16 %v6634, %v6633
      %v6644 = vpack.c.b16 %v6636, %v6635
      %v6661 = vunpack.c.l.b16 %v6583
      %v6662 = vunpack.c.l.b16 %v6586
      %v6663 = vunpack.c.l.b16 %v6589
      %v6664 = vunpack.c.l.b16 %v6592
      %v6665 = vunpack.c.l.b16 %v6595
      %v6666 = vunpack.c.l.b16 %v6598
      %v6667 = vunpack.c.l.b16 %v6601
      %v6668 = vunpack.c.l.b16 %v6604
      %v6669 = vpack.c.b16 %v6661, %v6661
      %v6670 = vpack.c.b16 %v6662, %v6662
      %v6671 = vpack.c.b16 %v6663, %v6663
      %v6672 = vpack.c.b16 %v6664, %v6664
      %v6673 = vpack.c.b16 %v6665, %v6665
      %v6674 = vpack.c.b16 %v6666, %v6666
      %v6675 = vpack.c.b16 %v6667, %v6667
      %v6676 = vpack.c.b16 %v6668, %v6668
      %v6678 = vshrl.u32 %v6637, 16
      %v6680 = vshll.u32 %v6637, 16
      %v6682 = vrot.slane %v6680, 1
      %v6683 = vor.u32 %v6678, %v6682
      %v6685 = vshll.u32 %v6669, 16
      %v6687 = vrot.slane %v6685, 1
      %v6688 = vsel %vm1008, %v6683, %v6687
      %v6690 = vshrl.u32 %v6638, 16
      %v6692 = vshll.u32 %v6638, 16
      %v6694 = vrot.slane %v6692, 1
      %v6695 = vor.u32 %v6690, %v6694
      %v6697 = vshll.u32 %v6670, 16
      %v6699 = vrot.slane %v6697, 1
      %v6700 = vsel %vm1008, %v6695, %v6699
      %v6702 = vshrl.u32 %v6639, 16
      %v6704 = vshll.u32 %v6639, 16
      %v6706 = vrot.slane %v6704, 1
      %v6707 = vor.u32 %v6702, %v6706
      %v6709 = vshll.u32 %v6671, 16
      %v6711 = vrot.slane %v6709, 1
      %v6712 = vsel %vm1008, %v6707, %v6711
      %v6714 = vshrl.u32 %v6640, 16
      %v6716 = vshll.u32 %v6640, 16
      %v6718 = vrot.slane %v6716, 1
      %v6719 = vor.u32 %v6714, %v6718
      %v6721 = vshll.u32 %v6672, 16
      %v6723 = vrot.slane %v6721, 1
      %v6724 = vsel %vm1008, %v6719, %v6723
      %v6726 = vshrl.u32 %v6641, 16
      %v6728 = vshll.u32 %v6641, 16
      %v6730 = vrot.slane %v6728, 1
      %v6731 = vor.u32 %v6726, %v6730
      %v6733 = vshll.u32 %v6673, 16
      %v6735 = vrot.slane %v6733, 1
      %v6736 = vsel %vm1008, %v6731, %v6735
      %v6738 = vshrl.u32 %v6642, 16
      %v6740 = vshll.u32 %v6642, 16
      %v6742 = vrot.slane %v6740, 1
      %v6743 = vor.u32 %v6738, %v6742
      %v6745 = vshll.u32 %v6674, 16
      %v6747 = vrot.slane %v6745, 1
      %v6748 = vsel %vm1008, %v6743, %v6747
      %v6750 = vshrl.u32 %v6643, 16
      %v6752 = vshll.u32 %v6643, 16
      %v6754 = vrot.slane %v6752, 1
      %v6755 = vor.u32 %v6750, %v6754
      %v6757 = vshll.u32 %v6675, 16
      %v6759 = vrot.slane %v6757, 1
      %v6760 = vsel %vm1008, %v6755, %v6759
      %v6762 = vshrl.u32 %v6644, 16
      %v6764 = vshll.u32 %v6644, 16
      %v6766 = vrot.slane %v6764, 1
      %v6767 = vor.u32 %v6762, %v6766
      %v6769 = vshll.u32 %v6676, 16
      %v6771 = vrot.slane %v6769, 1
      %v6772 = vsel %vm1008, %v6767, %v6771
      %v6781 = vrot.slane %v6637, 1
      %v6782 = vrot.slane %v6669, 1
      %v6783 = vsel %vm1165, %v6781, %v6782
      %v6784 = vrot.slane %v6638, 1
      %v6785 = vrot.slane %v6670, 1
      %v6786 = vsel %vm1165, %v6784, %v6785
      %v6787 = vrot.slane %v6639, 1
      %v6788 = vrot.slane %v6671, 1
      %v6789 = vsel %vm1165, %v6787, %v6788
      %v6790 = vrot.slane %v6640, 1
      %v6791 = vrot.slane %v6672, 1
      %v6792 = vsel %vm1165, %v6790, %v6791
      %v6793 = vrot.slane %v6641, 1
      %v6794 = vrot.slane %v6673, 1
      %v6795 = vsel %vm1165, %v6793, %v6794
      %v6796 = vrot.slane %v6642, 1
      %v6797 = vrot.slane %v6674, 1
      %v6798 = vsel %vm1165, %v6796, %v6797
      %v6799 = vrot.slane %v6643, 1
      %v6800 = vrot.slane %v6675, 1
      %v6801 = vsel %vm1165, %v6799, %v6800
      %v6802 = vrot.slane %v6644, 1
      %v6803 = vrot.slane %v6676, 1
      %v6804 = vsel %vm1165, %v6802, %v6803
      %v6813 = vld [vmem:[%s5] sm:$0xf]
      %v6814 = vld [vmem:[%s5 + $0x4] sm:$0xf]
      %v6815 = vld [vmem:[%s5 + $0x8] sm:$0xf]
      %v6816 = vld [vmem:[%s5 + $0xc] sm:$0xf]
      %v6817 = vld [vmem:[%s5 + $0x10] sm:$0xf]
      %v6818 = vld [vmem:[%s5 + $0x14] sm:$0xf]
      %v6819 = vld [vmem:[%s5 + $0x18] sm:$0xf]
      %v6820 = vld [vmem:[%s5 + $0x1c] sm:$0xf]
      %v6821 = vld [vmem:[%s5 + $0x20] sm:$0xf]
      %v6822 = vld [vmem:[%s5 + $0x24] sm:$0xf]
      %v6823 = vld [vmem:[%s5 + $0x28] sm:$0xf]
      %v6824 = vld [vmem:[%s5 + $0x2c] sm:$0xf]
      %v6825 = vld [vmem:[%s5 + $0x30] sm:$0xf]
      %v6826 = vld [vmem:[%s5 + $0x34] sm:$0xf]
      %v6827 = vld [vmem:[%s5 + $0x38] sm:$0xf]
      %v6828 = vld [vmem:[%s5 + $0x3c] sm:$0xf]
      %v6829 = vld [vmem:[%s5 + $0x40] sm:$0xf]
      %v6830 = vld [vmem:[%s5 + $0x44] sm:$0xf]
      %v6831 = vld [vmem:[%s5 + $0x48] sm:$0xf]
      %v6832 = vld [vmem:[%s5 + $0x4c] sm:$0xf]
      %v6833 = vld [vmem:[%s5 + $0x50] sm:$0xf]
      %v6834 = vld [vmem:[%s5 + $0x54] sm:$0xf]
      %v6835 = vld [vmem:[%s5 + $0x58] sm:$0xf]
      %v6836 = vld [vmem:[%s5 + $0x5c] sm:$0xf]
      %v6837 = vld [vmem:[%s5 + $0x60] sm:$0xf]
      %v6838 = vld [vmem:[%s5 + $0x64] sm:$0xf]
      %v6839 = vld [vmem:[%s5 + $0x68] sm:$0xf]
      %v6840 = vld [vmem:[%s5 + $0x6c] sm:$0xf]
      %v6841 = vld [vmem:[%s5 + $0x70] sm:$0xf]
      %v6842 = vld [vmem:[%s5 + $0x74] sm:$0xf]
      %v6843 = vld [vmem:[%s5 + $0x78] sm:$0xf]
      %v6844 = vld [vmem:[%s5 + $0x7c] sm:$0xf]
      %v6845 = vld [vmem:[%s5 + $0x80] sm:$0xf]
      %v6846 = vld [vmem:[%s5 + $0x84] sm:$0xf]
      %v6847 = vld [vmem:[%s5 + $0x88] sm:$0xf]
      %v6848 = vld [vmem:[%s5 + $0x8c] sm:$0xf]
      %v6849 = vld [vmem:[%s5 + $0x90] sm:$0xf]
      %v6850 = vld [vmem:[%s5 + $0x94] sm:$0xf]
      %v6851 = vld [vmem:[%s5 + $0x98] sm:$0xf]
      %v6852 = vld [vmem:[%s5 + $0x9c] sm:$0xf]
      %v6853 = vld [vmem:[%s5 + $0xa0] sm:$0xf]
      %v6854 = vld [vmem:[%s5 + $0xa4] sm:$0xf]
      %v6855 = vld [vmem:[%s5 + $0xa8] sm:$0xf]
      %v6856 = vld [vmem:[%s5 + $0xac] sm:$0xf]
      %v6857 = vld [vmem:[%s5 + $0xb0] sm:$0xf]
      %v6858 = vld [vmem:[%s5 + $0xb4] sm:$0xf]
      %v6859 = vld [vmem:[%s5 + $0xb8] sm:$0xf]
      %v6860 = vld [vmem:[%s5 + $0xbc] sm:$0xf]
      %v6861 = vld [vmem:[%s5329] sm:$0xf]
      %v6862 = vld [vmem:[%s5329 + $0x4] sm:$0xf]
      %v6863 = vld [vmem:[%s5329 + $0x8] sm:$0x1]
      %v6864 = vld [vmem:[%s5329 + $0xc] sm:$0xf]
      %v6865 = vld [vmem:[%s5329 + $0x10] sm:$0xf]
      %v6866 = vld [vmem:[%s5329 + $0x14] sm:$0x1]
      %v6867 = vld [vmem:[%s5329 + $0x18] sm:$0xf]
      %v6868 = vld [vmem:[%s5329 + $0x1c] sm:$0xf]
      %v6869 = vld [vmem:[%s5329 + $0x20] sm:$0x1]
      %v6870 = vld [vmem:[%s5329 + $0x24] sm:$0xf]
      %v6871 = vld [vmem:[%s5329 + $0x28] sm:$0xf]
      %v6872 = vld [vmem:[%s5329 + $0x2c] sm:$0x1]
      %v6873 = vld [vmem:[%s5329 + $0x30] sm:$0xf]
      %v6874 = vld [vmem:[%s5329 + $0x34] sm:$0xf]
      %v6875 = vld [vmem:[%s5329 + $0x38] sm:$0x1]
      %v6876 = vld [vmem:[%s5329 + $0x3c] sm:$0xf]
      %v6877 = vld [vmem:[%s5329 + $0x40] sm:$0xf]
      %v6878 = vld [vmem:[%s5329 + $0x44] sm:$0x1]
      %v6879 = vld [vmem:[%s5329 + $0x48] sm:$0xf]
      %v6880 = vld [vmem:[%s5329 + $0x4c] sm:$0xf]
      %v6881 = vld [vmem:[%s5329 + $0x50] sm:$0x1]
      %v6882 = vld [vmem:[%s5329 + $0x54] sm:$0xf]
      %v6883 = vld [vmem:[%s5329 + $0x58] sm:$0xf]
      %v6884 = vld [vmem:[%s5329 + $0x5c] sm:$0x1]
      %v6901 = vunpack.c.l.b16 %v6861
      %v6902 = vunpack.c.l.b16 %v6862
      %v6903 = vunpack.c.l.b16 %v6864
      %v6904 = vunpack.c.l.b16 %v6865
      %v6905 = vunpack.c.l.b16 %v6867
      %v6906 = vunpack.c.l.b16 %v6868
      %v6907 = vunpack.c.l.b16 %v6870
      %v6908 = vunpack.c.l.b16 %v6871
      %v6909 = vunpack.c.l.b16 %v6873
      %v6910 = vunpack.c.l.b16 %v6874
      %v6911 = vunpack.c.l.b16 %v6876
      %v6912 = vunpack.c.l.b16 %v6877
      %v6913 = vunpack.c.l.b16 %v6879
      %v6914 = vunpack.c.l.b16 %v6880
      %v6915 = vunpack.c.l.b16 %v6882
      %v6916 = vunpack.c.l.b16 %v6883
      %v6917 = vpack.c.b16 %v6902, %v6901
      %v6918 = vpack.c.b16 %v6904, %v6903
      %v6919 = vpack.c.b16 %v6906, %v6905
      %v6920 = vpack.c.b16 %v6908, %v6907
      %v6921 = vpack.c.b16 %v6910, %v6909
      %v6922 = vpack.c.b16 %v6912, %v6911
      %v6923 = vpack.c.b16 %v6914, %v6913
      %v6924 = vpack.c.b16 %v6916, %v6915
      %v6941 = vunpack.c.l.b16 %v6863
      %v6942 = vunpack.c.l.b16 %v6866
      %v6943 = vunpack.c.l.b16 %v6869
      %v6944 = vunpack.c.l.b16 %v6872
      %v6945 = vunpack.c.l.b16 %v6875
      %v6946 = vunpack.c.l.b16 %v6878
      %v6947 = vunpack.c.l.b16 %v6881
      %v6948 = vunpack.c.l.b16 %v6884
      %v6949 = vpack.c.b16 %v6941, %v6941
      %v6950 = vpack.c.b16 %v6942, %v6942
      %v6951 = vpack.c.b16 %v6943, %v6943
      %v6952 = vpack.c.b16 %v6944, %v6944
      %v6953 = vpack.c.b16 %v6945, %v6945
      %v6954 = vpack.c.b16 %v6946, %v6946
      %v6955 = vpack.c.b16 %v6947, %v6947
      %v6956 = vpack.c.b16 %v6948, %v6948
      %v6958 = vshrl.u32 %v6917, 16
      %v6960 = vshll.u32 %v6917, 16
      %v6962 = vrot.slane %v6960, 1
      %v6963 = vor.u32 %v6958, %v6962
      %v6965 = vshll.u32 %v6949, 16
      %v6967 = vrot.slane %v6965, 1
      %v6968 = vsel %vm1008, %v6963, %v6967
      %v6970 = vshrl.u32 %v6918, 16
      %v6972 = vshll.u32 %v6918, 16
      %v6974 = vrot.slane %v6972, 1
      %v6975 = vor.u32 %v6970, %v6974
      %v6977 = vshll.u32 %v6950, 16
      %v6979 = vrot.slane %v6977, 1
      %v6980 = vsel %vm1008, %v6975, %v6979
      %v6982 = vshrl.u32 %v6919, 16
      %v6984 = vshll.u32 %v6919, 16
      %v6986 = vrot.slane %v6984, 1
      %v6987 = vor.u32 %v6982, %v6986
      %v6989 = vshll.u32 %v6951, 16
      %v6991 = vrot.slane %v6989, 1
      %v6992 = vsel %vm1008, %v6987, %v6991
      %v6994 = vshrl.u32 %v6920, 16
      %v6996 = vshll.u32 %v6920, 16
      %v6998 = vrot.slane %v6996, 1
      %v6999 = vor.u32 %v6994, %v6998
      %v7001 = vshll.u32 %v6952, 16
      %v7003 = vrot.slane %v7001, 1
      %v7004 = vsel %vm1008, %v6999, %v7003
      %v7006 = vshrl.u32 %v6921, 16
      %v7008 = vshll.u32 %v6921, 16
      %v7010 = vrot.slane %v7008, 1
      %v7011 = vor.u32 %v7006, %v7010
      %v7013 = vshll.u32 %v6953, 16
      %v7015 = vrot.slane %v7013, 1
      %v7016 = vsel %vm1008, %v7011, %v7015
      %v7018 = vshrl.u32 %v6922, 16
      %v7020 = vshll.u32 %v6922, 16
      %v7022 = vrot.slane %v7020, 1
      %v7023 = vor.u32 %v7018, %v7022
      %v7025 = vshll.u32 %v6954, 16
      %v7027 = vrot.slane %v7025, 1
      %v7028 = vsel %vm1008, %v7023, %v7027
      %v7030 = vshrl.u32 %v6923, 16
      %v7032 = vshll.u32 %v6923, 16
      %v7034 = vrot.slane %v7032, 1
      %v7035 = vor.u32 %v7030, %v7034
      %v7037 = vshll.u32 %v6955, 16
      %v7039 = vrot.slane %v7037, 1
      %v7040 = vsel %vm1008, %v7035, %v7039
      %v7042 = vshrl.u32 %v6924, 16
      %v7044 = vshll.u32 %v6924, 16
      %v7046 = vrot.slane %v7044, 1
      %v7047 = vor.u32 %v7042, %v7046
      %v7049 = vshll.u32 %v6956, 16
      %v7051 = vrot.slane %v7049, 1
      %v7052 = vsel %vm1008, %v7047, %v7051
      %v7061 = vrot.slane %v6917, 1
      %v7062 = vrot.slane %v6949, 1
      %v7063 = vsel %vm1165, %v7061, %v7062
      %v7064 = vrot.slane %v6918, 1
      %v7065 = vrot.slane %v6950, 1
      %v7066 = vsel %vm1165, %v7064, %v7065
      %v7067 = vrot.slane %v6919, 1
      %v7068 = vrot.slane %v6951, 1
      %v7069 = vsel %vm1165, %v7067, %v7068
      %v7070 = vrot.slane %v6920, 1
      %v7071 = vrot.slane %v6952, 1
      %v7072 = vsel %vm1165, %v7070, %v7071
      %v7073 = vrot.slane %v6921, 1
      %v7074 = vrot.slane %v6953, 1
      %v7075 = vsel %vm1165, %v7073, %v7074
      %v7076 = vrot.slane %v6922, 1
      %v7077 = vrot.slane %v6954, 1
      %v7078 = vsel %vm1165, %v7076, %v7077
      %v7079 = vrot.slane %v6923, 1
      %v7080 = vrot.slane %v6955, 1
      %v7081 = vsel %vm1165, %v7079, %v7080
      %v7082 = vrot.slane %v6924, 1
      %v7083 = vrot.slane %v6956, 1
      %v7084 = vsel %vm1165, %v7082, %v7083
      %s7093 = scalar_lea.vmem %s5, 192
      %v7094 = vld [vmem:[%s7093] sm:$0xf]
      %v7095 = vld [vmem:[%s7093 + $0x4] sm:$0xf]
      %v7096 = vld [vmem:[%s7093 + $0x8] sm:$0xf]
      %v7097 = vld [vmem:[%s7093 + $0xc] sm:$0xf]
      %v7098 = vld [vmem:[%s7093 + $0x10] sm:$0xf]
      %v7099 = vld [vmem:[%s7093 + $0x14] sm:$0xf]
      %v7100 = vld [vmem:[%s7093 + $0x18] sm:$0xf]
      %v7101 = vld [vmem:[%s7093 + $0x1c] sm:$0xf]
      %v7102 = vld [vmem:[%s7093 + $0x20] sm:$0xf]
      %v7103 = vld [vmem:[%s7093 + $0x24] sm:$0xf]
      %v7104 = vld [vmem:[%s7093 + $0x28] sm:$0xf]
      %v7105 = vld [vmem:[%s7093 + $0x2c] sm:$0xf]
      %v7106 = vld [vmem:[%s7093 + $0x30] sm:$0xf]
      %v7107 = vld [vmem:[%s7093 + $0x34] sm:$0xf]
      %v7108 = vld [vmem:[%s7093 + $0x38] sm:$0xf]
      %v7109 = vld [vmem:[%s7093 + $0x3c] sm:$0xf]
      %v7110 = vld [vmem:[%s7093 + $0x40] sm:$0xf]
      %v7111 = vld [vmem:[%s7093 + $0x44] sm:$0xf]
      %v7112 = vld [vmem:[%s7093 + $0x48] sm:$0xf]
      %v7113 = vld [vmem:[%s7093 + $0x4c] sm:$0xf]
      %v7114 = vld [vmem:[%s7093 + $0x50] sm:$0xf]
      %v7115 = vld [vmem:[%s7093 + $0x54] sm:$0xf]
      %v7116 = vld [vmem:[%s7093 + $0x58] sm:$0xf]
      %v7117 = vld [vmem:[%s7093 + $0x5c] sm:$0xf]
      %v7118 = vld [vmem:[%s7093 + $0x60] sm:$0xf]
      %v7119 = vld [vmem:[%s7093 + $0x64] sm:$0xf]
      %v7120 = vld [vmem:[%s7093 + $0x68] sm:$0xf]
      %v7121 = vld [vmem:[%s7093 + $0x6c] sm:$0xf]
      %v7122 = vld [vmem:[%s7093 + $0x70] sm:$0xf]
      %v7123 = vld [vmem:[%s7093 + $0x74] sm:$0xf]
      %v7124 = vld [vmem:[%s7093 + $0x78] sm:$0xf]
      %v7125 = vld [vmem:[%s7093 + $0x7c] sm:$0xf]
      %v7126 = vld [vmem:[%s7093 + $0x80] sm:$0xf]
      %v7127 = vld [vmem:[%s7093 + $0x84] sm:$0xf]
      %v7128 = vld [vmem:[%s7093 + $0x88] sm:$0xf]
      %v7129 = vld [vmem:[%s7093 + $0x8c] sm:$0xf]
      %v7130 = vld [vmem:[%s7093 + $0x90] sm:$0xf]
      %v7131 = vld [vmem:[%s7093 + $0x94] sm:$0xf]
      %v7132 = vld [vmem:[%s7093 + $0x98] sm:$0xf]
      %v7133 = vld [vmem:[%s7093 + $0x9c] sm:$0xf]
      %v7134 = vld [vmem:[%s7093 + $0xa0] sm:$0xf]
      %v7135 = vld [vmem:[%s7093 + $0xa4] sm:$0xf]
      %v7136 = vld [vmem:[%s7093 + $0xa8] sm:$0xf]
      %v7137 = vld [vmem:[%s7093 + $0xac] sm:$0xf]
      %v7138 = vld [vmem:[%s7093 + $0xb0] sm:$0xf]
      %v7139 = vld [vmem:[%s7093 + $0xb4] sm:$0xf]
      %v7140 = vld [vmem:[%s7093 + $0xb8] sm:$0xf]
      %v7141 = vld [vmem:[%s7093 + $0xbc] sm:$0xf]
      %v7190 = vunpack.c.l.b16 %v7094
      %v7191 = vunpack.c.l.b16 %v7095
      %v7192 = vunpack.c.l.b16 %v7096
      %v7193 = vunpack.c.l.b16 %v7097
      %v7194 = vunpack.c.l.b16 %v7098
      %v7195 = vunpack.c.l.b16 %v7099
      %v7196 = vunpack.c.l.b16 %v7100
      %v7197 = vunpack.c.l.b16 %v7101
      %v7198 = vunpack.c.l.b16 %v7102
      %v7199 = vunpack.c.l.b16 %v7103
      %v7200 = vunpack.c.l.b16 %v7104
      %v7201 = vunpack.c.l.b16 %v7105
      %v7202 = vunpack.c.l.b16 %v7106
      %v7203 = vunpack.c.l.b16 %v7107
      %v7204 = vunpack.c.l.b16 %v7108
      %v7205 = vunpack.c.l.b16 %v7109
      %v7206 = vunpack.c.l.b16 %v7110
      %v7207 = vunpack.c.l.b16 %v7111
      %v7208 = vunpack.c.l.b16 %v7112
      %v7209 = vunpack.c.l.b16 %v7113
      %v7210 = vunpack.c.l.b16 %v7114
      %v7211 = vunpack.c.l.b16 %v7115
      %v7212 = vunpack.c.l.b16 %v7116
      %v7213 = vunpack.c.l.b16 %v7117
      %v7214 = vunpack.c.l.b16 %v7118
      %v7215 = vunpack.c.l.b16 %v7119
      %v7216 = vunpack.c.l.b16 %v7120
      %v7217 = vunpack.c.l.b16 %v7121
      %v7218 = vunpack.c.l.b16 %v7122
      %v7219 = vunpack.c.l.b16 %v7123
      %v7220 = vunpack.c.l.b16 %v7124
      %v7221 = vunpack.c.l.b16 %v7125
      %v7222 = vunpack.c.l.b16 %v7126
      %v7223 = vunpack.c.l.b16 %v7127
      %v7224 = vunpack.c.l.b16 %v7128
      %v7225 = vunpack.c.l.b16 %v7129
      %v7226 = vunpack.c.l.b16 %v7130
      %v7227 = vunpack.c.l.b16 %v7131
      %v7228 = vunpack.c.l.b16 %v7132
      %v7229 = vunpack.c.l.b16 %v7133
      %v7230 = vunpack.c.l.b16 %v7134
      %v7231 = vunpack.c.l.b16 %v7135
      %v7232 = vunpack.c.l.b16 %v7136
      %v7233 = vunpack.c.l.b16 %v7137
      %v7234 = vunpack.c.l.b16 %v7138
      %v7235 = vunpack.c.l.b16 %v7139
      %v7236 = vunpack.c.l.b16 %v7140
      %v7237 = vunpack.c.l.b16 %v7141
      %v7238 = vpack.c.b16 %v7191, %v7190
      %v7239 = vpack.c.b16 %v7193, %v7192
      %v7240 = vpack.c.b16 %v7195, %v7194
      %v7241 = vpack.c.b16 %v7197, %v7196
      %v7242 = vpack.c.b16 %v7199, %v7198
      %v7243 = vpack.c.b16 %v7201, %v7200
      %v7244 = vpack.c.b16 %v7203, %v7202
      %v7245 = vpack.c.b16 %v7205, %v7204
      %v7246 = vpack.c.b16 %v7207, %v7206
      %v7247 = vpack.c.b16 %v7209, %v7208
      %v7248 = vpack.c.b16 %v7211, %v7210
      %v7249 = vpack.c.b16 %v7213, %v7212
      %v7250 = vpack.c.b16 %v7215, %v7214
      %v7251 = vpack.c.b16 %v7217, %v7216
      %v7252 = vpack.c.b16 %v7219, %v7218
      %v7253 = vpack.c.b16 %v7221, %v7220
      %v7254 = vpack.c.b16 %v7223, %v7222
      %v7255 = vpack.c.b16 %v7225, %v7224
      %v7256 = vpack.c.b16 %v7227, %v7226
      %v7257 = vpack.c.b16 %v7229, %v7228
      %v7258 = vpack.c.b16 %v7231, %v7230
      %v7259 = vpack.c.b16 %v7233, %v7232
      %v7260 = vpack.c.b16 %v7235, %v7234
      %v7261 = vpack.c.b16 %v7237, %v7236
      %7286 = vmatprep.subr.bf16.mxu0 0
      %7287 = vmatpush1.bf16.msra.mxu0 %v7245
      %7288 = vmatprep.subr.bf16.mxu0 0
      %7289 = vmatpush1.bf16.msra.mxu0 %v7244
      %7290 = vmatprep.subr.bf16.mxu0 0
      %7291 = vmatpush1.bf16.msra.mxu0 %v7243
      %7292 = vmatprep.subr.bf16.mxu0 0
      %7293 = vmatpush1.bf16.msra.mxu0 %v7242
      %7294 = vmatprep.subr.bf16.mxu0 0
      %7295 = vmatpush1.bf16.msra.mxu0 %v7241
      %7296 = vmatprep.subr.bf16.mxu0 0
      %7297 = vmatpush1.bf16.msra.mxu0 %v7240
      %7298 = vmatprep.subr.bf16.mxu0 0
      %7299 = vmatpush1.bf16.msra.mxu0 %v7239
      %7300 = vmatprep.subr.bf16.mxu0 0
      %7301 = vmatpush1.bf16.msra.mxu0 %v7238
      %7302 = vmatprep.subr.bf16.mxu0 0
      %7303 = vmatpush2.bf16.msra.mxu0 %v7253
      %7304 = vmatprep.subr.bf16.mxu0 0
      %7305 = vmatpush2.bf16.msra.mxu0 %v7252
      %7306 = vmatprep.subr.bf16.mxu0 0
      %7307 = vmatpush2.bf16.msra.mxu0 %v7251
      %7308 = vmatprep.subr.bf16.mxu0 0
      %7309 = vmatpush2.bf16.msra.mxu0 %v7250
      %7310 = vmatprep.subr.bf16.mxu0 0
      %7311 = vmatpush2.bf16.msra.mxu0 %v7249
      %7312 = vmatprep.subr.bf16.mxu0 0
      %7313 = vmatpush2.bf16.msra.mxu0 %v7248
      %7314 = vmatprep.subr.bf16.mxu0 0
      %7315 = vmatpush2.bf16.msra.mxu0 %v7247
      %7316 = vmatprep.subr.bf16.mxu0 0
      %7317 = vmatpush2.bf16.msra.mxu0 %v7246
      %7318 = vmatprep.mubr.bf16.mxu0 %v6968
      %7319 = vmatmul.mubr.bf16.gmra.mxu0 %v6917
      %v7320 = vpop.f32.mrf.mxu0
      %v7321 = vadd.f32 0.0, %v7320
      %v7322 = vpop.f32.mrf.mxu0
      %v7323 = vpop.f32.mrf.mxu0
      %v7324 = vadd.f32 0.0, %v7323
      %v7325 = vpop.f32.mrf.mxu0
      %7326 = vmatprep.mubr.bf16.mxu0 %v6980
      %7327 = vmatmul.mubr.bf16.gmra.mxu0 %v6918
      %v7328 = vpop.f32.mrf.mxu0
      %v7329 = vadd.f32 0.0, %v7328
      %v7330 = vpop.f32.mrf.mxu0
      %v7331 = vpop.f32.mrf.mxu0
      %v7332 = vadd.f32 0.0, %v7331
      %v7333 = vpop.f32.mrf.mxu0
      %7334 = vmatprep.mubr.bf16.mxu0 %v6992
      %7335 = vmatmul.mubr.bf16.gmra.mxu0 %v6919
      %v7336 = vpop.f32.mrf.mxu0
      %v7337 = vadd.f32 0.0, %v7336
      %v7338 = vpop.f32.mrf.mxu0
      %v7339 = vpop.f32.mrf.mxu0
      %v7340 = vadd.f32 0.0, %v7339
      %v7341 = vpop.f32.mrf.mxu0
      %7342 = vmatprep.mubr.bf16.mxu0 %v7004
      %7343 = vmatmul.mubr.bf16.gmra.mxu0 %v6920
      %v7344 = vpop.f32.mrf.mxu0
      %v7345 = vadd.f32 0.0, %v7344
      %v7346 = vpop.f32.mrf.mxu0
      %v7347 = vpop.f32.mrf.mxu0
      %v7348 = vadd.f32 0.0, %v7347
      %v7349 = vpop.f32.mrf.mxu0
      %7350 = vmatprep.mubr.bf16.mxu0 %v7016
      %7351 = vmatmul.mubr.bf16.gmra.mxu0 %v6921
      %v7352 = vpop.f32.mrf.mxu0
      %v7353 = vadd.f32 0.0, %v7352
      %v7354 = vpop.f32.mrf.mxu0
      %v7355 = vpop.f32.mrf.mxu0
      %v7356 = vadd.f32 0.0, %v7355
      %v7357 = vpop.f32.mrf.mxu0
      %7358 = vmatprep.mubr.bf16.mxu0 %v7028
      %7359 = vmatmul.mubr.bf16.gmra.mxu0 %v6922
      %v7360 = vpop.f32.mrf.mxu0
      %v7361 = vadd.f32 0.0, %v7360
      %v7362 = vpop.f32.mrf.mxu0
      %v7363 = vpop.f32.mrf.mxu0
      %v7364 = vadd.f32 0.0, %v7363
      %v7365 = vpop.f32.mrf.mxu0
      %7366 = vmatprep.mubr.bf16.mxu0 %v7040
      %7367 = vmatmul.mubr.bf16.gmra.mxu0 %v6923
      %v7368 = vpop.f32.mrf.mxu0
      %v7369 = vadd.f32 0.0, %v7368
      %v7370 = vpop.f32.mrf.mxu0
      %v7371 = vpop.f32.mrf.mxu0
      %v7372 = vadd.f32 0.0, %v7371
      %v7373 = vpop.f32.mrf.mxu0
      %7374 = vmatprep.mubr.bf16.mxu0 %v7052
      %7375 = vmatmul.mubr.bf16.gmra.mxu0 %v6924
      %v7376 = vpop.f32.mrf.mxu0
      %v7377 = vadd.f32 0.0, %v7376
      %v7378 = vpop.f32.mrf.mxu0
      %v7379 = vpop.f32.mrf.mxu0
      %v7380 = vadd.f32 0.0, %v7379
      %v7381 = vpop.f32.mrf.mxu0
      %7382 = vdwg.mxu0
      %7383 = vmatprep.subr.bf16.mxu0 0
      %7384 = vmatpush1.bf16.msra.mxu0 %v7261
      %7385 = vmatprep.subr.bf16.mxu0 0
      %7386 = vmatpush1.bf16.msra.mxu0 %v7260
      %7387 = vmatprep.subr.bf16.mxu0 0
      %7388 = vmatpush1.bf16.msra.mxu0 %v7259
      %7389 = vmatprep.subr.bf16.mxu0 0
      %7390 = vmatpush1.bf16.msra.mxu0 %v7258
      %7391 = vmatprep.subr.bf16.mxu0 0
      %7392 = vmatpush1.bf16.msra.mxu0 %v7257
      %7393 = vmatprep.subr.bf16.mxu0 0
      %7394 = vmatpush1.bf16.msra.mxu0 %v7256
      %7395 = vmatprep.subr.bf16.mxu0 0
      %7396 = vmatpush1.bf16.msra.mxu0 %v7255
      %7397 = vmatprep.subr.bf16.mxu0 0
      %7398 = vmatpush1.bf16.msra.mxu0 %v7254
      %7399 = vmatprep.subr.bf16.mxu0 0
      %7400 = vmatpush2.bf16.msra.mxu0 0
      %7401 = vmatprep.subr.bf16.mxu0 0
      %7402 = vmatpush2.bf16.msra.mxu0 0
      %7403 = vmatprep.subr.bf16.mxu0 0
      %7404 = vmatpush2.bf16.msra.mxu0 0
      %7405 = vmatprep.subr.bf16.mxu0 0
      %7406 = vmatpush2.bf16.msra.mxu0 0
      %7407 = vmatprep.subr.bf16.mxu0 0
      %7408 = vmatpush2.bf16.msra.mxu0 0
      %7409 = vmatprep.subr.bf16.mxu0 0
      %7410 = vmatpush2.bf16.msra.mxu0 0
      %7411 = vmatprep.subr.bf16.mxu0 0
      %7412 = vmatpush2.bf16.msra.mxu0 0
      %7413 = vmatprep.subr.bf16.mxu0 0
      %7414 = vmatpush2.bf16.msra.mxu0 0
      %7415 = vmatprep.mubr.bf16.mxu0 0
      %7416 = vmatmul.mubr.bf16.gmra.mxu0 %v7063
      %v7417 = vpop.f32.mrf.mxu0
      %v7418 = vadd.f32 %v7321, %v7417
      %v7419 = vpop.f32.mrf.mxu0
      %v7420 = vpop.f32.mrf.mxu0
      %v7421 = vadd.f32 %v7324, %v7420
      %v7422 = vpop.f32.mrf.mxu0
      %7423 = vmatprep.mubr.bf16.mxu0 0
      %7424 = vmatmul.mubr.bf16.gmra.mxu0 %v7066
      %v7425 = vpop.f32.mrf.mxu0
      %v7426 = vadd.f32 %v7329, %v7425
      %v7427 = vpop.f32.mrf.mxu0
      %v7428 = vpop.f32.mrf.mxu0
      %v7429 = vadd.f32 %v7332, %v7428
      %v7430 = vpop.f32.mrf.mxu0
      %7431 = vmatprep.mubr.bf16.mxu0 0
      %7432 = vmatmul.mubr.bf16.gmra.mxu0 %v7069
      %v7433 = vpop.f32.mrf.mxu0
      %v7434 = vadd.f32 %v7337, %v7433
      %v7435 = vpop.f32.mrf.mxu0
      %v7436 = vpop.f32.mrf.mxu0
      %v7437 = vadd.f32 %v7340, %v7436
      %v7438 = vpop.f32.mrf.mxu0
      %7439 = vmatprep.mubr.bf16.mxu0 0
      %7440 = vmatmul.mubr.bf16.gmra.mxu0 %v7072
      %v7441 = vpop.f32.mrf.mxu0
      %v7442 = vadd.f32 %v7345, %v7441
      %v7443 = vpop.f32.mrf.mxu0
      %v7444 = vpop.f32.mrf.mxu0
      %v7445 = vadd.f32 %v7348, %v7444
      %v7446 = vpop.f32.mrf.mxu0
      %7447 = vmatprep.mubr.bf16.mxu0 0
      %7448 = vmatmul.mubr.bf16.gmra.mxu0 %v7075
      %v7449 = vpop.f32.mrf.mxu0
      %v7450 = vadd.f32 %v7353, %v7449
      %v7451 = vpop.f32.mrf.mxu0
      %v7452 = vpop.f32.mrf.mxu0
      %v7453 = vadd.f32 %v7356, %v7452
      %v7454 = vpop.f32.mrf.mxu0
      %7455 = vmatprep.mubr.bf16.mxu0 0
      %7456 = vmatmul.mubr.bf16.gmra.mxu0 %v7078
      %v7457 = vpop.f32.mrf.mxu0
      %v7458 = vadd.f32 %v7361, %v7457
      %v7459 = vpop.f32.mrf.mxu0
      %v7460 = vpop.f32.mrf.mxu0
      %v7461 = vadd.f32 %v7364, %v7460
      %v7462 = vpop.f32.mrf.mxu0
      %7463 = vmatprep.mubr.bf16.mxu0 0
      %7464 = vmatmul.mubr.bf16.gmra.mxu0 %v7081
      %v7465 = vpop.f32.mrf.mxu0
      %v7466 = vadd.f32 %v7369, %v7465
      %v7467 = vpop.f32.mrf.mxu0
      %v7468 = vpop.f32.mrf.mxu0
      %v7469 = vadd.f32 %v7372, %v7468
      %v7470 = vpop.f32.mrf.mxu0
      %7471 = vmatprep.mubr.bf16.mxu0 0
      %7472 = vmatmul.mubr.bf16.gmra.mxu0 %v7084
      %v7473 = vpop.f32.mrf.mxu0
      %v7474 = vadd.f32 %v7377, %v7473
      %v7475 = vpop.f32.mrf.mxu0
      %v7476 = vpop.f32.mrf.mxu0
      %v7477 = vadd.f32 %v7380, %v7476
      %v7478 = vpop.f32.mrf.mxu0
      %7479 = vdwg.mxu0
      %v7528 = vunpack.c.l.b16 %v6813
      %v7529 = vunpack.c.l.b16 %v6814
      %v7530 = vunpack.c.l.b16 %v6815
      %v7531 = vunpack.c.l.b16 %v6816
      %v7532 = vunpack.c.l.b16 %v6817
      %v7533 = vunpack.c.l.b16 %v6818
      %v7534 = vunpack.c.l.b16 %v6819
      %v7535 = vunpack.c.l.b16 %v6820
      %v7536 = vunpack.c.l.b16 %v6821
      %v7537 = vunpack.c.l.b16 %v6822
      %v7538 = vunpack.c.l.b16 %v6823
      %v7539 = vunpack.c.l.b16 %v6824
      %v7540 = vunpack.c.l.b16 %v6825
      %v7541 = vunpack.c.l.b16 %v6826
      %v7542 = vunpack.c.l.b16 %v6827
      %v7543 = vunpack.c.l.b16 %v6828
      %v7544 = vunpack.c.l.b16 %v6829
      %v7545 = vunpack.c.l.b16 %v6830
      %v7546 = vunpack.c.l.b16 %v6831
      %v7547 = vunpack.c.l.b16 %v6832
      %v7548 = vunpack.c.l.b16 %v6833
      %v7549 = vunpack.c.l.b16 %v6834
      %v7550 = vunpack.c.l.b16 %v6835
      %v7551 = vunpack.c.l.b16 %v6836
      %v7552 = vunpack.c.l.b16 %v6837
      %v7553 = vunpack.c.l.b16 %v6838
      %v7554 = vunpack.c.l.b16 %v6839
      %v7555 = vunpack.c.l.b16 %v6840
      %v7556 = vunpack.c.l.b16 %v6841
      %v7557 = vunpack.c.l.b16 %v6842
      %v7558 = vunpack.c.l.b16 %v6843
      %v7559 = vunpack.c.l.b16 %v6844
      %v7560 = vunpack.c.l.b16 %v6845
      %v7561 = vunpack.c.l.b16 %v6846
      %v7562 = vunpack.c.l.b16 %v6847
      %v7563 = vunpack.c.l.b16 %v6848
      %v7564 = vunpack.c.l.b16 %v6849
      %v7565 = vunpack.c.l.b16 %v6850
      %v7566 = vunpack.c.l.b16 %v6851
      %v7567 = vunpack.c.l.b16 %v6852
      %v7568 = vunpack.c.l.b16 %v6853
      %v7569 = vunpack.c.l.b16 %v6854
      %v7570 = vunpack.c.l.b16 %v6855
      %v7571 = vunpack.c.l.b16 %v6856
      %v7572 = vunpack.c.l.b16 %v6857
      %v7573 = vunpack.c.l.b16 %v6858
      %v7574 = vunpack.c.l.b16 %v6859
      %v7575 = vunpack.c.l.b16 %v6860
      %v7576 = vpack.c.b16 %v7529, %v7528
      %v7577 = vpack.c.b16 %v7531, %v7530
      %v7578 = vpack.c.b16 %v7533, %v7532
      %v7579 = vpack.c.b16 %v7535, %v7534
      %v7580 = vpack.c.b16 %v7537, %v7536
      %v7581 = vpack.c.b16 %v7539, %v7538
      %v7582 = vpack.c.b16 %v7541, %v7540
      %v7583 = vpack.c.b16 %v7543, %v7542
      %v7584 = vpack.c.b16 %v7545, %v7544
      %v7585 = vpack.c.b16 %v7547, %v7546
      %v7586 = vpack.c.b16 %v7549, %v7548
      %v7587 = vpack.c.b16 %v7551, %v7550
      %v7588 = vpack.c.b16 %v7553, %v7552
      %v7589 = vpack.c.b16 %v7555, %v7554
      %v7590 = vpack.c.b16 %v7557, %v7556
      %v7591 = vpack.c.b16 %v7559, %v7558
      %v7592 = vpack.c.b16 %v7561, %v7560
      %v7593 = vpack.c.b16 %v7563, %v7562
      %v7594 = vpack.c.b16 %v7565, %v7564
      %v7595 = vpack.c.b16 %v7567, %v7566
      %v7596 = vpack.c.b16 %v7569, %v7568
      %v7597 = vpack.c.b16 %v7571, %v7570
      %v7598 = vpack.c.b16 %v7573, %v7572
      %v7599 = vpack.c.b16 %v7575, %v7574
      %7624 = vmatprep.subr.bf16.mxu0 0
      %7625 = vmatpush1.bf16.msra.mxu0 %v7583
      %7626 = vmatprep.subr.bf16.mxu0 0
      %7627 = vmatpush1.bf16.msra.mxu0 %v7582
      %7628 = vmatprep.subr.bf16.mxu0 0
      %7629 = vmatpush1.bf16.msra.mxu0 %v7581
      %7630 = vmatprep.subr.bf16.mxu0 0
      %7631 = vmatpush1.bf16.msra.mxu0 %v7580
      %7632 = vmatprep.subr.bf16.mxu0 0
      %7633 = vmatpush1.bf16.msra.mxu0 %v7579
      %7634 = vmatprep.subr.bf16.mxu0 0
      %7635 = vmatpush1.bf16.msra.mxu0 %v7578
      %7636 = vmatprep.subr.bf16.mxu0 0
      %7637 = vmatpush1.bf16.msra.mxu0 %v7577
      %7638 = vmatprep.subr.bf16.mxu0 0
      %7639 = vmatpush1.bf16.msra.mxu0 %v7576
      %7640 = vmatprep.subr.bf16.mxu0 0
      %7641 = vmatpush2.bf16.msra.mxu0 %v7591
      %7642 = vmatprep.subr.bf16.mxu0 0
      %7643 = vmatpush2.bf16.msra.mxu0 %v7590
      %7644 = vmatprep.subr.bf16.mxu0 0
      %7645 = vmatpush2.bf16.msra.mxu0 %v7589
      %7646 = vmatprep.subr.bf16.mxu0 0
      %7647 = vmatpush2.bf16.msra.mxu0 %v7588
      %7648 = vmatprep.subr.bf16.mxu0 0
      %7649 = vmatpush2.bf16.msra.mxu0 %v7587
      %7650 = vmatprep.subr.bf16.mxu0 0
      %7651 = vmatpush2.bf16.msra.mxu0 %v7586
      %7652 = vmatprep.subr.bf16.mxu0 0
      %7653 = vmatpush2.bf16.msra.mxu0 %v7585
      %7654 = vmatprep.subr.bf16.mxu0 0
      %7655 = vmatpush2.bf16.msra.mxu0 %v7584
      %7656 = vmatprep.mubr.bf16.mxu0 %v6688
      %7657 = vmatmul.mubr.bf16.gmra.mxu0 %v6637
      %v7658 = vpop.f32.mrf.mxu0
      %v7659 = vadd.f32 %v7418, %v7658
      %v7660 = vpop.f32.mrf.mxu0
      %v7661 = vpop.f32.mrf.mxu0
      %v7662 = vadd.f32 %v7421, %v7661
      %v7663 = vpop.f32.mrf.mxu0
      %7664 = vmatprep.mubr.bf16.mxu0 %v6700
      %7665 = vmatmul.mubr.bf16.gmra.mxu0 %v6638
      %v7666 = vpop.f32.mrf.mxu0
      %v7667 = vadd.f32 %v7426, %v7666
      %v7668 = vpop.f32.mrf.mxu0
      %v7669 = vpop.f32.mrf.mxu0
      %v7670 = vadd.f32 %v7429, %v7669
      %v7671 = vpop.f32.mrf.mxu0
      %7672 = vmatprep.mubr.bf16.mxu0 %v6712
      %7673 = vmatmul.mubr.bf16.gmra.mxu0 %v6639
      %v7674 = vpop.f32.mrf.mxu0
      %v7675 = vadd.f32 %v7434, %v7674
      %v7676 = vpop.f32.mrf.mxu0
      %v7677 = vpop.f32.mrf.mxu0
      %v7678 = vadd.f32 %v7437, %v7677
      %v7679 = vpop.f32.mrf.mxu0
      %7680 = vmatprep.mubr.bf16.mxu0 %v6724
      %7681 = vmatmul.mubr.bf16.gmra.mxu0 %v6640
      %v7682 = vpop.f32.mrf.mxu0
      %v7683 = vadd.f32 %v7442, %v7682
      %v7684 = vpop.f32.mrf.mxu0
      %v7685 = vpop.f32.mrf.mxu0
      %v7686 = vadd.f32 %v7445, %v7685
      %v7687 = vpop.f32.mrf.mxu0
      %7688 = vmatprep.mubr.bf16.mxu0 %v6736
      %7689 = vmatmul.mubr.bf16.gmra.mxu0 %v6641
      %v7690 = vpop.f32.mrf.mxu0
      %v7691 = vadd.f32 %v7450, %v7690
      %v7692 = vpop.f32.mrf.mxu0
      %v7693 = vpop.f32.mrf.mxu0
      %v7694 = vadd.f32 %v7453, %v7693
      %v7695 = vpop.f32.mrf.mxu0
      %7696 = vmatprep.mubr.bf16.mxu0 %v6748
      %7697 = vmatmul.mubr.bf16.gmra.mxu0 %v6642
      %v7698 = vpop.f32.mrf.mxu0
      %v7699 = vadd.f32 %v7458, %v7698
      %v7700 = vpop.f32.mrf.mxu0
      %v7701 = vpop.f32.mrf.mxu0
      %v7702 = vadd.f32 %v7461, %v7701
      %v7703 = vpop.f32.mrf.mxu0
      %7704 = vmatprep.mubr.bf16.mxu0 %v6760
      %7705 = vmatmul.mubr.bf16.gmra.mxu0 %v6643
      %v7706 = vpop.f32.mrf.mxu0
      %v7707 = vadd.f32 %v7466, %v7706
      %v7708 = vpop.f32.mrf.mxu0
      %v7709 = vpop.f32.mrf.mxu0
      %v7710 = vadd.f32 %v7469, %v7709
      %v7711 = vpop.f32.mrf.mxu0
      %7712 = vmatprep.mubr.bf16.mxu0 %v6772
      %7713 = vmatmul.mubr.bf16.gmra.mxu0 %v6644
      %v7714 = vpop.f32.mrf.mxu0
      %v7715 = vadd.f32 %v7474, %v7714
      %v7716 = vpop.f32.mrf.mxu0
      %v7717 = vpop.f32.mrf.mxu0
      %v7718 = vadd.f32 %v7477, %v7717
      %v7719 = vpop.f32.mrf.mxu0
      %7720 = vdwg.mxu0
      %7721 = vmatprep.subr.bf16.mxu0 0
      %7722 = vmatpush1.bf16.msra.mxu0 %v7599
      %7723 = vmatprep.subr.bf16.mxu0 0
      %7724 = vmatpush1.bf16.msra.mxu0 %v7598
      %7725 = vmatprep.subr.bf16.mxu0 0
      %7726 = vmatpush1.bf16.msra.mxu0 %v7597
      %7727 = vmatprep.subr.bf16.mxu0 0
      %7728 = vmatpush1.bf16.msra.mxu0 %v7596
      %7729 = vmatprep.subr.bf16.mxu0 0
      %7730 = vmatpush1.bf16.msra.mxu0 %v7595
      %7731 = vmatprep.subr.bf16.mxu0 0
      %7732 = vmatpush1.bf16.msra.mxu0 %v7594
      %7733 = vmatprep.subr.bf16.mxu0 0
      %7734 = vmatpush1.bf16.msra.mxu0 %v7593
      %7735 = vmatprep.subr.bf16.mxu0 0
      %7736 = vmatpush1.bf16.msra.mxu0 %v7592
      %7737 = vmatprep.subr.bf16.mxu0 0
      %7738 = vmatpush2.bf16.msra.mxu0 0
      %7739 = vmatprep.subr.bf16.mxu0 0
      %7740 = vmatpush2.bf16.msra.mxu0 0
      %7741 = vmatprep.subr.bf16.mxu0 0
      %7742 = vmatpush2.bf16.msra.mxu0 0
      %7743 = vmatprep.subr.bf16.mxu0 0
      %7744 = vmatpush2.bf16.msra.mxu0 0
      %7745 = vmatprep.subr.bf16.mxu0 0
      %7746 = vmatpush2.bf16.msra.mxu0 0
      %7747 = vmatprep.subr.bf16.mxu0 0
      %7748 = vmatpush2.bf16.msra.mxu0 0
      %7749 = vmatprep.subr.bf16.mxu0 0
      %7750 = vmatpush2.bf16.msra.mxu0 0
      %7751 = vmatprep.subr.bf16.mxu0 0
      %7752 = vmatpush2.bf16.msra.mxu0 0
      %7753 = vmatprep.mubr.bf16.mxu0 0
      %7754 = vmatmul.mubr.bf16.gmra.mxu0 %v6783
      %v7755 = vpop.f32.mrf.mxu0
      %v7756 = vadd.f32 %v7659, %v7755
      %v7757 = vpop.f32.mrf.mxu0
      %v7758 = vpop.f32.mrf.mxu0
      %v7759 = vadd.f32 %v7662, %v7758
      %v7760 = vpop.f32.mrf.mxu0
      %7761 = vmatprep.mubr.bf16.mxu0 0
      %7762 = vmatmul.mubr.bf16.gmra.mxu0 %v6786
      %v7763 = vpop.f32.mrf.mxu0
      %v7764 = vadd.f32 %v7667, %v7763
      %v7765 = vpop.f32.mrf.mxu0
      %v7766 = vpop.f32.mrf.mxu0
      %v7767 = vadd.f32 %v7670, %v7766
      %v7768 = vpop.f32.mrf.mxu0
      %7769 = vmatprep.mubr.bf16.mxu0 0
      %7770 = vmatmul.mubr.bf16.gmra.mxu0 %v6789
      %v7771 = vpop.f32.mrf.mxu0
      %v7772 = vadd.f32 %v7675, %v7771
      %v7773 = vpop.f32.mrf.mxu0
      %v7774 = vpop.f32.mrf.mxu0
      %v7775 = vadd.f32 %v7678, %v7774
      %v7776 = vpop.f32.mrf.mxu0
      %7777 = vmatprep.mubr.bf16.mxu0 0
      %7778 = vmatmul.mubr.bf16.gmra.mxu0 %v6792
      %v7779 = vpop.f32.mrf.mxu0
      %v7780 = vadd.f32 %v7683, %v7779
      %v7781 = vpop.f32.mrf.mxu0
      %v7782 = vpop.f32.mrf.mxu0
      %v7783 = vadd.f32 %v7686, %v7782
      %v7784 = vpop.f32.mrf.mxu0
      %7785 = vmatprep.mubr.bf16.mxu0 0
      %7786 = vmatmul.mubr.bf16.gmra.mxu0 %v6795
      %v7787 = vpop.f32.mrf.mxu0
      %v7788 = vadd.f32 %v7691, %v7787
      %v7789 = vpop.f32.mrf.mxu0
      %v7790 = vpop.f32.mrf.mxu0
      %v7791 = vadd.f32 %v7694, %v7790
      %v7792 = vpop.f32.mrf.mxu0
      %7793 = vmatprep.mubr.bf16.mxu0 0
      %7794 = vmatmul.mubr.bf16.gmra.mxu0 %v6798
      %v7795 = vpop.f32.mrf.mxu0
      %v7796 = vadd.f32 %v7699, %v7795
      %v7797 = vpop.f32.mrf.mxu0
      %v7798 = vpop.f32.mrf.mxu0
      %v7799 = vadd.f32 %v7702, %v7798
      %v7800 = vpop.f32.mrf.mxu0
      %7801 = vmatprep.mubr.bf16.mxu0 0
      %7802 = vmatmul.mubr.bf16.gmra.mxu0 %v6801
      %v7803 = vpop.f32.mrf.mxu0
      %v7804 = vadd.f32 %v7707, %v7803
      %v7805 = vpop.f32.mrf.mxu0
      %v7806 = vpop.f32.mrf.mxu0
      %v7807 = vadd.f32 %v7710, %v7806
      %v7808 = vpop.f32.mrf.mxu0
      %7809 = vmatprep.mubr.bf16.mxu0 0
      %7810 = vmatmul.mubr.bf16.gmra.mxu0 %v6804
      %v7811 = vpop.f32.mrf.mxu0
      %v7812 = vadd.f32 %v7715, %v7811
      %v7813 = vpop.f32.mrf.mxu0
      %v7814 = vpop.f32.mrf.mxu0
      %v7815 = vadd.f32 %v7718, %v7814
      %v7816 = vpop.f32.mrf.mxu0
      %7817 = vdwg.mxu0
      %s7818 = scalar_lea.vmem [#allocation2], 48
      %v7819 = vld [vmem:[%s7818] sm:$0xf]
      %v7820 = vld [vmem:[%s7818 + $0x4] sm:$0xf]
      %v7821 = vld [vmem:[%s7818 + $0x8] sm:$0x1]
      %v7822 = vld [vmem:[%s7818 + $0xc] sm:$0xf]
      %v7823 = vld [vmem:[%s7818 + $0x10] sm:$0xf]
      %v7824 = vld [vmem:[%s7818 + $0x14] sm:$0x1]
      %v7825 = vld [vmem:[%s7818 + $0x18] sm:$0xf]
      %v7826 = vld [vmem:[%s7818 + $0x1c] sm:$0xf]
      %v7827 = vld [vmem:[%s7818 + $0x20] sm:$0x1]
      %v7828 = vld [vmem:[%s7818 + $0x24] sm:$0xf]
      %v7829 = vld [vmem:[%s7818 + $0x28] sm:$0xf]
      %v7830 = vld [vmem:[%s7818 + $0x2c] sm:$0x1]
      %v7831 = vld [vmem:[%s7818 + $0x30] sm:$0xf]
      %v7832 = vld [vmem:[%s7818 + $0x34] sm:$0xf]
      %v7833 = vld [vmem:[%s7818 + $0x38] sm:$0x1]
      %v7834 = vld [vmem:[%s7818 + $0x3c] sm:$0xf]
      %v7835 = vld [vmem:[%s7818 + $0x40] sm:$0xf]
      %v7836 = vld [vmem:[%s7818 + $0x44] sm:$0x1]
      %v7837 = vld [vmem:[%s7818 + $0x48] sm:$0xf]
      %v7838 = vld [vmem:[%s7818 + $0x4c] sm:$0xf]
      %v7839 = vld [vmem:[%s7818 + $0x50] sm:$0x1]
      %v7840 = vld [vmem:[%s7818 + $0x54] sm:$0xf]
      %v7841 = vld [vmem:[%s7818 + $0x58] sm:$0xf]
      %v7842 = vld [vmem:[%s7818 + $0x5c] sm:$0x1]
      %v7859 = vunpack.c.l.b16 %v7819
      %v7860 = vunpack.c.l.b16 %v7820
      %v7861 = vunpack.c.l.b16 %v7822
      %v7862 = vunpack.c.l.b16 %v7823
      %v7863 = vunpack.c.l.b16 %v7825
      %v7864 = vunpack.c.l.b16 %v7826
      %v7865 = vunpack.c.l.b16 %v7828
      %v7866 = vunpack.c.l.b16 %v7829
      %v7867 = vunpack.c.l.b16 %v7831
      %v7868 = vunpack.c.l.b16 %v7832
      %v7869 = vunpack.c.l.b16 %v7834
      %v7870 = vunpack.c.l.b16 %v7835
      %v7871 = vunpack.c.l.b16 %v7837
      %v7872 = vunpack.c.l.b16 %v7838
      %v7873 = vunpack.c.l.b16 %v7840
      %v7874 = vunpack.c.l.b16 %v7841
      %v7875 = vpack.c.b16 %v7860, %v7859
      %v7876 = vpack.c.b16 %v7862, %v7861
      %v7877 = vpack.c.b16 %v7864, %v7863
      %v7878 = vpack.c.b16 %v7866, %v7865
      %v7879 = vpack.c.b16 %v7868, %v7867
      %v7880 = vpack.c.b16 %v7870, %v7869
      %v7881 = vpack.c.b16 %v7872, %v7871
      %v7882 = vpack.c.b16 %v7874, %v7873
      %v7899 = vunpack.c.l.b16 %v7821
      %v7900 = vunpack.c.l.b16 %v7824
      %v7901 = vunpack.c.l.b16 %v7827
      %v7902 = vunpack.c.l.b16 %v7830
      %v7903 = vunpack.c.l.b16 %v7833
      %v7904 = vunpack.c.l.b16 %v7836
      %v7905 = vunpack.c.l.b16 %v7839
      %v7906 = vunpack.c.l.b16 %v7842
      %v7907 = vpack.c.b16 %v7899, %v7899
      %v7908 = vpack.c.b16 %v7900, %v7900
      %v7909 = vpack.c.b16 %v7901, %v7901
      %v7910 = vpack.c.b16 %v7902, %v7902
      %v7911 = vpack.c.b16 %v7903, %v7903
      %v7912 = vpack.c.b16 %v7904, %v7904
      %v7913 = vpack.c.b16 %v7905, %v7905
      %v7914 = vpack.c.b16 %v7906, %v7906
      %v7916 = vshrl.u32 %v7875, 16
      %v7918 = vshll.u32 %v7875, 16
      %v7920 = vrot.slane %v7918, 1
      %v7921 = vor.u32 %v7916, %v7920
      %v7923 = vshll.u32 %v7907, 16
      %v7925 = vrot.slane %v7923, 1
      %v7926 = vsel %vm1008, %v7921, %v7925
      %v7928 = vshrl.u32 %v7876, 16
      %v7930 = vshll.u32 %v7876, 16
      %v7932 = vrot.slane %v7930, 1
      %v7933 = vor.u32 %v7928, %v7932
      %v7935 = vshll.u32 %v7908, 16
      %v7937 = vrot.slane %v7935, 1
      %v7938 = vsel %vm1008, %v7933, %v7937
      %v7940 = vshrl.u32 %v7877, 16
      %v7942 = vshll.u32 %v7877, 16
      %v7944 = vrot.slane %v7942, 1
      %v7945 = vor.u32 %v7940, %v7944
      %v7947 = vshll.u32 %v7909, 16
      %v7949 = vrot.slane %v7947, 1
      %v7950 = vsel %vm1008, %v7945, %v7949
      %v7952 = vshrl.u32 %v7878, 16
      %v7954 = vshll.u32 %v7878, 16
      %v7956 = vrot.slane %v7954, 1
      %v7957 = vor.u32 %v7952, %v7956
      %v7959 = vshll.u32 %v7910, 16
      %v7961 = vrot.slane %v7959, 1
      %v7962 = vsel %vm1008, %v7957, %v7961
      %v7964 = vshrl.u32 %v7879, 16
      %v7966 = vshll.u32 %v7879, 16
      %v7968 = vrot.slane %v7966, 1
      %v7969 = vor.u32 %v7964, %v7968
      %v7971 = vshll.u32 %v7911, 16
      %v7973 = vrot.slane %v7971, 1
      %v7974 = vsel %vm1008, %v7969, %v7973
      %v7976 = vshrl.u32 %v7880, 16
      %v7978 = vshll.u32 %v7880, 16
      %v7980 = vrot.slane %v7978, 1
      %v7981 = vor.u32 %v7976, %v7980
      %v7983 = vshll.u32 %v7912, 16
      %v7985 = vrot.slane %v7983, 1
      %v7986 = vsel %vm1008, %v7981, %v7985
      %v7988 = vshrl.u32 %v7881, 16
      %v7990 = vshll.u32 %v7881, 16
      %v7992 = vrot.slane %v7990, 1
      %v7993 = vor.u32 %v7988, %v7992
      %v7995 = vshll.u32 %v7913, 16
      %v7997 = vrot.slane %v7995, 1
      %v7998 = vsel %vm1008, %v7993, %v7997
      %v8000 = vshrl.u32 %v7882, 16
      %v8002 = vshll.u32 %v7882, 16
      %v8004 = vrot.slane %v8002, 1
      %v8005 = vor.u32 %v8000, %v8004
      %v8007 = vshll.u32 %v7914, 16
      %v8009 = vrot.slane %v8007, 1
      %v8010 = vsel %vm1008, %v8005, %v8009
      %v8019 = vrot.slane %v7875, 1
      %v8020 = vrot.slane %v7907, 1
      %v8021 = vsel %vm1165, %v8019, %v8020
      %v8022 = vrot.slane %v7876, 1
      %v8023 = vrot.slane %v7908, 1
      %v8024 = vsel %vm1165, %v8022, %v8023
      %v8025 = vrot.slane %v7877, 1
      %v8026 = vrot.slane %v7909, 1
      %v8027 = vsel %vm1165, %v8025, %v8026
      %v8028 = vrot.slane %v7878, 1
      %v8029 = vrot.slane %v7910, 1
      %v8030 = vsel %vm1165, %v8028, %v8029
      %v8031 = vrot.slane %v7879, 1
      %v8032 = vrot.slane %v7911, 1
      %v8033 = vsel %vm1165, %v8031, %v8032
      %v8034 = vrot.slane %v7880, 1
      %v8035 = vrot.slane %v7912, 1
      %v8036 = vsel %vm1165, %v8034, %v8035
      %v8037 = vrot.slane %v7881, 1
      %v8038 = vrot.slane %v7913, 1
      %v8039 = vsel %vm1165, %v8037, %v8038
      %v8040 = vrot.slane %v7882, 1
      %v8041 = vrot.slane %v7914, 1
      %v8042 = vsel %vm1165, %v8040, %v8041
      %s8051 = scalar_lea.vmem %s5, 384
      %v8052 = vld [vmem:[%s8051] sm:$0xf]
      %v8053 = vld [vmem:[%s8051 + $0x4] sm:$0xf]
      %v8054 = vld [vmem:[%s8051 + $0x8] sm:$0xf]
      %v8055 = vld [vmem:[%s8051 + $0xc] sm:$0xf]
      %v8056 = vld [vmem:[%s8051 + $0x10] sm:$0xf]
      %v8057 = vld [vmem:[%s8051 + $0x14] sm:$0xf]
      %v8058 = vld [vmem:[%s8051 + $0x18] sm:$0xf]
      %v8059 = vld [vmem:[%s8051 + $0x1c] sm:$0xf]
      %v8060 = vld [vmem:[%s8051 + $0x20] sm:$0xf]
      %v8061 = vld [vmem:[%s8051 + $0x24] sm:$0xf]
      %v8062 = vld [vmem:[%s8051 + $0x28] sm:$0xf]
      %v8063 = vld [vmem:[%s8051 + $0x2c] sm:$0xf]
      %v8064 = vld [vmem:[%s8051 + $0x30] sm:$0xf]
      %v8065 = vld [vmem:[%s8051 + $0x34] sm:$0xf]
      %v8066 = vld [vmem:[%s8051 + $0x38] sm:$0xf]
      %v8067 = vld [vmem:[%s8051 + $0x3c] sm:$0xf]
      %v8068 = vld [vmem:[%s8051 + $0x40] sm:$0xf]
      %v8069 = vld [vmem:[%s8051 + $0x44] sm:$0xf]
      %v8070 = vld [vmem:[%s8051 + $0x48] sm:$0xf]
      %v8071 = vld [vmem:[%s8051 + $0x4c] sm:$0xf]
      %v8072 = vld [vmem:[%s8051 + $0x50] sm:$0xf]
      %v8073 = vld [vmem:[%s8051 + $0x54] sm:$0xf]
      %v8074 = vld [vmem:[%s8051 + $0x58] sm:$0xf]
      %v8075 = vld [vmem:[%s8051 + $0x5c] sm:$0xf]
      %v8076 = vld [vmem:[%s8051 + $0x60] sm:$0xf]
      %v8077 = vld [vmem:[%s8051 + $0x64] sm:$0xf]
      %v8078 = vld [vmem:[%s8051 + $0x68] sm:$0xf]
      %v8079 = vld [vmem:[%s8051 + $0x6c] sm:$0xf]
      %v8080 = vld [vmem:[%s8051 + $0x70] sm:$0xf]
      %v8081 = vld [vmem:[%s8051 + $0x74] sm:$0xf]
      %v8082 = vld [vmem:[%s8051 + $0x78] sm:$0xf]
      %v8083 = vld [vmem:[%s8051 + $0x7c] sm:$0xf]
      %v8084 = vld [vmem:[%s8051 + $0x80] sm:$0xf]
      %v8085 = vld [vmem:[%s8051 + $0x84] sm:$0xf]
      %v8086 = vld [vmem:[%s8051 + $0x88] sm:$0xf]
      %v8087 = vld [vmem:[%s8051 + $0x8c] sm:$0xf]
      %v8088 = vld [vmem:[%s8051 + $0x90] sm:$0xf]
      %v8089 = vld [vmem:[%s8051 + $0x94] sm:$0xf]
      %v8090 = vld [vmem:[%s8051 + $0x98] sm:$0xf]
      %v8091 = vld [vmem:[%s8051 + $0x9c] sm:$0xf]
      %v8092 = vld [vmem:[%s8051 + $0xa0] sm:$0xf]
      %v8093 = vld [vmem:[%s8051 + $0xa4] sm:$0xf]
      %v8094 = vld [vmem:[%s8051 + $0xa8] sm:$0xf]
      %v8095 = vld [vmem:[%s8051 + $0xac] sm:$0xf]
      %v8096 = vld [vmem:[%s8051 + $0xb0] sm:$0xf]
      %v8097 = vld [vmem:[%s8051 + $0xb4] sm:$0xf]
      %v8098 = vld [vmem:[%s8051 + $0xb8] sm:$0xf]
      %v8099 = vld [vmem:[%s8051 + $0xbc] sm:$0xf]
      %v8148 = vunpack.c.l.b16 %v8052
      %v8149 = vunpack.c.l.b16 %v8053
      %v8150 = vunpack.c.l.b16 %v8054
      %v8151 = vunpack.c.l.b16 %v8055
      %v8152 = vunpack.c.l.b16 %v8056
      %v8153 = vunpack.c.l.b16 %v8057
      %v8154 = vunpack.c.l.b16 %v8058
      %v8155 = vunpack.c.l.b16 %v8059
      %v8156 = vunpack.c.l.b16 %v8060
      %v8157 = vunpack.c.l.b16 %v8061
      %v8158 = vunpack.c.l.b16 %v8062
      %v8159 = vunpack.c.l.b16 %v8063
      %v8160 = vunpack.c.l.b16 %v8064
      %v8161 = vunpack.c.l.b16 %v8065
      %v8162 = vunpack.c.l.b16 %v8066
      %v8163 = vunpack.c.l.b16 %v8067
      %v8164 = vunpack.c.l.b16 %v8068
      %v8165 = vunpack.c.l.b16 %v8069
      %v8166 = vunpack.c.l.b16 %v8070
      %v8167 = vunpack.c.l.b16 %v8071
      %v8168 = vunpack.c.l.b16 %v8072
      %v8169 = vunpack.c.l.b16 %v8073
      %v8170 = vunpack.c.l.b16 %v8074
      %v8171 = vunpack.c.l.b16 %v8075
      %v8172 = vunpack.c.l.b16 %v8076
      %v8173 = vunpack.c.l.b16 %v8077
      %v8174 = vunpack.c.l.b16 %v8078
      %v8175 = vunpack.c.l.b16 %v8079
      %v8176 = vunpack.c.l.b16 %v8080
      %v8177 = vunpack.c.l.b16 %v8081
      %v8178 = vunpack.c.l.b16 %v8082
      %v8179 = vunpack.c.l.b16 %v8083
      %v8180 = vunpack.c.l.b16 %v8084
      %v8181 = vunpack.c.l.b16 %v8085
      %v8182 = vunpack.c.l.b16 %v8086
      %v8183 = vunpack.c.l.b16 %v8087
      %v8184 = vunpack.c.l.b16 %v8088
      %v8185 = vunpack.c.l.b16 %v8089
      %v8186 = vunpack.c.l.b16 %v8090
      %v8187 = vunpack.c.l.b16 %v8091
      %v8188 = vunpack.c.l.b16 %v8092
      %v8189 = vunpack.c.l.b16 %v8093
      %v8190 = vunpack.c.l.b16 %v8094
      %v8191 = vunpack.c.l.b16 %v8095
      %v8192 = vunpack.c.l.b16 %v8096
      %v8193 = vunpack.c.l.b16 %v8097
      %v8194 = vunpack.c.l.b16 %v8098
      %v8195 = vunpack.c.l.b16 %v8099
      %v8196 = vpack.c.b16 %v8149, %v8148
      %v8197 = vpack.c.b16 %v8151, %v8150
      %v8198 = vpack.c.b16 %v8153, %v8152
      %v8199 = vpack.c.b16 %v8155, %v8154
      %v8200 = vpack.c.b16 %v8157, %v8156
      %v8201 = vpack.c.b16 %v8159, %v8158
      %v8202 = vpack.c.b16 %v8161, %v8160
      %v8203 = vpack.c.b16 %v8163, %v8162
      %v8204 = vpack.c.b16 %v8165, %v8164
      %v8205 = vpack.c.b16 %v8167, %v8166
      %v8206 = vpack.c.b16 %v8169, %v8168
      %v8207 = vpack.c.b16 %v8171, %v8170
      %v8208 = vpack.c.b16 %v8173, %v8172
      %v8209 = vpack.c.b16 %v8175, %v8174
      %v8210 = vpack.c.b16 %v8177, %v8176
      %v8211 = vpack.c.b16 %v8179, %v8178
      %v8212 = vpack.c.b16 %v8181, %v8180
      %v8213 = vpack.c.b16 %v8183, %v8182
      %v8214 = vpack.c.b16 %v8185, %v8184
      %v8215 = vpack.c.b16 %v8187, %v8186
      %v8216 = vpack.c.b16 %v8189, %v8188
      %v8217 = vpack.c.b16 %v8191, %v8190
      %v8218 = vpack.c.b16 %v8193, %v8192
      %v8219 = vpack.c.b16 %v8195, %v8194
      %8244 = vmatprep.subr.bf16.mxu0 0
      %8245 = vmatpush1.bf16.msra.mxu0 %v8203
      %8246 = vmatprep.subr.bf16.mxu0 0
      %8247 = vmatpush1.bf16.msra.mxu0 %v8202
      %8248 = vmatprep.subr.bf16.mxu0 0
      %8249 = vmatpush1.bf16.msra.mxu0 %v8201
      %8250 = vmatprep.subr.bf16.mxu0 0
      %8251 = vmatpush1.bf16.msra.mxu0 %v8200
      %8252 = vmatprep.subr.bf16.mxu0 0
      %8253 = vmatpush1.bf16.msra.mxu0 %v8199
      %8254 = vmatprep.subr.bf16.mxu0 0
      %8255 = vmatpush1.bf16.msra.mxu0 %v8198
      %8256 = vmatprep.subr.bf16.mxu0 0
      %8257 = vmatpush1.bf16.msra.mxu0 %v8197
      %8258 = vmatprep.subr.bf16.mxu0 0
      %8259 = vmatpush1.bf16.msra.mxu0 %v8196
      %8260 = vmatprep.subr.bf16.mxu0 0
      %8261 = vmatpush2.bf16.msra.mxu0 %v8211
      %8262 = vmatprep.subr.bf16.mxu0 0
      %8263 = vmatpush2.bf16.msra.mxu0 %v8210
      %8264 = vmatprep.subr.bf16.mxu0 0
      %8265 = vmatpush2.bf16.msra.mxu0 %v8209
      %8266 = vmatprep.subr.bf16.mxu0 0
      %8267 = vmatpush2.bf16.msra.mxu0 %v8208
      %8268 = vmatprep.subr.bf16.mxu0 0
      %8269 = vmatpush2.bf16.msra.mxu0 %v8207
      %8270 = vmatprep.subr.bf16.mxu0 0
      %8271 = vmatpush2.bf16.msra.mxu0 %v8206
      %8272 = vmatprep.subr.bf16.mxu0 0
      %8273 = vmatpush2.bf16.msra.mxu0 %v8205
      %8274 = vmatprep.subr.bf16.mxu0 0
      %8275 = vmatpush2.bf16.msra.mxu0 %v8204
      %8276 = vmatprep.mubr.bf16.mxu0 %v7926
      %8277 = vmatmul.mubr.bf16.gmra.mxu0 %v7875
      %v8278 = vpop.f32.mrf.mxu0
      %v8279 = vadd.f32 0.0, %v8278
      %v8280 = vpop.f32.mrf.mxu0
      %v8281 = vpop.f32.mrf.mxu0
      %v8282 = vadd.f32 0.0, %v8281
      %v8283 = vpop.f32.mrf.mxu0
      %8284 = vmatprep.mubr.bf16.mxu0 %v7938
      %8285 = vmatmul.mubr.bf16.gmra.mxu0 %v7876
      %v8286 = vpop.f32.mrf.mxu0
      %v8287 = vadd.f32 0.0, %v8286
      %v8288 = vpop.f32.mrf.mxu0
      %v8289 = vpop.f32.mrf.mxu0
      %v8290 = vadd.f32 0.0, %v8289
      %v8291 = vpop.f32.mrf.mxu0
      %8292 = vmatprep.mubr.bf16.mxu0 %v7950
      %8293 = vmatmul.mubr.bf16.gmra.mxu0 %v7877
      %v8294 = vpop.f32.mrf.mxu0
      %v8295 = vadd.f32 0.0, %v8294
      %v8296 = vpop.f32.mrf.mxu0
      %v8297 = vpop.f32.mrf.mxu0
      %v8298 = vadd.f32 0.0, %v8297
      %v8299 = vpop.f32.mrf.mxu0
      %8300 = vmatprep.mubr.bf16.mxu0 %v7962
      %8301 = vmatmul.mubr.bf16.gmra.mxu0 %v7878
      %v8302 = vpop.f32.mrf.mxu0
      %v8303 = vadd.f32 0.0, %v8302
      %v8304 = vpop.f32.mrf.mxu0
      %v8305 = vpop.f32.mrf.mxu0
      %v8306 = vadd.f32 0.0, %v8305
      %v8307 = vpop.f32.mrf.mxu0
      %8308 = vmatprep.mubr.bf16.mxu0 %v7974
      %8309 = vmatmul.mubr.bf16.gmra.mxu0 %v7879
      %v8310 = vpop.f32.mrf.mxu0
      %v8311 = vadd.f32 0.0, %v8310
      %v8312 = vpop.f32.mrf.mxu0
      %v8313 = vpop.f32.mrf.mxu0
      %v8314 = vadd.f32 0.0, %v8313
      %v8315 = vpop.f32.mrf.mxu0
      %8316 = vmatprep.mubr.bf16.mxu0 %v7986
      %8317 = vmatmul.mubr.bf16.gmra.mxu0 %v7880
      %v8318 = vpop.f32.mrf.mxu0
      %v8319 = vadd.f32 0.0, %v8318
      %v8320 = vpop.f32.mrf.mxu0
      %v8321 = vpop.f32.mrf.mxu0
      %v8322 = vadd.f32 0.0, %v8321
      %v8323 = vpop.f32.mrf.mxu0
      %8324 = vmatprep.mubr.bf16.mxu0 %v7998
      %8325 = vmatmul.mubr.bf16.gmra.mxu0 %v7881
      %v8326 = vpop.f32.mrf.mxu0
      %v8327 = vadd.f32 0.0, %v8326
      %v8328 = vpop.f32.mrf.mxu0
      %v8329 = vpop.f32.mrf.mxu0
      %v8330 = vadd.f32 0.0, %v8329
      %v8331 = vpop.f32.mrf.mxu0
      %8332 = vmatprep.mubr.bf16.mxu0 %v8010
      %8333 = vmatmul.mubr.bf16.gmra.mxu0 %v7882
      %v8334 = vpop.f32.mrf.mxu0
      %v8335 = vadd.f32 0.0, %v8334
      %v8336 = vpop.f32.mrf.mxu0
      %v8337 = vpop.f32.mrf.mxu0
      %v8338 = vadd.f32 0.0, %v8337
      %v8339 = vpop.f32.mrf.mxu0
      %8340 = vdwg.mxu0
      %8341 = vmatprep.subr.bf16.mxu0 0
      %8342 = vmatpush1.bf16.msra.mxu0 %v8219
      %8343 = vmatprep.subr.bf16.mxu0 0
      %8344 = vmatpush1.bf16.msra.mxu0 %v8218
      %8345 = vmatprep.subr.bf16.mxu0 0
      %8346 = vmatpush1.bf16.msra.mxu0 %v8217
      %8347 = vmatprep.subr.bf16.mxu0 0
      %8348 = vmatpush1.bf16.msra.mxu0 %v8216
      %8349 = vmatprep.subr.bf16.mxu0 0
      %8350 = vmatpush1.bf16.msra.mxu0 %v8215
      %8351 = vmatprep.subr.bf16.mxu0 0
      %8352 = vmatpush1.bf16.msra.mxu0 %v8214
      %8353 = vmatprep.subr.bf16.mxu0 0
      %8354 = vmatpush1.bf16.msra.mxu0 %v8213
      %8355 = vmatprep.subr.bf16.mxu0 0
      %8356 = vmatpush1.bf16.msra.mxu0 %v8212
      %8357 = vmatprep.subr.bf16.mxu0 0
      %8358 = vmatpush2.bf16.msra.mxu0 0
      %8359 = vmatprep.subr.bf16.mxu0 0
      %8360 = vmatpush2.bf16.msra.mxu0 0
      %8361 = vmatprep.subr.bf16.mxu0 0
      %8362 = vmatpush2.bf16.msra.mxu0 0
      %8363 = vmatprep.subr.bf16.mxu0 0
      %8364 = vmatpush2.bf16.msra.mxu0 0
      %8365 = vmatprep.subr.bf16.mxu0 0
      %8366 = vmatpush2.bf16.msra.mxu0 0
      %8367 = vmatprep.subr.bf16.mxu0 0
      %8368 = vmatpush2.bf16.msra.mxu0 0
      %8369 = vmatprep.subr.bf16.mxu0 0
      %8370 = vmatpush2.bf16.msra.mxu0 0
      %8371 = vmatprep.subr.bf16.mxu0 0
      %8372 = vmatpush2.bf16.msra.mxu0 0
      %8373 = vmatprep.mubr.bf16.mxu0 0
      %8374 = vmatmul.mubr.bf16.gmra.mxu0 %v8021
      %v8375 = vpop.f32.mrf.mxu0
      %v8376 = vadd.f32 %v8279, %v8375
      %v8377 = vpop.f32.mrf.mxu0
      %v8378 = vpop.f32.mrf.mxu0
      %v8379 = vadd.f32 %v8282, %v8378
      %v8380 = vpop.f32.mrf.mxu0
      %8381 = vmatprep.mubr.bf16.mxu0 0
      %8382 = vmatmul.mubr.bf16.gmra.mxu0 %v8024
      %v8383 = vpop.f32.mrf.mxu0
      %v8384 = vadd.f32 %v8287, %v8383
      %v8385 = vpop.f32.mrf.mxu0
      %v8386 = vpop.f32.mrf.mxu0
      %v8387 = vadd.f32 %v8290, %v8386
      %v8388 = vpop.f32.mrf.mxu0
      %8389 = vmatprep.mubr.bf16.mxu0 0
      %8390 = vmatmul.mubr.bf16.gmra.mxu0 %v8027
      %v8391 = vpop.f32.mrf.mxu0
      %v8392 = vadd.f32 %v8295, %v8391
      %v8393 = vpop.f32.mrf.mxu0
      %v8394 = vpop.f32.mrf.mxu0
      %v8395 = vadd.f32 %v8298, %v8394
      %v8396 = vpop.f32.mrf.mxu0
      %8397 = vmatprep.mubr.bf16.mxu0 0
      %8398 = vmatmul.mubr.bf16.gmra.mxu0 %v8030
      %v8399 = vpop.f32.mrf.mxu0
      %v8400 = vadd.f32 %v8303, %v8399
      %v8401 = vpop.f32.mrf.mxu0
      %v8402 = vpop.f32.mrf.mxu0
      %v8403 = vadd.f32 %v8306, %v8402
      %v8404 = vpop.f32.mrf.mxu0
      %8405 = vmatprep.mubr.bf16.mxu0 0
      %8406 = vmatmul.mubr.bf16.gmra.mxu0 %v8033
      %v8407 = vpop.f32.mrf.mxu0
      %v8408 = vadd.f32 %v8311, %v8407
      %v8409 = vpop.f32.mrf.mxu0
      %v8410 = vpop.f32.mrf.mxu0
      %v8411 = vadd.f32 %v8314, %v8410
      %v8412 = vpop.f32.mrf.mxu0
      %8413 = vmatprep.mubr.bf16.mxu0 0
      %8414 = vmatmul.mubr.bf16.gmra.mxu0 %v8036
      %v8415 = vpop.f32.mrf.mxu0
      %v8416 = vadd.f32 %v8319, %v8415
      %v8417 = vpop.f32.mrf.mxu0
      %v8418 = vpop.f32.mrf.mxu0
      %v8419 = vadd.f32 %v8322, %v8418
      %v8420 = vpop.f32.mrf.mxu0
      %8421 = vmatprep.mubr.bf16.mxu0 0
      %8422 = vmatmul.mubr.bf16.gmra.mxu0 %v8039
      %v8423 = vpop.f32.mrf.mxu0
      %v8424 = vadd.f32 %v8327, %v8423
      %v8425 = vpop.f32.mrf.mxu0
      %v8426 = vpop.f32.mrf.mxu0
      %v8427 = vadd.f32 %v8330, %v8426
      %v8428 = vpop.f32.mrf.mxu0
      %8429 = vmatprep.mubr.bf16.mxu0 0
      %8430 = vmatmul.mubr.bf16.gmra.mxu0 %v8042
      %v8431 = vpop.f32.mrf.mxu0
      %v8432 = vadd.f32 %v8335, %v8431
      %v8433 = vpop.f32.mrf.mxu0
      %v8434 = vpop.f32.mrf.mxu0
      %v8435 = vadd.f32 %v8338, %v8434
      %v8436 = vpop.f32.mrf.mxu0
      %8437 = vdwg.mxu0
      %v8438 = vadd.f32 %v7756, %v8376
      %v8439 = vadd.f32 %v7759, %v8379
      %v8440 = vadd.f32 %v7764, %v8384
      %v8441 = vadd.f32 %v7767, %v8387
      %v8442 = vadd.f32 %v7772, %v8392
      %v8443 = vadd.f32 %v7775, %v8395
      %v8444 = vadd.f32 %v7780, %v8400
      %v8445 = vadd.f32 %v7783, %v8403
      %v8446 = vadd.f32 %v7788, %v8408
      %v8447 = vadd.f32 %v7791, %v8411
      %v8448 = vadd.f32 %v7796, %v8416
      %v8449 = vadd.f32 %v7799, %v8419
      %v8450 = vadd.f32 %v7804, %v8424
      %v8451 = vadd.f32 %v7807, %v8427
      %v8452 = vadd.f32 %v7812, %v8432
      %v8453 = vadd.f32 %v7815, %v8435
      %v8454 = vld [vmem:[%s6] sm:$0x1]
      %v8456 = vlaneseq
      %v8457 = vshrl.u32 %v8456, 7
      %v8458 = vsub.s32 0, %v8457
      %v8459 = vrot.slane %v8454, %v8458
      %v8461 = vadd.f32 %v8438, %v8459
      %v8462 = vadd.f32 %v8439, %v8459
      %v8463 = vadd.f32 %v8440, %v8459
      %v8464 = vadd.f32 %v8441, %v8459
      %v8465 = vadd.f32 %v8442, %v8459
      %v8466 = vadd.f32 %v8443, %v8459
      %v8467 = vadd.f32 %v8444, %v8459
      %v8468 = vadd.f32 %v8445, %v8459
      %v8469 = vadd.f32 %v8446, %v8459
      %v8470 = vadd.f32 %v8447, %v8459
      %v8471 = vadd.f32 %v8448, %v8459
      %v8472 = vadd.f32 %v8449, %v8459
      %v8473 = vadd.f32 %v8450, %v8459
      %v8474 = vadd.f32 %v8451, %v8459
      %v8475 = vadd.f32 %v8452, %v8459
      %v8476 = vadd.f32 %v8453, %v8459
      %v8477 = vmax.f32 %v8461, 0.0
      %v8478 = vmax.f32 %v8462, 0.0
      %v8479 = vmax.f32 %v8463, 0.0
      %v8480 = vmax.f32 %v8464, 0.0
      %v8481 = vmax.f32 %v8465, 0.0
      %v8482 = vmax.f32 %v8466, 0.0
      %v8483 = vmax.f32 %v8467, 0.0
      %v8484 = vmax.f32 %v8468, 0.0
      %v8485 = vmax.f32 %v8469, 0.0
      %v8486 = vmax.f32 %v8470, 0.0
      %v8487 = vmax.f32 %v8471, 0.0
      %v8488 = vmax.f32 %v8472, 0.0
      %v8489 = vmax.f32 %v8473, 0.0
      %v8490 = vmax.f32 %v8474, 0.0
      %v8491 = vmax.f32 %v8475, 0.0
      %v8492 = vmax.f32 %v8476, 0.0
      %8493 = vst [vmem:[%s316] sm:$0xff] %v8477
      %8494 = vst [vmem:[%s316 + $0x8] sm:$0xff] %v8478
      %8495 = vst [vmem:[%s316 + $0x10] sm:$0xff] %v8479
      %8496 = vst [vmem:[%s316 + $0x18] sm:$0xff] %v8480
      %8497 = vst [vmem:[%s316 + $0x20] sm:$0xff] %v8481
      %8498 = vst [vmem:[%s316 + $0x28] sm:$0xff] %v8482
      %8499 = vst [vmem:[%s316 + $0x30] sm:$0xff] %v8483
      %8500 = vst [vmem:[%s316 + $0x38] sm:$0xff] %v8484
      %8501 = vst [vmem:[%s316 + $0x40] sm:$0xff] %v8485
      %8502 = vst [vmem:[%s316 + $0x48] sm:$0xff] %v8486
      %8503 = vst [vmem:[%s316 + $0x50] sm:$0xff] %v8487
      %8504 = vst [vmem:[%s316 + $0x58] sm:$0xff] %v8488
      %8505 = vst [vmem:[%s316 + $0x60] sm:$0xff] %v8489
      %8506 = vst [vmem:[%s316 + $0x68] sm:$0xff] %v8490
      %8507 = vst [vmem:[%s316 + $0x70] sm:$0xff] %v8491
      %8508 = vst [vmem:[%s316 + $0x78] sm:$0xff] %v8492
      %s8509 = smul.u32 8, %s23
      %p8510 = scmp.lt.s32.totalorder %s22, 1
      %s8511 = scalar_select %p8510, %s22, 1
      %p8512 = scmp.lt.s32.totalorder %s8509, 15
      %s8513 = scalar_select %p8512, %s8509, 15
      %s8514 = smul.addr %s8513, 2
      %s8515 = smul.addr %s8511, 32
      %s8516 = sadd.s32 %s8514, %s8515
      %s8517 = smul.addr %s8516, 8
      %s8518 = scalar_lea.vmem %s7, %s8517
      // Predicated region
      $region49: #{dense_block_forward.1} parent=47 // pred_check
        %p8519 = pneg %p204
      $region50: #{dense_block_forward.1} parent=47 // pred_check_branch
        %8521 = sbr.rel (%p8519) target = $region52
      $region51: #{dense_block_forward.1} parent=47 // pred_region
        %s8522 = smul.u32 8, %s23
      $region52: #{dense_block_forward.1} parent=47 // pred_fallthru
        _
    $region48: #{dense_block_forward.1} parent=5 // pred_fallthru
      _
    %p8523 = scmp.le.s32.totalorder 2, %s13
    // Predicated region
    $region53: #{dense_block_forward.1} parent=5 // pred_check
      %p8524 = pneg %p8523
    $region54: #{dense_block_forward.1} parent=5 // pred_check_branch
      %8526 = sbr.rel (%p8524) target = $region56
    $region55: #{dense_block_forward.1} parent=5 // pred_region
      %s8527 = ssub.s32 %s13, 2
      // Predicated region
      $region57: #{dense_block_forward.1} parent=55 // pred_check
        %p8528 = pneg %p210
      $region58: #{dense_block_forward.1} parent=55 // pred_check_branch
        %8530 = sbr.rel (%p8528) target = $region60
      $region59: #{dense_block_forward.1} parent=55 // pred_region
        %s8531 = smul.u32 8, %s25
        %p8532 = scmp.lt.s32.totalorder %s24, 1
        %s8533 = scalar_select %p8532, %s24, 1
        %p8534 = scmp.lt.s32.totalorder %s8531, 15
        %s8535 = scalar_select %p8534, %s8531, 15
        %s8536 = smul.addr %s8535, 2
        %s8537 = smul.addr %s8533, 32
        %s8538 = sadd.s32 %s8536, %s8537
        %s8539 = smul.addr %s8538, 8
        %s8540 = scalar_lea.vmem %s7, %s8539
      $region60: #{dense_block_forward.1} parent=55 // pred_fallthru
        _
    $region56: #{dense_block_forward.1} parent=5 // pred_fallthru
      _
  $region6: #{dense_block_forward.1} parent=0 // loop_footer
    %s17 = sadd.s32 1, %s13
  $region7: #{dense_block_forward.1} parent=0 // loop_footer_branch
    %12 = sbr.rel target = $region3
  $region8: #{dense_block_forward.1} parent=0 // loop_exit
    _

</llo_original>
